<compile_context>
chip_gen: v7x
topology: tpu7x:2x2x1
jax: 0.10.0
libtpu: 0.0.40
codegen_flags: <defaults>
</compile_context>

<pallas_src>
import functools

import jax
import jax.numpy as jnp
import numpy as np
from jax import lax
from jax.experimental import pallas as pl
from jax.experimental.pallas import tpu as pltpu

IMAGENET_MEAN = (0.485, 0.456, 0.406)
IMAGENET_STD = (0.229, 0.224, 0.225)

LAYER_WEIGHTS = {'1': 1.0, '3': 1.0}   # ReLU outputs of the first two convs
PERCEPTUAL_WEIGHT = 1.0
STYLE_WEIGHT = 1.0


# ----------------------------------------------------------------------------
# Conv 3x3 (stride 1, pad 1) + bias + optional ReLU  -> bf16 activations
# ----------------------------------------------------------------------------
def _conv3x3_kernel(x_ref, w_ref, b_ref, pad_ref, o_ref, xpad_ref, *,
                    apply_relu):
    # x_ref:    (1, H, W, Cin)    input tile (one image)
    # w_ref:    (9*Cin, Cout)     bf16 im2col-ordered taps (dy, dx, cin)
    # b_ref:    (1, Cout)         f32 bias
    # pad_ref:  (1, Cin)          f32 per-channel border fill value
    # o_ref:    (1, H, W, Cout)   bf16 output tile
    # xpad_ref: (H+2, W+2, Cin)   bf16 VMEM scratch (halo buffer)
    _, H, W, Cout = o_ref.shape
    Cin = x_ref.shape[3]

    pad = pad_ref[...].astype(jnp.bfloat16).reshape(1, 1, Cin)
    # Border-only halo fill (top/bottom full rows, left/right columns of the
    # interior rows); interior is written exactly once -> no redundant stores.
    xpad_ref[0:1, :, :] = jnp.broadcast_to(pad, (1, W + 2, Cin))
    xpad_ref[H + 1:H + 2, :, :] = jnp.broadcast_to(pad, (1, W + 2, Cin))
    xpad_ref[1:H + 1, 0:1, :] = jnp.broadcast_to(pad, (H, 1, Cin))
    xpad_ref[1:H + 1, W + 1:W + 2, :] = jnp.broadcast_to(pad, (H, 1, Cin))
    xpad_ref[1:H + 1, 1:W + 1, :] = x_ref[0].astype(jnp.bfloat16)

    # im2col operand: ONE MXU matmul with K = 9*Cin (576 for conv1, 27 for
    # conv0) instead of several small accumulating matmuls + VPU adds.
    lhs = jnp.concatenate(
        [xpad_ref[dy:dy + H, dx:dx + W, :].reshape(H * W, Cin)
         for dy in range(3) for dx in range(3)], axis=-1)     # (H*W, 9*Cin)
    acc = jnp.dot(lhs, w_ref[...], preferred_element_type=jnp.float32)
    acc = acc + b_ref[...]
    if apply_relu:
        acc = jnp.maximum(acc, 0.0)
    o_ref[...] = acc.reshape(1, H, W, Cout).astype(o_ref.dtype)


def conv3x3(x_nhwc, w_flat, b, pad_vec, apply_relu):
    NB, H, W, Cin = x_nhwc.shape
    Cout = w_flat.shape[-1]
    kernel = functools.partial(_conv3x3_kernel, apply_relu=apply_relu)
    return pl.pallas_call(
        kernel,
        out_shape=jax.ShapeDtypeStruct((NB, H, W, Cout), jnp.bfloat16),
        grid_spec=pltpu.PrefetchScalarGridSpec(
            num_scalar_prefetch=0,
            grid=(NB,),
            in_specs=[
                pl.BlockSpec((1, H, W, Cin), lambda n: (n, 0, 0, 0)),
                pl.BlockSpec((9 * Cin, Cout), lambda n: (0, 0)),
                pl.BlockSpec((1, Cout), lambda n: (0, 0)),
                pl.BlockSpec((1, Cin), lambda n: (0, 0)),
            ],
            out_specs=pl.BlockSpec((1, H, W, Cout), lambda n: (n, 0, 0, 0)),
            scratch_shapes=[pltpu.VMEM((H + 2, W + 2, Cin), jnp.bfloat16)],
        ),
        compiler_params=pltpu.CompilerParams(
            dimension_semantics=("parallel",)),
    )(x_nhwc, w_flat, b.reshape(1, Cout), pad_vec)


# ----------------------------------------------------------------------------
# Fused per-layer loss: perceptual |fx-fg| sum + Gram-L1 sum in one kernel.
# Features are streamed from HBM exactly once; Grams never hit HBM.
# ----------------------------------------------------------------------------
def _layer_loss_kernel(fx_ref, fg_ref, l1_ref, gram_ref, *, c, inv_gram_denom):
    # fx_ref / fg_ref: (1, H*W, C) bf16 features of one image (x and gt)
    # l1_ref:   (1, 1) running sum of |fx - fg| over the batch grid
    # gram_ref: (1, 1) running sum of |G_x - G_gt| / (C*H*W) over the grid
    @pl.when(pl.program_id(0) == 0)
    def _():
        l1_ref[...] = jnp.zeros_like(l1_ref)
        gram_ref[...] = jnp.zeros_like(gram_ref)

    fx = fx_ref[0]                                    # (HW, C) bf16
    fg = fg_ref[0]

    # Perceptual L1 partial sum (f32).
    diff = fx.astype(jnp.float32) - fg.astype(jnp.float32)
    l1_ref[...] = l1_ref[...] + jnp.sum(jnp.abs(diff))

    # Gram of the concatenated [fx | fg] block: one 128-lane matmul, then the
    # two CxC diagonal blocks are G_x and G_gt.
    cat = jnp.concatenate([fx, fg], axis=-1)          # (HW, 2C) bf16
    dims = (((0,), (0,)), ((), ()))                   # contract over pixels
    g = lax.dot_general(cat, cat, dims, preferred_element_type=jnp.float32)
    gd = g[:c, :c] - g[c:, c:]                        # G_x - G_gt
    gram_ref[...] = gram_ref[...] + jnp.sum(jnp.abs(gd)) * inv_gram_denom


def layer_losses(feat_2n, n_img):
    """feat_2n: (2N, H*W, C) features of [x; gt]. Returns (l1_sum, gram_sum)."""
    NB, P, C = feat_2n.shape
    kernel = functools.partial(_layer_loss_kernel, c=C,
                               inv_gram_denom=1.0 / float(C * P))
    l1s, grs = pl.pallas_call(
        kernel,
        out_shape=(jax.ShapeDtypeStruct((1, 1), jnp.float32),
                   jax.ShapeDtypeStruct((1, 1), jnp.float32)),
        grid_spec=pltpu.PrefetchScalarGridSpec(
            num_scalar_prefetch=0,
            grid=(n_img,),
            in_specs=[
                pl.BlockSpec((1, P, C), lambda n: (n, 0, 0)),
                pl.BlockSpec((1, P, C), lambda n: (n + n_img, 0, 0)),
            ],
            out_specs=(pl.BlockSpec((1, 1), lambda n: (0, 0)),
                       pl.BlockSpec((1, 1), lambda n: (0, 0))),
        ),
        compiler_params=pltpu.CompilerParams(
            dimension_semantics=("arbitrary",)),
    )(feat_2n, feat_2n)
    return l1s[0, 0], grs[0, 0]


# ----------------------------------------------------------------------------
# Parameters (synthetic, deterministic) with normalization folded into conv0
# ----------------------------------------------------------------------------
def init_params():
    key = jax.random.PRNGKey(42)
    k0, k1, k2, k3 = jax.random.split(key, 4)
    w0 = jax.random.normal(k0, (64, 3, 3, 3), jnp.float32) * 0.10   # OIHW
    b0 = jax.random.normal(k1, (64,), jnp.float32) * 0.10
    w1 = jax.random.normal(k2, (64, 64, 3, 3), jnp.float32) * 0.05  # OIHW
    b1 = jax.random.normal(k3, (64,), jnp.float32) * 0.05

    def to_taps(w_oihw):                  # -> (9, Cin, Cout), tap = ky*3+kx
        kh, kw = w_oihw.shape[2], w_oihw.shape[3]
        return jnp.transpose(w_oihw, (2, 3, 1, 0)).reshape(
            kh * kw, w_oihw.shape[1], w_oihw.shape[0])

    def flat(taps):                       # (9, Cin, Cout) -> (9*Cin, Cout)
        t, cin, cout = taps.shape
        return taps.reshape(t * cin, cout)

    mean = jnp.asarray(IMAGENET_MEAN, jnp.float32)
    std = jnp.asarray(IMAGENET_STD, jnp.float32)
    # x_norm = ((x+1)*0.5 - mean)/std = a*x + d  per input channel.
    a = 0.5 / std
    d = (0.5 - mean) / std

    taps0 = to_taps(w0)                              # (9, 3, 64)
    taps0_folded = taps0 * a[None, :, None]
    b0_folded = b0 + jnp.einsum('tco,c->o', taps0, d)
    pad0 = (2.0 * mean - 1.0).reshape(1, 3)          # raw value that norms to 0

    taps1 = to_taps(w1)                              # (9, 64, 64)
    pad1 = jnp.zeros((1, 64), jnp.float32)

    return {
        # Pallas params (folded, im2col-ordered, bf16 MXU operands)
        'w0f': flat(taps0_folded).astype(jnp.bfloat16),
        'b0f': b0_folded, 'pad0': pad0,
        'w1f': flat(taps1).astype(jnp.bfloat16),
        'b1f': b1, 'pad1': pad1,
        # Original weights for the pure-JAX reference
        'w0_oihw': w0, 'b0': b0, 'w1_oihw': w1, 'b1': b1,
    }


# ----------------------------------------------------------------------------
# PerceptualLoss forward (glue in plain JAX)
# ----------------------------------------------------------------------------
def perceptual_loss(x_nchw, gt_nchw, params):
    N = x_nchw.shape[0]
    # Batch x and gt through a single VGG forward (one weight DMA, longer grid).
    xb = jnp.concatenate([x_nchw, gt_nchw], axis=0)
    xb = jnp.transpose(xb, (0, 2, 3, 1))             # NCHW -> NHWC

    feats = {}
    h = conv3x3(xb, params['w0f'], params['b0f'], params['pad0'],
                apply_relu=True)                     # layers '0','1' (+ norm)
    feats['1'] = h
    h = conv3x3(h, params['w1f'], params['b1f'], params['pad1'],
                apply_relu=True)                     # layers '2','3'
    feats['3'] = h

    percep = jnp.float32(0.0)
    style = jnp.float32(0.0)
    for k, lw in LAYER_WEIGHTS.items():
        f = feats[k]
        NB, H, W, C = f.shape
        l1_sum, gram_sum = layer_losses(f.reshape(NB, H * W, C), N)
        percep = percep + (l1_sum / float(N * H * W * C)) * lw   # L1 criterion
        style = style + (gram_sum / float(N * C * C)) * lw       # L1 on grams
    return percep * PERCEPTUAL_WEIGHT, style * STYLE_WEIGHT


# ----------------------------------------------------------------------------
# Pure-JAX reference (original module semantics, for a sanity check only)
# ----------------------------------------------------------------------------
def _ref_vgg(x_nchw, params):
    mean = jnp.asarray(IMAGENET_MEAN, jnp.float32).reshape(1, 3, 1, 1)
    std = jnp.asarray(IMAGENET_STD, jnp.float32).reshape(1, 3, 1, 1)
    x = (x_nchw + 1.0) * 0.5
    x = (x - mean) / std

    def conv(x, w, b):
        y = lax.conv_general_dilated(
            x, w, (1, 1), 'SAME',
            dimension_numbers=('NCHW', 'OIHW', 'NCHW'),
            precision=lax.Precision.HIGHEST)
        return y + b.reshape(1, -1, 1, 1)

    feats = {}
    x = jax.nn.relu(conv(x, params['w0_oihw'], params['b0']))
    feats['1'] = x
    x = jax.nn.relu(conv(x, params['w1_oihw'], params['b1']))
    feats['3'] = x
    return feats


def _ref_gram(x_nchw):
    n, c, h, w = x_nchw.shape
    f = x_nchw.reshape(n, c, h * w)
    return jnp.einsum('ncl,ndl->ncd', f, f,
                      precision=lax.Precision.HIGHEST) / (c * h * w)


def _ref_loss(x, gt, params):
    xf = _ref_vgg(x, params)
    gf = _ref_vgg(gt, params)
    p = sum(jnp.mean(jnp.abs(xf[k] - gf[k])) * LAYER_WEIGHTS[k] for k in xf)
    s = sum(jnp.mean(jnp.abs(_ref_gram(xf[k]) - _ref_gram(gf[k])))
            * LAYER_WEIGHTS[k] for k in xf)
    return p * PERCEPTUAL_WEIGHT, s * STYLE_WEIGHT


# ----------------------------------------------------------------------------
if __name__ == "__main__":
    key = jax.random.PRNGKey(0)
    kx, kg = jax.random.split(key)
    N, C, H, W = 2, 3, 16, 16            # VGG requires 3 input channels
    x = jax.random.uniform(kx, (N, C, H, W), jnp.float32, -1.0, 1.0)
    gt = jax.random.uniform(kg, (N, C, H, W), jnp.float32, -1.0, 1.0)

    params = init_params()

    loss_fn = jax.jit(perceptual_loss)
    percep, style = loss_fn(x, gt, params)
    percep, style = jax.block_until_ready((percep, style))

    ref_p, ref_s = _ref_loss(x, gt, params)
    assert np.allclose(np.asarray(percep), np.asarray(ref_p),
                       rtol=5e-2, atol=1e-3), (float(percep), float(ref_p))
    assert np.allclose(np.asarray(style), np.asarray(ref_s),
                       rtol=5e-2, atol=1e-3), (float(style), float(ref_s))

    print("KERNEL_OK")
</pallas_src>

<mosaic_0001>
module attributes {stable_mosaic.version = 11 : i64} {
  func.func @_conv3x3_kernel(%arg0: i32, %arg1: memref<1x16x16x3xf32, #tpu.memory_space<vmem>>, %arg2: memref<27x64xbf16, #tpu.memory_space<vmem>>, %arg3: memref<1x64xf32, #tpu.memory_space<vmem>>, %arg4: memref<1x3xf32, #tpu.memory_space<vmem>>, %arg5: memref<1x16x16x64xbf16, #tpu.memory_space<vmem>>, %arg6: memref<18x18x3xbf16, #tpu.memory_space<vmem>>) attributes {dimension_semantics = [#tpu.dimension_semantics<parallel>], iteration_bounds = array<i64: 4>, scalar_prefetch = 0 : i64, scratch_operands = 1 : i64, tpu.core_type = #tpu.core_type<tc>, window_params = [{transform_indices = @transform_0, window_bounds = array<i64: 1, 16, 16, 3>}, {pipeline_mode = #tpu.pipeline_mode<synchronous>, transform_indices = @transform_1, window_bounds = array<i64: 27, 64>}, {pipeline_mode = #tpu.pipeline_mode<synchronous>, transform_indices = @transform_2, window_bounds = array<i64: 1, 64>}, {pipeline_mode = #tpu.pipeline_mode<synchronous>, transform_indices = @transform_3, window_bounds = array<i64: 1, 3>}, {transform_indices = @transform_4, window_bounds = array<i64: 1, 16, 16, 64>}]} {
    %c0 = arith.constant 0 : index
    %c0_0 = arith.constant 0 : index
    %0 = vector.load %arg4[%c0, %c0_0] : memref<1x3xf32, #tpu.memory_space<vmem>>, vector<1x3xf32>
    %1 = arith.truncf %0 : vector<1x3xf32> to vector<1x3xbf16>
    %2 = vector.shape_cast %1 : vector<1x3xbf16> to vector<1x1x3xbf16>
    %3 = vector.shape_cast %2 : vector<1x1x3xbf16> to vector<1x1x3xbf16>
    %4 = vector.broadcast %3 : vector<1x1x3xbf16> to vector<1x18x3xbf16>
    %c0_1 = arith.constant 0 : index
    %c0_2 = arith.constant 0 : index
    %c0_3 = arith.constant 0 : index
    %5 = vector.load %arg6[%c0_1, %c0_2, %c0_3] : memref<18x18x3xbf16, #tpu.memory_space<vmem>>, vector<1x18x3xbf16>
    tpu.vector_store %arg6[%c0_1, %c0_2, %c0_3], %4 {strides = array<i32>} : memref<18x18x3xbf16, #tpu.memory_space<vmem>>, vector<1x18x3xbf16>,
    %6 = vector.shape_cast %2 : vector<1x1x3xbf16> to vector<1x1x3xbf16>
    %7 = vector.broadcast %6 : vector<1x1x3xbf16> to vector<1x18x3xbf16>
    %c17 = arith.constant 17 : index
    %c0_4 = arith.constant 0 : index
    %c0_5 = arith.constant 0 : index
    %8 = vector.load %arg6[%c17, %c0_4, %c0_5] : memref<18x18x3xbf16, #tpu.memory_space<vmem>>, vector<1x18x3xbf16>
    tpu.vector_store %arg6[%c17, %c0_4, %c0_5], %7 {strides = array<i32>} : memref<18x18x3xbf16, #tpu.memory_space<vmem>>, vector<1x18x3xbf16>,
    %9 = vector.shape_cast %2 : vector<1x1x3xbf16> to vector<1x1x3xbf16>
    %10 = vector.broadcast %9 : vector<1x1x3xbf16> to vector<16x1x3xbf16>
    %c1 = arith.constant 1 : index
    %c0_6 = arith.constant 0 : index
    %c0_7 = arith.constant 0 : index
    %11 = vector.load %arg6[%c1, %c0_6, %c0_7] : memref<18x18x3xbf16, #tpu.memory_space<vmem>>, vector<16x1x3xbf16>
    tpu.vector_store %arg6[%c1, %c0_6, %c0_7], %10 {strides = array<i32>} : memref<18x18x3xbf16, #tpu.memory_space<vmem>>, vector<16x1x3xbf16>,
    %12 = vector.shape_cast %2 : vector<1x1x3xbf16> to vector<1x1x3xbf16>
    %13 = vector.broadcast %12 : vector<1x1x3xbf16> to vector<16x1x3xbf16>
    %c1_8 = arith.constant 1 : index
    %c17_9 = arith.constant 17 : index
    %c0_10 = arith.constant 0 : index
    %14 = vector.load %arg6[%c1_8, %c17_9, %c0_10] : memref<18x18x3xbf16, #tpu.memory_space<vmem>>, vector<16x1x3xbf16>
    tpu.vector_store %arg6[%c1_8, %c17_9, %c0_10], %13 {strides = array<i32>} : memref<18x18x3xbf16, #tpu.memory_space<vmem>>, vector<16x1x3xbf16>,
    %c0_11 = arith.constant 0 : index
    %c0_12 = arith.constant 0 : index
    %c0_13 = arith.constant 0 : index
    %c0_14 = arith.constant 0 : index
    %15 = vector.load %arg1[%c0_11, %c0_12, %c0_13, %c0_14] : memref<1x16x16x3xf32, #tpu.memory_space<vmem>>, vector<1x16x16x3xf32>
    %16 = vector.shape_cast %15 : vector<1x16x16x3xf32> to vector<16x16x3xf32>
    %17 = arith.truncf %16 : vector<16x16x3xf32> to vector<16x16x3xbf16>
    %c1_15 = arith.constant 1 : index
    %c1_16 = arith.constant 1 : index
    %c0_17 = arith.constant 0 : index
    %18 = vector.load %arg6[%c1_15, %c1_16, %c0_17] : memref<18x18x3xbf16, #tpu.memory_space<vmem>>, vector<16x16x3xbf16>
    tpu.vector_store %arg6[%c1_15, %c1_16, %c0_17], %17 {strides = array<i32>} : memref<18x18x3xbf16, #tpu.memory_space<vmem>>, vector<16x16x3xbf16>,
    %c0_18 = arith.constant 0 : index
    %c0_19 = arith.constant 0 : index
    %c0_20 = arith.constant 0 : index
    %19 = vector.load %arg6[%c0_18, %c0_19, %c0_20] : memref<18x18x3xbf16, #tpu.memory_space<vmem>>, vector<16x16x3xbf16>
    %20 = vector.shape_cast %19 : vector<16x16x3xbf16> to vector<256x3xbf16>
    %c0_21 = arith.constant 0 : index
    %c1_22 = arith.constant 1 : index
    %c0_23 = arith.constant 0 : index
    %21 = vector.load %arg6[%c0_21, %c1_22, %c0_23] : memref<18x18x3xbf16, #tpu.memory_space<vmem>>, vector<16x16x3xbf16>
    %22 = vector.shape_cast %21 : vector<16x16x3xbf16> to vector<256x3xbf16>
    %c0_24 = arith.constant 0 : index
    %c2 = arith.constant 2 : index
    %c0_25 = arith.constant 0 : index
    %23 = vector.load %arg6[%c0_24, %c2, %c0_25] : memref<18x18x3xbf16, #tpu.memory_space<vmem>>, vector<16x16x3xbf16>
    %24 = vector.shape_cast %23 : vector<16x16x3xbf16> to vector<256x3xbf16>
    %c1_26 = arith.constant 1 : index
    %c0_27 = arith.constant 0 : index
    %c0_28 = arith.constant 0 : index
    %25 = vector.load %arg6[%c1_26, %c0_27, %c0_28] : memref<18x18x3xbf16, #tpu.memory_space<vmem>>, vector<16x16x3xbf16>
    %26 = vector.shape_cast %25 : vector<16x16x3xbf16> to vector<256x3xbf16>
    %c1_29 = arith.constant 1 : index
    %c1_30 = arith.constant 1 : index
    %c0_31 = arith.constant 0 : index
    %27 = vector.load %arg6[%c1_29, %c1_30, %c0_31] : memref<18x18x3xbf16, #tpu.memory_space<vmem>>, vector<16x16x3xbf16>
    %28 = vector.shape_cast %27 : vector<16x16x3xbf16> to vector<256x3xbf16>
    %c1_32 = arith.constant 1 : index
    %c2_33 = arith.constant 2 : index
    %c0_34 = arith.constant 0 : index
    %29 = vector.load %arg6[%c1_32, %c2_33, %c0_34] : memref<18x18x3xbf16, #tpu.memory_space<vmem>>, vector<16x16x3xbf16>
    %30 = vector.shape_cast %29 : vector<16x16x3xbf16> to vector<256x3xbf16>
    %c2_35 = arith.constant 2 : index
    %c0_36 = arith.constant 0 : index
    %c0_37 = arith.constant 0 : index
    %31 = vector.load %arg6[%c2_35, %c0_36, %c0_37] : memref<18x18x3xbf16, #tpu.memory_space<vmem>>, vector<16x16x3xbf16>
    %32 = vector.shape_cast %31 : vector<16x16x3xbf16> to vector<256x3xbf16>
    %c2_38 = arith.constant 2 : index
    %c1_39 = arith.constant 1 : index
    %c0_40 = arith.constant 0 : index
    %33 = vector.load %arg6[%c2_38, %c1_39, %c0_40] : memref<18x18x3xbf16, #tpu.memory_space<vmem>>, vector<16x16x3xbf16>
    %34 = vector.shape_cast %33 : vector<16x16x3xbf16> to vector<256x3xbf16>
    %c2_41 = arith.constant 2 : index
    %c2_42 = arith.constant 2 : index
    %c0_43 = arith.constant 0 : index
    %35 = vector.load %arg6[%c2_41, %c2_42, %c0_43] : memref<18x18x3xbf16, #tpu.memory_space<vmem>>, vector<16x16x3xbf16>
    %36 = vector.shape_cast %35 : vector<16x16x3xbf16> to vector<256x3xbf16>
    %37 = tpu.concatenate %20, %22, %24, %26, %28, %30, %32, %34, %36 in 1 : vector<256x3xbf16>, vector<256x3xbf16>, vector<256x3xbf16>, vector<256x3xbf16>, vector<256x3xbf16>, vector<256x3xbf16>, vector<256x3xbf16>, vector<256x3xbf16>, vector<256x3xbf16> -> vector<256x27xbf16>
    %c0_44 = arith.constant 0 : index
    %c0_45 = arith.constant 0 : index
    %38 = vector.load %arg2[%c0_44, %c0_45] : memref<27x64xbf16, #tpu.memory_space<vmem>>, vector<27x64xbf16>
    %cst = arith.constant dense<0.000000e+00> : vector<256x64xf32>
    %39 = tpu.matmul %37, %38, %cst {dimension_numbers = #tpu.dot_dimension_numbers<[1], [0], [0], [1], [0, 0, 1, 1], [], []>} : vector<256x27xbf16>, vector<27x64xbf16>, vector<256x64xf32> -> vector<256x64xf32>
    %c0_46 = arith.constant 0 : index
    %c0_47 = arith.constant 0 : index
    %40 = vector.load %arg3[%c0_46, %c0_47] : memref<1x64xf32, #tpu.memory_space<vmem>>, vector<1x64xf32>
    %41 = vector.broadcast %40 : vector<1x64xf32> to vector<256x64xf32>
    %42 = arith.addf %39, %41 : vector<256x64xf32>
    %cst_48 = arith.constant 0.000000e+00 : f32
    %43 = vector.broadcast %cst_48 : f32 to vector<256x64xf32>
    %44 = arith.maximumf %42, %43 : vector<256x64xf32>
    %45 = vector.shape_cast %44 : vector<256x64xf32> to vector<1x16x16x64xf32>
    %46 = arith.truncf %45 : vector<1x16x16x64xf32> to vector<1x16x16x64xbf16>
    %c0_49 = arith.constant 0 : index
    %c0_50 = arith.constant 0 : index
    %c0_51 = arith.constant 0 : index
    %c0_52 = arith.constant 0 : index
    %47 = vector.load %arg5[%c0_49, %c0_50, %c0_51, %c0_52] : memref<1x16x16x64xbf16, #tpu.memory_space<vmem>>, vector<1x16x16x64xbf16>
    tpu.vector_store %arg5[%c0_49, %c0_50, %c0_51, %c0_52], %46 {strides = array<i32>} : memref<1x16x16x64xbf16, #tpu.memory_space<vmem>>, vector<1x16x16x64xbf16>,
    return
  }
  func.func @transform_0(%arg0: i32) -> (i32, i32, i32, i32) {
    %c0_i32 = arith.constant 0 : i32
    %c0_i32_0 = arith.constant 0 : i32
    %c0_i32_1 = arith.constant 0 : i32
    %c0_i32_2 = arith.constant 0 : i32
    return %arg0, %c0_i32, %c0_i32_0, %c0_i32_1 : i32, i32, i32, i32
  }
  func.func @transform_1(%arg0: i32) -> (i32, i32) {
    %c0_i32 = arith.constant 0 : i32
    %c0_i32_0 = arith.constant 0 : i32
    %c0_i32_1 = arith.constant 0 : i32
    return %c0_i32, %c0_i32_0 : i32, i32
  }
  func.func @transform_2(%arg0: i32) -> (i32, i32) {
    %c0_i32 = arith.constant 0 : i32
    %c0_i32_0 = arith.constant 0 : i32
    %c0_i32_1 = arith.constant 0 : i32
    return %c0_i32, %c0_i32_0 : i32, i32
  }
  func.func @transform_3(%arg0: i32) -> (i32, i32) {
    %c0_i32 = arith.constant 0 : i32
    %c0_i32_0 = arith.constant 0 : i32
    %c0_i32_1 = arith.constant 0 : i32
    return %c0_i32, %c0_i32_0 : i32, i32
  }
  func.func @transform_4(%arg0: i32) -> (i32, i32, i32, i32) {
    %c0_i32 = arith.constant 0 : i32
    %c0_i32_0 = arith.constant 0 : i32
    %c0_i32_1 = arith.constant 0 : i32
    %c0_i32_2 = arith.constant 0 : i32
    return %arg0, %c0_i32, %c0_i32_0, %c0_i32_1 : i32, i32, i32, i32
  }
}

module attributes {stable_mosaic.version = 11 : i64} {
  func.func @_layer_loss_kernel(%arg0: i32, %arg1: memref<1x256x64xbf16, #tpu.memory_space<vmem>>, %arg2: memref<1x256x64xbf16, #tpu.memory_space<vmem>>, %arg3: memref<1x1xf32, #tpu.memory_space<vmem>>, %arg4: memref<1x1xf32, #tpu.memory_space<vmem>>) attributes {dimension_semantics = [#tpu.dimension_semantics<arbitrary>], iteration_bounds = array<i64: 2>, scalar_prefetch = 0 : i64, scratch_operands = 0 : i64, tpu.core_type = #tpu.core_type<tc>, window_params = [{transform_indices = @transform_0, window_bounds = array<i64: 1, 256, 64>}, {transform_indices = @transform_1, window_bounds = array<i64: 1, 256, 64>}, {pipeline_mode = #tpu.pipeline_mode<synchronous>, transform_indices = @transform_2, window_bounds = array<i64: 1, 1>}, {pipeline_mode = #tpu.pipeline_mode<synchronous>, transform_indices = @transform_3, window_bounds = array<i64: 1, 1>}]} {
    %c0_i32 = arith.constant 0 : i32
    %0 = arith.cmpi eq, %arg0, %c0_i32 : i32
    %1 = arith.extui %0 : i1 to i32
    %c0_i32_0 = arith.constant 0 : i32
    %2 = arith.cmpi ne, %1, %c0_i32_0 : i32
    scf.if %2 {
      %cst_17 = arith.constant 0.000000e+00 : f32
      %34 = vector.broadcast %cst_17 : f32 to vector<1x1xf32>
      %c0_18 = arith.constant 0 : index
      %c0_19 = arith.constant 0 : index
      %35 = vector.load %arg3[%c0_18, %c0_19] : memref<1x1xf32, #tpu.memory_space<vmem>>, vector<1x1xf32>
      tpu.vector_store %arg3[%c0_18, %c0_19], %34 {strides = array<i32>} : memref<1x1xf32, #tpu.memory_space<vmem>>, vector<1x1xf32>,
      %cst_20 = arith.constant 0.000000e+00 : f32
      %36 = vector.broadcast %cst_20 : f32 to vector<1x1xf32>
      %c0_21 = arith.constant 0 : index
      %c0_22 = arith.constant 0 : index
      %37 = vector.load %arg4[%c0_21, %c0_22] : memref<1x1xf32, #tpu.memory_space<vmem>>, vector<1x1xf32>
      tpu.vector_store %arg4[%c0_21, %c0_22], %36 {strides = array<i32>} : memref<1x1xf32, #tpu.memory_space<vmem>>, vector<1x1xf32>,
    } else {
    }
    %c0 = arith.constant 0 : index
    %c0_1 = arith.constant 0 : index
    %c0_2 = arith.constant 0 : index
    %3 = vector.load %arg1[%c0, %c0_1, %c0_2] : memref<1x256x64xbf16, #tpu.memory_space<vmem>>, vector<1x256x64xbf16>
    %4 = vector.shape_cast %3 : vector<1x256x64xbf16> to vector<256x64xbf16>
    %c0_3 = arith.constant 0 : index
    %c0_4 = arith.constant 0 : index
    %c0_5 = arith.constant 0 : index
    %5 = vector.load %arg2[%c0_3, %c0_4, %c0_5] : memref<1x256x64xbf16, #tpu.memory_space<vmem>>, vector<1x256x64xbf16>
    %6 = vector.shape_cast %5 : vector<1x256x64xbf16> to vector<256x64xbf16>
    %7 = arith.extf %4 : vector<256x64xbf16> to vector<256x64xf32>
    %8 = arith.extf %6 : vector<256x64xbf16> to vector<256x64xf32>
    %9 = arith.subf %7, %8 : vector<256x64xf32>
    %c0_6 = arith.constant 0 : index
    %c0_7 = arith.constant 0 : index
    %10 = vector.load %arg3[%c0_6, %c0_7] : memref<1x1xf32, #tpu.memory_space<vmem>>, vector<1x1xf32>
    %11 = math.absf %9 : vector<256x64xf32>
    %12 = vector.shape_cast %11 : vector<256x64xf32> to vector<1x256x64xf32>
    %cst = arith.constant dense<0.000000e+00> : vector<1xf32>
    %13 = vector.multi_reduction <add>, %12, %cst [1, 2] : vector<1x256x64xf32> to vector<1xf32>
    %14 = vector.shape_cast %13 : vector<1xf32> to vector<1x1x1xf32>
    %15 = vector.extract %14[0, 0, 0] : f32 from vector<1x1x1xf32>
    %16 = vector.broadcast %15 : f32 to vector<1x1xf32>
    %17 = arith.addf %10, %16 : vector<1x1xf32>
    %c0_8 = arith.constant 0 : index
    %c0_9 = arith.constant 0 : index
    %18 = vector.load %arg3[%c0_8, %c0_9] : memref<1x1xf32, #tpu.memory_space<vmem>>, vector<1x1xf32>
    tpu.vector_store %arg3[%c0_8, %c0_9], %17 {strides = array<i32>} : memref<1x1xf32, #tpu.memory_space<vmem>>, vector<1x1xf32>,
    %19 = tpu.concatenate %4, %6 in 1 : vector<256x64xbf16>, vector<256x64xbf16> -> vector<256x128xbf16>
    %cst_10 = arith.constant dense<0.000000e+00> : vector<128x128xf32>
    %20 = tpu.matmul %19, %19, %cst_10 {dimension_numbers = #tpu.dot_dimension_numbers<[0], [0], [1], [1], [0, 1, 1, 1], [], []>} : vector<256x128xbf16>, vector<256x128xbf16>, vector<128x128xf32> -> vector<128x128xf32>
    %21 = vector.extract_strided_slice %20 {offsets = [0, 0], sizes = [64, 64], strides = [1, 1]} : vector<128x128xf32> to vector<64x64xf32>
    %22 = vector.extract_strided_slice %20 {offsets = [64, 64], sizes = [64, 64], strides = [1, 1]} : vector<128x128xf32> to vector<64x64xf32>
    %23 = arith.subf %21, %22 : vector<64x64xf32>
    %c0_11 = arith.constant 0 : index
    %c0_12 = arith.constant 0 : index
    %24 = vector.load %arg4[%c0_11, %c0_12] : memref<1x1xf32, #tpu.memory_space<vmem>>, vector<1x1xf32>
    %25 = math.absf %23 : vector<64x64xf32>
    %26 = vector.shape_cast %25 : vector<64x64xf32> to vector<1x64x64xf32>
    %cst_13 = arith.constant dense<0.000000e+00> : vector<1xf32>
    %27 = vector.multi_reduction <add>, %26, %cst_13 [1, 2] : vector<1x64x64xf32> to vector<1xf32>
    %28 = vector.shape_cast %27 : vector<1xf32> to vector<1x1x1xf32>
    %29 = vector.extract %28[0, 0, 0] : f32 from vector<1x1x1xf32>
    %cst_14 = arith.constant 6.10351563E-5 : f32
    %30 = arith.mulf %29, %cst_14 : f32
    %31 = vector.broadcast %30 : f32 to vector<1x1xf32>
    %32 = arith.addf %24, %31 : vector<1x1xf32>
    %c0_15 = arith.constant 0 : index
    %c0_16 = arith.constant 0 : index
    %33 = vector.load %arg4[%c0_15, %c0_16] : memref<1x1xf32, #tpu.memory_space<vmem>>, vector<1x1xf32>
    tpu.vector_store %arg4[%c0_15, %c0_16], %32 {strides = array<i32>} : memref<1x1xf32, #tpu.memory_space<vmem>>, vector<1x1xf32>,
    return
  }
  func.func @transform_0(%arg0: i32) -> (i32, i32, i32) {
    %c0_i32 = arith.constant 0 : i32
    %c0_i32_0 = arith.constant 0 : i32
    %c0_i32_1 = arith.constant 0 : i32
    return %arg0, %c0_i32, %c0_i32_0 : i32, i32, i32
  }
  func.func @transform_1(%arg0: i32) -> (i32, i32, i32) {
    %c2_i32 = arith.constant 2 : i32
    %0 = arith.addi %arg0, %c2_i32 : i32
    %c0_i32 = arith.constant 0 : i32
    %c0_i32_0 = arith.constant 0 : i32
    %c0_i32_1 = arith.constant 0 : i32
    return %0, %c0_i32, %c0_i32_0 : i32, i32, i32
  }
  func.func @transform_2(%arg0: i32) -> (i32, i32) {
    %c0_i32 = arith.constant 0 : i32
    %c0_i32_0 = arith.constant 0 : i32
    %c0_i32_1 = arith.constant 0 : i32
    return %c0_i32, %c0_i32_0 : i32, i32
  }
  func.func @transform_3(%arg0: i32) -> (i32, i32) {
    %c0_i32 = arith.constant 0 : i32
    %c0_i32_0 = arith.constant 0 : i32
    %c0_i32_1 = arith.constant 0 : i32
    return %c0_i32, %c0_i32_0 : i32, i32
  }
}

module attributes {stable_mosaic.version = 11 : i64} {
  func.func @_conv3x3_kernel(%arg0: i32, %arg1: memref<1x16x16x64xbf16, #tpu.memory_space<vmem>>, %arg2: memref<576x64xbf16, #tpu.memory_space<vmem>>, %arg3: memref<1x64xf32, #tpu.memory_space<vmem>>, %arg4: memref<1x64xf32, #tpu.memory_space<vmem>>, %arg5: memref<1x16x16x64xbf16, #tpu.memory_space<vmem>>, %arg6: memref<18x18x64xbf16, #tpu.memory_space<vmem>>) attributes {dimension_semantics = [#tpu.dimension_semantics<parallel>], iteration_bounds = array<i64: 4>, scalar_prefetch = 0 : i64, scratch_operands = 1 : i64, tpu.core_type = #tpu.core_type<tc>, window_params = [{transform_indices = @transform_0, window_bounds = array<i64: 1, 16, 16, 64>}, {pipeline_mode = #tpu.pipeline_mode<synchronous>, transform_indices = @transform_1, window_bounds = array<i64: 576, 64>}, {pipeline_mode = #tpu.pipeline_mode<synchronous>, transform_indices = @transform_2, window_bounds = array<i64: 1, 64>}, {pipeline_mode = #tpu.pipeline_mode<synchronous>, transform_indices = @transform_3, window_bounds = array<i64: 1, 64>}, {transform_indices = @transform_4, window_bounds = array<i64: 1, 16, 16, 64>}]} {
    %c0 = arith.constant 0 : index
    %c0_0 = arith.constant 0 : index
    %0 = vector.load %arg4[%c0, %c0_0] : memref<1x64xf32, #tpu.memory_space<vmem>>, vector<1x64xf32>
    %1 = arith.truncf %0 : vector<1x64xf32> to vector<1x64xbf16>
    %2 = vector.shape_cast %1 : vector<1x64xbf16> to vector<1x1x64xbf16>
    %3 = vector.shape_cast %2 : vector<1x1x64xbf16> to vector<1x1x64xbf16>
    %4 = vector.broadcast %3 : vector<1x1x64xbf16> to vector<1x18x64xbf16>
    %c0_1 = arith.constant 0 : index
    %c0_2 = arith.constant 0 : index
    %c0_3 = arith.constant 0 : index
    %5 = vector.load %arg6[%c0_1, %c0_2, %c0_3] : memref<18x18x64xbf16, #tpu.memory_space<vmem>>, vector<1x18x64xbf16>
    tpu.vector_store %arg6[%c0_1, %c0_2, %c0_3], %4 {strides = array<i32>} : memref<18x18x64xbf16, #tpu.memory_space<vmem>>, vector<1x18x64xbf16>,
    %6 = vector.shape_cast %2 : vector<1x1x64xbf16> to vector<1x1x64xbf16>
    %7 = vector.broadcast %6 : vector<1x1x64xbf16> to vector<1x18x64xbf16>
    %c17 = arith.constant 17 : index
    %c0_4 = arith.constant 0 : index
    %c0_5 = arith.constant 0 : index
    %8 = vector.load %arg6[%c17, %c0_4, %c0_5] : memref<18x18x64xbf16, #tpu.memory_space<vmem>>, vector<1x18x64xbf16>
    tpu.vector_store %arg6[%c17, %c0_4, %c0_5], %7 {strides = array<i32>} : memref<18x18x64xbf16, #tpu.memory_space<vmem>>, vector<1x18x64xbf16>,
    %9 = vector.shape_cast %2 : vector<1x1x64xbf16> to vector<1x1x64xbf16>
    %10 = vector.broadcast %9 : vector<1x1x64xbf16> to vector<16x1x64xbf16>
    %c1 = arith.constant 1 : index
    %c0_6 = arith.constant 0 : index
    %c0_7 = arith.constant 0 : index
    %11 = vector.load %arg6[%c1, %c0_6, %c0_7] : memref<18x18x64xbf16, #tpu.memory_space<vmem>>, vector<16x1x64xbf16>
    tpu.vector_store %arg6[%c1, %c0_6, %c0_7], %10 {strides = array<i32>} : memref<18x18x64xbf16, #tpu.memory_space<vmem>>, vector<16x1x64xbf16>,
    %12 = vector.shape_cast %2 : vector<1x1x64xbf16> to vector<1x1x64xbf16>
    %13 = vector.broadcast %12 : vector<1x1x64xbf16> to vector<16x1x64xbf16>
    %c1_8 = arith.constant 1 : index
    %c17_9 = arith.constant 17 : index
    %c0_10 = arith.constant 0 : index
    %14 = vector.load %arg6[%c1_8, %c17_9, %c0_10] : memref<18x18x64xbf16, #tpu.memory_space<vmem>>, vector<16x1x64xbf16>
    tpu.vector_store %arg6[%c1_8, %c17_9, %c0_10], %13 {strides = array<i32>} : memref<18x18x64xbf16, #tpu.memory_space<vmem>>, vector<16x1x64xbf16>,
    %c0_11 = arith.constant 0 : index
    %c0_12 = arith.constant 0 : index
    %c0_13 = arith.constant 0 : index
    %c0_14 = arith.constant 0 : index
    %15 = vector.load %arg1[%c0_11, %c0_12, %c0_13, %c0_14] : memref<1x16x16x64xbf16, #tpu.memory_space<vmem>>, vector<1x16x16x64xbf16>
    %16 = vector.shape_cast %15 : vector<1x16x16x64xbf16> to vector<16x16x64xbf16>
    %c1_15 = arith.constant 1 : index
    %c1_16 = arith.constant 1 : index
    %c0_17 = arith.constant 0 : index
    %17 = vector.load %arg6[%c1_15, %c1_16, %c0_17] : memref<18x18x64xbf16, #tpu.memory_space<vmem>>, vector<16x16x64xbf16>
    tpu.vector_store %arg6[%c1_15, %c1_16, %c0_17], %16 {strides = array<i32>} : memref<18x18x64xbf16, #tpu.memory_space<vmem>>, vector<16x16x64xbf16>,
    %c0_18 = arith.constant 0 : index
    %c0_19 = arith.constant 0 : index
    %c0_20 = arith.constant 0 : index
    %18 = vector.load %arg6[%c0_18, %c0_19, %c0_20] : memref<18x18x64xbf16, #tpu.memory_space<vmem>>, vector<16x16x64xbf16>
    %19 = vector.shape_cast %18 : vector<16x16x64xbf16> to vector<256x64xbf16>
    %c0_21 = arith.constant 0 : index
    %c1_22 = arith.constant 1 : index
    %c0_23 = arith.constant 0 : index
    %20 = vector.load %arg6[%c0_21, %c1_22, %c0_23] : memref<18x18x64xbf16, #tpu.memory_space<vmem>>, vector<16x16x64xbf16>
    %21 = vector.shape_cast %20 : vector<16x16x64xbf16> to vector<256x64xbf16>
    %c0_24 = arith.constant 0 : index
    %c2 = arith.constant 2 : index
    %c0_25 = arith.constant 0 : index
    %22 = vector.load %arg6[%c0_24, %c2, %c0_25] : memref<18x18x64xbf16, #tpu.memory_space<vmem>>, vector<16x16x64xbf16>
    %23 = vector.shape_cast %22 : vector<16x16x64xbf16> to vector<256x64xbf16>
    %c1_26 = arith.constant 1 : index
    %c0_27 = arith.constant 0 : index
    %c0_28 = arith.constant 0 : index
    %24 = vector.load %arg6[%c1_26, %c0_27, %c0_28] : memref<18x18x64xbf16, #tpu.memory_space<vmem>>, vector<16x16x64xbf16>
    %25 = vector.shape_cast %24 : vector<16x16x64xbf16> to vector<256x64xbf16>
    %c1_29 = arith.constant 1 : index
    %c1_30 = arith.constant 1 : index
    %c0_31 = arith.constant 0 : index
    %26 = vector.load %arg6[%c1_29, %c1_30, %c0_31] : memref<18x18x64xbf16, #tpu.memory_space<vmem>>, vector<16x16x64xbf16>
    %27 = vector.shape_cast %26 : vector<16x16x64xbf16> to vector<256x64xbf16>
    %c1_32 = arith.constant 1 : index
    %c2_33 = arith.constant 2 : index
    %c0_34 = arith.constant 0 : index
    %28 = vector.load %arg6[%c1_32, %c2_33, %c0_34] : memref<18x18x64xbf16, #tpu.memory_space<vmem>>, vector<16x16x64xbf16>
    %29 = vector.shape_cast %28 : vector<16x16x64xbf16> to vector<256x64xbf16>
    %c2_35 = arith.constant 2 : index
    %c0_36 = arith.constant 0 : index
    %c0_37 = arith.constant 0 : index
    %30 = vector.load %arg6[%c2_35, %c0_36, %c0_37] : memref<18x18x64xbf16, #tpu.memory_space<vmem>>, vector<16x16x64xbf16>
    %31 = vector.shape_cast %30 : vector<16x16x64xbf16> to vector<256x64xbf16>
    %c2_38 = arith.constant 2 : index
    %c1_39 = arith.constant 1 : index
    %c0_40 = arith.constant 0 : index
    %32 = vector.load %arg6[%c2_38, %c1_39, %c0_40] : memref<18x18x64xbf16, #tpu.memory_space<vmem>>, vector<16x16x64xbf16>
    %33 = vector.shape_cast %32 : vector<16x16x64xbf16> to vector<256x64xbf16>
    %c2_41 = arith.constant 2 : index
    %c2_42 = arith.constant 2 : index
    %c0_43 = arith.constant 0 : index
    %34 = vector.load %arg6[%c2_41, %c2_42, %c0_43] : memref<18x18x64xbf16, #tpu.memory_space<vmem>>, vector<16x16x64xbf16>
    %35 = vector.shape_cast %34 : vector<16x16x64xbf16> to vector<256x64xbf16>
    %36 = tpu.concatenate %19, %21, %23, %25, %27, %29, %31, %33, %35 in 1 : vector<256x64xbf16>, vector<256x64xbf16>, vector<256x64xbf16>, vector<256x64xbf16>, vector<256x64xbf16>, vector<256x64xbf16>, vector<256x64xbf16>, vector<256x64xbf16>, vector<256x64xbf16> -> vector<256x576xbf16>
    %c0_44 = arith.constant 0 : index
    %c0_45 = arith.constant 0 : index
    %37 = vector.load %arg2[%c0_44, %c0_45] : memref<576x64xbf16, #tpu.memory_space<vmem>>, vector<576x64xbf16>
    %cst = arith.constant dense<0.000000e+00> : vector<256x64xf32>
    %38 = tpu.matmul %36, %37, %cst {dimension_numbers = #tpu.dot_dimension_numbers<[1], [0], [0], [1], [0, 0, 1, 1], [], []>} : vector<256x576xbf16>, vector<576x64xbf16>, vector<256x64xf32> -> vector<256x64xf32>
    %c0_46 = arith.constant 0 : index
    %c0_47 = arith.constant 0 : index
    %39 = vector.load %arg3[%c0_46, %c0_47] : memref<1x64xf32, #tpu.memory_space<vmem>>, vector<1x64xf32>
    %40 = vector.broadcast %39 : vector<1x64xf32> to vector<256x64xf32>
    %41 = arith.addf %38, %40 : vector<256x64xf32>
    %cst_48 = arith.constant 0.000000e+00 : f32
    %42 = vector.broadcast %cst_48 : f32 to vector<256x64xf32>
    %43 = arith.maximumf %41, %42 : vector<256x64xf32>
    %44 = vector.shape_cast %43 : vector<256x64xf32> to vector<1x16x16x64xf32>
    %45 = arith.truncf %44 : vector<1x16x16x64xf32> to vector<1x16x16x64xbf16>
    %c0_49 = arith.constant 0 : index
    %c0_50 = arith.constant 0 : index
    %c0_51 = arith.constant 0 : index
    %c0_52 = arith.constant 0 : index
    %46 = vector.load %arg5[%c0_49, %c0_50, %c0_51, %c0_52] : memref<1x16x16x64xbf16, #tpu.memory_space<vmem>>, vector<1x16x16x64xbf16>
    tpu.vector_store %arg5[%c0_49, %c0_50, %c0_51, %c0_52], %45 {strides = array<i32>} : memref<1x16x16x64xbf16, #tpu.memory_space<vmem>>, vector<1x16x16x64xbf16>,
    return
  }
  func.func @transform_0(%arg0: i32) -> (i32, i32, i32, i32) {
    %c0_i32 = arith.constant 0 : i32
    %c0_i32_0 = arith.constant 0 : i32
    %c0_i32_1 = arith.constant 0 : i32
    %c0_i32_2 = arith.constant 0 : i32
    return %arg0, %c0_i32, %c0_i32_0, %c0_i32_1 : i32, i32, i32, i32
  }
  func.func @transform_1(%arg0: i32) -> (i32, i32) {
    %c0_i32 = arith.constant 0 : i32
    %c0_i32_0 = arith.constant 0 : i32
    %c0_i32_1 = arith.constant 0 : i32
    return %c0_i32, %c0_i32_0 : i32, i32
  }
  func.func @transform_2(%arg0: i32) -> (i32, i32) {
    %c0_i32 = arith.constant 0 : i32
    %c0_i32_0 = arith.constant 0 : i32
    %c0_i32_1 = arith.constant 0 : i32
    return %c0_i32, %c0_i32_0 : i32, i32
  }
  func.func @transform_3(%arg0: i32) -> (i32, i32) {
    %c0_i32 = arith.constant 0 : i32
    %c0_i32_0 = arith.constant 0 : i32
    %c0_i32_1 = arith.constant 0 : i32
    return %c0_i32, %c0_i32_0 : i32, i32
  }
  func.func @transform_4(%arg0: i32) -> (i32, i32, i32, i32) {
    %c0_i32 = arith.constant 0 : i32
    %c0_i32_0 = arith.constant 0 : i32
    %c0_i32_1 = arith.constant 0 : i32
    %c0_i32_2 = arith.constant 0 : i32
    return %arg0, %c0_i32, %c0_i32_0, %c0_i32_1 : i32, i32, i32, i32
  }
}

</mosaic_0001>

<llo_original>
// kernel: perceptual_loss.7
$region0: #{perceptual_loss.7}
  #allocation0 [shape = 'u32[]', space=smem, size = 0x4, offset = 0x4, fixed_abs, tag = 'smem constant byte address 0x4 - core index']
  #allocation1 [shape = 'u32[144,128]{1,0:T(1,128)}', space=vmem, size = 0x12000, scoped, tag = 'internal scratch']
  %s0 = inlined_call_operand.vmem [shape: bf16[4,256,64], index: 0, kind: input, shape index: {}, may-alias: {0,1}]
  %s1 = inlined_call_operand.vmem [shape: bf16[4,256,64], index: 1, kind: input, shape index: {}, may-alias: {0,1}]
  %s2 = inlined_call_operand.hbm [shape: f32[1,1], index: 2, kind: output, shape index: {0}]
  %s3 = inlined_call_operand.hbm [shape: f32[1,1], index: 3, kind: output, shape index: {1}]
  %4 = xla_tuple %s2, %s3
  %s5 = sld [smem:[#allocation0]]
  $region53: #{perceptual_loss.7} parent=0
    _
  %s7 = ssub.s32 1, %s5
  %s8 = scalar_select 0, %s7, %s5
  $region1: #{perceptual_loss.7} parent=0
    #allocation2 [shape = 'u8[512]{0}', space=vmem, size = 0x400, scoped, tag = 'output window, operand 0, single buffered']
    #allocation3 [shape = 's32[2]{0}', space=sflag, size = 0x8, scoped, tag = 'scoped memory for perceptual_loss.7']
    #allocation4 [shape = 'u8[512]{0}', space=vmem, size = 0x400, scoped, tag = 'output window, operand 1, single buffered']
    #allocation5 [shape = 's32[1]{0}', space=sflag, size = 0x4, scoped, tag = 'scoped memory for perceptual_loss.7']
    %9 = vsyncpa [#allocation3], 0
    %10 = vsyncpa [#allocation5], 0
    loop: start=0, step=1, limit=4
    $region2: #{perceptual_loss.7} parent=1 // loop_pre_header
      _
    $region3: #{perceptual_loss.7} parent=1 // loop_header
      %s12 = sphi 0, %s16
      %p13 = scmp.ge.s32.totalorder %s12, 4
      %s22 = sphi 0, %s24
      %s25 = sphi 0, %s22
      %s26 = sphi 0, %s25
      %s42 = sphi 0, %s26
      %s50 = sphi 0, %s52
      %s53 = sphi 0, %s50
      %s54 = sphi 0, %s53
      %s70 = sphi 0, %s54
      %s74 = sphi 0, %s74
      %s76 = sphi 0, %s74
      %s77 = sphi 0, %s76
      %s91 = sphi 0, %s77
      %s95 = sphi 0, %s95
      %s97 = sphi 0, %s95
      %s98 = sphi 0, %s97
      %s112 = sphi 0, %s98
    $region4: #{perceptual_loss.7} parent=1 // loop_header_branch
      %15 = sbr.rel (%p13) target = $region8
    $region5: #{perceptual_loss.7} parent=1 // loop_body
      %s17 = ssub.s32 %s12, 1
      %s18 = ssub.s32 %s12, 2
      %s19 = sadd.s32 %s12, 1
      %s20 = ssub.s32 %s12, %s19
      %p21 = scmp.eq.s32.totalorder %s20, 0
      %s23 = sadd.s32 %s22, 1
      %s24 = scalar_select %p21, %s22, %s23
      %p27 = pneg %p21
      %p28 = scmp.eq.s32.totalorder %s12, 1
      %p29 = por %p27, %p28
      %p30 = scmp.ne.s32.totalorder %s22, %s25
      %p31 = scmp.eq.s32.totalorder %s12, 0
      %p32 = por %p30, %p31
      %p33 = scmp.ne.s32.totalorder %s22, %s25
      %p34 = scmp.eq.s32.totalorder %s17, 1
      %p35 = por %p33, %p34
      %p36 = scmp.ne.s32.totalorder %s25, %s26
      %p37 = scmp.eq.s32.totalorder %s17, 0
      %p38 = por %p36, %p37
      %p39 = scmp.ne.s32.totalorder %s25, %s26
      %p40 = scmp.eq.s32.totalorder %s18, 1
      %p41 = por %p39, %p40
      %p43 = scmp.ne.s32.totalorder %s26, %s42
      %p44 = scmp.eq.s32.totalorder %s18, 0
      %p45 = por %p43, %p44
      %s46 = sadd.s32 %s12, 2
      %s47 = sadd.s32 %s19, 2
      %s48 = ssub.s32 %s46, %s47
      %p49 = scmp.eq.s32.totalorder %s48, 0
      %s51 = sadd.s32 %s50, 1
      %s52 = scalar_select %p49, %s50, %s51
      %p55 = pneg %p49
      %p56 = scmp.eq.s32.totalorder %s12, 1
      %p57 = por %p55, %p56
      %p58 = scmp.ne.s32.totalorder %s50, %s53
      %p59 = scmp.eq.s32.totalorder %s12, 0
      %p60 = por %p58, %p59
      %p61 = scmp.ne.s32.totalorder %s50, %s53
      %p62 = scmp.eq.s32.totalorder %s17, 1
      %p63 = por %p61, %p62
      %p64 = scmp.ne.s32.totalorder %s53, %s54
      %p65 = scmp.eq.s32.totalorder %s17, 0
      %p66 = por %p64, %p65
      %p67 = scmp.ne.s32.totalorder %s53, %s54
      %p68 = scmp.eq.s32.totalorder %s18, 1
      %p69 = por %p67, %p68
      %p71 = scmp.ne.s32.totalorder %s54, %s70
      %p72 = scmp.eq.s32.totalorder %s18, 0
      %p73 = por %p71, %p72
      %s75 = sadd.s32 %s74, 1
      %p78 = scmp.eq.s32.totalorder %s12, 1
      %p79 = scmp.ne.s32.totalorder %s74, %s76
      %p80 = scmp.eq.s32.totalorder %s12, 0
      %p81 = por %p79, %p80
      %p82 = scmp.ne.s32.totalorder %s74, %s76
      %p83 = scmp.eq.s32.totalorder %s17, 1
      %p84 = por %p82, %p83
      %p85 = scmp.ne.s32.totalorder %s76, %s77
      %p86 = scmp.eq.s32.totalorder %s17, 0
      %p87 = por %p85, %p86
      %p88 = scmp.ne.s32.totalorder %s76, %s77
      %p89 = scmp.eq.s32.totalorder %s18, 1
      %p90 = por %p88, %p89
      %p92 = scmp.ne.s32.totalorder %s77, %s91
      %p93 = scmp.eq.s32.totalorder %s18, 0
      %p94 = por %p92, %p93
      %s96 = sadd.s32 %s95, 1
      %p99 = scmp.eq.s32.totalorder %s12, 1
      %p100 = scmp.ne.s32.totalorder %s95, %s97
      %p101 = scmp.eq.s32.totalorder %s12, 0
      %p102 = por %p100, %p101
      %p103 = scmp.ne.s32.totalorder %s95, %s97
      %p104 = scmp.eq.s32.totalorder %s17, 1
      %p105 = por %p103, %p104
      %p106 = scmp.ne.s32.totalorder %s97, %s98
      %p107 = scmp.eq.s32.totalorder %s17, 0
      %p108 = por %p106, %p107
      %p109 = scmp.ne.s32.totalorder %s97, %s98
      %p110 = scmp.eq.s32.totalorder %s18, 1
      %p111 = por %p109, %p110
      %p113 = scmp.ne.s32.totalorder %s98, %s112
      %p114 = scmp.eq.s32.totalorder %s18, 0
      %p115 = por %p113, %p114
      %p116 = scmp.le.s32.totalorder 1, %s12
      %p117 = scmp.lt.s32.totalorder %s12, 3
      %p118 = pnand %p116, %p117
      %p119 = pneg %p118
      // Predicated region
      $region9: #{perceptual_loss.7} parent=5 // pred_check
        _
      $region10: #{perceptual_loss.7} parent=5 // pred_check_branch
        %121 = sbr.rel (%p118) target = $region12
      $region11: #{perceptual_loss.7} parent=5 // pred_region
        %s122 = ssub.s32 %s12, 1
      $region12: #{perceptual_loss.7} parent=5 // pred_fallthru
        _
      %p123 = scmp.lt.s32.totalorder %s12, 2
      // Predicated region
      $region13: #{perceptual_loss.7} parent=5 // pred_check
        %p124 = pneg %p123
      $region14: #{perceptual_loss.7} parent=5 // pred_check_branch
        %126 = sbr.rel (%p124) target = $region16
      $region15: #{perceptual_loss.7} parent=5 // pred_region
        // Predicated region
        $region17: #{perceptual_loss.7} parent=15 // pred_check
          %p127 = pneg %p32
        $region18: #{perceptual_loss.7} parent=15 // pred_check_branch
          %129 = sbr.rel (%p127) target = $region20
        $region19: #{perceptual_loss.7} parent=15 // pred_region
          %p130 = scmp.lt.s32.totalorder %s12, 3
          %s131 = scalar_select %p130, %s12, 3
          %s132 = smul.addr %s131, 32
          %s133 = smul.addr %s132, 4
          %s134 = scalar_lea.vmem %s0, %s133
        $region20: #{perceptual_loss.7} parent=15 // pred_fallthru
          _
        // Predicated region
        $region21: #{perceptual_loss.7} parent=15 // pred_check
          %p135 = pneg %p60
        $region22: #{perceptual_loss.7} parent=15 // pred_check_branch
          %137 = sbr.rel (%p135) target = $region24
        $region23: #{perceptual_loss.7} parent=15 // pred_region
          %s138 = sadd.s32 %s12, 2
          %p139 = scmp.lt.s32.totalorder %s138, 3
          %s140 = scalar_select %p139, %s138, 3
          %s141 = smul.addr %s140, 32
          %s142 = smul.addr %s141, 4
          %s143 = scalar_lea.vmem %s1, %s142
          %s144 = sadd.s32 %s12, 2
        $region24: #{perceptual_loss.7} parent=15 // pred_fallthru
          _
      $region16: #{perceptual_loss.7} parent=5 // pred_fallthru
        _
      %p145 = scmp.le.s32.totalorder 1, %s12
      %p146 = scmp.lt.s32.totalorder %s12, 3
      %p147 = pnand %p145, %p146
      %p148 = pneg %p147
      // Predicated region
      $region25: #{perceptual_loss.7} parent=5 // pred_check
        _
      $region26: #{perceptual_loss.7} parent=5 // pred_check_branch
        %150 = sbr.rel (%p147) target = $region28
      $region27: #{perceptual_loss.7} parent=5 // pred_region
        %s151 = ssub.s32 %s12, 1
        %p152 = scmp.lt.s32.totalorder %s17, 3
        %s153 = scalar_select %p152, %s17, 3
        %s154 = smul.addr %s153, 32
        %s155 = smul.addr %s154, 4
        %s156 = scalar_lea.vmem %s0, %s155
        %p157 = pneg %p38
        %p158 = pneg %p35
        %s159 = sadd.s32 %s17, 2
        %p160 = scmp.lt.s32.totalorder %s159, 3
        %s161 = scalar_select %p160, %s159, 3
        %s162 = smul.addr %s161, 32
        %s163 = smul.addr %s162, 4
        %s164 = scalar_lea.vmem %s1, %s163
        %p165 = pneg %p66
        %p166 = pneg %p63
        %p167 = pneg %p87
        %p168 = pneg %p84
        %p169 = pneg %p108
        %p170 = pneg %p105
        %p171 = scmp.lt.s32.totalorder %s17, 3
        %s172 = scalar_select %p171, %s17, 3
        %s173 = smul.addr %s172, 32
        %s174 = smul.addr %s173, 4
        %s175 = scalar_lea.vmem %s0, %s174
        %s176 = sadd.s32 %s17, 2
        %p177 = scmp.lt.s32.totalorder %s176, 3
        %s178 = scalar_select %p177, %s176, 3
        %s179 = smul.addr %s178, 32
        %s180 = smul.addr %s179, 4
        %s181 = scalar_lea.vmem %s1, %s180
        %s182 = sadd.s32 %s17, 2
        %p184 = scmp.eq.s32.totalorder %s17, 0
        // Predicated region
        $region29: #{perceptual_loss.7} parent=27 // pred_check
          %p185 = pneg %p184
        $region30: #{perceptual_loss.7} parent=27 // pred_check_branch
          %187 = sbr.rel (%p185) target = $region32
        $region31: #{perceptual_loss.7} parent=27 // pred_region
          %vm188 = vcmask 0
          %189 = vst.msk [vmem:[#allocation2] sm:$0x1] %vm188, 0.0
          %190 = vst.msk [vmem:[#allocation4] sm:$0x1] %vm188, 0.0
        $region32: #{perceptual_loss.7} parent=27 // pred_fallthru
          _
        %v191 = vld [vmem:[%s175] sm:$0xf]
        %v192 = vld [vmem:[%s175 + $0x4] sm:$0xf]
        %v193 = vld [vmem:[%s175 + $0x8] sm:$0xf]
        %v194 = vld [vmem:[%s175 + $0xc] sm:$0xf]
        %v195 = vld [vmem:[%s175 + $0x10] sm:$0xf]
        %v196 = vld [vmem:[%s175 + $0x14] sm:$0xf]
        %v197 = vld [vmem:[%s175 + $0x18] sm:$0xf]
        %v198 = vld [vmem:[%s175 + $0x1c] sm:$0xf]
        %v199 = vld [vmem:[%s175 + $0x20] sm:$0xf]
        %v200 = vld [vmem:[%s175 + $0x24] sm:$0xf]
        %v201 = vld [vmem:[%s175 + $0x28] sm:$0xf]
        %v202 = vld [vmem:[%s175 + $0x2c] sm:$0xf]
        %v203 = vld [vmem:[%s175 + $0x30] sm:$0xf]
        %v204 = vld [vmem:[%s175 + $0x34] sm:$0xf]
        %v205 = vld [vmem:[%s175 + $0x38] sm:$0xf]
        %v206 = vld [vmem:[%s175 + $0x3c] sm:$0xf]
        %v207 = vld [vmem:[%s175 + $0x40] sm:$0xf]
        %v208 = vld [vmem:[%s175 + $0x44] sm:$0xf]
        %v209 = vld [vmem:[%s175 + $0x48] sm:$0xf]
        %v210 = vld [vmem:[%s175 + $0x4c] sm:$0xf]
        %v211 = vld [vmem:[%s175 + $0x50] sm:$0xf]
        %v212 = vld [vmem:[%s175 + $0x54] sm:$0xf]
        %v213 = vld [vmem:[%s175 + $0x58] sm:$0xf]
        %v214 = vld [vmem:[%s175 + $0x5c] sm:$0xf]
        %v215 = vld [vmem:[%s175 + $0x60] sm:$0xf]
        %v216 = vld [vmem:[%s175 + $0x64] sm:$0xf]
        %v217 = vld [vmem:[%s175 + $0x68] sm:$0xf]
        %v218 = vld [vmem:[%s175 + $0x6c] sm:$0xf]
        %v219 = vld [vmem:[%s175 + $0x70] sm:$0xf]
        %v220 = vld [vmem:[%s175 + $0x74] sm:$0xf]
        %v221 = vld [vmem:[%s175 + $0x78] sm:$0xf]
        %v222 = vld [vmem:[%s175 + $0x7c] sm:$0xf]
        %v223 = vld [vmem:[%s181] sm:$0xf]
        %v224 = vld [vmem:[%s181 + $0x4] sm:$0xf]
        %v225 = vld [vmem:[%s181 + $0x8] sm:$0xf]
        %v226 = vld [vmem:[%s181 + $0xc] sm:$0xf]
        %v227 = vld [vmem:[%s181 + $0x10] sm:$0xf]
        %v228 = vld [vmem:[%s181 + $0x14] sm:$0xf]
        %v229 = vld [vmem:[%s181 + $0x18] sm:$0xf]
        %v230 = vld [vmem:[%s181 + $0x1c] sm:$0xf]
        %v231 = vld [vmem:[%s181 + $0x20] sm:$0xf]
        %v232 = vld [vmem:[%s181 + $0x24] sm:$0xf]
        %v233 = vld [vmem:[%s181 + $0x28] sm:$0xf]
        %v234 = vld [vmem:[%s181 + $0x2c] sm:$0xf]
        %v235 = vld [vmem:[%s181 + $0x30] sm:$0xf]
        %v236 = vld [vmem:[%s181 + $0x34] sm:$0xf]
        %v237 = vld [vmem:[%s181 + $0x38] sm:$0xf]
        %v238 = vld [vmem:[%s181 + $0x3c] sm:$0xf]
        %v239 = vld [vmem:[%s181 + $0x40] sm:$0xf]
        %v240 = vld [vmem:[%s181 + $0x44] sm:$0xf]
        %v241 = vld [vmem:[%s181 + $0x48] sm:$0xf]
        %v242 = vld [vmem:[%s181 + $0x4c] sm:$0xf]
        %v243 = vld [vmem:[%s181 + $0x50] sm:$0xf]
        %v244 = vld [vmem:[%s181 + $0x54] sm:$0xf]
        %v245 = vld [vmem:[%s181 + $0x58] sm:$0xf]
        %v246 = vld [vmem:[%s181 + $0x5c] sm:$0xf]
        %v247 = vld [vmem:[%s181 + $0x60] sm:$0xf]
        %v248 = vld [vmem:[%s181 + $0x64] sm:$0xf]
        %v249 = vld [vmem:[%s181 + $0x68] sm:$0xf]
        %v250 = vld [vmem:[%s181 + $0x6c] sm:$0xf]
        %v251 = vld [vmem:[%s181 + $0x70] sm:$0xf]
        %v252 = vld [vmem:[%s181 + $0x74] sm:$0xf]
        %v253 = vld [vmem:[%s181 + $0x78] sm:$0xf]
        %v254 = vld [vmem:[%s181 + $0x7c] sm:$0xf]
        %v255 = vunpack.c.l.bf16 %v191
        %v256 = vunpack.c.l.bf16 %v192
        %v257 = vunpack.c.l.bf16 %v193
        %v258 = vunpack.c.l.bf16 %v194
        %v259 = vunpack.c.l.bf16 %v195
        %v260 = vunpack.c.l.bf16 %v196
        %v261 = vunpack.c.l.bf16 %v197
        %v262 = vunpack.c.l.bf16 %v198
        %v263 = vunpack.c.l.bf16 %v199
        %v264 = vunpack.c.l.bf16 %v200
        %v265 = vunpack.c.l.bf16 %v201
        %v266 = vunpack.c.l.bf16 %v202
        %v267 = vunpack.c.l.bf16 %v203
        %v268 = vunpack.c.l.bf16 %v204
        %v269 = vunpack.c.l.bf16 %v205
        %v270 = vunpack.c.l.bf16 %v206
        %v271 = vunpack.c.l.bf16 %v207
        %v272 = vunpack.c.l.bf16 %v208
        %v273 = vunpack.c.l.bf16 %v209
        %v274 = vunpack.c.l.bf16 %v210
        %v275 = vunpack.c.l.bf16 %v211
        %v276 = vunpack.c.l.bf16 %v212
        %v277 = vunpack.c.l.bf16 %v213
        %v278 = vunpack.c.l.bf16 %v214
        %v279 = vunpack.c.l.bf16 %v215
        %v280 = vunpack.c.l.bf16 %v216
        %v281 = vunpack.c.l.bf16 %v217
        %v282 = vunpack.c.l.bf16 %v218
        %v283 = vunpack.c.l.bf16 %v219
        %v284 = vunpack.c.l.bf16 %v220
        %v285 = vunpack.c.l.bf16 %v221
        %v286 = vunpack.c.l.bf16 %v222
        %v287 = vunpack.c.l.bf16 %v223
        %v288 = vunpack.c.l.bf16 %v224
        %v289 = vunpack.c.l.bf16 %v225
        %v290 = vunpack.c.l.bf16 %v226
        %v291 = vunpack.c.l.bf16 %v227
        %v292 = vunpack.c.l.bf16 %v228
        %v293 = vunpack.c.l.bf16 %v229
        %v294 = vunpack.c.l.bf16 %v230
        %v295 = vunpack.c.l.bf16 %v231
        %v296 = vunpack.c.l.bf16 %v232
        %v297 = vunpack.c.l.bf16 %v233
        %v298 = vunpack.c.l.bf16 %v234
        %v299 = vunpack.c.l.bf16 %v235
        %v300 = vunpack.c.l.bf16 %v236
        %v301 = vunpack.c.l.bf16 %v237
        %v302 = vunpack.c.l.bf16 %v238
        %v303 = vunpack.c.l.bf16 %v239
        %v304 = vunpack.c.l.bf16 %v240
        %v305 = vunpack.c.l.bf16 %v241
        %v306 = vunpack.c.l.bf16 %v242
        %v307 = vunpack.c.l.bf16 %v243
        %v308 = vunpack.c.l.bf16 %v244
        %v309 = vunpack.c.l.bf16 %v245
        %v310 = vunpack.c.l.bf16 %v246
        %v311 = vunpack.c.l.bf16 %v247
        %v312 = vunpack.c.l.bf16 %v248
        %v313 = vunpack.c.l.bf16 %v249
        %v314 = vunpack.c.l.bf16 %v250
        %v315 = vunpack.c.l.bf16 %v251
        %v316 = vunpack.c.l.bf16 %v252
        %v317 = vunpack.c.l.bf16 %v253
        %v318 = vunpack.c.l.bf16 %v254
        %v319 = vsub.f32 %v255, %v287
        %v320 = vsub.f32 %v256, %v288
        %v321 = vsub.f32 %v257, %v289
        %v322 = vsub.f32 %v258, %v290
        %v323 = vsub.f32 %v259, %v291
        %v324 = vsub.f32 %v260, %v292
        %v325 = vsub.f32 %v261, %v293
        %v326 = vsub.f32 %v262, %v294
        %v327 = vsub.f32 %v263, %v295
        %v328 = vsub.f32 %v264, %v296
        %v329 = vsub.f32 %v265, %v297
        %v330 = vsub.f32 %v266, %v298
        %v331 = vsub.f32 %v267, %v299
        %v332 = vsub.f32 %v268, %v300
        %v333 = vsub.f32 %v269, %v301
        %v334 = vsub.f32 %v270, %v302
        %v335 = vsub.f32 %v271, %v303
        %v336 = vsub.f32 %v272, %v304
        %v337 = vsub.f32 %v273, %v305
        %v338 = vsub.f32 %v274, %v306
        %v339 = vsub.f32 %v275, %v307
        %v340 = vsub.f32 %v276, %v308
        %v341 = vsub.f32 %v277, %v309
        %v342 = vsub.f32 %v278, %v310
        %v343 = vsub.f32 %v279, %v311
        %v344 = vsub.f32 %v280, %v312
        %v345 = vsub.f32 %v281, %v313
        %v346 = vsub.f32 %v282, %v314
        %v347 = vsub.f32 %v283, %v315
        %v348 = vsub.f32 %v284, %v316
        %v349 = vsub.f32 %v285, %v317
        %v350 = vsub.f32 %v286, %v318
        %v351 = vld [vmem:[#allocation2] sm:$0x1]
        %v352 = vand.u32 2147483647, %v319
        %v353 = vand.u32 2147483647, %v320
        %v354 = vand.u32 2147483647, %v321
        %v355 = vand.u32 2147483647, %v322
        %v356 = vand.u32 2147483647, %v323
        %v357 = vand.u32 2147483647, %v324
        %v358 = vand.u32 2147483647, %v325
        %v359 = vand.u32 2147483647, %v326
        %v360 = vand.u32 2147483647, %v327
        %v361 = vand.u32 2147483647, %v328
        %v362 = vand.u32 2147483647, %v329
        %v363 = vand.u32 2147483647, %v330
        %v364 = vand.u32 2147483647, %v331
        %v365 = vand.u32 2147483647, %v332
        %v366 = vand.u32 2147483647, %v333
        %v367 = vand.u32 2147483647, %v334
        %v368 = vand.u32 2147483647, %v335
        %v369 = vand.u32 2147483647, %v336
        %v370 = vand.u32 2147483647, %v337
        %v371 = vand.u32 2147483647, %v338
        %v372 = vand.u32 2147483647, %v339
        %v373 = vand.u32 2147483647, %v340
        %v374 = vand.u32 2147483647, %v341
        %v375 = vand.u32 2147483647, %v342
        %v376 = vand.u32 2147483647, %v343
        %v377 = vand.u32 2147483647, %v344
        %v378 = vand.u32 2147483647, %v345
        %v379 = vand.u32 2147483647, %v346
        %v380 = vand.u32 2147483647, %v347
        %v381 = vand.u32 2147483647, %v348
        %v382 = vand.u32 2147483647, %v349
        %v383 = vand.u32 2147483647, %v350
        %vm384 = vcmask 523264
        %v385 = vsel %vm384, %v352, 0.0
        %v386 = vsel %vm384, %v353, 0.0
        %v387 = vadd.f32 %v385, %v386
        %v388 = vsel %vm384, %v354, 0.0
        %v389 = vadd.f32 %v387, %v388
        %v390 = vsel %vm384, %v355, 0.0
        %v391 = vadd.f32 %v389, %v390
        %v392 = vsel %vm384, %v356, 0.0
        %v393 = vadd.f32 %v391, %v392
        %v394 = vsel %vm384, %v357, 0.0
        %v395 = vadd.f32 %v393, %v394
        %v396 = vsel %vm384, %v358, 0.0
        %v397 = vadd.f32 %v395, %v396
        %v398 = vsel %vm384, %v359, 0.0
        %v399 = vadd.f32 %v397, %v398
        %v400 = vsel %vm384, %v360, 0.0
        %v401 = vadd.f32 %v399, %v400
        %v402 = vsel %vm384, %v361, 0.0
        %v403 = vadd.f32 %v401, %v402
        %v404 = vsel %vm384, %v362, 0.0
        %v405 = vadd.f32 %v403, %v404
        %v406 = vsel %vm384, %v363, 0.0
        %v407 = vadd.f32 %v405, %v406
        %v408 = vsel %vm384, %v364, 0.0
        %v409 = vadd.f32 %v407, %v408
        %v410 = vsel %vm384, %v365, 0.0
        %v411 = vadd.f32 %v409, %v410
        %v412 = vsel %vm384, %v366, 0.0
        %v413 = vadd.f32 %v411, %v412
        %v414 = vsel %vm384, %v367, 0.0
        %v415 = vadd.f32 %v413, %v414
        %v416 = vsel %vm384, %v368, 0.0
        %v417 = vadd.f32 %v415, %v416
        %v418 = vsel %vm384, %v369, 0.0
        %v419 = vadd.f32 %v417, %v418
        %v420 = vsel %vm384, %v370, 0.0
        %v421 = vadd.f32 %v419, %v420
        %v422 = vsel %vm384, %v371, 0.0
        %v423 = vadd.f32 %v421, %v422
        %v424 = vsel %vm384, %v372, 0.0
        %v425 = vadd.f32 %v423, %v424
        %v426 = vsel %vm384, %v373, 0.0
        %v427 = vadd.f32 %v425, %v426
        %v428 = vsel %vm384, %v374, 0.0
        %v429 = vadd.f32 %v427, %v428
        %v430 = vsel %vm384, %v375, 0.0
        %v431 = vadd.f32 %v429, %v430
        %v432 = vsel %vm384, %v376, 0.0
        %v433 = vadd.f32 %v431, %v432
        %v434 = vsel %vm384, %v377, 0.0
        %v435 = vadd.f32 %v433, %v434
        %v436 = vsel %vm384, %v378, 0.0
        %v437 = vadd.f32 %v435, %v436
        %v438 = vsel %vm384, %v379, 0.0
        %v439 = vadd.f32 %v437, %v438
        %v440 = vsel %vm384, %v380, 0.0
        %v441 = vadd.f32 %v439, %v440
        %v442 = vsel %vm384, %v381, 0.0
        %v443 = vadd.f32 %v441, %v442
        %v444 = vsel %vm384, %v382, 0.0
        %v445 = vadd.f32 %v443, %v444
        %v446 = vsel %vm384, %v383, 0.0
        %v447 = vadd.f32 %v445, %v446
        %448 = vadd.xlane.f32.xlu0 %v447
        %v449 = vpop.xlane.xlu0 %448
        %v450 = vrot.slane %v449, 4
        %v451 = vadd.f32 %v449, %v450
        %v452 = vrot.slane %v451, 2
        %v453 = vadd.f32 %v451, %v452
        %v454 = vrot.slane %v453, 1
        %v455 = vadd.f32 %v453, %v454
        %s456 = vtos %v455
        %v457 = vstv %s456
        %v458 = vadd.f32 %v351, %v457
        %vm459 = vcmask 0
        %460 = vst.msk [vmem:[#allocation2] sm:$0x1] %vm459, %v458
        %v493 = vunpack.c.l.b16 %v191
        %v494 = vunpack.c.l.b16 %v192
        %v495 = vunpack.c.l.b16 %v193
        %v496 = vunpack.c.l.b16 %v194
        %v497 = vunpack.c.l.b16 %v195
        %v498 = vunpack.c.l.b16 %v196
        %v499 = vunpack.c.l.b16 %v197
        %v500 = vunpack.c.l.b16 %v198
        %v501 = vunpack.c.l.b16 %v199
        %v502 = vunpack.c.l.b16 %v200
        %v503 = vunpack.c.l.b16 %v201
        %v504 = vunpack.c.l.b16 %v202
        %v505 = vunpack.c.l.b16 %v203
        %v506 = vunpack.c.l.b16 %v204
        %v507 = vunpack.c.l.b16 %v205
        %v508 = vunpack.c.l.b16 %v206
        %v509 = vunpack.c.l.b16 %v207
        %v510 = vunpack.c.l.b16 %v208
        %v511 = vunpack.c.l.b16 %v209
        %v512 = vunpack.c.l.b16 %v210
        %v513 = vunpack.c.l.b16 %v211
        %v514 = vunpack.c.l.b16 %v212
        %v515 = vunpack.c.l.b16 %v213
        %v516 = vunpack.c.l.b16 %v214
        %v517 = vunpack.c.l.b16 %v215
        %v518 = vunpack.c.l.b16 %v216
        %v519 = vunpack.c.l.b16 %v217
        %v520 = vunpack.c.l.b16 %v218
        %v521 = vunpack.c.l.b16 %v219
        %v522 = vunpack.c.l.b16 %v220
        %v523 = vunpack.c.l.b16 %v221
        %v524 = vunpack.c.l.b16 %v222
        %v525 = vpack.c.b16 %v494, %v493
        %v526 = vpack.c.b16 %v496, %v495
        %v527 = vpack.c.b16 %v498, %v497
        %v528 = vpack.c.b16 %v500, %v499
        %v529 = vpack.c.b16 %v502, %v501
        %v530 = vpack.c.b16 %v504, %v503
        %v531 = vpack.c.b16 %v506, %v505
        %v532 = vpack.c.b16 %v508, %v507
        %v533 = vpack.c.b16 %v510, %v509
        %v534 = vpack.c.b16 %v512, %v511
        %v535 = vpack.c.b16 %v514, %v513
        %v536 = vpack.c.b16 %v516, %v515
        %v537 = vpack.c.b16 %v518, %v517
        %v538 = vpack.c.b16 %v520, %v519
        %v539 = vpack.c.b16 %v522, %v521
        %v540 = vpack.c.b16 %v524, %v523
        %v573 = vunpack.c.l.b16 %v223
        %v574 = vunpack.c.l.b16 %v224
        %v575 = vunpack.c.l.b16 %v225
        %v576 = vunpack.c.l.b16 %v226
        %v577 = vunpack.c.l.b16 %v227
        %v578 = vunpack.c.l.b16 %v228
        %v579 = vunpack.c.l.b16 %v229
        %v580 = vunpack.c.l.b16 %v230
        %v581 = vunpack.c.l.b16 %v231
        %v582 = vunpack.c.l.b16 %v232
        %v583 = vunpack.c.l.b16 %v233
        %v584 = vunpack.c.l.b16 %v234
        %v585 = vunpack.c.l.b16 %v235
        %v586 = vunpack.c.l.b16 %v236
        %v587 = vunpack.c.l.b16 %v237
        %v588 = vunpack.c.l.b16 %v238
        %v589 = vunpack.c.l.b16 %v239
        %v590 = vunpack.c.l.b16 %v240
        %v591 = vunpack.c.l.b16 %v241
        %v592 = vunpack.c.l.b16 %v242
        %v593 = vunpack.c.l.b16 %v243
        %v594 = vunpack.c.l.b16 %v244
        %v595 = vunpack.c.l.b16 %v245
        %v596 = vunpack.c.l.b16 %v246
        %v597 = vunpack.c.l.b16 %v247
        %v598 = vunpack.c.l.b16 %v248
        %v599 = vunpack.c.l.b16 %v249
        %v600 = vunpack.c.l.b16 %v250
        %v601 = vunpack.c.l.b16 %v251
        %v602 = vunpack.c.l.b16 %v252
        %v603 = vunpack.c.l.b16 %v253
        %v604 = vunpack.c.l.b16 %v254
        %v605 = vpack.c.b16 %v574, %v573
        %v606 = vpack.c.b16 %v576, %v575
        %v607 = vpack.c.b16 %v578, %v577
        %v608 = vpack.c.b16 %v580, %v579
        %v609 = vpack.c.b16 %v582, %v581
        %v610 = vpack.c.b16 %v584, %v583
        %v611 = vpack.c.b16 %v586, %v585
        %v612 = vpack.c.b16 %v588, %v587
        %v613 = vpack.c.b16 %v590, %v589
        %v614 = vpack.c.b16 %v592, %v591
        %v615 = vpack.c.b16 %v594, %v593
        %v616 = vpack.c.b16 %v596, %v595
        %v617 = vpack.c.b16 %v598, %v597
        %v618 = vpack.c.b16 %v600, %v599
        %v619 = vpack.c.b16 %v602, %v601
        %v620 = vpack.c.b16 %v604, %v603
        %621 = vrot.lane.b32.xlu0 %v605, 64
        %v622 = vpop.permute.xlu0 %621
        %623 = vrot.lane.b32.xlu0 %v606, 64
        %v624 = vpop.permute.xlu0 %623
        %625 = vrot.lane.b32.xlu0 %v607, 64
        %v626 = vpop.permute.xlu0 %625
        %627 = vrot.lane.b32.xlu0 %v608, 64
        %v628 = vpop.permute.xlu0 %627
        %629 = vrot.lane.b32.xlu0 %v609, 64
        %v630 = vpop.permute.xlu0 %629
        %631 = vrot.lane.b32.xlu0 %v610, 64
        %v632 = vpop.permute.xlu0 %631
        %633 = vrot.lane.b32.xlu0 %v611, 64
        %v634 = vpop.permute.xlu0 %633
        %635 = vrot.lane.b32.xlu0 %v612, 64
        %v636 = vpop.permute.xlu0 %635
        %637 = vrot.lane.b32.xlu0 %v613, 64
        %v638 = vpop.permute.xlu0 %637
        %639 = vrot.lane.b32.xlu0 %v614, 64
        %v640 = vpop.permute.xlu0 %639
        %641 = vrot.lane.b32.xlu0 %v615, 64
        %v642 = vpop.permute.xlu0 %641
        %643 = vrot.lane.b32.xlu0 %v616, 64
        %v644 = vpop.permute.xlu0 %643
        %645 = vrot.lane.b32.xlu0 %v617, 64
        %v646 = vpop.permute.xlu0 %645
        %647 = vrot.lane.b32.xlu0 %v618, 64
        %v648 = vpop.permute.xlu0 %647
        %649 = vrot.lane.b32.xlu0 %v619, 64
        %v650 = vpop.permute.xlu0 %649
        %651 = vrot.lane.b32.xlu0 %v620, 64
        %v652 = vpop.permute.xlu0 %651
        %v655 = vsel %vm384, %v525, %v622
        %v659 = vsel %vm384, %v526, %v624
        %v663 = vsel %vm384, %v527, %v626
        %v667 = vsel %vm384, %v528, %v628
        %v671 = vsel %vm384, %v529, %v630
        %v675 = vsel %vm384, %v530, %v632
        %v679 = vsel %vm384, %v531, %v634
        %v683 = vsel %vm384, %v532, %v636
        %v687 = vsel %vm384, %v533, %v638
        %v691 = vsel %vm384, %v534, %v640
        %v695 = vsel %vm384, %v535, %v642
        %v699 = vsel %vm384, %v536, %v644
        %v703 = vsel %vm384, %v537, %v646
        %v707 = vsel %vm384, %v538, %v648
        %v711 = vsel %vm384, %v539, %v650
        %v715 = vsel %vm384, %v540, %v652
        %717 = vxpose.xlu0.c.b16.start [1/8] %v655, 128
        %718 = vxpose.xlu0.c.b16.cont [2/8] %v659, 128
        %719 = vxpose.xlu0.c.b16.cont [3/8] %v663, 128
        %720 = vxpose.xlu0.c.b16.cont [4/8] %v667, 128
        %721 = vxpose.xlu0.c.b16.cont [5/8] %v671, 128
        %722 = vxpose.xlu0.c.b16.cont [6/8] %v675, 128
        %723 = vxpose.xlu0.c.b16.cont [7/8] %v679, 128
        %724 = vxpose.xlu0.c.b16.end [8/8] %v683, 128
        %v725 = vpop.trf.xlu0
        %v726 = vpop.trf.xlu0
        %v727 = vpop.trf.xlu0
        %v728 = vpop.trf.xlu0
        %v729 = vpop.trf.xlu0
        %v730 = vpop.trf.xlu0
        %v731 = vpop.trf.xlu0
        %v732 = vpop.trf.xlu0
        %733 = vxpose.xlu0.c.b16.start [1/8] %v687, 128
        %734 = vxpose.xlu0.c.b16.cont [2/8] %v691, 128
        %735 = vxpose.xlu0.c.b16.cont [3/8] %v695, 128
        %736 = vxpose.xlu0.c.b16.cont [4/8] %v699, 128
        %737 = vxpose.xlu0.c.b16.cont [5/8] %v703, 128
        %738 = vxpose.xlu0.c.b16.cont [6/8] %v707, 128
        %739 = vxpose.xlu0.c.b16.cont [7/8] %v711, 128
        %740 = vxpose.xlu0.c.b16.end [8/8] %v715, 128
        %v741 = vpop.trf.xlu0
        %v742 = vpop.trf.xlu0
        %v743 = vpop.trf.xlu0
        %v744 = vpop.trf.xlu0
        %v745 = vpop.trf.xlu0
        %v746 = vpop.trf.xlu0
        %v747 = vpop.trf.xlu0
        %v748 = vpop.trf.xlu0
        %749 = vmatprep.subr.bf16.mxu0 0
        %750 = vmatpush1.bf16.msra.mxu0 %v655
        %751 = vmatprep.subr.bf16.mxu0 0
        %752 = vmatpush1.bf16.msra.mxu0 %v659
        %753 = vmatprep.subr.bf16.mxu0 0
        %754 = vmatpush1.bf16.msra.mxu0 %v663
        %755 = vmatprep.subr.bf16.mxu0 0
        %756 = vmatpush1.bf16.msra.mxu0 %v667
        %757 = vmatprep.subr.bf16.mxu0 0
        %758 = vmatpush1.bf16.msra.mxu0 %v671
        %759 = vmatprep.subr.bf16.mxu0 0
        %760 = vmatpush1.bf16.msra.mxu0 %v675
        %761 = vmatprep.subr.bf16.mxu0 0
        %762 = vmatpush1.bf16.msra.mxu0 %v679
        %763 = vmatprep.subr.bf16.mxu0 0
        %764 = vmatpush1.bf16.msra.mxu0 %v683
        %765 = vmatprep.subr.bf16.mxu0 0
        %766 = vmatpush1.bf16.msra.mxu0 %v687
        %767 = vmatprep.subr.bf16.mxu0 0
        %768 = vmatpush1.bf16.msra.mxu0 %v691
        %769 = vmatprep.subr.bf16.mxu0 0
        %770 = vmatpush1.bf16.msra.mxu0 %v695
        %771 = vmatprep.subr.bf16.mxu0 0
        %772 = vmatpush1.bf16.msra.mxu0 %v699
        %773 = vmatprep.subr.bf16.mxu0 0
        %774 = vmatpush1.bf16.msra.mxu0 %v703
        %775 = vmatprep.subr.bf16.mxu0 0
        %776 = vmatpush1.bf16.msra.mxu0 %v707
        %777 = vmatprep.subr.bf16.mxu0 0
        %778 = vmatpush1.bf16.msra.mxu0 %v711
        %779 = vmatprep.subr.bf16.mxu0 0
        %780 = vmatpush1.bf16.msra.mxu0 %v715
        %781 = vmatprep.mubr.bf16.mxu0 %v741
        %782 = vmatmul.mubr.bf16.gmra.mrb[0].mxu0 %v725
        %v783 = vpop.f32.mrb[0].mxu0
        %v784 = vadd.f32 0.0, %v783
        %v785 = vpop.f32.mrb[0].mxu0
        %v786 = vpop.f32.mrb[0].mxu0
        %v787 = vadd.f32 0.0, %v786
        %v788 = vpop.f32.mrb[0].mxu0
        %789 = vmatprep.mubr.bf16.mxu0 %v742
        %790 = vmatmul.mubr.bf16.gmra.mrb[0].mxu0 %v726
        %v791 = vpop.f32.mrb[0].mxu0
        %v792 = vadd.f32 0.0, %v791
        %v793 = vpop.f32.mrb[0].mxu0
        %v794 = vpop.f32.mrb[0].mxu0
        %v795 = vadd.f32 0.0, %v794
        %v796 = vpop.f32.mrb[0].mxu0
        %797 = vmatprep.mubr.bf16.mxu0 %v743
        %798 = vmatmul.mubr.bf16.gmra.mrb[0].mxu0 %v727
        %v799 = vpop.f32.mrb[0].mxu0
        %v800 = vadd.f32 0.0, %v799
        %v801 = vpop.f32.mrb[0].mxu0
        %v802 = vpop.f32.mrb[0].mxu0
        %v803 = vadd.f32 0.0, %v802
        %v804 = vpop.f32.mrb[0].mxu0
        %805 = vmatprep.mubr.bf16.mxu0 %v744
        %806 = vmatmul.mubr.bf16.gmra.mrb[0].mxu0 %v728
        %v807 = vpop.f32.mrb[0].mxu0
        %v808 = vadd.f32 0.0, %v807
        %v809 = vpop.f32.mrb[0].mxu0
        %v810 = vpop.f32.mrb[0].mxu0
        %v811 = vadd.f32 0.0, %v810
        %v812 = vpop.f32.mrb[0].mxu0
        %813 = vmatprep.mubr.bf16.mxu0 %v745
        %814 = vmatmul.mubr.bf16.gmra.mrb[0].mxu0 %v729
        %v815 = vpop.f32.mrb[0].mxu0
        %v816 = vadd.f32 0.0, %v815
        %v817 = vpop.f32.mrb[0].mxu0
        %v818 = vpop.f32.mrb[0].mxu0
        %v819 = vadd.f32 0.0, %v818
        %v820 = vpop.f32.mrb[0].mxu0
        %821 = vmatprep.mubr.bf16.mxu0 %v746
        %822 = vmatmul.mubr.bf16.gmra.mrb[0].mxu0 %v730
        %v823 = vpop.f32.mrb[0].mxu0
        %v824 = vadd.f32 0.0, %v823
        %v825 = vpop.f32.mrb[0].mxu0
        %v826 = vpop.f32.mrb[0].mxu0
        %v827 = vadd.f32 0.0, %v826
        %v828 = vpop.f32.mrb[0].mxu0
        %829 = vmatprep.mubr.bf16.mxu0 %v747
        %830 = vmatmul.mubr.bf16.gmra.mrb[0].mxu0 %v731
        %v831 = vpop.f32.mrb[0].mxu0
        %v832 = vadd.f32 0.0, %v831
        %v833 = vpop.f32.mrb[0].mxu0
        %v834 = vpop.f32.mrb[0].mxu0
        %v835 = vadd.f32 0.0, %v834
        %v836 = vpop.f32.mrb[0].mxu0
        %837 = vmatprep.mubr.bf16.mxu0 %v748
        %838 = vmatmul.mubr.bf16.gmra.mrb[0].mxu0 %v732
        %v839 = vpop.f32.mrb[0].mxu0
        %v840 = vadd.f32 0.0, %v839
        %v841 = vpop.f32.mrb[0].mxu0
        %v842 = vpop.f32.mrb[0].mxu0
        %v843 = vadd.f32 0.0, %v842
        %v844 = vpop.f32.mrb[0].mxu0
        %845 = vdwg.mxu0
        %854 = vrot.lane.b32.xlu0 %v816, 64
        %v855 = vpop.permute.xlu0 %854
        %856 = vrot.lane.b32.xlu0 %v819, 64
        %v857 = vpop.permute.xlu0 %856
        %858 = vrot.lane.b32.xlu0 %v824, 64
        %v859 = vpop.permute.xlu0 %858
        %860 = vrot.lane.b32.xlu0 %v827, 64
        %v861 = vpop.permute.xlu0 %860
        %862 = vrot.lane.b32.xlu0 %v832, 64
        %v863 = vpop.permute.xlu0 %862
        %864 = vrot.lane.b32.xlu0 %v835, 64
        %v865 = vpop.permute.xlu0 %864
        %866 = vrot.lane.b32.xlu0 %v840, 64
        %v867 = vpop.permute.xlu0 %866
        %868 = vrot.lane.b32.xlu0 %v843, 64
        %v869 = vpop.permute.xlu0 %868
        %v878 = vsub.f32 %v784, %v855
        %v879 = vsub.f32 %v787, %v857
        %v880 = vsub.f32 %v792, %v859
        %v881 = vsub.f32 %v795, %v861
        %v882 = vsub.f32 %v800, %v863
        %v883 = vsub.f32 %v803, %v865
        %v884 = vsub.f32 %v808, %v867
        %v885 = vsub.f32 %v811, %v869
        %v886 = vld [vmem:[#allocation4] sm:$0x1]
        %v887 = vand.u32 2147483647, %v878
        %v888 = vand.u32 2147483647, %v879
        %v889 = vand.u32 2147483647, %v880
        %v890 = vand.u32 2147483647, %v881
        %v891 = vand.u32 2147483647, %v882
        %v892 = vand.u32 2147483647, %v883
        %v893 = vand.u32 2147483647, %v884
        %v894 = vand.u32 2147483647, %v885
        %v895 = vsel %vm384, %v887, 0.0
        %v896 = vsel %vm384, %v888, 0.0
        %v897 = vadd.f32 %v895, %v896
        %v898 = vsel %vm384, %v889, 0.0
        %v899 = vadd.f32 %v897, %v898
        %v900 = vsel %vm384, %v890, 0.0
        %v901 = vadd.f32 %v899, %v900
        %v902 = vsel %vm384, %v891, 0.0
        %v903 = vadd.f32 %v901, %v902
        %v904 = vsel %vm384, %v892, 0.0
        %v905 = vadd.f32 %v903, %v904
        %v906 = vsel %vm384, %v893, 0.0
        %v907 = vadd.f32 %v905, %v906
        %v908 = vsel %vm384, %v894, 0.0
        %v909 = vadd.f32 %v907, %v908
        %910 = vadd.xlane.f32.xlu0 %v909
        %v911 = vpop.xlane.xlu0 %910
        %v912 = vrot.slane %v911, 4
        %v913 = vadd.f32 %v911, %v912
        %v914 = vrot.slane %v913, 2
        %v915 = vadd.f32 %v913, %v914
        %v916 = vrot.slane %v915, 1
        %v917 = vadd.f32 %v915, %v916
        %s918 = vtos %v917
        %s919 = smul.f32 %s918, 6.1035156e-05
        %v920 = vstv %s919
        %v921 = vadd.f32 %v886, %v920
        %922 = vst.msk [vmem:[#allocation4] sm:$0x1] %vm459, %v921
        // Predicated region
        $region33: #{perceptual_loss.7} parent=27 // pred_check
          %p923 = pneg %p84
        $region34: #{perceptual_loss.7} parent=27 // pred_check_branch
          %925 = sbr.rel (%p923) target = $region36
        $region35: #{perceptual_loss.7} parent=27 // pred_region
          %s927 = ssub.s32 16, 16
          %928 = vsyncadd [#allocation3], %s927
          %s930 = sshll.u32 [#allocation2], 4
          %s931 = int_to_ptr.vmem [resolvable:$true] %s930
          %933 = dma.vmem_to_hbm [thread:$0]  %s931, 16, %s2, [#allocation3]
        $region36: #{perceptual_loss.7} parent=27 // pred_fallthru
          _
        // Predicated region
        $region37: #{perceptual_loss.7} parent=27 // pred_check
          %p934 = pneg %p105
        $region38: #{perceptual_loss.7} parent=27 // pred_check_branch
          %936 = sbr.rel (%p934) target = $region40
        $region39: #{perceptual_loss.7} parent=27 // pred_region
          %s938 = ssub.s32 16, 16
          %939 = vsyncadd [#allocation5], %s938
          %s941 = sshll.u32 [#allocation4], 4
          %s942 = int_to_ptr.vmem [resolvable:$true] %s941
          %944 = dma.vmem_to_hbm [thread:$0]  %s942, 16, %s3, [#allocation5]
        $region40: #{perceptual_loss.7} parent=27 // pred_fallthru
          _
        // Predicated region
        $region41: #{perceptual_loss.7} parent=27 // pred_check
          %p945 = pneg %p84
        $region42: #{perceptual_loss.7} parent=27 // pred_check_branch
          %947 = sbr.rel (%p945) target = $region44
        $region43: #{perceptual_loss.7} parent=27 // pred_region
          %948 = dma.done [#allocation3], 16
        $region44: #{perceptual_loss.7} parent=27 // pred_fallthru
          _
        // Predicated region
        $region45: #{perceptual_loss.7} parent=27 // pred_check
          %p949 = pneg %p105
        $region46: #{perceptual_loss.7} parent=27 // pred_check_branch
          %951 = sbr.rel (%p949) target = $region48
        $region47: #{perceptual_loss.7} parent=27 // pred_region
          %952 = dma.done [#allocation5], 16
        $region48: #{perceptual_loss.7} parent=27 // pred_fallthru
          _
      $region28: #{perceptual_loss.7} parent=5 // pred_fallthru
        _
      %p953 = scmp.le.s32.totalorder 2, %s12
      // Predicated region
      $region49: #{perceptual_loss.7} parent=5 // pred_check
        %p954 = pneg %p953
      $region50: #{perceptual_loss.7} parent=5 // pred_check_branch
        %956 = sbr.rel (%p954) target = $region52
      $region51: #{perceptual_loss.7} parent=5 // pred_region
        %s957 = ssub.s32 %s12, 2
      $region52: #{perceptual_loss.7} parent=5 // pred_fallthru
        _
    $region6: #{perceptual_loss.7} parent=1 // loop_footer
      %s16 = sadd.s32 1, %s12
    $region7: #{perceptual_loss.7} parent=1 // loop_footer_branch
      %11 = sbr.rel target = $region3
    $region8: #{perceptual_loss.7} parent=1 // loop_exit
      _
    %958 = vsyncpa [#allocation3], 1
    %s959 = scalar_lea.sflag [#allocation3], 1
    %960 = vsyncpa %s959, 1
    %961 = vsyncpa [#allocation5], 1

// kernel: perceptual_loss.4
$region0: #{perceptual_loss.4}
  #allocation0 [shape = 'u32[]', space=smem, size = 0x4, offset = 0x4, fixed_abs, tag = 'smem constant byte address 0x4 - core index']
  #allocation1 [shape = 'u32[144,128]{1,0:T(1,128)}', space=vmem, size = 0x12000, scoped, tag = 'internal scratch']
  #allocation2 [shape = 'bf16[18,18,3]{2,1,0:T(8,128)(2,1)}', space=vmem, size = 0x1b000, scoped, tag = 'scratch operand']
  %s0 = inlined_call_operand.vmem [shape: f32[4,16,16,3], index: 0, kind: input, shape index: {}]
  %s1 = inlined_call_operand.vmem [shape: bf16[27,64], index: 1, kind: input, shape index: {}]
  %s2 = inlined_call_operand.vmem [shape: f32[1,64], index: 2, kind: input, shape index: {}]
  %s3 = inlined_call_operand.vmem [shape: f32[1,3], index: 3, kind: input, shape index: {}]
  %s4 = inlined_call_operand.vmem [shape: bf16[4,16,16,64], index: 4, kind: output, shape index: {}]
  %s5 = sld [smem:[#allocation0]]
  $region49: #{perceptual_loss.4} parent=0
    _
  %s7 = ssub.s32 1, %s5
  %s8 = scalar_select 0, %s7, %s5
  loop: start=0, step=1, limit=6
  $region2: #{perceptual_loss.4} parent=0 // loop_pre_header
    _
  $region3: #{perceptual_loss.4} parent=0 // loop_header
    %s10 = sphi 0, %s14
    %p11 = scmp.ge.s32.totalorder %s10, 6
    %s20 = sphi 0, %s22
    %s23 = sphi 0, %s20
    %s24 = sphi 0, %s23
    %s40 = sphi 0, %s24
    %s44 = sphi 0, %s44
    %s46 = sphi 0, %s44
    %s47 = sphi 0, %s46
    %s61 = sphi 0, %s47
    %s65 = sphi 0, %s65
    %s67 = sphi 0, %s65
    %s68 = sphi 0, %s67
    %s82 = sphi 0, %s68
    %s86 = sphi 0, %s86
    %s88 = sphi 0, %s86
    %s89 = sphi 0, %s88
    %s103 = sphi 0, %s89
    %s109 = sphi 0, %s111
    %s112 = sphi 0, %s109
    %s113 = sphi 0, %s112
    %s129 = sphi 0, %s113
  $region4: #{perceptual_loss.4} parent=0 // loop_header_branch
    %13 = sbr.rel (%p11) target = $region8
  $region5: #{perceptual_loss.4} parent=0 // loop_body
    %s15 = ssub.s32 %s10, 1
    %s16 = ssub.s32 %s10, 2
    %s17 = sadd.s32 %s10, 1
    %s18 = ssub.s32 %s10, %s17
    %p19 = scmp.eq.s32.totalorder %s18, 0
    %s21 = sadd.s32 %s20, 1
    %s22 = scalar_select %p19, %s20, %s21
    %p25 = pneg %p19
    %p26 = scmp.eq.s32.totalorder %s10, 3
    %p27 = por %p25, %p26
    %p28 = scmp.ne.s32.totalorder %s20, %s23
    %p29 = scmp.eq.s32.totalorder %s10, 0
    %p30 = por %p28, %p29
    %p31 = scmp.ne.s32.totalorder %s20, %s23
    %p32 = scmp.eq.s32.totalorder %s15, 3
    %p33 = por %p31, %p32
    %p34 = scmp.ne.s32.totalorder %s23, %s24
    %p35 = scmp.eq.s32.totalorder %s15, 0
    %p36 = por %p34, %p35
    %p37 = scmp.ne.s32.totalorder %s23, %s24
    %p38 = scmp.eq.s32.totalorder %s16, 3
    %p39 = por %p37, %p38
    %p41 = scmp.ne.s32.totalorder %s24, %s40
    %p42 = scmp.eq.s32.totalorder %s16, 0
    %p43 = por %p41, %p42
    %s45 = sadd.s32 %s44, 1
    %p48 = scmp.eq.s32.totalorder %s10, 3
    %p49 = scmp.ne.s32.totalorder %s44, %s46
    %p50 = scmp.eq.s32.totalorder %s10, 0
    %p51 = por %p49, %p50
    %p52 = scmp.ne.s32.totalorder %s44, %s46
    %p53 = scmp.eq.s32.totalorder %s15, 3
    %p54 = por %p52, %p53
    %p55 = scmp.ne.s32.totalorder %s46, %s47
    %p56 = scmp.eq.s32.totalorder %s15, 0
    %p57 = por %p55, %p56
    %p58 = scmp.ne.s32.totalorder %s46, %s47
    %p59 = scmp.eq.s32.totalorder %s16, 3
    %p60 = por %p58, %p59
    %p62 = scmp.ne.s32.totalorder %s47, %s61
    %p63 = scmp.eq.s32.totalorder %s16, 0
    %p64 = por %p62, %p63
    %s66 = sadd.s32 %s65, 1
    %p69 = scmp.eq.s32.totalorder %s10, 3
    %p70 = scmp.ne.s32.totalorder %s65, %s67
    %p71 = scmp.eq.s32.totalorder %s10, 0
    %p72 = por %p70, %p71
    %p73 = scmp.ne.s32.totalorder %s65, %s67
    %p74 = scmp.eq.s32.totalorder %s15, 3
    %p75 = por %p73, %p74
    %p76 = scmp.ne.s32.totalorder %s67, %s68
    %p77 = scmp.eq.s32.totalorder %s15, 0
    %p78 = por %p76, %p77
    %p79 = scmp.ne.s32.totalorder %s67, %s68
    %p80 = scmp.eq.s32.totalorder %s16, 3
    %p81 = por %p79, %p80
    %p83 = scmp.ne.s32.totalorder %s68, %s82
    %p84 = scmp.eq.s32.totalorder %s16, 0
    %p85 = por %p83, %p84
    %s87 = sadd.s32 %s86, 1
    %p90 = scmp.eq.s32.totalorder %s10, 3
    %p91 = scmp.ne.s32.totalorder %s86, %s88
    %p92 = scmp.eq.s32.totalorder %s10, 0
    %p93 = por %p91, %p92
    %p94 = scmp.ne.s32.totalorder %s86, %s88
    %p95 = scmp.eq.s32.totalorder %s15, 3
    %p96 = por %p94, %p95
    %p97 = scmp.ne.s32.totalorder %s88, %s89
    %p98 = scmp.eq.s32.totalorder %s15, 0
    %p99 = por %p97, %p98
    %p100 = scmp.ne.s32.totalorder %s88, %s89
    %p101 = scmp.eq.s32.totalorder %s16, 3
    %p102 = por %p100, %p101
    %p104 = scmp.ne.s32.totalorder %s89, %s103
    %p105 = scmp.eq.s32.totalorder %s16, 0
    %p106 = por %p104, %p105
    %s107 = ssub.s32 %s10, %s17
    %p108 = scmp.eq.s32.totalorder %s107, 0
    %s110 = sadd.s32 %s109, 1
    %s111 = scalar_select %p108, %s109, %s110
    %p114 = pneg %p108
    %p115 = scmp.eq.s32.totalorder %s10, 3
    %p116 = por %p114, %p115
    %p117 = scmp.ne.s32.totalorder %s109, %s112
    %p118 = scmp.eq.s32.totalorder %s10, 0
    %p119 = por %p117, %p118
    %p120 = scmp.ne.s32.totalorder %s109, %s112
    %p121 = scmp.eq.s32.totalorder %s15, 3
    %p122 = por %p120, %p121
    %p123 = scmp.ne.s32.totalorder %s112, %s113
    %p124 = scmp.eq.s32.totalorder %s15, 0
    %p125 = por %p123, %p124
    %p126 = scmp.ne.s32.totalorder %s112, %s113
    %p127 = scmp.eq.s32.totalorder %s16, 3
    %p128 = por %p126, %p127
    %p130 = scmp.ne.s32.totalorder %s113, %s129
    %p131 = scmp.eq.s32.totalorder %s16, 0
    %p132 = por %p130, %p131
    %p133 = scmp.le.s32.totalorder 1, %s10
    %p134 = scmp.lt.s32.totalorder %s10, 5
    %p135 = pnand %p133, %p134
    %p136 = pneg %p135
    // Predicated region
    $region9: #{perceptual_loss.4} parent=5 // pred_check
      _
    $region10: #{perceptual_loss.4} parent=5 // pred_check_branch
      %138 = sbr.rel (%p135) target = $region12
    $region11: #{perceptual_loss.4} parent=5 // pred_region
      %s139 = ssub.s32 %s10, 1
      // Predicated region
      $region13: #{perceptual_loss.4} parent=11 // pred_check
        %p140 = pneg %p57
      $region14: #{perceptual_loss.4} parent=11 // pred_check_branch
        %142 = sbr.rel (%p140) target = $region16
      $region15: #{perceptual_loss.4} parent=11 // pred_region
        _
      $region16: #{perceptual_loss.4} parent=11 // pred_fallthru
        _
      // Predicated region
      $region17: #{perceptual_loss.4} parent=11 // pred_check
        %p143 = pneg %p78
      $region18: #{perceptual_loss.4} parent=11 // pred_check_branch
        %145 = sbr.rel (%p143) target = $region20
      $region19: #{perceptual_loss.4} parent=11 // pred_region
        _
      $region20: #{perceptual_loss.4} parent=11 // pred_fallthru
        _
      // Predicated region
      $region21: #{perceptual_loss.4} parent=11 // pred_check
        %p146 = pneg %p99
      $region22: #{perceptual_loss.4} parent=11 // pred_check_branch
        %148 = sbr.rel (%p146) target = $region24
      $region23: #{perceptual_loss.4} parent=11 // pred_region
        _
      $region24: #{perceptual_loss.4} parent=11 // pred_fallthru
        _
    $region12: #{perceptual_loss.4} parent=5 // pred_fallthru
      _
    %p149 = scmp.lt.s32.totalorder %s10, 4
    // Predicated region
    $region25: #{perceptual_loss.4} parent=5 // pred_check
      %p150 = pneg %p149
    $region26: #{perceptual_loss.4} parent=5 // pred_check_branch
      %152 = sbr.rel (%p150) target = $region28
    $region27: #{perceptual_loss.4} parent=5 // pred_region
      // Predicated region
      $region29: #{perceptual_loss.4} parent=27 // pred_check
        %p153 = pneg %p30
      $region30: #{perceptual_loss.4} parent=27 // pred_check_branch
        %155 = sbr.rel (%p153) target = $region32
      $region31: #{perceptual_loss.4} parent=27 // pred_region
        %p156 = scmp.lt.s32.totalorder %s10, 3
        %s157 = scalar_select %p156, %s10, 3
        %s158 = smul.addr %s157, 32
        %s159 = smul.addr %s158, 8
        %s160 = scalar_lea.vmem %s0, %s159
      $region32: #{perceptual_loss.4} parent=27 // pred_fallthru
        _
    $region28: #{perceptual_loss.4} parent=5 // pred_fallthru
      _
    %p161 = scmp.le.s32.totalorder 1, %s10
    %p162 = scmp.lt.s32.totalorder %s10, 5
    %p163 = pnand %p161, %p162
    %p164 = pneg %p163
    // Predicated region
    $region33: #{perceptual_loss.4} parent=5 // pred_check
      _
    $region34: #{perceptual_loss.4} parent=5 // pred_check_branch
      %166 = sbr.rel (%p163) target = $region36
    $region35: #{perceptual_loss.4} parent=5 // pred_region
      %s167 = ssub.s32 %s10, 1
      %p168 = scmp.lt.s32.totalorder %s15, 3
      %s169 = scalar_select %p168, %s15, 3
      %s170 = smul.addr %s169, 32
      %s171 = smul.addr %s170, 8
      %s172 = scalar_lea.vmem %s0, %s171
      %p173 = pneg %p36
      %p174 = pneg %p33
      %p175 = pneg %p57
      %p176 = pneg %p54
      %p177 = pneg %p78
      %p178 = pneg %p75
      %p179 = pneg %p99
      %p180 = pneg %p96
      %p181 = pneg %p125
      %p182 = pneg %p122
      %p183 = scmp.lt.s32.totalorder %s15, 3
      %s184 = scalar_select %p183, %s15, 3
      %s185 = smul.addr %s184, 32
      %s186 = smul.addr %s185, 4
      %s187 = scalar_lea.vmem %s4, %s186
      %p188 = scmp.lt.s32.totalorder %s15, 3
      %s189 = scalar_select %p188, %s15, 3
      %s190 = smul.addr %s189, 32
      %s191 = smul.addr %s190, 8
      %s192 = scalar_lea.vmem %s0, %s191
      %p193 = scmp.lt.s32.totalorder %s15, 3
      %s194 = scalar_select %p193, %s15, 3
      %s195 = smul.addr %s194, 32
      %s196 = smul.addr %s195, 4
      %s197 = scalar_lea.vmem %s4, %s196
      %v199 = vld [vmem:[%s3] sm:$0x1]
      %v200 = vpack.c.bf16 %v199, %v199
      %v202 = vpack.i.b16 %v200, %v200
      %v204 = vlaneseq
      %v205 = vshrl.u32 %v204, 7
      %v206 = vsub.s32 0, %v205
      %v207 = vrot.slane %v202, %v206
      %v209 = vunpack.c.l.b16 %v207
      %v210 = vpack.c.b16 %v209, %v209
      %vm212 = vcmask 19456
      %213 = vst.msk [vmem:[#allocation2] sm:$0xf] %vm212, %v210
      %214 = vst.msk [vmem:[#allocation2 + $0x4] sm:$0xf] %vm212, %v210
      %vm215 = vcmask 16384
      %216 = vst.msk [vmem:[#allocation2 + $0x8] sm:$0x1] %vm215, %v210
      %s217 = scalar_lea.vmem [#allocation2], 204
      %218 = vst.msk [vmem:[%s217] sm:$0xf] %vm212, %v210
      %219 = vst.msk [vmem:[%s217 + $0x4] sm:$0xf] %vm212, %v210
      %220 = vst.msk [vmem:[%s217 + $0x8] sm:$0x1] %vm215, %v210
      %s221 = scalar_lea.vmem [#allocation2], 12
      %vm222 = vcmask 16384
      %vm223 = vsmask.f32 256
      %vm224 = vmand %vm222, %vm223
      %v225 = vld [vmem:[%s221] sm:$0x1]
      %v226 = vsel %vm224, %v200, %v225
      %227 = vst [vmem:[%s221] sm:$0x1] %v226
      %v228 = vld [vmem:[%s221 + $0xc] sm:$0x1]
      %v229 = vsel %vm224, %v200, %v228
      %230 = vst [vmem:[%s221 + $0xc] sm:$0x1] %v229
      %v231 = vld [vmem:[%s221 + $0x18] sm:$0x1]
      %v232 = vsel %vm224, %v200, %v231
      %233 = vst [vmem:[%s221 + $0x18] sm:$0x1] %v232
      %v234 = vld [vmem:[%s221 + $0x24] sm:$0x1]
      %v235 = vsel %vm224, %v200, %v234
      %236 = vst [vmem:[%s221 + $0x24] sm:$0x1] %v235
      %v237 = vld [vmem:[%s221 + $0x30] sm:$0x1]
      %v238 = vsel %vm224, %v200, %v237
      %239 = vst [vmem:[%s221 + $0x30] sm:$0x1] %v238
      %v240 = vld [vmem:[%s221 + $0x3c] sm:$0x1]
      %v241 = vsel %vm224, %v200, %v240
      %242 = vst [vmem:[%s221 + $0x3c] sm:$0x1] %v241
      %v243 = vld [vmem:[%s221 + $0x48] sm:$0x1]
      %v244 = vsel %vm224, %v200, %v243
      %245 = vst [vmem:[%s221 + $0x48] sm:$0x1] %v244
      %v246 = vld [vmem:[%s221 + $0x54] sm:$0x1]
      %v247 = vsel %vm224, %v200, %v246
      %248 = vst [vmem:[%s221 + $0x54] sm:$0x1] %v247
      %v249 = vld [vmem:[%s221 + $0x60] sm:$0x1]
      %v250 = vsel %vm224, %v200, %v249
      %251 = vst [vmem:[%s221 + $0x60] sm:$0x1] %v250
      %v252 = vld [vmem:[%s221 + $0x6c] sm:$0x1]
      %v253 = vsel %vm224, %v200, %v252
      %254 = vst [vmem:[%s221 + $0x6c] sm:$0x1] %v253
      %v255 = vld [vmem:[%s221 + $0x78] sm:$0x1]
      %v256 = vsel %vm224, %v200, %v255
      %257 = vst [vmem:[%s221 + $0x78] sm:$0x1] %v256
      %v258 = vld [vmem:[%s221 + $0x84] sm:$0x1]
      %v259 = vsel %vm224, %v200, %v258
      %260 = vst [vmem:[%s221 + $0x84] sm:$0x1] %v259
      %v261 = vld [vmem:[%s221 + $0x90] sm:$0x1]
      %v262 = vsel %vm224, %v200, %v261
      %263 = vst [vmem:[%s221 + $0x90] sm:$0x1] %v262
      %v264 = vld [vmem:[%s221 + $0x9c] sm:$0x1]
      %v265 = vsel %vm224, %v200, %v264
      %266 = vst [vmem:[%s221 + $0x9c] sm:$0x1] %v265
      %v267 = vld [vmem:[%s221 + $0xa8] sm:$0x1]
      %v268 = vsel %vm224, %v200, %v267
      %269 = vst [vmem:[%s221 + $0xa8] sm:$0x1] %v268
      %v270 = vld [vmem:[%s221 + $0xb4] sm:$0x1]
      %v271 = vsel %vm224, %v200, %v270
      %272 = vst [vmem:[%s221 + $0xb4] sm:$0x1] %v271
      %v274 = vunpack.c.l.b16 %v200
      %v275 = vpack.c.b16 %v274, %v274
      %v277 = vshll.u32 %v275, 16
      %vm280 = vsmask.f32 7938
      %vm281 = vmand %vm222, %vm280
      %v282 = vld [vmem:[%s221 + $0x8] sm:$0x1]
      %v283 = vsel %vm281, %v277, %v282
      %284 = vst [vmem:[%s221 + $0x8] sm:$0x1] %v283
      %v285 = vld [vmem:[%s221 + $0x14] sm:$0x1]
      %v286 = vsel %vm281, %v277, %v285
      %287 = vst [vmem:[%s221 + $0x14] sm:$0x1] %v286
      %v288 = vld [vmem:[%s221 + $0x20] sm:$0x1]
      %v289 = vsel %vm281, %v277, %v288
      %290 = vst [vmem:[%s221 + $0x20] sm:$0x1] %v289
      %v291 = vld [vmem:[%s221 + $0x2c] sm:$0x1]
      %v292 = vsel %vm281, %v277, %v291
      %293 = vst [vmem:[%s221 + $0x2c] sm:$0x1] %v292
      %v294 = vld [vmem:[%s221 + $0x38] sm:$0x1]
      %v295 = vsel %vm281, %v277, %v294
      %296 = vst [vmem:[%s221 + $0x38] sm:$0x1] %v295
      %v297 = vld [vmem:[%s221 + $0x44] sm:$0x1]
      %v298 = vsel %vm281, %v277, %v297
      %299 = vst [vmem:[%s221 + $0x44] sm:$0x1] %v298
      %v300 = vld [vmem:[%s221 + $0x50] sm:$0x1]
      %v301 = vsel %vm281, %v277, %v300
      %302 = vst [vmem:[%s221 + $0x50] sm:$0x1] %v301
      %v303 = vld [vmem:[%s221 + $0x5c] sm:$0x1]
      %v304 = vsel %vm281, %v277, %v303
      %305 = vst [vmem:[%s221 + $0x5c] sm:$0x1] %v304
      %v306 = vld [vmem:[%s221 + $0x68] sm:$0x1]
      %v307 = vsel %vm281, %v277, %v306
      %308 = vst [vmem:[%s221 + $0x68] sm:$0x1] %v307
      %v309 = vld [vmem:[%s221 + $0x74] sm:$0x1]
      %v310 = vsel %vm281, %v277, %v309
      %311 = vst [vmem:[%s221 + $0x74] sm:$0x1] %v310
      %v312 = vld [vmem:[%s221 + $0x80] sm:$0x1]
      %v313 = vsel %vm281, %v277, %v312
      %314 = vst [vmem:[%s221 + $0x80] sm:$0x1] %v313
      %v315 = vld [vmem:[%s221 + $0x8c] sm:$0x1]
      %v316 = vsel %vm281, %v277, %v315
      %317 = vst [vmem:[%s221 + $0x8c] sm:$0x1] %v316
      %v318 = vld [vmem:[%s221 + $0x98] sm:$0x1]
      %v319 = vsel %vm281, %v277, %v318
      %320 = vst [vmem:[%s221 + $0x98] sm:$0x1] %v319
      %v321 = vld [vmem:[%s221 + $0xa4] sm:$0x1]
      %v322 = vsel %vm281, %v277, %v321
      %323 = vst [vmem:[%s221 + $0xa4] sm:$0x1] %v322
      %v324 = vld [vmem:[%s221 + $0xb0] sm:$0x1]
      %v325 = vsel %vm281, %v277, %v324
      %326 = vst [vmem:[%s221 + $0xb0] sm:$0x1] %v325
      %v327 = vld [vmem:[%s221 + $0xbc] sm:$0x1]
      %v328 = vsel %vm281, %v277, %v327
      %329 = vst [vmem:[%s221 + $0xbc] sm:$0x1] %v328
      %v330 = vld [vmem:[%s192] sm:$0xff]
      %v331 = vld [vmem:[%s192 + $0x8] sm:$0xff]
      %v332 = vld [vmem:[%s192 + $0x10] sm:$0xff]
      %v333 = vld [vmem:[%s192 + $0x18] sm:$0xff]
      %v334 = vld [vmem:[%s192 + $0x20] sm:$0xff]
      %v335 = vld [vmem:[%s192 + $0x28] sm:$0xff]
      %v336 = vld [vmem:[%s192 + $0x30] sm:$0xff]
      %v337 = vld [vmem:[%s192 + $0x38] sm:$0xff]
      %v338 = vld [vmem:[%s192 + $0x40] sm:$0xff]
      %v339 = vld [vmem:[%s192 + $0x48] sm:$0xff]
      %v340 = vld [vmem:[%s192 + $0x50] sm:$0xff]
      %v341 = vld [vmem:[%s192 + $0x58] sm:$0xff]
      %v342 = vld [vmem:[%s192 + $0x60] sm:$0xff]
      %v343 = vld [vmem:[%s192 + $0x68] sm:$0xff]
      %v344 = vld [vmem:[%s192 + $0x70] sm:$0xff]
      %v345 = vld [vmem:[%s192 + $0x78] sm:$0xff]
      %v346 = vld [vmem:[%s192 + $0x80] sm:$0xff]
      %v347 = vld [vmem:[%s192 + $0x88] sm:$0xff]
      %v348 = vld [vmem:[%s192 + $0x90] sm:$0xff]
      %v349 = vld [vmem:[%s192 + $0x98] sm:$0xff]
      %v350 = vld [vmem:[%s192 + $0xa0] sm:$0xff]
      %v351 = vld [vmem:[%s192 + $0xa8] sm:$0xff]
      %v352 = vld [vmem:[%s192 + $0xb0] sm:$0xff]
      %v353 = vld [vmem:[%s192 + $0xb8] sm:$0xff]
      %v354 = vld [vmem:[%s192 + $0xc0] sm:$0xff]
      %v355 = vld [vmem:[%s192 + $0xc8] sm:$0xff]
      %v356 = vld [vmem:[%s192 + $0xd0] sm:$0xff]
      %v357 = vld [vmem:[%s192 + $0xd8] sm:$0xff]
      %v358 = vld [vmem:[%s192 + $0xe0] sm:$0xff]
      %v359 = vld [vmem:[%s192 + $0xe8] sm:$0xff]
      %v360 = vld [vmem:[%s192 + $0xf0] sm:$0xff]
      %v361 = vld [vmem:[%s192 + $0xf8] sm:$0xff]
      %v362 = vpack.c.bf16 %v331, %v330
      %v363 = vpack.c.bf16 %v333, %v332
      %v364 = vpack.c.bf16 %v335, %v334
      %v365 = vpack.c.bf16 %v337, %v336
      %v366 = vpack.c.bf16 %v339, %v338
      %v367 = vpack.c.bf16 %v341, %v340
      %v368 = vpack.c.bf16 %v343, %v342
      %v369 = vpack.c.bf16 %v345, %v344
      %v370 = vpack.c.bf16 %v347, %v346
      %v371 = vpack.c.bf16 %v349, %v348
      %v372 = vpack.c.bf16 %v351, %v350
      %v373 = vpack.c.bf16 %v353, %v352
      %v374 = vpack.c.bf16 %v355, %v354
      %v375 = vpack.c.bf16 %v357, %v356
      %v376 = vpack.c.bf16 %v359, %v358
      %v377 = vpack.c.bf16 %v361, %v360
      %v394 = vunpack.c.l.b16 %v362
      %v395 = vunpack.c.h.b16 %v362
      %v396 = vunpack.c.l.b16 %v363
      %v397 = vunpack.c.h.b16 %v363
      %v398 = vunpack.c.l.b16 %v364
      %v399 = vunpack.c.h.b16 %v364
      %v400 = vunpack.c.l.b16 %v365
      %v401 = vunpack.c.h.b16 %v365
      %v402 = vunpack.c.l.b16 %v366
      %v403 = vunpack.c.h.b16 %v366
      %v404 = vunpack.c.l.b16 %v367
      %v405 = vunpack.c.h.b16 %v367
      %v406 = vunpack.c.l.b16 %v368
      %v407 = vunpack.c.h.b16 %v368
      %v408 = vunpack.c.l.b16 %v369
      %v409 = vunpack.c.h.b16 %v369
      %v410 = vunpack.c.l.b16 %v370
      %v411 = vunpack.c.h.b16 %v370
      %v412 = vunpack.c.l.b16 %v371
      %v413 = vunpack.c.h.b16 %v371
      %v414 = vunpack.c.l.b16 %v372
      %v415 = vunpack.c.h.b16 %v372
      %v416 = vunpack.c.l.b16 %v373
      %v417 = vunpack.c.h.b16 %v373
      %v418 = vunpack.c.l.b16 %v374
      %v419 = vunpack.c.h.b16 %v374
      %v420 = vunpack.c.l.b16 %v375
      %v421 = vunpack.c.h.b16 %v375
      %v422 = vunpack.c.l.b16 %v376
      %v423 = vunpack.c.h.b16 %v376
      %v424 = vunpack.c.l.b16 %v377
      %v425 = vunpack.c.h.b16 %v377
      %v426 = vpack.c.b16 %v394, %v394
      %v427 = vpack.c.b16 %v395, %v395
      %v428 = vpack.c.b16 %v396, %v396
      %v429 = vpack.c.b16 %v397, %v397
      %v430 = vpack.c.b16 %v398, %v398
      %v431 = vpack.c.b16 %v399, %v399
      %v432 = vpack.c.b16 %v400, %v400
      %v433 = vpack.c.b16 %v401, %v401
      %v434 = vpack.c.b16 %v402, %v402
      %v435 = vpack.c.b16 %v403, %v403
      %v436 = vpack.c.b16 %v404, %v404
      %v437 = vpack.c.b16 %v405, %v405
      %v438 = vpack.c.b16 %v406, %v406
      %v439 = vpack.c.b16 %v407, %v407
      %v440 = vpack.c.b16 %v408, %v408
      %v441 = vpack.c.b16 %v409, %v409
      %v442 = vpack.c.b16 %v410, %v410
      %v443 = vpack.c.b16 %v411, %v411
      %v444 = vpack.c.b16 %v412, %v412
      %v445 = vpack.c.b16 %v413, %v413
      %v446 = vpack.c.b16 %v414, %v414
      %v447 = vpack.c.b16 %v415, %v415
      %v448 = vpack.c.b16 %v416, %v416
      %v449 = vpack.c.b16 %v417, %v417
      %v450 = vpack.c.b16 %v418, %v418
      %v451 = vpack.c.b16 %v419, %v419
      %v452 = vpack.c.b16 %v420, %v420
      %v453 = vpack.c.b16 %v421, %v421
      %v454 = vpack.c.b16 %v422, %v422
      %v455 = vpack.c.b16 %v423, %v423
      %v456 = vpack.c.b16 %v424, %v424
      %v457 = vpack.c.b16 %v425, %v425
      %vm458 = vsmask.f32 4368
      %vm459 = vmor %vm223, %vm458
      %v461 = vshrl.u32 %v426, 16
      %v463 = vrot.slane %v461, 7
      %v464 = vshll.u32 %v426, 16
      %v466 = vor.u32 %v463, %v464
      %v467 = vrot.slane %v463, 4
      %v469 = vshrl.u32 %v427, 16
      %v471 = vrot.slane %v469, 7
      %v472 = vshll.u32 %v427, 16
      %v474 = vor.u32 %v471, %v472
      %v475 = vsel %vm459, %v467, %v474
      %v476 = vrot.slane %v471, 4
      %v478 = vshrl.u32 %v428, 16
      %v480 = vrot.slane %v478, 7
      %v481 = vshll.u32 %v428, 16
      %v483 = vor.u32 %v480, %v481
      %v484 = vrot.slane %v480, 4
      %v486 = vshrl.u32 %v429, 16
      %v488 = vrot.slane %v486, 7
      %v489 = vshll.u32 %v429, 16
      %v491 = vor.u32 %v488, %v489
      %v492 = vsel %vm459, %v484, %v491
      %v493 = vrot.slane %v488, 4
      %v495 = vshrl.u32 %v430, 16
      %v497 = vrot.slane %v495, 7
      %v498 = vshll.u32 %v430, 16
      %v500 = vor.u32 %v497, %v498
      %v501 = vrot.slane %v497, 4
      %v503 = vshrl.u32 %v431, 16
      %v505 = vrot.slane %v503, 7
      %v506 = vshll.u32 %v431, 16
      %v508 = vor.u32 %v505, %v506
      %v509 = vsel %vm459, %v501, %v508
      %v510 = vrot.slane %v505, 4
      %v512 = vshrl.u32 %v432, 16
      %v514 = vrot.slane %v512, 7
      %v515 = vshll.u32 %v432, 16
      %v517 = vor.u32 %v514, %v515
      %v518 = vrot.slane %v514, 4
      %v520 = vshrl.u32 %v433, 16
      %v522 = vrot.slane %v520, 7
      %v523 = vshll.u32 %v433, 16
      %v525 = vor.u32 %v522, %v523
      %v526 = vsel %vm459, %v518, %v525
      %v527 = vrot.slane %v522, 4
      %v529 = vshrl.u32 %v434, 16
      %v531 = vrot.slane %v529, 7
      %v532 = vshll.u32 %v434, 16
      %v534 = vor.u32 %v531, %v532
      %v535 = vrot.slane %v531, 4
      %v537 = vshrl.u32 %v435, 16
      %v539 = vrot.slane %v537, 7
      %v540 = vshll.u32 %v435, 16
      %v542 = vor.u32 %v539, %v540
      %v543 = vsel %vm459, %v535, %v542
      %v544 = vrot.slane %v539, 4
      %v546 = vshrl.u32 %v436, 16
      %v548 = vrot.slane %v546, 7
      %v549 = vshll.u32 %v436, 16
      %v551 = vor.u32 %v548, %v549
      %v552 = vrot.slane %v548, 4
      %v554 = vshrl.u32 %v437, 16
      %v556 = vrot.slane %v554, 7
      %v557 = vshll.u32 %v437, 16
      %v559 = vor.u32 %v556, %v557
      %v560 = vsel %vm459, %v552, %v559
      %v561 = vrot.slane %v556, 4
      %v563 = vshrl.u32 %v438, 16
      %v565 = vrot.slane %v563, 7
      %v566 = vshll.u32 %v438, 16
      %v568 = vor.u32 %v565, %v566
      %v569 = vrot.slane %v565, 4
      %v571 = vshrl.u32 %v439, 16
      %v573 = vrot.slane %v571, 7
      %v574 = vshll.u32 %v439, 16
      %v576 = vor.u32 %v573, %v574
      %v577 = vsel %vm459, %v569, %v576
      %v578 = vrot.slane %v573, 4
      %v580 = vshrl.u32 %v440, 16
      %v582 = vrot.slane %v580, 7
      %v583 = vshll.u32 %v440, 16
      %v585 = vor.u32 %v582, %v583
      %v586 = vrot.slane %v582, 4
      %v588 = vshrl.u32 %v441, 16
      %v590 = vrot.slane %v588, 7
      %v591 = vshll.u32 %v441, 16
      %v593 = vor.u32 %v590, %v591
      %v594 = vsel %vm459, %v586, %v593
      %v595 = vrot.slane %v590, 4
      %v597 = vshrl.u32 %v442, 16
      %v599 = vrot.slane %v597, 7
      %v600 = vshll.u32 %v442, 16
      %v602 = vor.u32 %v599, %v600
      %v603 = vrot.slane %v599, 4
      %v605 = vshrl.u32 %v443, 16
      %v607 = vrot.slane %v605, 7
      %v608 = vshll.u32 %v443, 16
      %v610 = vor.u32 %v607, %v608
      %v611 = vsel %vm459, %v603, %v610
      %v612 = vrot.slane %v607, 4
      %v614 = vshrl.u32 %v444, 16
      %v616 = vrot.slane %v614, 7
      %v617 = vshll.u32 %v444, 16
      %v619 = vor.u32 %v616, %v617
      %v620 = vrot.slane %v616, 4
      %v622 = vshrl.u32 %v445, 16
      %v624 = vrot.slane %v622, 7
      %v625 = vshll.u32 %v445, 16
      %v627 = vor.u32 %v624, %v625
      %v628 = vsel %vm459, %v620, %v627
      %v629 = vrot.slane %v624, 4
      %v631 = vshrl.u32 %v446, 16
      %v633 = vrot.slane %v631, 7
      %v634 = vshll.u32 %v446, 16
      %v636 = vor.u32 %v633, %v634
      %v637 = vrot.slane %v633, 4
      %v639 = vshrl.u32 %v447, 16
      %v641 = vrot.slane %v639, 7
      %v642 = vshll.u32 %v447, 16
      %v644 = vor.u32 %v641, %v642
      %v645 = vsel %vm459, %v637, %v644
      %v646 = vrot.slane %v641, 4
      %v648 = vshrl.u32 %v448, 16
      %v650 = vrot.slane %v648, 7
      %v651 = vshll.u32 %v448, 16
      %v653 = vor.u32 %v650, %v651
      %v654 = vrot.slane %v650, 4
      %v656 = vshrl.u32 %v449, 16
      %v658 = vrot.slane %v656, 7
      %v659 = vshll.u32 %v449, 16
      %v661 = vor.u32 %v658, %v659
      %v662 = vsel %vm459, %v654, %v661
      %v663 = vrot.slane %v658, 4
      %v665 = vshrl.u32 %v450, 16
      %v667 = vrot.slane %v665, 7
      %v668 = vshll.u32 %v450, 16
      %v670 = vor.u32 %v667, %v668
      %v671 = vrot.slane %v667, 4
      %v673 = vshrl.u32 %v451, 16
      %v675 = vrot.slane %v673, 7
      %v676 = vshll.u32 %v451, 16
      %v678 = vor.u32 %v675, %v676
      %v679 = vsel %vm459, %v671, %v678
      %v680 = vrot.slane %v675, 4
      %v682 = vshrl.u32 %v452, 16
      %v684 = vrot.slane %v682, 7
      %v685 = vshll.u32 %v452, 16
      %v687 = vor.u32 %v684, %v685
      %v688 = vrot.slane %v684, 4
      %v690 = vshrl.u32 %v453, 16
      %v692 = vrot.slane %v690, 7
      %v693 = vshll.u32 %v453, 16
      %v695 = vor.u32 %v692, %v693
      %v696 = vsel %vm459, %v688, %v695
      %v697 = vrot.slane %v692, 4
      %v699 = vshrl.u32 %v454, 16
      %v701 = vrot.slane %v699, 7
      %v702 = vshll.u32 %v454, 16
      %v704 = vor.u32 %v701, %v702
      %v705 = vrot.slane %v701, 4
      %v707 = vshrl.u32 %v455, 16
      %v709 = vrot.slane %v707, 7
      %v710 = vshll.u32 %v455, 16
      %v712 = vor.u32 %v709, %v710
      %v713 = vsel %vm459, %v705, %v712
      %v714 = vrot.slane %v709, 4
      %v716 = vshrl.u32 %v456, 16
      %v718 = vrot.slane %v716, 7
      %v719 = vshll.u32 %v456, 16
      %v721 = vor.u32 %v718, %v719
      %v722 = vrot.slane %v718, 4
      %v724 = vshrl.u32 %v457, 16
      %v726 = vrot.slane %v724, 7
      %v727 = vshll.u32 %v457, 16
      %v729 = vor.u32 %v726, %v727
      %v730 = vsel %vm459, %v722, %v729
      %v731 = vrot.slane %v726, 4
      %vm780 = vcmask 19456
      %vm781 = vmand %vm780, %vm280
      %v782 = vld [vmem:[%s221] sm:$0xf]
      %v783 = vsel %vm781, %v466, %v782
      %784 = vst [vmem:[%s221] sm:$0xf] %v783
      %785 = vst.msk [vmem:[%s221 + $0x4] sm:$0xf] %vm212, %v475
      %v786 = vld [vmem:[%s221 + $0x8] sm:$0x1]
      %v787 = vsel %vm224, %v476, %v786
      %788 = vst [vmem:[%s221 + $0x8] sm:$0x1] %v787
      %v789 = vld [vmem:[%s221 + $0xc] sm:$0xf]
      %v790 = vsel %vm781, %v483, %v789
      %791 = vst [vmem:[%s221 + $0xc] sm:$0xf] %v790
      %792 = vst.msk [vmem:[%s221 + $0x10] sm:$0xf] %vm212, %v492
      %v793 = vld [vmem:[%s221 + $0x14] sm:$0x1]
      %v794 = vsel %vm224, %v493, %v793
      %795 = vst [vmem:[%s221 + $0x14] sm:$0x1] %v794
      %v796 = vld [vmem:[%s221 + $0x18] sm:$0xf]
      %v797 = vsel %vm781, %v500, %v796
      %798 = vst [vmem:[%s221 + $0x18] sm:$0xf] %v797
      %799 = vst.msk [vmem:[%s221 + $0x1c] sm:$0xf] %vm212, %v509
      %v800 = vld [vmem:[%s221 + $0x20] sm:$0x1]
      %v801 = vsel %vm224, %v510, %v800
      %802 = vst [vmem:[%s221 + $0x20] sm:$0x1] %v801
      %v803 = vld [vmem:[%s221 + $0x24] sm:$0xf]
      %v804 = vsel %vm781, %v517, %v803
      %805 = vst [vmem:[%s221 + $0x24] sm:$0xf] %v804
      %806 = vst.msk [vmem:[%s221 + $0x28] sm:$0xf] %vm212, %v526
      %v807 = vld [vmem:[%s221 + $0x2c] sm:$0x1]
      %v808 = vsel %vm224, %v527, %v807
      %809 = vst [vmem:[%s221 + $0x2c] sm:$0x1] %v808
      %v810 = vld [vmem:[%s221 + $0x30] sm:$0xf]
      %v811 = vsel %vm781, %v534, %v810
      %812 = vst [vmem:[%s221 + $0x30] sm:$0xf] %v811
      %813 = vst.msk [vmem:[%s221 + $0x34] sm:$0xf] %vm212, %v543
      %v814 = vld [vmem:[%s221 + $0x38] sm:$0x1]
      %v815 = vsel %vm224, %v544, %v814
      %816 = vst [vmem:[%s221 + $0x38] sm:$0x1] %v815
      %v817 = vld [vmem:[%s221 + $0x3c] sm:$0xf]
      %v818 = vsel %vm781, %v551, %v817
      %819 = vst [vmem:[%s221 + $0x3c] sm:$0xf] %v818
      %820 = vst.msk [vmem:[%s221 + $0x40] sm:$0xf] %vm212, %v560
      %v821 = vld [vmem:[%s221 + $0x44] sm:$0x1]
      %v822 = vsel %vm224, %v561, %v821
      %823 = vst [vmem:[%s221 + $0x44] sm:$0x1] %v822
      %v824 = vld [vmem:[%s221 + $0x48] sm:$0xf]
      %v825 = vsel %vm781, %v568, %v824
      %826 = vst [vmem:[%s221 + $0x48] sm:$0xf] %v825
      %827 = vst.msk [vmem:[%s221 + $0x4c] sm:$0xf] %vm212, %v577
      %v828 = vld [vmem:[%s221 + $0x50] sm:$0x1]
      %v829 = vsel %vm224, %v578, %v828
      %830 = vst [vmem:[%s221 + $0x50] sm:$0x1] %v829
      %v831 = vld [vmem:[%s221 + $0x54] sm:$0xf]
      %v832 = vsel %vm781, %v585, %v831
      %833 = vst [vmem:[%s221 + $0x54] sm:$0xf] %v832
      %834 = vst.msk [vmem:[%s221 + $0x58] sm:$0xf] %vm212, %v594
      %v835 = vld [vmem:[%s221 + $0x5c] sm:$0x1]
      %v836 = vsel %vm224, %v595, %v835
      %837 = vst [vmem:[%s221 + $0x5c] sm:$0x1] %v836
      %v838 = vld [vmem:[%s221 + $0x60] sm:$0xf]
      %v839 = vsel %vm781, %v602, %v838
      %840 = vst [vmem:[%s221 + $0x60] sm:$0xf] %v839
      %841 = vst.msk [vmem:[%s221 + $0x64] sm:$0xf] %vm212, %v611
      %v842 = vld [vmem:[%s221 + $0x68] sm:$0x1]
      %v843 = vsel %vm224, %v612, %v842
      %844 = vst [vmem:[%s221 + $0x68] sm:$0x1] %v843
      %v845 = vld [vmem:[%s221 + $0x6c] sm:$0xf]
      %v846 = vsel %vm781, %v619, %v845
      %847 = vst [vmem:[%s221 + $0x6c] sm:$0xf] %v846
      %848 = vst.msk [vmem:[%s221 + $0x70] sm:$0xf] %vm212, %v628
      %v849 = vld [vmem:[%s221 + $0x74] sm:$0x1]
      %v850 = vsel %vm224, %v629, %v849
      %851 = vst [vmem:[%s221 + $0x74] sm:$0x1] %v850
      %v852 = vld [vmem:[%s221 + $0x78] sm:$0xf]
      %v853 = vsel %vm781, %v636, %v852
      %854 = vst [vmem:[%s221 + $0x78] sm:$0xf] %v853
      %855 = vst.msk [vmem:[%s221 + $0x7c] sm:$0xf] %vm212, %v645
      %v856 = vld [vmem:[%s221 + $0x80] sm:$0x1]
      %v857 = vsel %vm224, %v646, %v856
      %858 = vst [vmem:[%s221 + $0x80] sm:$0x1] %v857
      %v859 = vld [vmem:[%s221 + $0x84] sm:$0xf]
      %v860 = vsel %vm781, %v653, %v859
      %861 = vst [vmem:[%s221 + $0x84] sm:$0xf] %v860
      %862 = vst.msk [vmem:[%s221 + $0x88] sm:$0xf] %vm212, %v662
      %v863 = vld [vmem:[%s221 + $0x8c] sm:$0x1]
      %v864 = vsel %vm224, %v663, %v863
      %865 = vst [vmem:[%s221 + $0x8c] sm:$0x1] %v864
      %v866 = vld [vmem:[%s221 + $0x90] sm:$0xf]
      %v867 = vsel %vm781, %v670, %v866
      %868 = vst [vmem:[%s221 + $0x90] sm:$0xf] %v867
      %869 = vst.msk [vmem:[%s221 + $0x94] sm:$0xf] %vm212, %v679
      %v870 = vld [vmem:[%s221 + $0x98] sm:$0x1]
      %v871 = vsel %vm224, %v680, %v870
      %872 = vst [vmem:[%s221 + $0x98] sm:$0x1] %v871
      %v873 = vld [vmem:[%s221 + $0x9c] sm:$0xf]
      %v874 = vsel %vm781, %v687, %v873
      %875 = vst [vmem:[%s221 + $0x9c] sm:$0xf] %v874
      %876 = vst.msk [vmem:[%s221 + $0xa0] sm:$0xf] %vm212, %v696
      %v877 = vld [vmem:[%s221 + $0xa4] sm:$0x1]
      %v878 = vsel %vm224, %v697, %v877
      %879 = vst [vmem:[%s221 + $0xa4] sm:$0x1] %v878
      %v880 = vld [vmem:[%s221 + $0xa8] sm:$0xf]
      %v881 = vsel %vm781, %v704, %v880
      %882 = vst [vmem:[%s221 + $0xa8] sm:$0xf] %v881
      %883 = vst.msk [vmem:[%s221 + $0xac] sm:$0xf] %vm212, %v713
      %v884 = vld [vmem:[%s221 + $0xb0] sm:$0x1]
      %v885 = vsel %vm224, %v714, %v884
      %886 = vst [vmem:[%s221 + $0xb0] sm:$0x1] %v885
      %v887 = vld [vmem:[%s221 + $0xb4] sm:$0xf]
      %v888 = vsel %vm781, %v721, %v887
      %889 = vst [vmem:[%s221 + $0xb4] sm:$0xf] %v888
      %890 = vst.msk [vmem:[%s221 + $0xb8] sm:$0xf] %vm212, %v730
      %v891 = vld [vmem:[%s221 + $0xbc] sm:$0x1]
      %v892 = vsel %vm224, %v731, %v891
      %893 = vst [vmem:[%s221 + $0xbc] sm:$0x1] %v892
      %v894 = vld [vmem:[#allocation2] sm:$0xf]
      %v895 = vld [vmem:[#allocation2 + $0x4] sm:$0xf]
      %v896 = vld [vmem:[#allocation2 + $0xc] sm:$0xf]
      %v897 = vld [vmem:[#allocation2 + $0x10] sm:$0xf]
      %v898 = vld [vmem:[#allocation2 + $0x18] sm:$0xf]
      %v899 = vld [vmem:[#allocation2 + $0x1c] sm:$0xf]
      %v900 = vld [vmem:[#allocation2 + $0x24] sm:$0xf]
      %v901 = vld [vmem:[#allocation2 + $0x28] sm:$0xf]
      %v902 = vld [vmem:[#allocation2 + $0x30] sm:$0xf]
      %v903 = vld [vmem:[#allocation2 + $0x34] sm:$0xf]
      %v904 = vld [vmem:[#allocation2 + $0x3c] sm:$0xf]
      %v905 = vld [vmem:[#allocation2 + $0x40] sm:$0xf]
      %v906 = vld [vmem:[#allocation2 + $0x48] sm:$0xf]
      %v907 = vld [vmem:[#allocation2 + $0x4c] sm:$0xf]
      %v908 = vld [vmem:[#allocation2 + $0x54] sm:$0xf]
      %v909 = vld [vmem:[#allocation2 + $0x58] sm:$0xf]
      %v910 = vld [vmem:[#allocation2 + $0x60] sm:$0xf]
      %v911 = vld [vmem:[#allocation2 + $0x64] sm:$0xf]
      %v912 = vld [vmem:[#allocation2 + $0x6c] sm:$0xf]
      %v913 = vld [vmem:[#allocation2 + $0x70] sm:$0xf]
      %v914 = vld [vmem:[#allocation2 + $0x78] sm:$0xf]
      %v915 = vld [vmem:[#allocation2 + $0x7c] sm:$0xf]
      %v916 = vld [vmem:[#allocation2 + $0x84] sm:$0xf]
      %v917 = vld [vmem:[#allocation2 + $0x88] sm:$0xf]
      %v918 = vld [vmem:[#allocation2 + $0x90] sm:$0xf]
      %v919 = vld [vmem:[#allocation2 + $0x94] sm:$0xf]
      %v920 = vld [vmem:[#allocation2 + $0x9c] sm:$0xf]
      %v921 = vld [vmem:[#allocation2 + $0xa0] sm:$0xf]
      %v922 = vld [vmem:[#allocation2 + $0xa8] sm:$0xf]
      %v923 = vld [vmem:[#allocation2 + $0xac] sm:$0xf]
      %v924 = vld [vmem:[#allocation2 + $0xb4] sm:$0xf]
      %v925 = vld [vmem:[#allocation2 + $0xb8] sm:$0xf]
      %v926 = vld [vmem:[#allocation2 + $0x8] sm:$0x1]
      %v927 = vld [vmem:[#allocation2 + $0x14] sm:$0x1]
      %v928 = vld [vmem:[#allocation2 + $0x20] sm:$0x1]
      %v929 = vld [vmem:[#allocation2 + $0x2c] sm:$0x1]
      %v930 = vld [vmem:[#allocation2 + $0x38] sm:$0x1]
      %v931 = vld [vmem:[#allocation2 + $0x44] sm:$0x1]
      %v932 = vld [vmem:[#allocation2 + $0x50] sm:$0x1]
      %v933 = vld [vmem:[#allocation2 + $0x5c] sm:$0x1]
      %v934 = vld [vmem:[#allocation2 + $0x68] sm:$0x1]
      %v935 = vld [vmem:[#allocation2 + $0x74] sm:$0x1]
      %v936 = vld [vmem:[#allocation2 + $0x80] sm:$0x1]
      %v937 = vld [vmem:[#allocation2 + $0x8c] sm:$0x1]
      %v938 = vld [vmem:[#allocation2 + $0x98] sm:$0x1]
      %v939 = vld [vmem:[#allocation2 + $0xa4] sm:$0x1]
      %v940 = vld [vmem:[#allocation2 + $0xb0] sm:$0x1]
      %v941 = vld [vmem:[#allocation2 + $0xbc] sm:$0x1]
      %vm942 = vsmask.f32 3328
      %vm943 = vsmask.f32 7440
      %vm944 = vmor %vm942, %vm943
      %v946 = vshrl.u32 %v894, 16
      %v948 = vrot.slane %v946, 4
      %v949 = vshll.u32 %v894, 16
      %v951 = vrot.slane %v949, 5
      %v952 = vor.u32 %v948, %v951
      %v953 = vrot.slane %v952, 4
      %v955 = vshll.u32 %v895, 16
      %v957 = vrot.slane %v955, 5
      %v958 = vsel %vm944, %v953, %v957
      %v959 = vshrl.u32 %v895, 16
      %v961 = vrot.slane %v959, 4
      %v962 = vor.u32 %v961, %v957
      %v963 = vrot.slane %v962, 4
      %v965 = vshll.u32 %v926, 16
      %v967 = vrot.slane %v965, 5
      %v968 = vsel %vm944, %v963, %v967
      %v970 = vshrl.u32 %v896, 16
      %v972 = vrot.slane %v970, 4
      %v973 = vshll.u32 %v896, 16
      %v975 = vrot.slane %v973, 5
      %v976 = vor.u32 %v972, %v975
      %v977 = vrot.slane %v976, 4
      %v979 = vshll.u32 %v897, 16
      %v981 = vrot.slane %v979, 5
      %v982 = vsel %vm944, %v977, %v981
      %v983 = vshrl.u32 %v897, 16
      %v985 = vrot.slane %v983, 4
      %v986 = vor.u32 %v985, %v981
      %v987 = vrot.slane %v986, 4
      %v989 = vshll.u32 %v927, 16
      %v991 = vrot.slane %v989, 5
      %v992 = vsel %vm944, %v987, %v991
      %v994 = vshrl.u32 %v898, 16
      %v996 = vrot.slane %v994, 4
      %v997 = vshll.u32 %v898, 16
      %v999 = vrot.slane %v997, 5
      %v1000 = vor.u32 %v996, %v999
      %v1001 = vrot.slane %v1000, 4
      %v1003 = vshll.u32 %v899, 16
      %v1005 = vrot.slane %v1003, 5
      %v1006 = vsel %vm944, %v1001, %v1005
      %v1007 = vshrl.u32 %v899, 16
      %v1009 = vrot.slane %v1007, 4
      %v1010 = vor.u32 %v1009, %v1005
      %v1011 = vrot.slane %v1010, 4
      %v1013 = vshll.u32 %v928, 16
      %v1015 = vrot.slane %v1013, 5
      %v1016 = vsel %vm944, %v1011, %v1015
      %v1018 = vshrl.u32 %v900, 16
      %v1020 = vrot.slane %v1018, 4
      %v1021 = vshll.u32 %v900, 16
      %v1023 = vrot.slane %v1021, 5
      %v1024 = vor.u32 %v1020, %v1023
      %v1025 = vrot.slane %v1024, 4
      %v1027 = vshll.u32 %v901, 16
      %v1029 = vrot.slane %v1027, 5
      %v1030 = vsel %vm944, %v1025, %v1029
      %v1031 = vshrl.u32 %v901, 16
      %v1033 = vrot.slane %v1031, 4
      %v1034 = vor.u32 %v1033, %v1029
      %v1035 = vrot.slane %v1034, 4
      %v1037 = vshll.u32 %v929, 16
      %v1039 = vrot.slane %v1037, 5
      %v1040 = vsel %vm944, %v1035, %v1039
      %v1042 = vshrl.u32 %v902, 16
      %v1044 = vrot.slane %v1042, 4
      %v1045 = vshll.u32 %v902, 16
      %v1047 = vrot.slane %v1045, 5
      %v1048 = vor.u32 %v1044, %v1047
      %v1049 = vrot.slane %v1048, 4
      %v1051 = vshll.u32 %v903, 16
      %v1053 = vrot.slane %v1051, 5
      %v1054 = vsel %vm944, %v1049, %v1053
      %v1055 = vshrl.u32 %v903, 16
      %v1057 = vrot.slane %v1055, 4
      %v1058 = vor.u32 %v1057, %v1053
      %v1059 = vrot.slane %v1058, 4
      %v1061 = vshll.u32 %v930, 16
      %v1063 = vrot.slane %v1061, 5
      %v1064 = vsel %vm944, %v1059, %v1063
      %v1066 = vshrl.u32 %v904, 16
      %v1068 = vrot.slane %v1066, 4
      %v1069 = vshll.u32 %v904, 16
      %v1071 = vrot.slane %v1069, 5
      %v1072 = vor.u32 %v1068, %v1071
      %v1073 = vrot.slane %v1072, 4
      %v1075 = vshll.u32 %v905, 16
      %v1077 = vrot.slane %v1075, 5
      %v1078 = vsel %vm944, %v1073, %v1077
      %v1079 = vshrl.u32 %v905, 16
      %v1081 = vrot.slane %v1079, 4
      %v1082 = vor.u32 %v1081, %v1077
      %v1083 = vrot.slane %v1082, 4
      %v1085 = vshll.u32 %v931, 16
      %v1087 = vrot.slane %v1085, 5
      %v1088 = vsel %vm944, %v1083, %v1087
      %v1090 = vshrl.u32 %v906, 16
      %v1092 = vrot.slane %v1090, 4
      %v1093 = vshll.u32 %v906, 16
      %v1095 = vrot.slane %v1093, 5
      %v1096 = vor.u32 %v1092, %v1095
      %v1097 = vrot.slane %v1096, 4
      %v1099 = vshll.u32 %v907, 16
      %v1101 = vrot.slane %v1099, 5
      %v1102 = vsel %vm944, %v1097, %v1101
      %v1103 = vshrl.u32 %v907, 16
      %v1105 = vrot.slane %v1103, 4
      %v1106 = vor.u32 %v1105, %v1101
      %v1107 = vrot.slane %v1106, 4
      %v1109 = vshll.u32 %v932, 16
      %v1111 = vrot.slane %v1109, 5
      %v1112 = vsel %vm944, %v1107, %v1111
      %v1114 = vshrl.u32 %v908, 16
      %v1116 = vrot.slane %v1114, 4
      %v1117 = vshll.u32 %v908, 16
      %v1119 = vrot.slane %v1117, 5
      %v1120 = vor.u32 %v1116, %v1119
      %v1121 = vrot.slane %v1120, 4
      %v1123 = vshll.u32 %v909, 16
      %v1125 = vrot.slane %v1123, 5
      %v1126 = vsel %vm944, %v1121, %v1125
      %v1127 = vshrl.u32 %v909, 16
      %v1129 = vrot.slane %v1127, 4
      %v1130 = vor.u32 %v1129, %v1125
      %v1131 = vrot.slane %v1130, 4
      %v1133 = vshll.u32 %v933, 16
      %v1135 = vrot.slane %v1133, 5
      %v1136 = vsel %vm944, %v1131, %v1135
      %v1138 = vshrl.u32 %v910, 16
      %v1140 = vrot.slane %v1138, 4
      %v1141 = vshll.u32 %v910, 16
      %v1143 = vrot.slane %v1141, 5
      %v1144 = vor.u32 %v1140, %v1143
      %v1145 = vrot.slane %v1144, 4
      %v1147 = vshll.u32 %v911, 16
      %v1149 = vrot.slane %v1147, 5
      %v1150 = vsel %vm944, %v1145, %v1149
      %v1151 = vshrl.u32 %v911, 16
      %v1153 = vrot.slane %v1151, 4
      %v1154 = vor.u32 %v1153, %v1149
      %v1155 = vrot.slane %v1154, 4
      %v1157 = vshll.u32 %v934, 16
      %v1159 = vrot.slane %v1157, 5
      %v1160 = vsel %vm944, %v1155, %v1159
      %v1162 = vshrl.u32 %v912, 16
      %v1164 = vrot.slane %v1162, 4
      %v1165 = vshll.u32 %v912, 16
      %v1167 = vrot.slane %v1165, 5
      %v1168 = vor.u32 %v1164, %v1167
      %v1169 = vrot.slane %v1168, 4
      %v1171 = vshll.u32 %v913, 16
      %v1173 = vrot.slane %v1171, 5
      %v1174 = vsel %vm944, %v1169, %v1173
      %v1175 = vshrl.u32 %v913, 16
      %v1177 = vrot.slane %v1175, 4
      %v1178 = vor.u32 %v1177, %v1173
      %v1179 = vrot.slane %v1178, 4
      %v1181 = vshll.u32 %v935, 16
      %v1183 = vrot.slane %v1181, 5
      %v1184 = vsel %vm944, %v1179, %v1183
      %v1186 = vshrl.u32 %v914, 16
      %v1188 = vrot.slane %v1186, 4
      %v1189 = vshll.u32 %v914, 16
      %v1191 = vrot.slane %v1189, 5
      %v1192 = vor.u32 %v1188, %v1191
      %v1193 = vrot.slane %v1192, 4
      %v1195 = vshll.u32 %v915, 16
      %v1197 = vrot.slane %v1195, 5
      %v1198 = vsel %vm944, %v1193, %v1197
      %v1199 = vshrl.u32 %v915, 16
      %v1201 = vrot.slane %v1199, 4
      %v1202 = vor.u32 %v1201, %v1197
      %v1203 = vrot.slane %v1202, 4
      %v1205 = vshll.u32 %v936, 16
      %v1207 = vrot.slane %v1205, 5
      %v1208 = vsel %vm944, %v1203, %v1207
      %v1210 = vshrl.u32 %v916, 16
      %v1212 = vrot.slane %v1210, 4
      %v1213 = vshll.u32 %v916, 16
      %v1215 = vrot.slane %v1213, 5
      %v1216 = vor.u32 %v1212, %v1215
      %v1217 = vrot.slane %v1216, 4
      %v1219 = vshll.u32 %v917, 16
      %v1221 = vrot.slane %v1219, 5
      %v1222 = vsel %vm944, %v1217, %v1221
      %v1223 = vshrl.u32 %v917, 16
      %v1225 = vrot.slane %v1223, 4
      %v1226 = vor.u32 %v1225, %v1221
      %v1227 = vrot.slane %v1226, 4
      %v1229 = vshll.u32 %v937, 16
      %v1231 = vrot.slane %v1229, 5
      %v1232 = vsel %vm944, %v1227, %v1231
      %v1234 = vshrl.u32 %v918, 16
      %v1236 = vrot.slane %v1234, 4
      %v1237 = vshll.u32 %v918, 16
      %v1239 = vrot.slane %v1237, 5
      %v1240 = vor.u32 %v1236, %v1239
      %v1241 = vrot.slane %v1240, 4
      %v1243 = vshll.u32 %v919, 16
      %v1245 = vrot.slane %v1243, 5
      %v1246 = vsel %vm944, %v1241, %v1245
      %v1247 = vshrl.u32 %v919, 16
      %v1249 = vrot.slane %v1247, 4
      %v1250 = vor.u32 %v1249, %v1245
      %v1251 = vrot.slane %v1250, 4
      %v1253 = vshll.u32 %v938, 16
      %v1255 = vrot.slane %v1253, 5
      %v1256 = vsel %vm944, %v1251, %v1255
      %v1258 = vshrl.u32 %v920, 16
      %v1260 = vrot.slane %v1258, 4
      %v1261 = vshll.u32 %v920, 16
      %v1263 = vrot.slane %v1261, 5
      %v1264 = vor.u32 %v1260, %v1263
      %v1265 = vrot.slane %v1264, 4
      %v1267 = vshll.u32 %v921, 16
      %v1269 = vrot.slane %v1267, 5
      %v1270 = vsel %vm944, %v1265, %v1269
      %v1271 = vshrl.u32 %v921, 16
      %v1273 = vrot.slane %v1271, 4
      %v1274 = vor.u32 %v1273, %v1269
      %v1275 = vrot.slane %v1274, 4
      %v1277 = vshll.u32 %v939, 16
      %v1279 = vrot.slane %v1277, 5
      %v1280 = vsel %vm944, %v1275, %v1279
      %v1282 = vshrl.u32 %v922, 16
      %v1284 = vrot.slane %v1282, 4
      %v1285 = vshll.u32 %v922, 16
      %v1287 = vrot.slane %v1285, 5
      %v1288 = vor.u32 %v1284, %v1287
      %v1289 = vrot.slane %v1288, 4
      %v1291 = vshll.u32 %v923, 16
      %v1293 = vrot.slane %v1291, 5
      %v1294 = vsel %vm944, %v1289, %v1293
      %v1295 = vshrl.u32 %v923, 16
      %v1297 = vrot.slane %v1295, 4
      %v1298 = vor.u32 %v1297, %v1293
      %v1299 = vrot.slane %v1298, 4
      %v1301 = vshll.u32 %v940, 16
      %v1303 = vrot.slane %v1301, 5
      %v1304 = vsel %vm944, %v1299, %v1303
      %v1306 = vshrl.u32 %v924, 16
      %v1308 = vrot.slane %v1306, 4
      %v1309 = vshll.u32 %v924, 16
      %v1311 = vrot.slane %v1309, 5
      %v1312 = vor.u32 %v1308, %v1311
      %v1313 = vrot.slane %v1312, 4
      %v1315 = vshll.u32 %v925, 16
      %v1317 = vrot.slane %v1315, 5
      %v1318 = vsel %vm944, %v1313, %v1317
      %v1319 = vshrl.u32 %v925, 16
      %v1321 = vrot.slane %v1319, 4
      %v1322 = vor.u32 %v1321, %v1317
      %v1323 = vrot.slane %v1322, 4
      %v1325 = vshll.u32 %v941, 16
      %v1327 = vrot.slane %v1325, 5
      %v1328 = vsel %vm944, %v1323, %v1327
      %v1329 = vld [vmem:[#allocation2] sm:$0xe]
      %v1330 = vld [vmem:[#allocation2 + $0xc] sm:$0xe]
      %v1331 = vld [vmem:[#allocation2 + $0x18] sm:$0xe]
      %v1332 = vld [vmem:[#allocation2 + $0x24] sm:$0xe]
      %v1333 = vld [vmem:[#allocation2 + $0x30] sm:$0xe]
      %v1334 = vld [vmem:[#allocation2 + $0x3c] sm:$0xe]
      %v1335 = vld [vmem:[#allocation2 + $0x48] sm:$0xe]
      %v1336 = vld [vmem:[#allocation2 + $0x54] sm:$0xe]
      %v1337 = vld [vmem:[#allocation2 + $0x60] sm:$0xe]
      %v1338 = vld [vmem:[#allocation2 + $0x6c] sm:$0xe]
      %v1339 = vld [vmem:[#allocation2 + $0x78] sm:$0xe]
      %v1340 = vld [vmem:[#allocation2 + $0x84] sm:$0xe]
      %v1341 = vld [vmem:[#allocation2 + $0x90] sm:$0xe]
      %v1342 = vld [vmem:[#allocation2 + $0x9c] sm:$0xe]
      %v1343 = vld [vmem:[#allocation2 + $0xa8] sm:$0xe]
      %v1344 = vld [vmem:[#allocation2 + $0xb4] sm:$0xe]
      %vm1393 = vcmask 1042432
      %vm1394 = vcmask 1046532
      %vm1395 = vmor %vm1393, %vm1394
      %v1396 = vrot.slane %v1329, 5
      %v1397 = vrot.slane %v1396, 4
      %v1398 = vrot.slane %v895, 5
      %v1399 = vsel %vm1395, %v1397, %v1398
      %v1400 = vrot.slane %v1398, 4
      %v1401 = vrot.slane %v926, 5
      %v1402 = vsel %vm1395, %v1400, %v1401
      %v1403 = vrot.slane %v1330, 5
      %v1404 = vrot.slane %v1403, 4
      %v1405 = vrot.slane %v897, 5
      %v1406 = vsel %vm1395, %v1404, %v1405
      %v1407 = vrot.slane %v1405, 4
      %v1408 = vrot.slane %v927, 5
      %v1409 = vsel %vm1395, %v1407, %v1408
      %v1410 = vrot.slane %v1331, 5
      %v1411 = vrot.slane %v1410, 4
      %v1412 = vrot.slane %v899, 5
      %v1413 = vsel %vm1395, %v1411, %v1412
      %v1414 = vrot.slane %v1412, 4
      %v1415 = vrot.slane %v928, 5
      %v1416 = vsel %vm1395, %v1414, %v1415
      %v1417 = vrot.slane %v1332, 5
      %v1418 = vrot.slane %v1417, 4
      %v1419 = vrot.slane %v901, 5
      %v1420 = vsel %vm1395, %v1418, %v1419
      %v1421 = vrot.slane %v1419, 4
      %v1422 = vrot.slane %v929, 5
      %v1423 = vsel %vm1395, %v1421, %v1422
      %v1424 = vrot.slane %v1333, 5
      %v1425 = vrot.slane %v1424, 4
      %v1426 = vrot.slane %v903, 5
      %v1427 = vsel %vm1395, %v1425, %v1426
      %v1428 = vrot.slane %v1426, 4
      %v1429 = vrot.slane %v930, 5
      %v1430 = vsel %vm1395, %v1428, %v1429
      %v1431 = vrot.slane %v1334, 5
      %v1432 = vrot.slane %v1431, 4
      %v1433 = vrot.slane %v905, 5
      %v1434 = vsel %vm1395, %v1432, %v1433
      %v1435 = vrot.slane %v1433, 4
      %v1436 = vrot.slane %v931, 5
      %v1437 = vsel %vm1395, %v1435, %v1436
      %v1438 = vrot.slane %v1335, 5
      %v1439 = vrot.slane %v1438, 4
      %v1440 = vrot.slane %v907, 5
      %v1441 = vsel %vm1395, %v1439, %v1440
      %v1442 = vrot.slane %v1440, 4
      %v1443 = vrot.slane %v932, 5
      %v1444 = vsel %vm1395, %v1442, %v1443
      %v1445 = vrot.slane %v1336, 5
      %v1446 = vrot.slane %v1445, 4
      %v1447 = vrot.slane %v909, 5
      %v1448 = vsel %vm1395, %v1446, %v1447
      %v1449 = vrot.slane %v1447, 4
      %v1450 = vrot.slane %v933, 5
      %v1451 = vsel %vm1395, %v1449, %v1450
      %v1452 = vrot.slane %v1337, 5
      %v1453 = vrot.slane %v1452, 4
      %v1454 = vrot.slane %v911, 5
      %v1455 = vsel %vm1395, %v1453, %v1454
      %v1456 = vrot.slane %v1454, 4
      %v1457 = vrot.slane %v934, 5
      %v1458 = vsel %vm1395, %v1456, %v1457
      %v1459 = vrot.slane %v1338, 5
      %v1460 = vrot.slane %v1459, 4
      %v1461 = vrot.slane %v913, 5
      %v1462 = vsel %vm1395, %v1460, %v1461
      %v1463 = vrot.slane %v1461, 4
      %v1464 = vrot.slane %v935, 5
      %v1465 = vsel %vm1395, %v1463, %v1464
      %v1466 = vrot.slane %v1339, 5
      %v1467 = vrot.slane %v1466, 4
      %v1468 = vrot.slane %v915, 5
      %v1469 = vsel %vm1395, %v1467, %v1468
      %v1470 = vrot.slane %v1468, 4
      %v1471 = vrot.slane %v936, 5
      %v1472 = vsel %vm1395, %v1470, %v1471
      %v1473 = vrot.slane %v1340, 5
      %v1474 = vrot.slane %v1473, 4
      %v1475 = vrot.slane %v917, 5
      %v1476 = vsel %vm1395, %v1474, %v1475
      %v1477 = vrot.slane %v1475, 4
      %v1478 = vrot.slane %v937, 5
      %v1479 = vsel %vm1395, %v1477, %v1478
      %v1480 = vrot.slane %v1341, 5
      %v1481 = vrot.slane %v1480, 4
      %v1482 = vrot.slane %v919, 5
      %v1483 = vsel %vm1395, %v1481, %v1482
      %v1484 = vrot.slane %v1482, 4
      %v1485 = vrot.slane %v938, 5
      %v1486 = vsel %vm1395, %v1484, %v1485
      %v1487 = vrot.slane %v1342, 5
      %v1488 = vrot.slane %v1487, 4
      %v1489 = vrot.slane %v921, 5
      %v1490 = vsel %vm1395, %v1488, %v1489
      %v1491 = vrot.slane %v1489, 4
      %v1492 = vrot.slane %v939, 5
      %v1493 = vsel %vm1395, %v1491, %v1492
      %v1494 = vrot.slane %v1343, 5
      %v1495 = vrot.slane %v1494, 4
      %v1496 = vrot.slane %v923, 5
      %v1497 = vsel %vm1395, %v1495, %v1496
      %v1498 = vrot.slane %v1496, 4
      %v1499 = vrot.slane %v940, 5
      %v1500 = vsel %vm1395, %v1498, %v1499
      %v1501 = vrot.slane %v1344, 5
      %v1502 = vrot.slane %v1501, 4
      %v1503 = vrot.slane %v925, 5
      %v1504 = vsel %vm1395, %v1502, %v1503
      %v1505 = vrot.slane %v1503, 4
      %v1506 = vrot.slane %v941, 5
      %v1507 = vsel %vm1395, %v1505, %v1506
      %v1508 = vld [vmem:[%s221] sm:$0xf]
      %v1509 = vld [vmem:[%s221 + $0x4] sm:$0xf]
      %v1510 = vld [vmem:[%s221 + $0xc] sm:$0xf]
      %v1511 = vld [vmem:[%s221 + $0x10] sm:$0xf]
      %v1512 = vld [vmem:[%s221 + $0x18] sm:$0xf]
      %v1513 = vld [vmem:[%s221 + $0x1c] sm:$0xf]
      %v1514 = vld [vmem:[%s221 + $0x24] sm:$0xf]
      %v1515 = vld [vmem:[%s221 + $0x28] sm:$0xf]
      %v1516 = vld [vmem:[%s221 + $0x30] sm:$0xf]
      %v1517 = vld [vmem:[%s221 + $0x34] sm:$0xf]
      %v1518 = vld [vmem:[%s221 + $0x3c] sm:$0xf]
      %v1519 = vld [vmem:[%s221 + $0x40] sm:$0xf]
      %v1520 = vld [vmem:[%s221 + $0x48] sm:$0xf]
      %v1521 = vld [vmem:[%s221 + $0x4c] sm:$0xf]
      %v1522 = vld [vmem:[%s221 + $0x54] sm:$0xf]
      %v1523 = vld [vmem:[%s221 + $0x58] sm:$0xf]
      %v1524 = vld [vmem:[%s221 + $0x60] sm:$0xf]
      %v1525 = vld [vmem:[%s221 + $0x64] sm:$0xf]
      %v1526 = vld [vmem:[%s221 + $0x6c] sm:$0xf]
      %v1527 = vld [vmem:[%s221 + $0x70] sm:$0xf]
      %v1528 = vld [vmem:[%s221 + $0x78] sm:$0xf]
      %v1529 = vld [vmem:[%s221 + $0x7c] sm:$0xf]
      %v1530 = vld [vmem:[%s221 + $0x84] sm:$0xf]
      %v1531 = vld [vmem:[%s221 + $0x88] sm:$0xf]
      %v1532 = vld [vmem:[%s221 + $0x90] sm:$0xf]
      %v1533 = vld [vmem:[%s221 + $0x94] sm:$0xf]
      %v1534 = vld [vmem:[%s221 + $0x9c] sm:$0xf]
      %v1535 = vld [vmem:[%s221 + $0xa0] sm:$0xf]
      %v1536 = vld [vmem:[%s221 + $0xa8] sm:$0xf]
      %v1537 = vld [vmem:[%s221 + $0xac] sm:$0xf]
      %v1538 = vld [vmem:[%s221 + $0xb4] sm:$0xf]
      %v1539 = vld [vmem:[%s221 + $0xb8] sm:$0xf]
      %v1540 = vld [vmem:[%s221 + $0x8] sm:$0x1]
      %v1541 = vld [vmem:[%s221 + $0x14] sm:$0x1]
      %v1542 = vld [vmem:[%s221 + $0x20] sm:$0x1]
      %v1543 = vld [vmem:[%s221 + $0x2c] sm:$0x1]
      %v1544 = vld [vmem:[%s221 + $0x38] sm:$0x1]
      %v1545 = vld [vmem:[%s221 + $0x44] sm:$0x1]
      %v1546 = vld [vmem:[%s221 + $0x50] sm:$0x1]
      %v1547 = vld [vmem:[%s221 + $0x5c] sm:$0x1]
      %v1548 = vld [vmem:[%s221 + $0x68] sm:$0x1]
      %v1549 = vld [vmem:[%s221 + $0x74] sm:$0x1]
      %v1550 = vld [vmem:[%s221 + $0x80] sm:$0x1]
      %v1551 = vld [vmem:[%s221 + $0x8c] sm:$0x1]
      %v1552 = vld [vmem:[%s221 + $0x98] sm:$0x1]
      %v1553 = vld [vmem:[%s221 + $0xa4] sm:$0x1]
      %v1554 = vld [vmem:[%s221 + $0xb0] sm:$0x1]
      %v1555 = vld [vmem:[%s221 + $0xbc] sm:$0x1]
      %v1557 = vshrl.u32 %v1508, 16
      %v1559 = vrot.slane %v1557, 4
      %v1560 = vshll.u32 %v1508, 16
      %v1562 = vrot.slane %v1560, 5
      %v1563 = vor.u32 %v1559, %v1562
      %v1564 = vrot.slane %v1563, 4
      %v1566 = vshll.u32 %v1509, 16
      %v1568 = vrot.slane %v1566, 5
      %v1569 = vsel %vm944, %v1564, %v1568
      %v1570 = vshrl.u32 %v1509, 16
      %v1572 = vrot.slane %v1570, 4
      %v1573 = vor.u32 %v1572, %v1568
      %v1574 = vrot.slane %v1573, 4
      %v1576 = vshll.u32 %v1540, 16
      %v1578 = vrot.slane %v1576, 5
      %v1579 = vsel %vm944, %v1574, %v1578
      %v1581 = vshrl.u32 %v1510, 16
      %v1583 = vrot.slane %v1581, 4
      %v1584 = vshll.u32 %v1510, 16
      %v1586 = vrot.slane %v1584, 5
      %v1587 = vor.u32 %v1583, %v1586
      %v1588 = vrot.slane %v1587, 4
      %v1590 = vshll.u32 %v1511, 16
      %v1592 = vrot.slane %v1590, 5
      %v1593 = vsel %vm944, %v1588, %v1592
      %v1594 = vshrl.u32 %v1511, 16
      %v1596 = vrot.slane %v1594, 4
      %v1597 = vor.u32 %v1596, %v1592
      %v1598 = vrot.slane %v1597, 4
      %v1600 = vshll.u32 %v1541, 16
      %v1602 = vrot.slane %v1600, 5
      %v1603 = vsel %vm944, %v1598, %v1602
      %v1605 = vshrl.u32 %v1512, 16
      %v1607 = vrot.slane %v1605, 4
      %v1608 = vshll.u32 %v1512, 16
      %v1610 = vrot.slane %v1608, 5
      %v1611 = vor.u32 %v1607, %v1610
      %v1612 = vrot.slane %v1611, 4
      %v1614 = vshll.u32 %v1513, 16
      %v1616 = vrot.slane %v1614, 5
      %v1617 = vsel %vm944, %v1612, %v1616
      %v1618 = vshrl.u32 %v1513, 16
      %v1620 = vrot.slane %v1618, 4
      %v1621 = vor.u32 %v1620, %v1616
      %v1622 = vrot.slane %v1621, 4
      %v1624 = vshll.u32 %v1542, 16
      %v1626 = vrot.slane %v1624, 5
      %v1627 = vsel %vm944, %v1622, %v1626
      %v1629 = vshrl.u32 %v1514, 16
      %v1631 = vrot.slane %v1629, 4
      %v1632 = vshll.u32 %v1514, 16
      %v1634 = vrot.slane %v1632, 5
      %v1635 = vor.u32 %v1631, %v1634
      %v1636 = vrot.slane %v1635, 4
      %v1638 = vshll.u32 %v1515, 16
      %v1640 = vrot.slane %v1638, 5
      %v1641 = vsel %vm944, %v1636, %v1640
      %v1642 = vshrl.u32 %v1515, 16
      %v1644 = vrot.slane %v1642, 4
      %v1645 = vor.u32 %v1644, %v1640
      %v1646 = vrot.slane %v1645, 4
      %v1648 = vshll.u32 %v1543, 16
      %v1650 = vrot.slane %v1648, 5
      %v1651 = vsel %vm944, %v1646, %v1650
      %v1653 = vshrl.u32 %v1516, 16
      %v1655 = vrot.slane %v1653, 4
      %v1656 = vshll.u32 %v1516, 16
      %v1658 = vrot.slane %v1656, 5
      %v1659 = vor.u32 %v1655, %v1658
      %v1660 = vrot.slane %v1659, 4
      %v1662 = vshll.u32 %v1517, 16
      %v1664 = vrot.slane %v1662, 5
      %v1665 = vsel %vm944, %v1660, %v1664
      %v1666 = vshrl.u32 %v1517, 16
      %v1668 = vrot.slane %v1666, 4
      %v1669 = vor.u32 %v1668, %v1664
      %v1670 = vrot.slane %v1669, 4
      %v1672 = vshll.u32 %v1544, 16
      %v1674 = vrot.slane %v1672, 5
      %v1675 = vsel %vm944, %v1670, %v1674
      %v1677 = vshrl.u32 %v1518, 16
      %v1679 = vrot.slane %v1677, 4
      %v1680 = vshll.u32 %v1518, 16
      %v1682 = vrot.slane %v1680, 5
      %v1683 = vor.u32 %v1679, %v1682
      %v1684 = vrot.slane %v1683, 4
      %v1686 = vshll.u32 %v1519, 16
      %v1688 = vrot.slane %v1686, 5
      %v1689 = vsel %vm944, %v1684, %v1688
      %v1690 = vshrl.u32 %v1519, 16
      %v1692 = vrot.slane %v1690, 4
      %v1693 = vor.u32 %v1692, %v1688
      %v1694 = vrot.slane %v1693, 4
      %v1696 = vshll.u32 %v1545, 16
      %v1698 = vrot.slane %v1696, 5
      %v1699 = vsel %vm944, %v1694, %v1698
      %v1701 = vshrl.u32 %v1520, 16
      %v1703 = vrot.slane %v1701, 4
      %v1704 = vshll.u32 %v1520, 16
      %v1706 = vrot.slane %v1704, 5
      %v1707 = vor.u32 %v1703, %v1706
      %v1708 = vrot.slane %v1707, 4
      %v1710 = vshll.u32 %v1521, 16
      %v1712 = vrot.slane %v1710, 5
      %v1713 = vsel %vm944, %v1708, %v1712
      %v1714 = vshrl.u32 %v1521, 16
      %v1716 = vrot.slane %v1714, 4
      %v1717 = vor.u32 %v1716, %v1712
      %v1718 = vrot.slane %v1717, 4
      %v1720 = vshll.u32 %v1546, 16
      %v1722 = vrot.slane %v1720, 5
      %v1723 = vsel %vm944, %v1718, %v1722
      %v1725 = vshrl.u32 %v1522, 16
      %v1727 = vrot.slane %v1725, 4
      %v1728 = vshll.u32 %v1522, 16
      %v1730 = vrot.slane %v1728, 5
      %v1731 = vor.u32 %v1727, %v1730
      %v1732 = vrot.slane %v1731, 4
      %v1734 = vshll.u32 %v1523, 16
      %v1736 = vrot.slane %v1734, 5
      %v1737 = vsel %vm944, %v1732, %v1736
      %v1738 = vshrl.u32 %v1523, 16
      %v1740 = vrot.slane %v1738, 4
      %v1741 = vor.u32 %v1740, %v1736
      %v1742 = vrot.slane %v1741, 4
      %v1744 = vshll.u32 %v1547, 16
      %v1746 = vrot.slane %v1744, 5
      %v1747 = vsel %vm944, %v1742, %v1746
      %v1749 = vshrl.u32 %v1524, 16
      %v1751 = vrot.slane %v1749, 4
      %v1752 = vshll.u32 %v1524, 16
      %v1754 = vrot.slane %v1752, 5
      %v1755 = vor.u32 %v1751, %v1754
      %v1756 = vrot.slane %v1755, 4
      %v1758 = vshll.u32 %v1525, 16
      %v1760 = vrot.slane %v1758, 5
      %v1761 = vsel %vm944, %v1756, %v1760
      %v1762 = vshrl.u32 %v1525, 16
      %v1764 = vrot.slane %v1762, 4
      %v1765 = vor.u32 %v1764, %v1760
      %v1766 = vrot.slane %v1765, 4
      %v1768 = vshll.u32 %v1548, 16
      %v1770 = vrot.slane %v1768, 5
      %v1771 = vsel %vm944, %v1766, %v1770
      %v1773 = vshrl.u32 %v1526, 16
      %v1775 = vrot.slane %v1773, 4
      %v1776 = vshll.u32 %v1526, 16
      %v1778 = vrot.slane %v1776, 5
      %v1779 = vor.u32 %v1775, %v1778
      %v1780 = vrot.slane %v1779, 4
      %v1782 = vshll.u32 %v1527, 16
      %v1784 = vrot.slane %v1782, 5
      %v1785 = vsel %vm944, %v1780, %v1784
      %v1786 = vshrl.u32 %v1527, 16
      %v1788 = vrot.slane %v1786, 4
      %v1789 = vor.u32 %v1788, %v1784
      %v1790 = vrot.slane %v1789, 4
      %v1792 = vshll.u32 %v1549, 16
      %v1794 = vrot.slane %v1792, 5
      %v1795 = vsel %vm944, %v1790, %v1794
      %v1797 = vshrl.u32 %v1528, 16
      %v1799 = vrot.slane %v1797, 4
      %v1800 = vshll.u32 %v1528, 16
      %v1802 = vrot.slane %v1800, 5
      %v1803 = vor.u32 %v1799, %v1802
      %v1804 = vrot.slane %v1803, 4
      %v1806 = vshll.u32 %v1529, 16
      %v1808 = vrot.slane %v1806, 5
      %v1809 = vsel %vm944, %v1804, %v1808
      %v1810 = vshrl.u32 %v1529, 16
      %v1812 = vrot.slane %v1810, 4
      %v1813 = vor.u32 %v1812, %v1808
      %v1814 = vrot.slane %v1813, 4
      %v1816 = vshll.u32 %v1550, 16
      %v1818 = vrot.slane %v1816, 5
      %v1819 = vsel %vm944, %v1814, %v1818
      %v1821 = vshrl.u32 %v1530, 16
      %v1823 = vrot.slane %v1821, 4
      %v1824 = vshll.u32 %v1530, 16
      %v1826 = vrot.slane %v1824, 5
      %v1827 = vor.u32 %v1823, %v1826
      %v1828 = vrot.slane %v1827, 4
      %v1830 = vshll.u32 %v1531, 16
      %v1832 = vrot.slane %v1830, 5
      %v1833 = vsel %vm944, %v1828, %v1832
      %v1834 = vshrl.u32 %v1531, 16
      %v1836 = vrot.slane %v1834, 4
      %v1837 = vor.u32 %v1836, %v1832
      %v1838 = vrot.slane %v1837, 4
      %v1840 = vshll.u32 %v1551, 16
      %v1842 = vrot.slane %v1840, 5
      %v1843 = vsel %vm944, %v1838, %v1842
      %v1845 = vshrl.u32 %v1532, 16
      %v1847 = vrot.slane %v1845, 4
      %v1848 = vshll.u32 %v1532, 16
      %v1850 = vrot.slane %v1848, 5
      %v1851 = vor.u32 %v1847, %v1850
      %v1852 = vrot.slane %v1851, 4
      %v1854 = vshll.u32 %v1533, 16
      %v1856 = vrot.slane %v1854, 5
      %v1857 = vsel %vm944, %v1852, %v1856
      %v1858 = vshrl.u32 %v1533, 16
      %v1860 = vrot.slane %v1858, 4
      %v1861 = vor.u32 %v1860, %v1856
      %v1862 = vrot.slane %v1861, 4
      %v1864 = vshll.u32 %v1552, 16
      %v1866 = vrot.slane %v1864, 5
      %v1867 = vsel %vm944, %v1862, %v1866
      %v1869 = vshrl.u32 %v1534, 16
      %v1871 = vrot.slane %v1869, 4
      %v1872 = vshll.u32 %v1534, 16
      %v1874 = vrot.slane %v1872, 5
      %v1875 = vor.u32 %v1871, %v1874
      %v1876 = vrot.slane %v1875, 4
      %v1878 = vshll.u32 %v1535, 16
      %v1880 = vrot.slane %v1878, 5
      %v1881 = vsel %vm944, %v1876, %v1880
      %v1882 = vshrl.u32 %v1535, 16
      %v1884 = vrot.slane %v1882, 4
      %v1885 = vor.u32 %v1884, %v1880
      %v1886 = vrot.slane %v1885, 4
      %v1888 = vshll.u32 %v1553, 16
      %v1890 = vrot.slane %v1888, 5
      %v1891 = vsel %vm944, %v1886, %v1890
      %v1893 = vshrl.u32 %v1536, 16
      %v1895 = vrot.slane %v1893, 4
      %v1896 = vshll.u32 %v1536, 16
      %v1898 = vrot.slane %v1896, 5
      %v1899 = vor.u32 %v1895, %v1898
      %v1900 = vrot.slane %v1899, 4
      %v1902 = vshll.u32 %v1537, 16
      %v1904 = vrot.slane %v1902, 5
      %v1905 = vsel %vm944, %v1900, %v1904
      %v1906 = vshrl.u32 %v1537, 16
      %v1908 = vrot.slane %v1906, 4
      %v1909 = vor.u32 %v1908, %v1904
      %v1910 = vrot.slane %v1909, 4
      %v1912 = vshll.u32 %v1554, 16
      %v1914 = vrot.slane %v1912, 5
      %v1915 = vsel %vm944, %v1910, %v1914
      %v1917 = vshrl.u32 %v1538, 16
      %v1919 = vrot.slane %v1917, 4
      %v1920 = vshll.u32 %v1538, 16
      %v1922 = vrot.slane %v1920, 5
      %v1923 = vor.u32 %v1919, %v1922
      %v1924 = vrot.slane %v1923, 4
      %v1926 = vshll.u32 %v1539, 16
      %v1928 = vrot.slane %v1926, 5
      %v1929 = vsel %vm944, %v1924, %v1928
      %v1930 = vshrl.u32 %v1539, 16
      %v1932 = vrot.slane %v1930, 4
      %v1933 = vor.u32 %v1932, %v1928
      %v1934 = vrot.slane %v1933, 4
      %v1936 = vshll.u32 %v1555, 16
      %v1938 = vrot.slane %v1936, 5
      %v1939 = vsel %vm944, %v1934, %v1938
      %v1940 = vld [vmem:[%s221] sm:$0xe]
      %v1941 = vld [vmem:[%s221 + $0xc] sm:$0xe]
      %v1942 = vld [vmem:[%s221 + $0x18] sm:$0xe]
      %v1943 = vld [vmem:[%s221 + $0x24] sm:$0xe]
      %v1944 = vld [vmem:[%s221 + $0x30] sm:$0xe]
      %v1945 = vld [vmem:[%s221 + $0x3c] sm:$0xe]
      %v1946 = vld [vmem:[%s221 + $0x48] sm:$0xe]
      %v1947 = vld [vmem:[%s221 + $0x54] sm:$0xe]
      %v1948 = vld [vmem:[%s221 + $0x60] sm:$0xe]
      %v1949 = vld [vmem:[%s221 + $0x6c] sm:$0xe]
      %v1950 = vld [vmem:[%s221 + $0x78] sm:$0xe]
      %v1951 = vld [vmem:[%s221 + $0x84] sm:$0xe]
      %v1952 = vld [vmem:[%s221 + $0x90] sm:$0xe]
      %v1953 = vld [vmem:[%s221 + $0x9c] sm:$0xe]
      %v1954 = vld [vmem:[%s221 + $0xa8] sm:$0xe]
      %v1955 = vld [vmem:[%s221 + $0xb4] sm:$0xe]
      %v2004 = vrot.slane %v1940, 5
      %v2005 = vrot.slane %v2004, 4
      %v2006 = vrot.slane %v1509, 5
      %v2007 = vsel %vm1395, %v2005, %v2006
      %v2008 = vrot.slane %v2006, 4
      %v2009 = vrot.slane %v1540, 5
      %v2010 = vsel %vm1395, %v2008, %v2009
      %v2011 = vrot.slane %v1941, 5
      %v2012 = vrot.slane %v2011, 4
      %v2013 = vrot.slane %v1511, 5
      %v2014 = vsel %vm1395, %v2012, %v2013
      %v2015 = vrot.slane %v2013, 4
      %v2016 = vrot.slane %v1541, 5
      %v2017 = vsel %vm1395, %v2015, %v2016
      %v2018 = vrot.slane %v1942, 5
      %v2019 = vrot.slane %v2018, 4
      %v2020 = vrot.slane %v1513, 5
      %v2021 = vsel %vm1395, %v2019, %v2020
      %v2022 = vrot.slane %v2020, 4
      %v2023 = vrot.slane %v1542, 5
      %v2024 = vsel %vm1395, %v2022, %v2023
      %v2025 = vrot.slane %v1943, 5
      %v2026 = vrot.slane %v2025, 4
      %v2027 = vrot.slane %v1515, 5
      %v2028 = vsel %vm1395, %v2026, %v2027
      %v2029 = vrot.slane %v2027, 4
      %v2030 = vrot.slane %v1543, 5
      %v2031 = vsel %vm1395, %v2029, %v2030
      %v2032 = vrot.slane %v1944, 5
      %v2033 = vrot.slane %v2032, 4
      %v2034 = vrot.slane %v1517, 5
      %v2035 = vsel %vm1395, %v2033, %v2034
      %v2036 = vrot.slane %v2034, 4
      %v2037 = vrot.slane %v1544, 5
      %v2038 = vsel %vm1395, %v2036, %v2037
      %v2039 = vrot.slane %v1945, 5
      %v2040 = vrot.slane %v2039, 4
      %v2041 = vrot.slane %v1519, 5
      %v2042 = vsel %vm1395, %v2040, %v2041
      %v2043 = vrot.slane %v2041, 4
      %v2044 = vrot.slane %v1545, 5
      %v2045 = vsel %vm1395, %v2043, %v2044
      %v2046 = vrot.slane %v1946, 5
      %v2047 = vrot.slane %v2046, 4
      %v2048 = vrot.slane %v1521, 5
      %v2049 = vsel %vm1395, %v2047, %v2048
      %v2050 = vrot.slane %v2048, 4
      %v2051 = vrot.slane %v1546, 5
      %v2052 = vsel %vm1395, %v2050, %v2051
      %v2053 = vrot.slane %v1947, 5
      %v2054 = vrot.slane %v2053, 4
      %v2055 = vrot.slane %v1523, 5
      %v2056 = vsel %vm1395, %v2054, %v2055
      %v2057 = vrot.slane %v2055, 4
      %v2058 = vrot.slane %v1547, 5
      %v2059 = vsel %vm1395, %v2057, %v2058
      %v2060 = vrot.slane %v1948, 5
      %v2061 = vrot.slane %v2060, 4
      %v2062 = vrot.slane %v1525, 5
      %v2063 = vsel %vm1395, %v2061, %v2062
      %v2064 = vrot.slane %v2062, 4
      %v2065 = vrot.slane %v1548, 5
      %v2066 = vsel %vm1395, %v2064, %v2065
      %v2067 = vrot.slane %v1949, 5
      %v2068 = vrot.slane %v2067, 4
      %v2069 = vrot.slane %v1527, 5
      %v2070 = vsel %vm1395, %v2068, %v2069
      %v2071 = vrot.slane %v2069, 4
      %v2072 = vrot.slane %v1549, 5
      %v2073 = vsel %vm1395, %v2071, %v2072
      %v2074 = vrot.slane %v1950, 5
      %v2075 = vrot.slane %v2074, 4
      %v2076 = vrot.slane %v1529, 5
      %v2077 = vsel %vm1395, %v2075, %v2076
      %v2078 = vrot.slane %v2076, 4
      %v2079 = vrot.slane %v1550, 5
      %v2080 = vsel %vm1395, %v2078, %v2079
      %v2081 = vrot.slane %v1951, 5
      %v2082 = vrot.slane %v2081, 4
      %v2083 = vrot.slane %v1531, 5
      %v2084 = vsel %vm1395, %v2082, %v2083
      %v2085 = vrot.slane %v2083, 4
      %v2086 = vrot.slane %v1551, 5
      %v2087 = vsel %vm1395, %v2085, %v2086
      %v2088 = vrot.slane %v1952, 5
      %v2089 = vrot.slane %v2088, 4
      %v2090 = vrot.slane %v1533, 5
      %v2091 = vsel %vm1395, %v2089, %v2090
      %v2092 = vrot.slane %v2090, 4
      %v2093 = vrot.slane %v1552, 5
      %v2094 = vsel %vm1395, %v2092, %v2093
      %v2095 = vrot.slane %v1953, 5
      %v2096 = vrot.slane %v2095, 4
      %v2097 = vrot.slane %v1535, 5
      %v2098 = vsel %vm1395, %v2096, %v2097
      %v2099 = vrot.slane %v2097, 4
      %v2100 = vrot.slane %v1553, 5
      %v2101 = vsel %vm1395, %v2099, %v2100
      %v2102 = vrot.slane %v1954, 5
      %v2103 = vrot.slane %v2102, 4
      %v2104 = vrot.slane %v1537, 5
      %v2105 = vsel %vm1395, %v2103, %v2104
      %v2106 = vrot.slane %v2104, 4
      %v2107 = vrot.slane %v1554, 5
      %v2108 = vsel %vm1395, %v2106, %v2107
      %v2109 = vrot.slane %v1955, 5
      %v2110 = vrot.slane %v2109, 4
      %v2111 = vrot.slane %v1539, 5
      %v2112 = vsel %vm1395, %v2110, %v2111
      %v2113 = vrot.slane %v2111, 4
      %v2114 = vrot.slane %v1555, 5
      %v2115 = vsel %vm1395, %v2113, %v2114
      %s2116 = scalar_lea.vmem [#allocation2], 24
      %v2117 = vld [vmem:[%s2116] sm:$0xf]
      %v2118 = vld [vmem:[%s2116 + $0x4] sm:$0xf]
      %v2119 = vld [vmem:[%s2116 + $0xc] sm:$0xf]
      %v2120 = vld [vmem:[%s2116 + $0x10] sm:$0xf]
      %v2121 = vld [vmem:[%s2116 + $0x18] sm:$0xf]
      %v2122 = vld [vmem:[%s2116 + $0x1c] sm:$0xf]
      %v2123 = vld [vmem:[%s2116 + $0x24] sm:$0xf]
      %v2124 = vld [vmem:[%s2116 + $0x28] sm:$0xf]
      %v2125 = vld [vmem:[%s2116 + $0x30] sm:$0xf]
      %v2126 = vld [vmem:[%s2116 + $0x34] sm:$0xf]
      %v2127 = vld [vmem:[%s2116 + $0x3c] sm:$0xf]
      %v2128 = vld [vmem:[%s2116 + $0x40] sm:$0xf]
      %v2129 = vld [vmem:[%s2116 + $0x48] sm:$0xf]
      %v2130 = vld [vmem:[%s2116 + $0x4c] sm:$0xf]
      %v2131 = vld [vmem:[%s2116 + $0x54] sm:$0xf]
      %v2132 = vld [vmem:[%s2116 + $0x58] sm:$0xf]
      %v2133 = vld [vmem:[%s2116 + $0x60] sm:$0xf]
      %v2134 = vld [vmem:[%s2116 + $0x64] sm:$0xf]
      %v2135 = vld [vmem:[%s2116 + $0x6c] sm:$0xf]
      %v2136 = vld [vmem:[%s2116 + $0x70] sm:$0xf]
      %v2137 = vld [vmem:[%s2116 + $0x78] sm:$0xf]
      %v2138 = vld [vmem:[%s2116 + $0x7c] sm:$0xf]
      %v2139 = vld [vmem:[%s2116 + $0x84] sm:$0xf]
      %v2140 = vld [vmem:[%s2116 + $0x88] sm:$0xf]
      %v2141 = vld [vmem:[%s2116 + $0x90] sm:$0xf]
      %v2142 = vld [vmem:[%s2116 + $0x94] sm:$0xf]
      %v2143 = vld [vmem:[%s2116 + $0x9c] sm:$0xf]
      %v2144 = vld [vmem:[%s2116 + $0xa0] sm:$0xf]
      %v2145 = vld [vmem:[%s2116 + $0xa8] sm:$0xf]
      %v2146 = vld [vmem:[%s2116 + $0xac] sm:$0xf]
      %v2147 = vld [vmem:[%s2116 + $0xb4] sm:$0xf]
      %v2148 = vld [vmem:[%s2116 + $0xb8] sm:$0xf]
      %v2149 = vld [vmem:[%s2116 + $0x8] sm:$0x1]
      %v2150 = vld [vmem:[%s2116 + $0x14] sm:$0x1]
      %v2151 = vld [vmem:[%s2116 + $0x20] sm:$0x1]
      %v2152 = vld [vmem:[%s2116 + $0x2c] sm:$0x1]
      %v2153 = vld [vmem:[%s2116 + $0x38] sm:$0x1]
      %v2154 = vld [vmem:[%s2116 + $0x44] sm:$0x1]
      %v2155 = vld [vmem:[%s2116 + $0x50] sm:$0x1]
      %v2156 = vld [vmem:[%s2116 + $0x5c] sm:$0x1]
      %v2157 = vld [vmem:[%s2116 + $0x68] sm:$0x1]
      %v2158 = vld [vmem:[%s2116 + $0x74] sm:$0x1]
      %v2159 = vld [vmem:[%s2116 + $0x80] sm:$0x1]
      %v2160 = vld [vmem:[%s2116 + $0x8c] sm:$0x1]
      %v2161 = vld [vmem:[%s2116 + $0x98] sm:$0x1]
      %v2162 = vld [vmem:[%s2116 + $0xa4] sm:$0x1]
      %v2163 = vld [vmem:[%s2116 + $0xb0] sm:$0x1]
      %v2164 = vld [vmem:[%s2116 + $0xbc] sm:$0x1]
      %v2166 = vshrl.u32 %v2117, 16
      %v2168 = vrot.slane %v2166, 4
      %v2169 = vshll.u32 %v2117, 16
      %v2171 = vrot.slane %v2169, 5
      %v2172 = vor.u32 %v2168, %v2171
      %v2173 = vrot.slane %v2172, 4
      %v2175 = vshll.u32 %v2118, 16
      %v2177 = vrot.slane %v2175, 5
      %v2178 = vsel %vm944, %v2173, %v2177
      %v2179 = vshrl.u32 %v2118, 16
      %v2181 = vrot.slane %v2179, 4
      %v2182 = vor.u32 %v2181, %v2177
      %v2183 = vrot.slane %v2182, 4
      %v2185 = vshll.u32 %v2149, 16
      %v2187 = vrot.slane %v2185, 5
      %v2188 = vsel %vm944, %v2183, %v2187
      %v2190 = vshrl.u32 %v2119, 16
      %v2192 = vrot.slane %v2190, 4
      %v2193 = vshll.u32 %v2119, 16
      %v2195 = vrot.slane %v2193, 5
      %v2196 = vor.u32 %v2192, %v2195
      %v2197 = vrot.slane %v2196, 4
      %v2199 = vshll.u32 %v2120, 16
      %v2201 = vrot.slane %v2199, 5
      %v2202 = vsel %vm944, %v2197, %v2201
      %v2203 = vshrl.u32 %v2120, 16
      %v2205 = vrot.slane %v2203, 4
      %v2206 = vor.u32 %v2205, %v2201
      %v2207 = vrot.slane %v2206, 4
      %v2209 = vshll.u32 %v2150, 16
      %v2211 = vrot.slane %v2209, 5
      %v2212 = vsel %vm944, %v2207, %v2211
      %v2214 = vshrl.u32 %v2121, 16
      %v2216 = vrot.slane %v2214, 4
      %v2217 = vshll.u32 %v2121, 16
      %v2219 = vrot.slane %v2217, 5
      %v2220 = vor.u32 %v2216, %v2219
      %v2221 = vrot.slane %v2220, 4
      %v2223 = vshll.u32 %v2122, 16
      %v2225 = vrot.slane %v2223, 5
      %v2226 = vsel %vm944, %v2221, %v2225
      %v2227 = vshrl.u32 %v2122, 16
      %v2229 = vrot.slane %v2227, 4
      %v2230 = vor.u32 %v2229, %v2225
      %v2231 = vrot.slane %v2230, 4
      %v2233 = vshll.u32 %v2151, 16
      %v2235 = vrot.slane %v2233, 5
      %v2236 = vsel %vm944, %v2231, %v2235
      %v2238 = vshrl.u32 %v2123, 16
      %v2240 = vrot.slane %v2238, 4
      %v2241 = vshll.u32 %v2123, 16
      %v2243 = vrot.slane %v2241, 5
      %v2244 = vor.u32 %v2240, %v2243
      %v2245 = vrot.slane %v2244, 4
      %v2247 = vshll.u32 %v2124, 16
      %v2249 = vrot.slane %v2247, 5
      %v2250 = vsel %vm944, %v2245, %v2249
      %v2251 = vshrl.u32 %v2124, 16
      %v2253 = vrot.slane %v2251, 4
      %v2254 = vor.u32 %v2253, %v2249
      %v2255 = vrot.slane %v2254, 4
      %v2257 = vshll.u32 %v2152, 16
      %v2259 = vrot.slane %v2257, 5
      %v2260 = vsel %vm944, %v2255, %v2259
      %v2262 = vshrl.u32 %v2125, 16
      %v2264 = vrot.slane %v2262, 4
      %v2265 = vshll.u32 %v2125, 16
      %v2267 = vrot.slane %v2265, 5
      %v2268 = vor.u32 %v2264, %v2267
      %v2269 = vrot.slane %v2268, 4
      %v2271 = vshll.u32 %v2126, 16
      %v2273 = vrot.slane %v2271, 5
      %v2274 = vsel %vm944, %v2269, %v2273
      %v2275 = vshrl.u32 %v2126, 16
      %v2277 = vrot.slane %v2275, 4
      %v2278 = vor.u32 %v2277, %v2273
      %v2279 = vrot.slane %v2278, 4
      %v2281 = vshll.u32 %v2153, 16
      %v2283 = vrot.slane %v2281, 5
      %v2284 = vsel %vm944, %v2279, %v2283
      %v2286 = vshrl.u32 %v2127, 16
      %v2288 = vrot.slane %v2286, 4
      %v2289 = vshll.u32 %v2127, 16
      %v2291 = vrot.slane %v2289, 5
      %v2292 = vor.u32 %v2288, %v2291
      %v2293 = vrot.slane %v2292, 4
      %v2295 = vshll.u32 %v2128, 16
      %v2297 = vrot.slane %v2295, 5
      %v2298 = vsel %vm944, %v2293, %v2297
      %v2299 = vshrl.u32 %v2128, 16
      %v2301 = vrot.slane %v2299, 4
      %v2302 = vor.u32 %v2301, %v2297
      %v2303 = vrot.slane %v2302, 4
      %v2305 = vshll.u32 %v2154, 16
      %v2307 = vrot.slane %v2305, 5
      %v2308 = vsel %vm944, %v2303, %v2307
      %v2310 = vshrl.u32 %v2129, 16
      %v2312 = vrot.slane %v2310, 4
      %v2313 = vshll.u32 %v2129, 16
      %v2315 = vrot.slane %v2313, 5
      %v2316 = vor.u32 %v2312, %v2315
      %v2317 = vrot.slane %v2316, 4
      %v2319 = vshll.u32 %v2130, 16
      %v2321 = vrot.slane %v2319, 5
      %v2322 = vsel %vm944, %v2317, %v2321
      %v2323 = vshrl.u32 %v2130, 16
      %v2325 = vrot.slane %v2323, 4
      %v2326 = vor.u32 %v2325, %v2321
      %v2327 = vrot.slane %v2326, 4
      %v2329 = vshll.u32 %v2155, 16
      %v2331 = vrot.slane %v2329, 5
      %v2332 = vsel %vm944, %v2327, %v2331
      %v2334 = vshrl.u32 %v2131, 16
      %v2336 = vrot.slane %v2334, 4
      %v2337 = vshll.u32 %v2131, 16
      %v2339 = vrot.slane %v2337, 5
      %v2340 = vor.u32 %v2336, %v2339
      %v2341 = vrot.slane %v2340, 4
      %v2343 = vshll.u32 %v2132, 16
      %v2345 = vrot.slane %v2343, 5
      %v2346 = vsel %vm944, %v2341, %v2345
      %v2347 = vshrl.u32 %v2132, 16
      %v2349 = vrot.slane %v2347, 4
      %v2350 = vor.u32 %v2349, %v2345
      %v2351 = vrot.slane %v2350, 4
      %v2353 = vshll.u32 %v2156, 16
      %v2355 = vrot.slane %v2353, 5
      %v2356 = vsel %vm944, %v2351, %v2355
      %v2358 = vshrl.u32 %v2133, 16
      %v2360 = vrot.slane %v2358, 4
      %v2361 = vshll.u32 %v2133, 16
      %v2363 = vrot.slane %v2361, 5
      %v2364 = vor.u32 %v2360, %v2363
      %v2365 = vrot.slane %v2364, 4
      %v2367 = vshll.u32 %v2134, 16
      %v2369 = vrot.slane %v2367, 5
      %v2370 = vsel %vm944, %v2365, %v2369
      %v2371 = vshrl.u32 %v2134, 16
      %v2373 = vrot.slane %v2371, 4
      %v2374 = vor.u32 %v2373, %v2369
      %v2375 = vrot.slane %v2374, 4
      %v2377 = vshll.u32 %v2157, 16
      %v2379 = vrot.slane %v2377, 5
      %v2380 = vsel %vm944, %v2375, %v2379
      %v2382 = vshrl.u32 %v2135, 16
      %v2384 = vrot.slane %v2382, 4
      %v2385 = vshll.u32 %v2135, 16
      %v2387 = vrot.slane %v2385, 5
      %v2388 = vor.u32 %v2384, %v2387
      %v2389 = vrot.slane %v2388, 4
      %v2391 = vshll.u32 %v2136, 16
      %v2393 = vrot.slane %v2391, 5
      %v2394 = vsel %vm944, %v2389, %v2393
      %v2395 = vshrl.u32 %v2136, 16
      %v2397 = vrot.slane %v2395, 4
      %v2398 = vor.u32 %v2397, %v2393
      %v2399 = vrot.slane %v2398, 4
      %v2401 = vshll.u32 %v2158, 16
      %v2403 = vrot.slane %v2401, 5
      %v2404 = vsel %vm944, %v2399, %v2403
      %v2406 = vshrl.u32 %v2137, 16
      %v2408 = vrot.slane %v2406, 4
      %v2409 = vshll.u32 %v2137, 16
      %v2411 = vrot.slane %v2409, 5
      %v2412 = vor.u32 %v2408, %v2411
      %v2413 = vrot.slane %v2412, 4
      %v2415 = vshll.u32 %v2138, 16
      %v2417 = vrot.slane %v2415, 5
      %v2418 = vsel %vm944, %v2413, %v2417
      %v2419 = vshrl.u32 %v2138, 16
      %v2421 = vrot.slane %v2419, 4
      %v2422 = vor.u32 %v2421, %v2417
      %v2423 = vrot.slane %v2422, 4
      %v2425 = vshll.u32 %v2159, 16
      %v2427 = vrot.slane %v2425, 5
      %v2428 = vsel %vm944, %v2423, %v2427
      %v2430 = vshrl.u32 %v2139, 16
      %v2432 = vrot.slane %v2430, 4
      %v2433 = vshll.u32 %v2139, 16
      %v2435 = vrot.slane %v2433, 5
      %v2436 = vor.u32 %v2432, %v2435
      %v2437 = vrot.slane %v2436, 4
      %v2439 = vshll.u32 %v2140, 16
      %v2441 = vrot.slane %v2439, 5
      %v2442 = vsel %vm944, %v2437, %v2441
      %v2443 = vshrl.u32 %v2140, 16
      %v2445 = vrot.slane %v2443, 4
      %v2446 = vor.u32 %v2445, %v2441
      %v2447 = vrot.slane %v2446, 4
      %v2449 = vshll.u32 %v2160, 16
      %v2451 = vrot.slane %v2449, 5
      %v2452 = vsel %vm944, %v2447, %v2451
      %v2454 = vshrl.u32 %v2141, 16
      %v2456 = vrot.slane %v2454, 4
      %v2457 = vshll.u32 %v2141, 16
      %v2459 = vrot.slane %v2457, 5
      %v2460 = vor.u32 %v2456, %v2459
      %v2461 = vrot.slane %v2460, 4
      %v2463 = vshll.u32 %v2142, 16
      %v2465 = vrot.slane %v2463, 5
      %v2466 = vsel %vm944, %v2461, %v2465
      %v2467 = vshrl.u32 %v2142, 16
      %v2469 = vrot.slane %v2467, 4
      %v2470 = vor.u32 %v2469, %v2465
      %v2471 = vrot.slane %v2470, 4
      %v2473 = vshll.u32 %v2161, 16
      %v2475 = vrot.slane %v2473, 5
      %v2476 = vsel %vm944, %v2471, %v2475
      %v2478 = vshrl.u32 %v2143, 16
      %v2480 = vrot.slane %v2478, 4
      %v2481 = vshll.u32 %v2143, 16
      %v2483 = vrot.slane %v2481, 5
      %v2484 = vor.u32 %v2480, %v2483
      %v2485 = vrot.slane %v2484, 4
      %v2487 = vshll.u32 %v2144, 16
      %v2489 = vrot.slane %v2487, 5
      %v2490 = vsel %vm944, %v2485, %v2489
      %v2491 = vshrl.u32 %v2144, 16
      %v2493 = vrot.slane %v2491, 4
      %v2494 = vor.u32 %v2493, %v2489
      %v2495 = vrot.slane %v2494, 4
      %v2497 = vshll.u32 %v2162, 16
      %v2499 = vrot.slane %v2497, 5
      %v2500 = vsel %vm944, %v2495, %v2499
      %v2502 = vshrl.u32 %v2145, 16
      %v2504 = vrot.slane %v2502, 4
      %v2505 = vshll.u32 %v2145, 16
      %v2507 = vrot.slane %v2505, 5
      %v2508 = vor.u32 %v2504, %v2507
      %v2509 = vrot.slane %v2508, 4
      %v2511 = vshll.u32 %v2146, 16
      %v2513 = vrot.slane %v2511, 5
      %v2514 = vsel %vm944, %v2509, %v2513
      %v2515 = vshrl.u32 %v2146, 16
      %v2517 = vrot.slane %v2515, 4
      %v2518 = vor.u32 %v2517, %v2513
      %v2519 = vrot.slane %v2518, 4
      %v2521 = vshll.u32 %v2163, 16
      %v2523 = vrot.slane %v2521, 5
      %v2524 = vsel %vm944, %v2519, %v2523
      %v2526 = vshrl.u32 %v2147, 16
      %v2528 = vrot.slane %v2526, 4
      %v2529 = vshll.u32 %v2147, 16
      %v2531 = vrot.slane %v2529, 5
      %v2532 = vor.u32 %v2528, %v2531
      %v2533 = vrot.slane %v2532, 4
      %v2535 = vshll.u32 %v2148, 16
      %v2537 = vrot.slane %v2535, 5
      %v2538 = vsel %vm944, %v2533, %v2537
      %v2539 = vshrl.u32 %v2148, 16
      %v2541 = vrot.slane %v2539, 4
      %v2542 = vor.u32 %v2541, %v2537
      %v2543 = vrot.slane %v2542, 4
      %v2545 = vshll.u32 %v2164, 16
      %v2547 = vrot.slane %v2545, 5
      %v2548 = vsel %vm944, %v2543, %v2547
      %v2549 = vld [vmem:[%s2116] sm:$0xe]
      %v2550 = vld [vmem:[%s2116 + $0xc] sm:$0xe]
      %v2551 = vld [vmem:[%s2116 + $0x18] sm:$0xe]
      %v2552 = vld [vmem:[%s2116 + $0x24] sm:$0xe]
      %v2553 = vld [vmem:[%s2116 + $0x30] sm:$0xe]
      %v2554 = vld [vmem:[%s2116 + $0x3c] sm:$0xe]
      %v2555 = vld [vmem:[%s2116 + $0x48] sm:$0xe]
      %v2556 = vld [vmem:[%s2116 + $0x54] sm:$0xe]
      %v2557 = vld [vmem:[%s2116 + $0x60] sm:$0xe]
      %v2558 = vld [vmem:[%s2116 + $0x6c] sm:$0xe]
      %v2559 = vld [vmem:[%s2116 + $0x78] sm:$0xe]
      %v2560 = vld [vmem:[%s2116 + $0x84] sm:$0xe]
      %v2561 = vld [vmem:[%s2116 + $0x90] sm:$0xe]
      %v2562 = vld [vmem:[%s2116 + $0x9c] sm:$0xe]
      %v2563 = vld [vmem:[%s2116 + $0xa8] sm:$0xe]
      %v2564 = vld [vmem:[%s2116 + $0xb4] sm:$0xe]
      %v2613 = vrot.slane %v2549, 5
      %v2614 = vrot.slane %v2613, 4
      %v2615 = vrot.slane %v2118, 5
      %v2616 = vsel %vm1395, %v2614, %v2615
      %v2617 = vrot.slane %v2615, 4
      %v2618 = vrot.slane %v2149, 5
      %v2619 = vsel %vm1395, %v2617, %v2618
      %v2620 = vrot.slane %v2550, 5
      %v2621 = vrot.slane %v2620, 4
      %v2622 = vrot.slane %v2120, 5
      %v2623 = vsel %vm1395, %v2621, %v2622
      %v2624 = vrot.slane %v2622, 4
      %v2625 = vrot.slane %v2150, 5
      %v2626 = vsel %vm1395, %v2624, %v2625
      %v2627 = vrot.slane %v2551, 5
      %v2628 = vrot.slane %v2627, 4
      %v2629 = vrot.slane %v2122, 5
      %v2630 = vsel %vm1395, %v2628, %v2629
      %v2631 = vrot.slane %v2629, 4
      %v2632 = vrot.slane %v2151, 5
      %v2633 = vsel %vm1395, %v2631, %v2632
      %v2634 = vrot.slane %v2552, 5
      %v2635 = vrot.slane %v2634, 4
      %v2636 = vrot.slane %v2124, 5
      %v2637 = vsel %vm1395, %v2635, %v2636
      %v2638 = vrot.slane %v2636, 4
      %v2639 = vrot.slane %v2152, 5
      %v2640 = vsel %vm1395, %v2638, %v2639
      %v2641 = vrot.slane %v2553, 5
      %v2642 = vrot.slane %v2641, 4
      %v2643 = vrot.slane %v2126, 5
      %v2644 = vsel %vm1395, %v2642, %v2643
      %v2645 = vrot.slane %v2643, 4
      %v2646 = vrot.slane %v2153, 5
      %v2647 = vsel %vm1395, %v2645, %v2646
      %v2648 = vrot.slane %v2554, 5
      %v2649 = vrot.slane %v2648, 4
      %v2650 = vrot.slane %v2128, 5
      %v2651 = vsel %vm1395, %v2649, %v2650
      %v2652 = vrot.slane %v2650, 4
      %v2653 = vrot.slane %v2154, 5
      %v2654 = vsel %vm1395, %v2652, %v2653
      %v2655 = vrot.slane %v2555, 5
      %v2656 = vrot.slane %v2655, 4
      %v2657 = vrot.slane %v2130, 5
      %v2658 = vsel %vm1395, %v2656, %v2657
      %v2659 = vrot.slane %v2657, 4
      %v2660 = vrot.slane %v2155, 5
      %v2661 = vsel %vm1395, %v2659, %v2660
      %v2662 = vrot.slane %v2556, 5
      %v2663 = vrot.slane %v2662, 4
      %v2664 = vrot.slane %v2132, 5
      %v2665 = vsel %vm1395, %v2663, %v2664
      %v2666 = vrot.slane %v2664, 4
      %v2667 = vrot.slane %v2156, 5
      %v2668 = vsel %vm1395, %v2666, %v2667
      %v2669 = vrot.slane %v2557, 5
      %v2670 = vrot.slane %v2669, 4
      %v2671 = vrot.slane %v2134, 5
      %v2672 = vsel %vm1395, %v2670, %v2671
      %v2673 = vrot.slane %v2671, 4
      %v2674 = vrot.slane %v2157, 5
      %v2675 = vsel %vm1395, %v2673, %v2674
      %v2676 = vrot.slane %v2558, 5
      %v2677 = vrot.slane %v2676, 4
      %v2678 = vrot.slane %v2136, 5
      %v2679 = vsel %vm1395, %v2677, %v2678
      %v2680 = vrot.slane %v2678, 4
      %v2681 = vrot.slane %v2158, 5
      %v2682 = vsel %vm1395, %v2680, %v2681
      %v2683 = vrot.slane %v2559, 5
      %v2684 = vrot.slane %v2683, 4
      %v2685 = vrot.slane %v2138, 5
      %v2686 = vsel %vm1395, %v2684, %v2685
      %v2687 = vrot.slane %v2685, 4
      %v2688 = vrot.slane %v2159, 5
      %v2689 = vsel %vm1395, %v2687, %v2688
      %v2690 = vrot.slane %v2560, 5
      %v2691 = vrot.slane %v2690, 4
      %v2692 = vrot.slane %v2140, 5
      %v2693 = vsel %vm1395, %v2691, %v2692
      %v2694 = vrot.slane %v2692, 4
      %v2695 = vrot.slane %v2160, 5
      %v2696 = vsel %vm1395, %v2694, %v2695
      %v2697 = vrot.slane %v2561, 5
      %v2698 = vrot.slane %v2697, 4
      %v2699 = vrot.slane %v2142, 5
      %v2700 = vsel %vm1395, %v2698, %v2699
      %v2701 = vrot.slane %v2699, 4
      %v2702 = vrot.slane %v2161, 5
      %v2703 = vsel %vm1395, %v2701, %v2702
      %v2704 = vrot.slane %v2562, 5
      %v2705 = vrot.slane %v2704, 4
      %v2706 = vrot.slane %v2144, 5
      %v2707 = vsel %vm1395, %v2705, %v2706
      %v2708 = vrot.slane %v2706, 4
      %v2709 = vrot.slane %v2162, 5
      %v2710 = vsel %vm1395, %v2708, %v2709
      %v2711 = vrot.slane %v2563, 5
      %v2712 = vrot.slane %v2711, 4
      %v2713 = vrot.slane %v2146, 5
      %v2714 = vsel %vm1395, %v2712, %v2713
      %v2715 = vrot.slane %v2713, 4
      %v2716 = vrot.slane %v2163, 5
      %v2717 = vsel %vm1395, %v2715, %v2716
      %v2718 = vrot.slane %v2564, 5
      %v2719 = vrot.slane %v2718, 4
      %v2720 = vrot.slane %v2148, 5
      %v2721 = vsel %vm1395, %v2719, %v2720
      %v2722 = vrot.slane %v2720, 4
      %v2723 = vrot.slane %v2164, 5
      %v2724 = vsel %vm1395, %v2722, %v2723
      %v2741 = vunpack.c.l.b16 %v894
      %v2742 = vunpack.c.l.b16 %v895
      %v2743 = vunpack.c.l.b16 %v896
      %v2744 = vunpack.c.l.b16 %v897
      %v2745 = vunpack.c.l.b16 %v898
      %v2746 = vunpack.c.l.b16 %v899
      %v2747 = vunpack.c.l.b16 %v900
      %v2748 = vunpack.c.l.b16 %v901
      %v2749 = vunpack.c.l.b16 %v902
      %v2750 = vunpack.c.l.b16 %v903
      %v2751 = vunpack.c.l.b16 %v904
      %v2752 = vunpack.c.l.b16 %v905
      %v2753 = vunpack.c.l.b16 %v906
      %v2754 = vunpack.c.l.b16 %v907
      %v2755 = vunpack.c.l.b16 %v908
      %v2756 = vunpack.c.l.b16 %v909
      %v2757 = vunpack.c.l.b16 %v910
      %v2758 = vunpack.c.l.b16 %v911
      %v2759 = vunpack.c.l.b16 %v912
      %v2760 = vunpack.c.l.b16 %v913
      %v2761 = vunpack.c.l.b16 %v914
      %v2762 = vunpack.c.l.b16 %v915
      %v2763 = vunpack.c.l.b16 %v916
      %v2764 = vunpack.c.l.b16 %v917
      %v2765 = vunpack.c.l.b16 %v918
      %v2766 = vunpack.c.l.b16 %v919
      %v2767 = vunpack.c.l.b16 %v920
      %v2768 = vunpack.c.l.b16 %v921
      %v2769 = vunpack.c.l.b16 %v922
      %v2770 = vunpack.c.l.b16 %v923
      %v2771 = vunpack.c.l.b16 %v924
      %v2772 = vunpack.c.l.b16 %v925
      %v2773 = vpack.c.b16 %v2742, %v2741
      %v2774 = vpack.c.b16 %v2744, %v2743
      %v2775 = vpack.c.b16 %v2746, %v2745
      %v2776 = vpack.c.b16 %v2748, %v2747
      %v2777 = vpack.c.b16 %v2750, %v2749
      %v2778 = vpack.c.b16 %v2752, %v2751
      %v2779 = vpack.c.b16 %v2754, %v2753
      %v2780 = vpack.c.b16 %v2756, %v2755
      %v2781 = vpack.c.b16 %v2758, %v2757
      %v2782 = vpack.c.b16 %v2760, %v2759
      %v2783 = vpack.c.b16 %v2762, %v2761
      %v2784 = vpack.c.b16 %v2764, %v2763
      %v2785 = vpack.c.b16 %v2766, %v2765
      %v2786 = vpack.c.b16 %v2768, %v2767
      %v2787 = vpack.c.b16 %v2770, %v2769
      %v2788 = vpack.c.b16 %v2772, %v2771
      %v2789 = vunpack.c.l.b16 %v958
      %v2790 = vunpack.c.l.b16 %v968
      %v2791 = vunpack.c.l.b16 %v982
      %v2792 = vunpack.c.l.b16 %v992
      %v2793 = vunpack.c.l.b16 %v1006
      %v2794 = vunpack.c.l.b16 %v1016
      %v2795 = vunpack.c.l.b16 %v1030
      %v2796 = vunpack.c.l.b16 %v1040
      %v2797 = vunpack.c.l.b16 %v1054
      %v2798 = vunpack.c.l.b16 %v1064
      %v2799 = vunpack.c.l.b16 %v1078
      %v2800 = vunpack.c.l.b16 %v1088
      %v2801 = vunpack.c.l.b16 %v1102
      %v2802 = vunpack.c.l.b16 %v1112
      %v2803 = vunpack.c.l.b16 %v1126
      %v2804 = vunpack.c.l.b16 %v1136
      %v2805 = vunpack.c.l.b16 %v1150
      %v2806 = vunpack.c.l.b16 %v1160
      %v2807 = vunpack.c.l.b16 %v1174
      %v2808 = vunpack.c.l.b16 %v1184
      %v2809 = vunpack.c.l.b16 %v1198
      %v2810 = vunpack.c.l.b16 %v1208
      %v2811 = vunpack.c.l.b16 %v1222
      %v2812 = vunpack.c.l.b16 %v1232
      %v2813 = vunpack.c.l.b16 %v1246
      %v2814 = vunpack.c.l.b16 %v1256
      %v2815 = vunpack.c.l.b16 %v1270
      %v2816 = vunpack.c.l.b16 %v1280
      %v2817 = vunpack.c.l.b16 %v1294
      %v2818 = vunpack.c.l.b16 %v1304
      %v2819 = vunpack.c.l.b16 %v1318
      %v2820 = vunpack.c.l.b16 %v1328
      %v2821 = vpack.c.b16 %v2790, %v2789
      %v2822 = vpack.c.b16 %v2792, %v2791
      %v2823 = vpack.c.b16 %v2794, %v2793
      %v2824 = vpack.c.b16 %v2796, %v2795
      %v2825 = vpack.c.b16 %v2798, %v2797
      %v2826 = vpack.c.b16 %v2800, %v2799
      %v2827 = vpack.c.b16 %v2802, %v2801
      %v2828 = vpack.c.b16 %v2804, %v2803
      %v2829 = vpack.c.b16 %v2806, %v2805
      %v2830 = vpack.c.b16 %v2808, %v2807
      %v2831 = vpack.c.b16 %v2810, %v2809
      %v2832 = vpack.c.b16 %v2812, %v2811
      %v2833 = vpack.c.b16 %v2814, %v2813
      %v2834 = vpack.c.b16 %v2816, %v2815
      %v2835 = vpack.c.b16 %v2818, %v2817
      %v2836 = vpack.c.b16 %v2820, %v2819
      %2837 = vrot.lane.b32.xlu0 %v2821, 3
      %v2838 = vpop.permute.xlu0 %2837
      %2839 = vrot.lane.b32.xlu0 %v2822, 3
      %v2840 = vpop.permute.xlu0 %2839
      %2841 = vrot.lane.b32.xlu0 %v2823, 3
      %v2842 = vpop.permute.xlu0 %2841
      %2843 = vrot.lane.b32.xlu0 %v2824, 3
      %v2844 = vpop.permute.xlu0 %2843
      %2845 = vrot.lane.b32.xlu0 %v2825, 3
      %v2846 = vpop.permute.xlu0 %2845
      %2847 = vrot.lane.b32.xlu0 %v2826, 3
      %v2848 = vpop.permute.xlu0 %2847
      %2849 = vrot.lane.b32.xlu0 %v2827, 3
      %v2850 = vpop.permute.xlu0 %2849
      %2851 = vrot.lane.b32.xlu0 %v2828, 3
      %v2852 = vpop.permute.xlu0 %2851
      %2853 = vrot.lane.b32.xlu0 %v2829, 3
      %v2854 = vpop.permute.xlu0 %2853
      %2855 = vrot.lane.b32.xlu0 %v2830, 3
      %v2856 = vpop.permute.xlu0 %2855
      %2857 = vrot.lane.b32.xlu0 %v2831, 3
      %v2858 = vpop.permute.xlu0 %2857
      %2859 = vrot.lane.b32.xlu0 %v2832, 3
      %v2860 = vpop.permute.xlu0 %2859
      %2861 = vrot.lane.b32.xlu0 %v2833, 3
      %v2862 = vpop.permute.xlu0 %2861
      %2863 = vrot.lane.b32.xlu0 %v2834, 3
      %v2864 = vpop.permute.xlu0 %2863
      %2865 = vrot.lane.b32.xlu0 %v2835, 3
      %v2866 = vpop.permute.xlu0 %2865
      %2867 = vrot.lane.b32.xlu0 %v2836, 3
      %v2868 = vpop.permute.xlu0 %2867
      %v2869 = vunpack.c.l.b16 %v1399
      %v2870 = vunpack.c.l.b16 %v1402
      %v2871 = vunpack.c.l.b16 %v1406
      %v2872 = vunpack.c.l.b16 %v1409
      %v2873 = vunpack.c.l.b16 %v1413
      %v2874 = vunpack.c.l.b16 %v1416
      %v2875 = vunpack.c.l.b16 %v1420
      %v2876 = vunpack.c.l.b16 %v1423
      %v2877 = vunpack.c.l.b16 %v1427
      %v2878 = vunpack.c.l.b16 %v1430
      %v2879 = vunpack.c.l.b16 %v1434
      %v2880 = vunpack.c.l.b16 %v1437
      %v2881 = vunpack.c.l.b16 %v1441
      %v2882 = vunpack.c.l.b16 %v1444
      %v2883 = vunpack.c.l.b16 %v1448
      %v2884 = vunpack.c.l.b16 %v1451
      %v2885 = vunpack.c.l.b16 %v1455
      %v2886 = vunpack.c.l.b16 %v1458
      %v2887 = vunpack.c.l.b16 %v1462
      %v2888 = vunpack.c.l.b16 %v1465
      %v2889 = vunpack.c.l.b16 %v1469
      %v2890 = vunpack.c.l.b16 %v1472
      %v2891 = vunpack.c.l.b16 %v1476
      %v2892 = vunpack.c.l.b16 %v1479
      %v2893 = vunpack.c.l.b16 %v1483
      %v2894 = vunpack.c.l.b16 %v1486
      %v2895 = vunpack.c.l.b16 %v1490
      %v2896 = vunpack.c.l.b16 %v1493
      %v2897 = vunpack.c.l.b16 %v1497
      %v2898 = vunpack.c.l.b16 %v1500
      %v2899 = vunpack.c.l.b16 %v1504
      %v2900 = vunpack.c.l.b16 %v1507
      %v2901 = vpack.c.b16 %v2870, %v2869
      %v2902 = vpack.c.b16 %v2872, %v2871
      %v2903 = vpack.c.b16 %v2874, %v2873
      %v2904 = vpack.c.b16 %v2876, %v2875
      %v2905 = vpack.c.b16 %v2878, %v2877
      %v2906 = vpack.c.b16 %v2880, %v2879
      %v2907 = vpack.c.b16 %v2882, %v2881
      %v2908 = vpack.c.b16 %v2884, %v2883
      %v2909 = vpack.c.b16 %v2886, %v2885
      %v2910 = vpack.c.b16 %v2888, %v2887
      %v2911 = vpack.c.b16 %v2890, %v2889
      %v2912 = vpack.c.b16 %v2892, %v2891
      %v2913 = vpack.c.b16 %v2894, %v2893
      %v2914 = vpack.c.b16 %v2896, %v2895
      %v2915 = vpack.c.b16 %v2898, %v2897
      %v2916 = vpack.c.b16 %v2900, %v2899
      %2917 = vrot.lane.b32.xlu0 %v2901, 6
      %v2918 = vpop.permute.xlu0 %2917
      %2919 = vrot.lane.b32.xlu0 %v2902, 6
      %v2920 = vpop.permute.xlu0 %2919
      %2921 = vrot.lane.b32.xlu0 %v2903, 6
      %v2922 = vpop.permute.xlu0 %2921
      %2923 = vrot.lane.b32.xlu0 %v2904, 6
      %v2924 = vpop.permute.xlu0 %2923
      %2925 = vrot.lane.b32.xlu0 %v2905, 6
      %v2926 = vpop.permute.xlu0 %2925
      %2927 = vrot.lane.b32.xlu0 %v2906, 6
      %v2928 = vpop.permute.xlu0 %2927
      %2929 = vrot.lane.b32.xlu0 %v2907, 6
      %v2930 = vpop.permute.xlu0 %2929
      %2931 = vrot.lane.b32.xlu0 %v2908, 6
      %v2932 = vpop.permute.xlu0 %2931
      %2933 = vrot.lane.b32.xlu0 %v2909, 6
      %v2934 = vpop.permute.xlu0 %2933
      %2935 = vrot.lane.b32.xlu0 %v2910, 6
      %v2936 = vpop.permute.xlu0 %2935
      %2937 = vrot.lane.b32.xlu0 %v2911, 6
      %v2938 = vpop.permute.xlu0 %2937
      %2939 = vrot.lane.b32.xlu0 %v2912, 6
      %v2940 = vpop.permute.xlu0 %2939
      %2941 = vrot.lane.b32.xlu0 %v2913, 6
      %v2942 = vpop.permute.xlu0 %2941
      %2943 = vrot.lane.b32.xlu0 %v2914, 6
      %v2944 = vpop.permute.xlu0 %2943
      %2945 = vrot.lane.b32.xlu0 %v2915, 6
      %v2946 = vpop.permute.xlu0 %2945
      %2947 = vrot.lane.b32.xlu0 %v2916, 6
      %v2948 = vpop.permute.xlu0 %2947
      %v2965 = vunpack.c.l.b16 %v1508
      %v2966 = vunpack.c.l.b16 %v1509
      %v2967 = vunpack.c.l.b16 %v1510
      %v2968 = vunpack.c.l.b16 %v1511
      %v2969 = vunpack.c.l.b16 %v1512
      %v2970 = vunpack.c.l.b16 %v1513
      %v2971 = vunpack.c.l.b16 %v1514
      %v2972 = vunpack.c.l.b16 %v1515
      %v2973 = vunpack.c.l.b16 %v1516
      %v2974 = vunpack.c.l.b16 %v1517
      %v2975 = vunpack.c.l.b16 %v1518
      %v2976 = vunpack.c.l.b16 %v1519
      %v2977 = vunpack.c.l.b16 %v1520
      %v2978 = vunpack.c.l.b16 %v1521
      %v2979 = vunpack.c.l.b16 %v1522
      %v2980 = vunpack.c.l.b16 %v1523
      %v2981 = vunpack.c.l.b16 %v1524
      %v2982 = vunpack.c.l.b16 %v1525
      %v2983 = vunpack.c.l.b16 %v1526
      %v2984 = vunpack.c.l.b16 %v1527
      %v2985 = vunpack.c.l.b16 %v1528
      %v2986 = vunpack.c.l.b16 %v1529
      %v2987 = vunpack.c.l.b16 %v1530
      %v2988 = vunpack.c.l.b16 %v1531
      %v2989 = vunpack.c.l.b16 %v1532
      %v2990 = vunpack.c.l.b16 %v1533
      %v2991 = vunpack.c.l.b16 %v1534
      %v2992 = vunpack.c.l.b16 %v1535
      %v2993 = vunpack.c.l.b16 %v1536
      %v2994 = vunpack.c.l.b16 %v1537
      %v2995 = vunpack.c.l.b16 %v1538
      %v2996 = vunpack.c.l.b16 %v1539
      %v2997 = vpack.c.b16 %v2966, %v2965
      %v2998 = vpack.c.b16 %v2968, %v2967
      %v2999 = vpack.c.b16 %v2970, %v2969
      %v3000 = vpack.c.b16 %v2972, %v2971
      %v3001 = vpack.c.b16 %v2974, %v2973
      %v3002 = vpack.c.b16 %v2976, %v2975
      %v3003 = vpack.c.b16 %v2978, %v2977
      %v3004 = vpack.c.b16 %v2980, %v2979
      %v3005 = vpack.c.b16 %v2982, %v2981
      %v3006 = vpack.c.b16 %v2984, %v2983
      %v3007 = vpack.c.b16 %v2986, %v2985
      %v3008 = vpack.c.b16 %v2988, %v2987
      %v3009 = vpack.c.b16 %v2990, %v2989
      %v3010 = vpack.c.b16 %v2992, %v2991
      %v3011 = vpack.c.b16 %v2994, %v2993
      %v3012 = vpack.c.b16 %v2996, %v2995
      %3013 = vrot.lane.b32.xlu0 %v2997, 9
      %v3014 = vpop.permute.xlu0 %3013
      %3015 = vrot.lane.b32.xlu0 %v2998, 9
      %v3016 = vpop.permute.xlu0 %3015
      %3017 = vrot.lane.b32.xlu0 %v2999, 9
      %v3018 = vpop.permute.xlu0 %3017
      %3019 = vrot.lane.b32.xlu0 %v3000, 9
      %v3020 = vpop.permute.xlu0 %3019
      %3021 = vrot.lane.b32.xlu0 %v3001, 9
      %v3022 = vpop.permute.xlu0 %3021
      %3023 = vrot.lane.b32.xlu0 %v3002, 9
      %v3024 = vpop.permute.xlu0 %3023
      %3025 = vrot.lane.b32.xlu0 %v3003, 9
      %v3026 = vpop.permute.xlu0 %3025
      %3027 = vrot.lane.b32.xlu0 %v3004, 9
      %v3028 = vpop.permute.xlu0 %3027
      %3029 = vrot.lane.b32.xlu0 %v3005, 9
      %v3030 = vpop.permute.xlu0 %3029
      %3031 = vrot.lane.b32.xlu0 %v3006, 9
      %v3032 = vpop.permute.xlu0 %3031
      %3033 = vrot.lane.b32.xlu0 %v3007, 9
      %v3034 = vpop.permute.xlu0 %3033
      %3035 = vrot.lane.b32.xlu0 %v3008, 9
      %v3036 = vpop.permute.xlu0 %3035
      %3037 = vrot.lane.b32.xlu0 %v3009, 9
      %v3038 = vpop.permute.xlu0 %3037
      %3039 = vrot.lane.b32.xlu0 %v3010, 9
      %v3040 = vpop.permute.xlu0 %3039
      %3041 = vrot.lane.b32.xlu0 %v3011, 9
      %v3042 = vpop.permute.xlu0 %3041
      %3043 = vrot.lane.b32.xlu0 %v3012, 9
      %v3044 = vpop.permute.xlu0 %3043
      %v3045 = vunpack.c.l.b16 %v1569
      %v3046 = vunpack.c.l.b16 %v1579
      %v3047 = vunpack.c.l.b16 %v1593
      %v3048 = vunpack.c.l.b16 %v1603
      %v3049 = vunpack.c.l.b16 %v1617
      %v3050 = vunpack.c.l.b16 %v1627
      %v3051 = vunpack.c.l.b16 %v1641
      %v3052 = vunpack.c.l.b16 %v1651
      %v3053 = vunpack.c.l.b16 %v1665
      %v3054 = vunpack.c.l.b16 %v1675
      %v3055 = vunpack.c.l.b16 %v1689
      %v3056 = vunpack.c.l.b16 %v1699
      %v3057 = vunpack.c.l.b16 %v1713
      %v3058 = vunpack.c.l.b16 %v1723
      %v3059 = vunpack.c.l.b16 %v1737
      %v3060 = vunpack.c.l.b16 %v1747
      %v3061 = vunpack.c.l.b16 %v1761
      %v3062 = vunpack.c.l.b16 %v1771
      %v3063 = vunpack.c.l.b16 %v1785
      %v3064 = vunpack.c.l.b16 %v1795
      %v3065 = vunpack.c.l.b16 %v1809
      %v3066 = vunpack.c.l.b16 %v1819
      %v3067 = vunpack.c.l.b16 %v1833
      %v3068 = vunpack.c.l.b16 %v1843
      %v3069 = vunpack.c.l.b16 %v1857
      %v3070 = vunpack.c.l.b16 %v1867
      %v3071 = vunpack.c.l.b16 %v1881
      %v3072 = vunpack.c.l.b16 %v1891
      %v3073 = vunpack.c.l.b16 %v1905
      %v3074 = vunpack.c.l.b16 %v1915
      %v3075 = vunpack.c.l.b16 %v1929
      %v3076 = vunpack.c.l.b16 %v1939
      %v3077 = vpack.c.b16 %v3046, %v3045
      %v3078 = vpack.c.b16 %v3048, %v3047
      %v3079 = vpack.c.b16 %v3050, %v3049
      %v3080 = vpack.c.b16 %v3052, %v3051
      %v3081 = vpack.c.b16 %v3054, %v3053
      %v3082 = vpack.c.b16 %v3056, %v3055
      %v3083 = vpack.c.b16 %v3058, %v3057
      %v3084 = vpack.c.b16 %v3060, %v3059
      %v3085 = vpack.c.b16 %v3062, %v3061
      %v3086 = vpack.c.b16 %v3064, %v3063
      %v3087 = vpack.c.b16 %v3066, %v3065
      %v3088 = vpack.c.b16 %v3068, %v3067
      %v3089 = vpack.c.b16 %v3070, %v3069
      %v3090 = vpack.c.b16 %v3072, %v3071
      %v3091 = vpack.c.b16 %v3074, %v3073
      %v3092 = vpack.c.b16 %v3076, %v3075
      %3093 = vrot.lane.b32.xlu0 %v3077, 12
      %v3094 = vpop.permute.xlu0 %3093
      %3095 = vrot.lane.b32.xlu0 %v3078, 12
      %v3096 = vpop.permute.xlu0 %3095
      %3097 = vrot.lane.b32.xlu0 %v3079, 12
      %v3098 = vpop.permute.xlu0 %3097
      %3099 = vrot.lane.b32.xlu0 %v3080, 12
      %v3100 = vpop.permute.xlu0 %3099
      %3101 = vrot.lane.b32.xlu0 %v3081, 12
      %v3102 = vpop.permute.xlu0 %3101
      %3103 = vrot.lane.b32.xlu0 %v3082, 12
      %v3104 = vpop.permute.xlu0 %3103
      %3105 = vrot.lane.b32.xlu0 %v3083, 12
      %v3106 = vpop.permute.xlu0 %3105
      %3107 = vrot.lane.b32.xlu0 %v3084, 12
      %v3108 = vpop.permute.xlu0 %3107
      %3109 = vrot.lane.b32.xlu0 %v3085, 12
      %v3110 = vpop.permute.xlu0 %3109
      %3111 = vrot.lane.b32.xlu0 %v3086, 12
      %v3112 = vpop.permute.xlu0 %3111
      %3113 = vrot.lane.b32.xlu0 %v3087, 12
      %v3114 = vpop.permute.xlu0 %3113
      %3115 = vrot.lane.b32.xlu0 %v3088, 12
      %v3116 = vpop.permute.xlu0 %3115
      %3117 = vrot.lane.b32.xlu0 %v3089, 12
      %v3118 = vpop.permute.xlu0 %3117
      %3119 = vrot.lane.b32.xlu0 %v3090, 12
      %v3120 = vpop.permute.xlu0 %3119
      %3121 = vrot.lane.b32.xlu0 %v3091, 12
      %v3122 = vpop.permute.xlu0 %3121
      %3123 = vrot.lane.b32.xlu0 %v3092, 12
      %v3124 = vpop.permute.xlu0 %3123
      %v3125 = vunpack.c.l.b16 %v2007
      %v3126 = vunpack.c.l.b16 %v2010
      %v3127 = vunpack.c.l.b16 %v2014
      %v3128 = vunpack.c.l.b16 %v2017
      %v3129 = vunpack.c.l.b16 %v2021
      %v3130 = vunpack.c.l.b16 %v2024
      %v3131 = vunpack.c.l.b16 %v2028
      %v3132 = vunpack.c.l.b16 %v2031
      %v3133 = vunpack.c.l.b16 %v2035
      %v3134 = vunpack.c.l.b16 %v2038
      %v3135 = vunpack.c.l.b16 %v2042
      %v3136 = vunpack.c.l.b16 %v2045
      %v3137 = vunpack.c.l.b16 %v2049
      %v3138 = vunpack.c.l.b16 %v2052
      %v3139 = vunpack.c.l.b16 %v2056
      %v3140 = vunpack.c.l.b16 %v2059
      %v3141 = vunpack.c.l.b16 %v2063
      %v3142 = vunpack.c.l.b16 %v2066
      %v3143 = vunpack.c.l.b16 %v2070
      %v3144 = vunpack.c.l.b16 %v2073
      %v3145 = vunpack.c.l.b16 %v2077
      %v3146 = vunpack.c.l.b16 %v2080
      %v3147 = vunpack.c.l.b16 %v2084
      %v3148 = vunpack.c.l.b16 %v2087
      %v3149 = vunpack.c.l.b16 %v2091
      %v3150 = vunpack.c.l.b16 %v2094
      %v3151 = vunpack.c.l.b16 %v2098
      %v3152 = vunpack.c.l.b16 %v2101
      %v3153 = vunpack.c.l.b16 %v2105
      %v3154 = vunpack.c.l.b16 %v2108
      %v3155 = vunpack.c.l.b16 %v2112
      %v3156 = vunpack.c.l.b16 %v2115
      %v3157 = vpack.c.b16 %v3126, %v3125
      %v3158 = vpack.c.b16 %v3128, %v3127
      %v3159 = vpack.c.b16 %v3130, %v3129
      %v3160 = vpack.c.b16 %v3132, %v3131
      %v3161 = vpack.c.b16 %v3134, %v3133
      %v3162 = vpack.c.b16 %v3136, %v3135
      %v3163 = vpack.c.b16 %v3138, %v3137
      %v3164 = vpack.c.b16 %v3140, %v3139
      %v3165 = vpack.c.b16 %v3142, %v3141
      %v3166 = vpack.c.b16 %v3144, %v3143
      %v3167 = vpack.c.b16 %v3146, %v3145
      %v3168 = vpack.c.b16 %v3148, %v3147
      %v3169 = vpack.c.b16 %v3150, %v3149
      %v3170 = vpack.c.b16 %v3152, %v3151
      %v3171 = vpack.c.b16 %v3154, %v3153
      %v3172 = vpack.c.b16 %v3156, %v3155
      %3173 = vrot.lane.b32.xlu0 %v3157, 15
      %v3174 = vpop.permute.xlu0 %3173
      %3175 = vrot.lane.b32.xlu0 %v3158, 15
      %v3176 = vpop.permute.xlu0 %3175
      %3177 = vrot.lane.b32.xlu0 %v3159, 15
      %v3178 = vpop.permute.xlu0 %3177
      %3179 = vrot.lane.b32.xlu0 %v3160, 15
      %v3180 = vpop.permute.xlu0 %3179
      %3181 = vrot.lane.b32.xlu0 %v3161, 15
      %v3182 = vpop.permute.xlu0 %3181
      %3183 = vrot.lane.b32.xlu0 %v3162, 15
      %v3184 = vpop.permute.xlu0 %3183
      %3185 = vrot.lane.b32.xlu0 %v3163, 15
      %v3186 = vpop.permute.xlu0 %3185
      %3187 = vrot.lane.b32.xlu0 %v3164, 15
      %v3188 = vpop.permute.xlu0 %3187
      %3189 = vrot.lane.b32.xlu0 %v3165, 15
      %v3190 = vpop.permute.xlu0 %3189
      %3191 = vrot.lane.b32.xlu0 %v3166, 15
      %v3192 = vpop.permute.xlu0 %3191
      %3193 = vrot.lane.b32.xlu0 %v3167, 15
      %v3194 = vpop.permute.xlu0 %3193
      %3195 = vrot.lane.b32.xlu0 %v3168, 15
      %v3196 = vpop.permute.xlu0 %3195
      %3197 = vrot.lane.b32.xlu0 %v3169, 15
      %v3198 = vpop.permute.xlu0 %3197
      %3199 = vrot.lane.b32.xlu0 %v3170, 15
      %v3200 = vpop.permute.xlu0 %3199
      %3201 = vrot.lane.b32.xlu0 %v3171, 15
      %v3202 = vpop.permute.xlu0 %3201
      %3203 = vrot.lane.b32.xlu0 %v3172, 15
      %v3204 = vpop.permute.xlu0 %3203
      %v3221 = vunpack.c.l.b16 %v2117
      %v3222 = vunpack.c.l.b16 %v2118
      %v3223 = vunpack.c.l.b16 %v2119
      %v3224 = vunpack.c.l.b16 %v2120
      %v3225 = vunpack.c.l.b16 %v2121
      %v3226 = vunpack.c.l.b16 %v2122
      %v3227 = vunpack.c.l.b16 %v2123
      %v3228 = vunpack.c.l.b16 %v2124
      %v3229 = vunpack.c.l.b16 %v2125
      %v3230 = vunpack.c.l.b16 %v2126
      %v3231 = vunpack.c.l.b16 %v2127
      %v3232 = vunpack.c.l.b16 %v2128
      %v3233 = vunpack.c.l.b16 %v2129
      %v3234 = vunpack.c.l.b16 %v2130
      %v3235 = vunpack.c.l.b16 %v2131
      %v3236 = vunpack.c.l.b16 %v2132
      %v3237 = vunpack.c.l.b16 %v2133
      %v3238 = vunpack.c.l.b16 %v2134
      %v3239 = vunpack.c.l.b16 %v2135
      %v3240 = vunpack.c.l.b16 %v2136
      %v3241 = vunpack.c.l.b16 %v2137
      %v3242 = vunpack.c.l.b16 %v2138
      %v3243 = vunpack.c.l.b16 %v2139
      %v3244 = vunpack.c.l.b16 %v2140
      %v3245 = vunpack.c.l.b16 %v2141
      %v3246 = vunpack.c.l.b16 %v2142
      %v3247 = vunpack.c.l.b16 %v2143
      %v3248 = vunpack.c.l.b16 %v2144
      %v3249 = vunpack.c.l.b16 %v2145
      %v3250 = vunpack.c.l.b16 %v2146
      %v3251 = vunpack.c.l.b16 %v2147
      %v3252 = vunpack.c.l.b16 %v2148
      %v3253 = vpack.c.b16 %v3222, %v3221
      %v3254 = vpack.c.b16 %v3224, %v3223
      %v3255 = vpack.c.b16 %v3226, %v3225
      %v3256 = vpack.c.b16 %v3228, %v3227
      %v3257 = vpack.c.b16 %v3230, %v3229
      %v3258 = vpack.c.b16 %v3232, %v3231
      %v3259 = vpack.c.b16 %v3234, %v3233
      %v3260 = vpack.c.b16 %v3236, %v3235
      %v3261 = vpack.c.b16 %v3238, %v3237
      %v3262 = vpack.c.b16 %v3240, %v3239
      %v3263 = vpack.c.b16 %v3242, %v3241
      %v3264 = vpack.c.b16 %v3244, %v3243
      %v3265 = vpack.c.b16 %v3246, %v3245
      %v3266 = vpack.c.b16 %v3248, %v3247
      %v3267 = vpack.c.b16 %v3250, %v3249
      %v3268 = vpack.c.b16 %v3252, %v3251
      %3269 = vrot.lane.b32.xlu0 %v3253, 18
      %v3270 = vpop.permute.xlu0 %3269
      %3271 = vrot.lane.b32.xlu0 %v3254, 18
      %v3272 = vpop.permute.xlu0 %3271
      %3273 = vrot.lane.b32.xlu0 %v3255, 18
      %v3274 = vpop.permute.xlu0 %3273
      %3275 = vrot.lane.b32.xlu0 %v3256, 18
      %v3276 = vpop.permute.xlu0 %3275
      %3277 = vrot.lane.b32.xlu0 %v3257, 18
      %v3278 = vpop.permute.xlu0 %3277
      %3279 = vrot.lane.b32.xlu0 %v3258, 18
      %v3280 = vpop.permute.xlu0 %3279
      %3281 = vrot.lane.b32.xlu0 %v3259, 18
      %v3282 = vpop.permute.xlu0 %3281
      %3283 = vrot.lane.b32.xlu0 %v3260, 18
      %v3284 = vpop.permute.xlu0 %3283
      %3285 = vrot.lane.b32.xlu0 %v3261, 18
      %v3286 = vpop.permute.xlu0 %3285
      %3287 = vrot.lane.b32.xlu0 %v3262, 18
      %v3288 = vpop.permute.xlu0 %3287
      %3289 = vrot.lane.b32.xlu0 %v3263, 18
      %v3290 = vpop.permute.xlu0 %3289
      %3291 = vrot.lane.b32.xlu0 %v3264, 18
      %v3292 = vpop.permute.xlu0 %3291
      %3293 = vrot.lane.b32.xlu0 %v3265, 18
      %v3294 = vpop.permute.xlu0 %3293
      %3295 = vrot.lane.b32.xlu0 %v3266, 18
      %v3296 = vpop.permute.xlu0 %3295
      %3297 = vrot.lane.b32.xlu0 %v3267, 18
      %v3298 = vpop.permute.xlu0 %3297
      %3299 = vrot.lane.b32.xlu0 %v3268, 18
      %v3300 = vpop.permute.xlu0 %3299
      %v3301 = vunpack.c.l.b16 %v2178
      %v3302 = vunpack.c.l.b16 %v2188
      %v3303 = vunpack.c.l.b16 %v2202
      %v3304 = vunpack.c.l.b16 %v2212
      %v3305 = vunpack.c.l.b16 %v2226
      %v3306 = vunpack.c.l.b16 %v2236
      %v3307 = vunpack.c.l.b16 %v2250
      %v3308 = vunpack.c.l.b16 %v2260
      %v3309 = vunpack.c.l.b16 %v2274
      %v3310 = vunpack.c.l.b16 %v2284
      %v3311 = vunpack.c.l.b16 %v2298
      %v3312 = vunpack.c.l.b16 %v2308
      %v3313 = vunpack.c.l.b16 %v2322
      %v3314 = vunpack.c.l.b16 %v2332
      %v3315 = vunpack.c.l.b16 %v2346
      %v3316 = vunpack.c.l.b16 %v2356
      %v3317 = vunpack.c.l.b16 %v2370
      %v3318 = vunpack.c.l.b16 %v2380
      %v3319 = vunpack.c.l.b16 %v2394
      %v3320 = vunpack.c.l.b16 %v2404
      %v3321 = vunpack.c.l.b16 %v2418
      %v3322 = vunpack.c.l.b16 %v2428
      %v3323 = vunpack.c.l.b16 %v2442
      %v3324 = vunpack.c.l.b16 %v2452
      %v3325 = vunpack.c.l.b16 %v2466
      %v3326 = vunpack.c.l.b16 %v2476
      %v3327 = vunpack.c.l.b16 %v2490
      %v3328 = vunpack.c.l.b16 %v2500
      %v3329 = vunpack.c.l.b16 %v2514
      %v3330 = vunpack.c.l.b16 %v2524
      %v3331 = vunpack.c.l.b16 %v2538
      %v3332 = vunpack.c.l.b16 %v2548
      %v3333 = vpack.c.b16 %v3302, %v3301
      %v3334 = vpack.c.b16 %v3304, %v3303
      %v3335 = vpack.c.b16 %v3306, %v3305
      %v3336 = vpack.c.b16 %v3308, %v3307
      %v3337 = vpack.c.b16 %v3310, %v3309
      %v3338 = vpack.c.b16 %v3312, %v3311
      %v3339 = vpack.c.b16 %v3314, %v3313
      %v3340 = vpack.c.b16 %v3316, %v3315
      %v3341 = vpack.c.b16 %v3318, %v3317
      %v3342 = vpack.c.b16 %v3320, %v3319
      %v3343 = vpack.c.b16 %v3322, %v3321
      %v3344 = vpack.c.b16 %v3324, %v3323
      %v3345 = vpack.c.b16 %v3326, %v3325
      %v3346 = vpack.c.b16 %v3328, %v3327
      %v3347 = vpack.c.b16 %v3330, %v3329
      %v3348 = vpack.c.b16 %v3332, %v3331
      %3349 = vrot.lane.b32.xlu0 %v3333, 21
      %v3350 = vpop.permute.xlu0 %3349
      %3351 = vrot.lane.b32.xlu0 %v3334, 21
      %v3352 = vpop.permute.xlu0 %3351
      %3353 = vrot.lane.b32.xlu0 %v3335, 21
      %v3354 = vpop.permute.xlu0 %3353
      %3355 = vrot.lane.b32.xlu0 %v3336, 21
      %v3356 = vpop.permute.xlu0 %3355
      %3357 = vrot.lane.b32.xlu0 %v3337, 21
      %v3358 = vpop.permute.xlu0 %3357
      %3359 = vrot.lane.b32.xlu0 %v3338, 21
      %v3360 = vpop.permute.xlu0 %3359
      %3361 = vrot.lane.b32.xlu0 %v3339, 21
      %v3362 = vpop.permute.xlu0 %3361
      %3363 = vrot.lane.b32.xlu0 %v3340, 21
      %v3364 = vpop.permute.xlu0 %3363
      %3365 = vrot.lane.b32.xlu0 %v3341, 21
      %v3366 = vpop.permute.xlu0 %3365
      %3367 = vrot.lane.b32.xlu0 %v3342, 21
      %v3368 = vpop.permute.xlu0 %3367
      %3369 = vrot.lane.b32.xlu0 %v3343, 21
      %v3370 = vpop.permute.xlu0 %3369
      %3371 = vrot.lane.b32.xlu0 %v3344, 21
      %v3372 = vpop.permute.xlu0 %3371
      %3373 = vrot.lane.b32.xlu0 %v3345, 21
      %v3374 = vpop.permute.xlu0 %3373
      %3375 = vrot.lane.b32.xlu0 %v3346, 21
      %v3376 = vpop.permute.xlu0 %3375
      %3377 = vrot.lane.b32.xlu0 %v3347, 21
      %v3378 = vpop.permute.xlu0 %3377
      %3379 = vrot.lane.b32.xlu0 %v3348, 21
      %v3380 = vpop.permute.xlu0 %3379
      %v3381 = vunpack.c.l.b16 %v2616
      %v3382 = vunpack.c.l.b16 %v2619
      %v3383 = vunpack.c.l.b16 %v2623
      %v3384 = vunpack.c.l.b16 %v2626
      %v3385 = vunpack.c.l.b16 %v2630
      %v3386 = vunpack.c.l.b16 %v2633
      %v3387 = vunpack.c.l.b16 %v2637
      %v3388 = vunpack.c.l.b16 %v2640
      %v3389 = vunpack.c.l.b16 %v2644
      %v3390 = vunpack.c.l.b16 %v2647
      %v3391 = vunpack.c.l.b16 %v2651
      %v3392 = vunpack.c.l.b16 %v2654
      %v3393 = vunpack.c.l.b16 %v2658
      %v3394 = vunpack.c.l.b16 %v2661
      %v3395 = vunpack.c.l.b16 %v2665
      %v3396 = vunpack.c.l.b16 %v2668
      %v3397 = vunpack.c.l.b16 %v2672
      %v3398 = vunpack.c.l.b16 %v2675
      %v3399 = vunpack.c.l.b16 %v2679
      %v3400 = vunpack.c.l.b16 %v2682
      %v3401 = vunpack.c.l.b16 %v2686
      %v3402 = vunpack.c.l.b16 %v2689
      %v3403 = vunpack.c.l.b16 %v2693
      %v3404 = vunpack.c.l.b16 %v2696
      %v3405 = vunpack.c.l.b16 %v2700
      %v3406 = vunpack.c.l.b16 %v2703
      %v3407 = vunpack.c.l.b16 %v2707
      %v3408 = vunpack.c.l.b16 %v2710
      %v3409 = vunpack.c.l.b16 %v2714
      %v3410 = vunpack.c.l.b16 %v2717
      %v3411 = vunpack.c.l.b16 %v2721
      %v3412 = vunpack.c.l.b16 %v2724
      %v3413 = vpack.c.b16 %v3382, %v3381
      %v3414 = vpack.c.b16 %v3384, %v3383
      %v3415 = vpack.c.b16 %v3386, %v3385
      %v3416 = vpack.c.b16 %v3388, %v3387
      %v3417 = vpack.c.b16 %v3390, %v3389
      %v3418 = vpack.c.b16 %v3392, %v3391
      %v3419 = vpack.c.b16 %v3394, %v3393
      %v3420 = vpack.c.b16 %v3396, %v3395
      %v3421 = vpack.c.b16 %v3398, %v3397
      %v3422 = vpack.c.b16 %v3400, %v3399
      %v3423 = vpack.c.b16 %v3402, %v3401
      %v3424 = vpack.c.b16 %v3404, %v3403
      %v3425 = vpack.c.b16 %v3406, %v3405
      %v3426 = vpack.c.b16 %v3408, %v3407
      %v3427 = vpack.c.b16 %v3410, %v3409
      %v3428 = vpack.c.b16 %v3412, %v3411
      %3429 = vrot.lane.b32.xlu0 %v3413, 24
      %v3430 = vpop.permute.xlu0 %3429
      %3431 = vrot.lane.b32.xlu0 %v3414, 24
      %v3432 = vpop.permute.xlu0 %3431
      %3433 = vrot.lane.b32.xlu0 %v3415, 24
      %v3434 = vpop.permute.xlu0 %3433
      %3435 = vrot.lane.b32.xlu0 %v3416, 24
      %v3436 = vpop.permute.xlu0 %3435
      %3437 = vrot.lane.b32.xlu0 %v3417, 24
      %v3438 = vpop.permute.xlu0 %3437
      %3439 = vrot.lane.b32.xlu0 %v3418, 24
      %v3440 = vpop.permute.xlu0 %3439
      %3441 = vrot.lane.b32.xlu0 %v3419, 24
      %v3442 = vpop.permute.xlu0 %3441
      %3443 = vrot.lane.b32.xlu0 %v3420, 24
      %v3444 = vpop.permute.xlu0 %3443
      %3445 = vrot.lane.b32.xlu0 %v3421, 24
      %v3446 = vpop.permute.xlu0 %3445
      %3447 = vrot.lane.b32.xlu0 %v3422, 24
      %v3448 = vpop.permute.xlu0 %3447
      %3449 = vrot.lane.b32.xlu0 %v3423, 24
      %v3450 = vpop.permute.xlu0 %3449
      %3451 = vrot.lane.b32.xlu0 %v3424, 24
      %v3452 = vpop.permute.xlu0 %3451
      %3453 = vrot.lane.b32.xlu0 %v3425, 24
      %v3454 = vpop.permute.xlu0 %3453
      %3455 = vrot.lane.b32.xlu0 %v3426, 24
      %v3456 = vpop.permute.xlu0 %3455
      %3457 = vrot.lane.b32.xlu0 %v3427, 24
      %v3458 = vpop.permute.xlu0 %3457
      %3459 = vrot.lane.b32.xlu0 %v3428, 24
      %v3460 = vpop.permute.xlu0 %3459
      %vm3461 = vcmask 23552
      %v3464 = vsel %vm3461, %v2773, %v2838
      %v3467 = vsel %vm3461, %v2774, %v2840
      %v3470 = vsel %vm3461, %v2775, %v2842
      %v3473 = vsel %vm3461, %v2776, %v2844
      %v3476 = vsel %vm3461, %v2777, %v2846
      %v3479 = vsel %vm3461, %v2778, %v2848
      %v3482 = vsel %vm3461, %v2779, %v2850
      %v3485 = vsel %vm3461, %v2780, %v2852
      %v3488 = vsel %vm3461, %v2781, %v2854
      %v3491 = vsel %vm3461, %v2782, %v2856
      %v3494 = vsel %vm3461, %v2783, %v2858
      %v3497 = vsel %vm3461, %v2784, %v2860
      %v3500 = vsel %vm3461, %v2785, %v2862
      %v3503 = vsel %vm3461, %v2786, %v2864
      %v3506 = vsel %vm3461, %v2787, %v2866
      %v3509 = vsel %vm3461, %v2788, %v2868
      %vm3510 = vcmask 48128
      %v3512 = vsel %vm3510, %v3464, %v2918
      %v3514 = vsel %vm3510, %v3467, %v2920
      %v3516 = vsel %vm3510, %v3470, %v2922
      %v3518 = vsel %vm3510, %v3473, %v2924
      %v3520 = vsel %vm3510, %v3476, %v2926
      %v3522 = vsel %vm3510, %v3479, %v2928
      %v3524 = vsel %vm3510, %v3482, %v2930
      %v3526 = vsel %vm3510, %v3485, %v2932
      %v3528 = vsel %vm3510, %v3488, %v2934
      %v3530 = vsel %vm3510, %v3491, %v2936
      %v3532 = vsel %vm3510, %v3494, %v2938
      %v3534 = vsel %vm3510, %v3497, %v2940
      %v3536 = vsel %vm3510, %v3500, %v2942
      %v3538 = vsel %vm3510, %v3503, %v2944
      %v3540 = vsel %vm3510, %v3506, %v2946
      %v3542 = vsel %vm3510, %v3509, %v2948
      %vm3543 = vcmask 72704
      %v3545 = vsel %vm3543, %v3512, %v3014
      %v3547 = vsel %vm3543, %v3514, %v3016
      %v3549 = vsel %vm3543, %v3516, %v3018
      %v3551 = vsel %vm3543, %v3518, %v3020
      %v3553 = vsel %vm3543, %v3520, %v3022
      %v3555 = vsel %vm3543, %v3522, %v3024
      %v3557 = vsel %vm3543, %v3524, %v3026
      %v3559 = vsel %vm3543, %v3526, %v3028
      %v3561 = vsel %vm3543, %v3528, %v3030
      %v3563 = vsel %vm3543, %v3530, %v3032
      %v3565 = vsel %vm3543, %v3532, %v3034
      %v3567 = vsel %vm3543, %v3534, %v3036
      %v3569 = vsel %vm3543, %v3536, %v3038
      %v3571 = vsel %vm3543, %v3538, %v3040
      %v3573 = vsel %vm3543, %v3540, %v3042
      %v3575 = vsel %vm3543, %v3542, %v3044
      %vm3576 = vcmask 97280
      %v3578 = vsel %vm3576, %v3545, %v3094
      %v3580 = vsel %vm3576, %v3547, %v3096
      %v3582 = vsel %vm3576, %v3549, %v3098
      %v3584 = vsel %vm3576, %v3551, %v3100
      %v3586 = vsel %vm3576, %v3553, %v3102
      %v3588 = vsel %vm3576, %v3555, %v3104
      %v3590 = vsel %vm3576, %v3557, %v3106
      %v3592 = vsel %vm3576, %v3559, %v3108
      %v3594 = vsel %vm3576, %v3561, %v3110
      %v3596 = vsel %vm3576, %v3563, %v3112
      %v3598 = vsel %vm3576, %v3565, %v3114
      %v3600 = vsel %vm3576, %v3567, %v3116
      %v3602 = vsel %vm3576, %v3569, %v3118
      %v3604 = vsel %vm3576, %v3571, %v3120
      %v3606 = vsel %vm3576, %v3573, %v3122
      %v3608 = vsel %vm3576, %v3575, %v3124
      %vm3609 = vcmask 121856
      %v3611 = vsel %vm3609, %v3578, %v3174
      %v3613 = vsel %vm3609, %v3580, %v3176
      %v3615 = vsel %vm3609, %v3582, %v3178
      %v3617 = vsel %vm3609, %v3584, %v3180
      %v3619 = vsel %vm3609, %v3586, %v3182
      %v3621 = vsel %vm3609, %v3588, %v3184
      %v3623 = vsel %vm3609, %v3590, %v3186
      %v3625 = vsel %vm3609, %v3592, %v3188
      %v3627 = vsel %vm3609, %v3594, %v3190
      %v3629 = vsel %vm3609, %v3596, %v3192
      %v3631 = vsel %vm3609, %v3598, %v3194
      %v3633 = vsel %vm3609, %v3600, %v3196
      %v3635 = vsel %vm3609, %v3602, %v3198
      %v3637 = vsel %vm3609, %v3604, %v3200
      %v3639 = vsel %vm3609, %v3606, %v3202
      %v3641 = vsel %vm3609, %v3608, %v3204
      %vm3642 = vcmask 146432
      %v3644 = vsel %vm3642, %v3611, %v3270
      %v3646 = vsel %vm3642, %v3613, %v3272
      %v3648 = vsel %vm3642, %v3615, %v3274
      %v3650 = vsel %vm3642, %v3617, %v3276
      %v3652 = vsel %vm3642, %v3619, %v3278
      %v3654 = vsel %vm3642, %v3621, %v3280
      %v3656 = vsel %vm3642, %v3623, %v3282
      %v3658 = vsel %vm3642, %v3625, %v3284
      %v3660 = vsel %vm3642, %v3627, %v3286
      %v3662 = vsel %vm3642, %v3629, %v3288
      %v3664 = vsel %vm3642, %v3631, %v3290
      %v3666 = vsel %vm3642, %v3633, %v3292
      %v3668 = vsel %vm3642, %v3635, %v3294
      %v3670 = vsel %vm3642, %v3637, %v3296
      %v3672 = vsel %vm3642, %v3639, %v3298
      %v3674 = vsel %vm3642, %v3641, %v3300
      %vm3675 = vcmask 171008
      %v3677 = vsel %vm3675, %v3644, %v3350
      %v3679 = vsel %vm3675, %v3646, %v3352
      %v3681 = vsel %vm3675, %v3648, %v3354
      %v3683 = vsel %vm3675, %v3650, %v3356
      %v3685 = vsel %vm3675, %v3652, %v3358
      %v3687 = vsel %vm3675, %v3654, %v3360
      %v3689 = vsel %vm3675, %v3656, %v3362
      %v3691 = vsel %vm3675, %v3658, %v3364
      %v3693 = vsel %vm3675, %v3660, %v3366
      %v3695 = vsel %vm3675, %v3662, %v3368
      %v3697 = vsel %vm3675, %v3664, %v3370
      %v3699 = vsel %vm3675, %v3666, %v3372
      %v3701 = vsel %vm3675, %v3668, %v3374
      %v3703 = vsel %vm3675, %v3670, %v3376
      %v3705 = vsel %vm3675, %v3672, %v3378
      %v3707 = vsel %vm3675, %v3674, %v3380
      %vm3708 = vcmask 195584
      %v3710 = vsel %vm3708, %v3677, %v3430
      %v3712 = vsel %vm3708, %v3679, %v3432
      %v3714 = vsel %vm3708, %v3681, %v3434
      %v3716 = vsel %vm3708, %v3683, %v3436
      %v3718 = vsel %vm3708, %v3685, %v3438
      %v3720 = vsel %vm3708, %v3687, %v3440
      %v3722 = vsel %vm3708, %v3689, %v3442
      %v3724 = vsel %vm3708, %v3691, %v3444
      %v3726 = vsel %vm3708, %v3693, %v3446
      %v3728 = vsel %vm3708, %v3695, %v3448
      %v3730 = vsel %vm3708, %v3697, %v3450
      %v3732 = vsel %vm3708, %v3699, %v3452
      %v3734 = vsel %vm3708, %v3701, %v3454
      %v3736 = vsel %vm3708, %v3703, %v3456
      %v3738 = vsel %vm3708, %v3705, %v3458
      %v3740 = vsel %vm3708, %v3707, %v3460
      %v3741 = vld [vmem:[%s1] sm:$0xf]
      %v3742 = vld [vmem:[%s1 + $0x4] sm:$0xf]
      %v3743 = vld [vmem:[%s1 + $0x8] sm:$0xf]
      %v3744 = vld [vmem:[%s1 + $0xc] sm:$0x3]
      %v3745 = vld [vmem:[%s2] sm:$0x1]
      %v3747 = vlaneseq
      %v3748 = vshrl.u32 %v3747, 7
      %v3749 = vsub.s32 0, %v3748
      %v3750 = vrot.slane %v3745, %v3749
      %v3756 = vunpack.c.l.b16 %v3741
      %v3757 = vunpack.c.l.b16 %v3742
      %v3758 = vunpack.c.l.b16 %v3743
      %v3759 = vunpack.c.l.b16 %v3744
      %v3760 = vpack.c.b16 %v3757, %v3756
      %v3761 = vpack.c.b16 %v3759, %v3758
      %vm3763 = vcmask 220160
      %v3764 = vsel %vm3763, %v3710, 0
      %v3766 = vsel %vm3763, %v3712, 0
      %v3768 = vsel %vm3763, %v3714, 0
      %v3770 = vsel %vm3763, %v3716, 0
      %v3772 = vsel %vm3763, %v3718, 0
      %v3774 = vsel %vm3763, %v3720, 0
      %v3776 = vsel %vm3763, %v3722, 0
      %v3778 = vsel %vm3763, %v3724, 0
      %v3780 = vsel %vm3763, %v3726, 0
      %v3782 = vsel %vm3763, %v3728, 0
      %v3784 = vsel %vm3763, %v3730, 0
      %v3786 = vsel %vm3763, %v3732, 0
      %v3788 = vsel %vm3763, %v3734, 0
      %v3790 = vsel %vm3763, %v3736, 0
      %v3792 = vsel %vm3763, %v3738, 0
      %v3794 = vsel %vm3763, %v3740, 0
      %vm3796 = vcmask 1044480
      %vm3797 = vcmask 1045504
      %v3798 = vsel %vm3796, 4294967295, 65535
      %v3799 = vsel %vm3797, %v3798, 0
      %v3801 = vand.u32 %v3761, %v3799
      %3803 = vmatprep.subr.bf16.mxu0 0
      %3804 = vmatpush1.bf16.msra.mxu0 %v3760
      %3805 = vmatprep.subr.bf16.mxu0 0
      %3806 = vmatpush1.bf16.msra.mxu0 %v3801
      %3807 = vmatprep.subr.bf16.mxu0 0
      %3808 = vmatpush1.bf16.msra.mxu0 0
      %3809 = vmatprep.subr.bf16.mxu0 0
      %3810 = vmatpush1.bf16.msra.mxu0 0
      %3811 = vmatprep.subr.bf16.mxu0 0
      %3812 = vmatpush1.bf16.msra.mxu0 0
      %3813 = vmatprep.subr.bf16.mxu0 0
      %3814 = vmatpush1.bf16.msra.mxu0 0
      %3815 = vmatprep.subr.bf16.mxu0 0
      %3816 = vmatpush1.bf16.msra.mxu0 0
      %3817 = vmatprep.subr.bf16.mxu0 0
      %3818 = vmatpush1.bf16.msra.mxu0 0
      %3819 = vmatprep.subr.bf16.mxu0 0
      %3820 = vmatpush1.bf16.msra.mxu0 0
      %3821 = vmatprep.subr.bf16.mxu0 0
      %3822 = vmatpush1.bf16.msra.mxu0 0
      %3823 = vmatprep.subr.bf16.mxu0 0
      %3824 = vmatpush1.bf16.msra.mxu0 0
      %3825 = vmatprep.subr.bf16.mxu0 0
      %3826 = vmatpush1.bf16.msra.mxu0 0
      %3827 = vmatprep.subr.bf16.mxu0 0
      %3828 = vmatpush1.bf16.msra.mxu0 0
      %3829 = vmatprep.subr.bf16.mxu0 0
      %3830 = vmatpush1.bf16.msra.mxu0 0
      %3831 = vmatprep.subr.bf16.mxu0 0
      %3832 = vmatpush1.bf16.msra.mxu0 0
      %3833 = vmatprep.subr.bf16.mxu0 0
      %3834 = vmatpush1.bf16.msra.mxu0 0
      %3835 = vmatprep.mubr.bf16.mxu0 0
      %3836 = vmatmul.mubr.bf16.gmra.mrb[0].mxu0 %v3764
      %v3837 = vpop.f32.mrb[0].mxu0
      %v3838 = vadd.f32 %v3750, %v3837
      %v3839 = vpop.f32.mrb[0].mxu0
      %v3840 = vpop.f32.mrb[0].mxu0
      %v3841 = vadd.f32 %v3750, %v3840
      %v3842 = vpop.f32.mrb[0].mxu0
      %3843 = vmatprep.mubr.bf16.mxu0 0
      %3844 = vmatmul.mubr.bf16.gmra.mrb[0].mxu0 %v3766
      %v3845 = vpop.f32.mrb[0].mxu0
      %v3846 = vadd.f32 %v3750, %v3845
      %v3847 = vpop.f32.mrb[0].mxu0
      %v3848 = vpop.f32.mrb[0].mxu0
      %v3849 = vadd.f32 %v3750, %v3848
      %v3850 = vpop.f32.mrb[0].mxu0
      %3851 = vmatprep.mubr.bf16.mxu0 0
      %3852 = vmatmul.mubr.bf16.gmra.mrb[0].mxu0 %v3768
      %v3853 = vpop.f32.mrb[0].mxu0
      %v3854 = vadd.f32 %v3750, %v3853
      %v3855 = vpop.f32.mrb[0].mxu0
      %v3856 = vpop.f32.mrb[0].mxu0
      %v3857 = vadd.f32 %v3750, %v3856
      %v3858 = vpop.f32.mrb[0].mxu0
      %3859 = vmatprep.mubr.bf16.mxu0 0
      %3860 = vmatmul.mubr.bf16.gmra.mrb[0].mxu0 %v3770
      %v3861 = vpop.f32.mrb[0].mxu0
      %v3862 = vadd.f32 %v3750, %v3861
      %v3863 = vpop.f32.mrb[0].mxu0
      %v3864 = vpop.f32.mrb[0].mxu0
      %v3865 = vadd.f32 %v3750, %v3864
      %v3866 = vpop.f32.mrb[0].mxu0
      %3867 = vmatprep.mubr.bf16.mxu0 0
      %3868 = vmatmul.mubr.bf16.gmra.mrb[0].mxu0 %v3772
      %v3869 = vpop.f32.mrb[0].mxu0
      %v3870 = vadd.f32 %v3750, %v3869
      %v3871 = vpop.f32.mrb[0].mxu0
      %v3872 = vpop.f32.mrb[0].mxu0
      %v3873 = vadd.f32 %v3750, %v3872
      %v3874 = vpop.f32.mrb[0].mxu0
      %3875 = vmatprep.mubr.bf16.mxu0 0
      %3876 = vmatmul.mubr.bf16.gmra.mrb[0].mxu0 %v3774
      %v3877 = vpop.f32.mrb[0].mxu0
      %v3878 = vadd.f32 %v3750, %v3877
      %v3879 = vpop.f32.mrb[0].mxu0
      %v3880 = vpop.f32.mrb[0].mxu0
      %v3881 = vadd.f32 %v3750, %v3880
      %v3882 = vpop.f32.mrb[0].mxu0
      %3883 = vmatprep.mubr.bf16.mxu0 0
      %3884 = vmatmul.mubr.bf16.gmra.mrb[0].mxu0 %v3776
      %v3885 = vpop.f32.mrb[0].mxu0
      %v3886 = vadd.f32 %v3750, %v3885
      %v3887 = vpop.f32.mrb[0].mxu0
      %v3888 = vpop.f32.mrb[0].mxu0
      %v3889 = vadd.f32 %v3750, %v3888
      %v3890 = vpop.f32.mrb[0].mxu0
      %3891 = vmatprep.mubr.bf16.mxu0 0
      %3892 = vmatmul.mubr.bf16.gmra.mrb[0].mxu0 %v3778
      %v3893 = vpop.f32.mrb[0].mxu0
      %v3894 = vadd.f32 %v3750, %v3893
      %v3895 = vpop.f32.mrb[0].mxu0
      %v3896 = vpop.f32.mrb[0].mxu0
      %v3897 = vadd.f32 %v3750, %v3896
      %v3898 = vpop.f32.mrb[0].mxu0
      %3899 = vmatprep.mubr.bf16.mxu0 0
      %3900 = vmatmul.mubr.bf16.gmra.mrb[0].mxu0 %v3780
      %v3901 = vpop.f32.mrb[0].mxu0
      %v3902 = vadd.f32 %v3750, %v3901
      %v3903 = vpop.f32.mrb[0].mxu0
      %v3904 = vpop.f32.mrb[0].mxu0
      %v3905 = vadd.f32 %v3750, %v3904
      %v3906 = vpop.f32.mrb[0].mxu0
      %3907 = vmatprep.mubr.bf16.mxu0 0
      %3908 = vmatmul.mubr.bf16.gmra.mrb[0].mxu0 %v3782
      %v3909 = vpop.f32.mrb[0].mxu0
      %v3910 = vadd.f32 %v3750, %v3909
      %v3911 = vpop.f32.mrb[0].mxu0
      %v3912 = vpop.f32.mrb[0].mxu0
      %v3913 = vadd.f32 %v3750, %v3912
      %v3914 = vpop.f32.mrb[0].mxu0
      %3915 = vmatprep.mubr.bf16.mxu0 0
      %3916 = vmatmul.mubr.bf16.gmra.mrb[0].mxu0 %v3784
      %v3917 = vpop.f32.mrb[0].mxu0
      %v3918 = vadd.f32 %v3750, %v3917
      %v3919 = vpop.f32.mrb[0].mxu0
      %v3920 = vpop.f32.mrb[0].mxu0
      %v3921 = vadd.f32 %v3750, %v3920
      %v3922 = vpop.f32.mrb[0].mxu0
      %3923 = vmatprep.mubr.bf16.mxu0 0
      %3924 = vmatmul.mubr.bf16.gmra.mrb[0].mxu0 %v3786
      %v3925 = vpop.f32.mrb[0].mxu0
      %v3926 = vadd.f32 %v3750, %v3925
      %v3927 = vpop.f32.mrb[0].mxu0
      %v3928 = vpop.f32.mrb[0].mxu0
      %v3929 = vadd.f32 %v3750, %v3928
      %v3930 = vpop.f32.mrb[0].mxu0
      %3931 = vmatprep.mubr.bf16.mxu0 0
      %3932 = vmatmul.mubr.bf16.gmra.mrb[0].mxu0 %v3788
      %v3933 = vpop.f32.mrb[0].mxu0
      %v3934 = vadd.f32 %v3750, %v3933
      %v3935 = vpop.f32.mrb[0].mxu0
      %v3936 = vpop.f32.mrb[0].mxu0
      %v3937 = vadd.f32 %v3750, %v3936
      %v3938 = vpop.f32.mrb[0].mxu0
      %3939 = vmatprep.mubr.bf16.mxu0 0
      %3940 = vmatmul.mubr.bf16.gmra.mrb[0].mxu0 %v3790
      %v3941 = vpop.f32.mrb[0].mxu0
      %v3942 = vadd.f32 %v3750, %v3941
      %v3943 = vpop.f32.mrb[0].mxu0
      %v3944 = vpop.f32.mrb[0].mxu0
      %v3945 = vadd.f32 %v3750, %v3944
      %v3946 = vpop.f32.mrb[0].mxu0
      %3947 = vmatprep.mubr.bf16.mxu0 0
      %3948 = vmatmul.mubr.bf16.gmra.mrb[0].mxu0 %v3792
      %v3949 = vpop.f32.mrb[0].mxu0
      %v3950 = vadd.f32 %v3750, %v3949
      %v3951 = vpop.f32.mrb[0].mxu0
      %v3952 = vpop.f32.mrb[0].mxu0
      %v3953 = vadd.f32 %v3750, %v3952
      %v3954 = vpop.f32.mrb[0].mxu0
      %3955 = vmatprep.mubr.bf16.mxu0 0
      %3956 = vmatmul.mubr.bf16.gmra.mrb[0].mxu0 %v3794
      %v3957 = vpop.f32.mrb[0].mxu0
      %v3958 = vadd.f32 %v3750, %v3957
      %v3959 = vpop.f32.mrb[0].mxu0
      %v3960 = vpop.f32.mrb[0].mxu0
      %v3961 = vadd.f32 %v3750, %v3960
      %v3962 = vpop.f32.mrb[0].mxu0
      %3963 = vdwg.mxu0
      %v3964 = vmax.f32 %v3838, 0.0
      %v3965 = vmax.f32 %v3841, 0.0
      %v3966 = vmax.f32 %v3846, 0.0
      %v3967 = vmax.f32 %v3849, 0.0
      %v3968 = vmax.f32 %v3854, 0.0
      %v3969 = vmax.f32 %v3857, 0.0
      %v3970 = vmax.f32 %v3862, 0.0
      %v3971 = vmax.f32 %v3865, 0.0
      %v3972 = vmax.f32 %v3870, 0.0
      %v3973 = vmax.f32 %v3873, 0.0
      %v3974 = vmax.f32 %v3878, 0.0
      %v3975 = vmax.f32 %v3881, 0.0
      %v3976 = vmax.f32 %v3886, 0.0
      %v3977 = vmax.f32 %v3889, 0.0
      %v3978 = vmax.f32 %v3894, 0.0
      %v3979 = vmax.f32 %v3897, 0.0
      %v3980 = vmax.f32 %v3902, 0.0
      %v3981 = vmax.f32 %v3905, 0.0
      %v3982 = vmax.f32 %v3910, 0.0
      %v3983 = vmax.f32 %v3913, 0.0
      %v3984 = vmax.f32 %v3918, 0.0
      %v3985 = vmax.f32 %v3921, 0.0
      %v3986 = vmax.f32 %v3926, 0.0
      %v3987 = vmax.f32 %v3929, 0.0
      %v3988 = vmax.f32 %v3934, 0.0
      %v3989 = vmax.f32 %v3937, 0.0
      %v3990 = vmax.f32 %v3942, 0.0
      %v3991 = vmax.f32 %v3945, 0.0
      %v3992 = vmax.f32 %v3950, 0.0
      %v3993 = vmax.f32 %v3953, 0.0
      %v3994 = vmax.f32 %v3958, 0.0
      %v3995 = vmax.f32 %v3961, 0.0
      %v3996 = vpack.c.bf16 %v3965, %v3964
      %v3997 = vpack.c.bf16 %v3967, %v3966
      %v3998 = vpack.c.bf16 %v3969, %v3968
      %v3999 = vpack.c.bf16 %v3971, %v3970
      %v4000 = vpack.c.bf16 %v3973, %v3972
      %v4001 = vpack.c.bf16 %v3975, %v3974
      %v4002 = vpack.c.bf16 %v3977, %v3976
      %v4003 = vpack.c.bf16 %v3979, %v3978
      %v4004 = vpack.c.bf16 %v3981, %v3980
      %v4005 = vpack.c.bf16 %v3983, %v3982
      %v4006 = vpack.c.bf16 %v3985, %v3984
      %v4007 = vpack.c.bf16 %v3987, %v3986
      %v4008 = vpack.c.bf16 %v3989, %v3988
      %v4009 = vpack.c.bf16 %v3991, %v3990
      %v4010 = vpack.c.bf16 %v3993, %v3992
      %v4011 = vpack.c.bf16 %v3995, %v3994
      %v4028 = vunpack.c.l.b16 %v3996
      %v4029 = vunpack.c.h.b16 %v3996
      %v4030 = vunpack.c.l.b16 %v3997
      %v4031 = vunpack.c.h.b16 %v3997
      %v4032 = vunpack.c.l.b16 %v3998
      %v4033 = vunpack.c.h.b16 %v3998
      %v4034 = vunpack.c.l.b16 %v3999
      %v4035 = vunpack.c.h.b16 %v3999
      %v4036 = vunpack.c.l.b16 %v4000
      %v4037 = vunpack.c.h.b16 %v4000
      %v4038 = vunpack.c.l.b16 %v4001
      %v4039 = vunpack.c.h.b16 %v4001
      %v4040 = vunpack.c.l.b16 %v4002
      %v4041 = vunpack.c.h.b16 %v4002
      %v4042 = vunpack.c.l.b16 %v4003
      %v4043 = vunpack.c.h.b16 %v4003
      %v4044 = vunpack.c.l.b16 %v4004
      %v4045 = vunpack.c.h.b16 %v4004
      %v4046 = vunpack.c.l.b16 %v4005
      %v4047 = vunpack.c.h.b16 %v4005
      %v4048 = vunpack.c.l.b16 %v4006
      %v4049 = vunpack.c.h.b16 %v4006
      %v4050 = vunpack.c.l.b16 %v4007
      %v4051 = vunpack.c.h.b16 %v4007
      %v4052 = vunpack.c.l.b16 %v4008
      %v4053 = vunpack.c.h.b16 %v4008
      %v4054 = vunpack.c.l.b16 %v4009
      %v4055 = vunpack.c.h.b16 %v4009
      %v4056 = vunpack.c.l.b16 %v4010
      %v4057 = vunpack.c.h.b16 %v4010
      %v4058 = vunpack.c.l.b16 %v4011
      %v4059 = vunpack.c.h.b16 %v4011
      %v4060 = vpack.c.b16 %v4028, %v4028
      %v4061 = vpack.c.b16 %v4029, %v4029
      %v4062 = vpack.c.b16 %v4030, %v4030
      %v4063 = vpack.c.b16 %v4031, %v4031
      %v4064 = vpack.c.b16 %v4032, %v4032
      %v4065 = vpack.c.b16 %v4033, %v4033
      %v4066 = vpack.c.b16 %v4034, %v4034
      %v4067 = vpack.c.b16 %v4035, %v4035
      %v4068 = vpack.c.b16 %v4036, %v4036
      %v4069 = vpack.c.b16 %v4037, %v4037
      %v4070 = vpack.c.b16 %v4038, %v4038
      %v4071 = vpack.c.b16 %v4039, %v4039
      %v4072 = vpack.c.b16 %v4040, %v4040
      %v4073 = vpack.c.b16 %v4041, %v4041
      %v4074 = vpack.c.b16 %v4042, %v4042
      %v4075 = vpack.c.b16 %v4043, %v4043
      %v4076 = vpack.c.b16 %v4044, %v4044
      %v4077 = vpack.c.b16 %v4045, %v4045
      %v4078 = vpack.c.b16 %v4046, %v4046
      %v4079 = vpack.c.b16 %v4047, %v4047
      %v4080 = vpack.c.b16 %v4048, %v4048
      %v4081 = vpack.c.b16 %v4049, %v4049
      %v4082 = vpack.c.b16 %v4050, %v4050
      %v4083 = vpack.c.b16 %v4051, %v4051
      %v4084 = vpack.c.b16 %v4052, %v4052
      %v4085 = vpack.c.b16 %v4053, %v4053
      %v4086 = vpack.c.b16 %v4054, %v4054
      %v4087 = vpack.c.b16 %v4055, %v4055
      %v4088 = vpack.c.b16 %v4056, %v4056
      %v4089 = vpack.c.b16 %v4057, %v4057
      %v4090 = vpack.c.b16 %v4058, %v4058
      %v4091 = vpack.c.b16 %v4059, %v4059
      %vm4124 = vcmask 519168
      %4125 = vst.msk [vmem:[%s197] sm:$0xf] %vm4124, %v4060
      %4126 = vst.msk [vmem:[%s197 + $0x4] sm:$0xf] %vm4124, %v4061
      %4127 = vst.msk [vmem:[%s197 + $0x8] sm:$0xf] %vm4124, %v4062
      %4128 = vst.msk [vmem:[%s197 + $0xc] sm:$0xf] %vm4124, %v4063
      %4129 = vst.msk [vmem:[%s197 + $0x10] sm:$0xf] %vm4124, %v4064
      %4130 = vst.msk [vmem:[%s197 + $0x14] sm:$0xf] %vm4124, %v4065
      %4131 = vst.msk [vmem:[%s197 + $0x18] sm:$0xf] %vm4124, %v4066
      %4132 = vst.msk [vmem:[%s197 + $0x1c] sm:$0xf] %vm4124, %v4067
      %4133 = vst.msk [vmem:[%s197 + $0x20] sm:$0xf] %vm4124, %v4068
      %4134 = vst.msk [vmem:[%s197 + $0x24] sm:$0xf] %vm4124, %v4069
      %4135 = vst.msk [vmem:[%s197 + $0x28] sm:$0xf] %vm4124, %v4070
      %4136 = vst.msk [vmem:[%s197 + $0x2c] sm:$0xf] %vm4124, %v4071
      %4137 = vst.msk [vmem:[%s197 + $0x30] sm:$0xf] %vm4124, %v4072
      %4138 = vst.msk [vmem:[%s197 + $0x34] sm:$0xf] %vm4124, %v4073
      %4139 = vst.msk [vmem:[%s197 + $0x38] sm:$0xf] %vm4124, %v4074
      %4140 = vst.msk [vmem:[%s197 + $0x3c] sm:$0xf] %vm4124, %v4075
      %4141 = vst.msk [vmem:[%s197 + $0x40] sm:$0xf] %vm4124, %v4076
      %4142 = vst.msk [vmem:[%s197 + $0x44] sm:$0xf] %vm4124, %v4077
      %4143 = vst.msk [vmem:[%s197 + $0x48] sm:$0xf] %vm4124, %v4078
      %4144 = vst.msk [vmem:[%s197 + $0x4c] sm:$0xf] %vm4124, %v4079
      %4145 = vst.msk [vmem:[%s197 + $0x50] sm:$0xf] %vm4124, %v4080
      %4146 = vst.msk [vmem:[%s197 + $0x54] sm:$0xf] %vm4124, %v4081
      %4147 = vst.msk [vmem:[%s197 + $0x58] sm:$0xf] %vm4124, %v4082
      %4148 = vst.msk [vmem:[%s197 + $0x5c] sm:$0xf] %vm4124, %v4083
      %4149 = vst.msk [vmem:[%s197 + $0x60] sm:$0xf] %vm4124, %v4084
      %4150 = vst.msk [vmem:[%s197 + $0x64] sm:$0xf] %vm4124, %v4085
      %4151 = vst.msk [vmem:[%s197 + $0x68] sm:$0xf] %vm4124, %v4086
      %4152 = vst.msk [vmem:[%s197 + $0x6c] sm:$0xf] %vm4124, %v4087
      %4153 = vst.msk [vmem:[%s197 + $0x70] sm:$0xf] %vm4124, %v4088
      %4154 = vst.msk [vmem:[%s197 + $0x74] sm:$0xf] %vm4124, %v4089
      %4155 = vst.msk [vmem:[%s197 + $0x78] sm:$0xf] %vm4124, %v4090
      %4156 = vst.msk [vmem:[%s197 + $0x7c] sm:$0xf] %vm4124, %v4091
      %p4157 = scmp.lt.s32.totalorder %s15, 3
      %s4158 = scalar_select %p4157, %s15, 3
      %s4159 = smul.addr %s4158, 32
      %s4160 = smul.addr %s4159, 4
      %s4161 = scalar_lea.vmem %s4, %s4160
      // Predicated region
      $region37: #{perceptual_loss.4} parent=35 // pred_check
        %p4162 = pneg %p122
      $region38: #{perceptual_loss.4} parent=35 // pred_check_branch
        %4164 = sbr.rel (%p4162) target = $region40
      $region39: #{perceptual_loss.4} parent=35 // pred_region
        _
      $region40: #{perceptual_loss.4} parent=35 // pred_fallthru
        _
    $region36: #{perceptual_loss.4} parent=5 // pred_fallthru
      _
    %p4165 = scmp.le.s32.totalorder 2, %s10
    // Predicated region
    $region41: #{perceptual_loss.4} parent=5 // pred_check
      %p4166 = pneg %p4165
    $region42: #{perceptual_loss.4} parent=5 // pred_check_branch
      %4168 = sbr.rel (%p4166) target = $region44
    $region43: #{perceptual_loss.4} parent=5 // pred_region
      %s4169 = ssub.s32 %s10, 2
      // Predicated region
      $region45: #{perceptual_loss.4} parent=43 // pred_check
        %p4170 = pneg %p128
      $region46: #{perceptual_loss.4} parent=43 // pred_check_branch
        %4172 = sbr.rel (%p4170) target = $region48
      $region47: #{perceptual_loss.4} parent=43 // pred_region
        %p4173 = scmp.lt.s32.totalorder %s16, 3
        %s4174 = scalar_select %p4173, %s16, 3
        %s4175 = smul.addr %s4174, 32
        %s4176 = smul.addr %s4175, 4
        %s4177 = scalar_lea.vmem %s4, %s4176
      $region48: #{perceptual_loss.4} parent=43 // pred_fallthru
        _
    $region44: #{perceptual_loss.4} parent=5 // pred_fallthru
      _
  $region6: #{perceptual_loss.4} parent=0 // loop_footer
    %s14 = sadd.s32 1, %s10
  $region7: #{perceptual_loss.4} parent=0 // loop_footer_branch
    %9 = sbr.rel target = $region3
  $region8: #{perceptual_loss.4} parent=0 // loop_exit
    _

// kernel: perceptual_loss.5
$region0: #{perceptual_loss.5}
  #allocation0 [shape = 'u32[]', space=smem, size = 0x4, offset = 0x4, fixed_abs, tag = 'smem constant byte address 0x4 - core index']
  #allocation1 [shape = 'u32[144,128]{1,0:T(1,128)}', space=vmem, size = 0x12000, scoped, tag = 'internal scratch']
  #allocation2 [shape = 'bf16[18,18,64]{2,1,0:T(8,128)(2,1)}', space=vmem, size = 0x1b000, scoped, tag = 'scratch operand']
  %s0 = inlined_call_operand.vmem [shape: bf16[4,16,16,64], index: 0, kind: input, shape index: {}]
  %s1 = inlined_call_operand.vmem [shape: bf16[576,64], index: 1, kind: input, shape index: {}]
  %s2 = inlined_call_operand.vmem [shape: f32[1,64], index: 2, kind: input, shape index: {}]
  %s3 = inlined_call_operand.vmem [shape: f32[1,64], index: 3, kind: input, shape index: {}]
  %s4 = inlined_call_operand.vmem [shape: bf16[4,16,16,64], index: 4, kind: output, shape index: {}]
  %s5 = sld [smem:[#allocation0]]
  $region49: #{perceptual_loss.5} parent=0
    _
  %s7 = ssub.s32 1, %s5
  %s8 = scalar_select 0, %s7, %s5
  loop: start=0, step=1, limit=6
  $region2: #{perceptual_loss.5} parent=0 // loop_pre_header
    _
  $region3: #{perceptual_loss.5} parent=0 // loop_header
    %s10 = sphi 0, %s14
    %p11 = scmp.ge.s32.totalorder %s10, 6
    %s20 = sphi 0, %s22
    %s23 = sphi 0, %s20
    %s24 = sphi 0, %s23
    %s40 = sphi 0, %s24
    %s44 = sphi 0, %s44
    %s46 = sphi 0, %s44
    %s47 = sphi 0, %s46
    %s61 = sphi 0, %s47
    %s65 = sphi 0, %s65
    %s67 = sphi 0, %s65
    %s68 = sphi 0, %s67
    %s82 = sphi 0, %s68
    %s86 = sphi 0, %s86
    %s88 = sphi 0, %s86
    %s89 = sphi 0, %s88
    %s103 = sphi 0, %s89
    %s109 = sphi 0, %s111
    %s112 = sphi 0, %s109
    %s113 = sphi 0, %s112
    %s129 = sphi 0, %s113
  $region4: #{perceptual_loss.5} parent=0 // loop_header_branch
    %13 = sbr.rel (%p11) target = $region8
  $region5: #{perceptual_loss.5} parent=0 // loop_body
    %s15 = ssub.s32 %s10, 1
    %s16 = ssub.s32 %s10, 2
    %s17 = sadd.s32 %s10, 1
    %s18 = ssub.s32 %s10, %s17
    %p19 = scmp.eq.s32.totalorder %s18, 0
    %s21 = sadd.s32 %s20, 1
    %s22 = scalar_select %p19, %s20, %s21
    %p25 = pneg %p19
    %p26 = scmp.eq.s32.totalorder %s10, 3
    %p27 = por %p25, %p26
    %p28 = scmp.ne.s32.totalorder %s20, %s23
    %p29 = scmp.eq.s32.totalorder %s10, 0
    %p30 = por %p28, %p29
    %p31 = scmp.ne.s32.totalorder %s20, %s23
    %p32 = scmp.eq.s32.totalorder %s15, 3
    %p33 = por %p31, %p32
    %p34 = scmp.ne.s32.totalorder %s23, %s24
    %p35 = scmp.eq.s32.totalorder %s15, 0
    %p36 = por %p34, %p35
    %p37 = scmp.ne.s32.totalorder %s23, %s24
    %p38 = scmp.eq.s32.totalorder %s16, 3
    %p39 = por %p37, %p38
    %p41 = scmp.ne.s32.totalorder %s24, %s40
    %p42 = scmp.eq.s32.totalorder %s16, 0
    %p43 = por %p41, %p42
    %s45 = sadd.s32 %s44, 1
    %p48 = scmp.eq.s32.totalorder %s10, 3
    %p49 = scmp.ne.s32.totalorder %s44, %s46
    %p50 = scmp.eq.s32.totalorder %s10, 0
    %p51 = por %p49, %p50
    %p52 = scmp.ne.s32.totalorder %s44, %s46
    %p53 = scmp.eq.s32.totalorder %s15, 3
    %p54 = por %p52, %p53
    %p55 = scmp.ne.s32.totalorder %s46, %s47
    %p56 = scmp.eq.s32.totalorder %s15, 0
    %p57 = por %p55, %p56
    %p58 = scmp.ne.s32.totalorder %s46, %s47
    %p59 = scmp.eq.s32.totalorder %s16, 3
    %p60 = por %p58, %p59
    %p62 = scmp.ne.s32.totalorder %s47, %s61
    %p63 = scmp.eq.s32.totalorder %s16, 0
    %p64 = por %p62, %p63
    %s66 = sadd.s32 %s65, 1
    %p69 = scmp.eq.s32.totalorder %s10, 3
    %p70 = scmp.ne.s32.totalorder %s65, %s67
    %p71 = scmp.eq.s32.totalorder %s10, 0
    %p72 = por %p70, %p71
    %p73 = scmp.ne.s32.totalorder %s65, %s67
    %p74 = scmp.eq.s32.totalorder %s15, 3
    %p75 = por %p73, %p74
    %p76 = scmp.ne.s32.totalorder %s67, %s68
    %p77 = scmp.eq.s32.totalorder %s15, 0
    %p78 = por %p76, %p77
    %p79 = scmp.ne.s32.totalorder %s67, %s68
    %p80 = scmp.eq.s32.totalorder %s16, 3
    %p81 = por %p79, %p80
    %p83 = scmp.ne.s32.totalorder %s68, %s82
    %p84 = scmp.eq.s32.totalorder %s16, 0
    %p85 = por %p83, %p84
    %s87 = sadd.s32 %s86, 1
    %p90 = scmp.eq.s32.totalorder %s10, 3
    %p91 = scmp.ne.s32.totalorder %s86, %s88
    %p92 = scmp.eq.s32.totalorder %s10, 0
    %p93 = por %p91, %p92
    %p94 = scmp.ne.s32.totalorder %s86, %s88
    %p95 = scmp.eq.s32.totalorder %s15, 3
    %p96 = por %p94, %p95
    %p97 = scmp.ne.s32.totalorder %s88, %s89
    %p98 = scmp.eq.s32.totalorder %s15, 0
    %p99 = por %p97, %p98
    %p100 = scmp.ne.s32.totalorder %s88, %s89
    %p101 = scmp.eq.s32.totalorder %s16, 3
    %p102 = por %p100, %p101
    %p104 = scmp.ne.s32.totalorder %s89, %s103
    %p105 = scmp.eq.s32.totalorder %s16, 0
    %p106 = por %p104, %p105
    %s107 = ssub.s32 %s10, %s17
    %p108 = scmp.eq.s32.totalorder %s107, 0
    %s110 = sadd.s32 %s109, 1
    %s111 = scalar_select %p108, %s109, %s110
    %p114 = pneg %p108
    %p115 = scmp.eq.s32.totalorder %s10, 3
    %p116 = por %p114, %p115
    %p117 = scmp.ne.s32.totalorder %s109, %s112
    %p118 = scmp.eq.s32.totalorder %s10, 0
    %p119 = por %p117, %p118
    %p120 = scmp.ne.s32.totalorder %s109, %s112
    %p121 = scmp.eq.s32.totalorder %s15, 3
    %p122 = por %p120, %p121
    %p123 = scmp.ne.s32.totalorder %s112, %s113
    %p124 = scmp.eq.s32.totalorder %s15, 0
    %p125 = por %p123, %p124
    %p126 = scmp.ne.s32.totalorder %s112, %s113
    %p127 = scmp.eq.s32.totalorder %s16, 3
    %p128 = por %p126, %p127
    %p130 = scmp.ne.s32.totalorder %s113, %s129
    %p131 = scmp.eq.s32.totalorder %s16, 0
    %p132 = por %p130, %p131
    %p133 = scmp.le.s32.totalorder 1, %s10
    %p134 = scmp.lt.s32.totalorder %s10, 5
    %p135 = pnand %p133, %p134
    %p136 = pneg %p135
    // Predicated region
    $region9: #{perceptual_loss.5} parent=5 // pred_check
      _
    $region10: #{perceptual_loss.5} parent=5 // pred_check_branch
      %138 = sbr.rel (%p135) target = $region12
    $region11: #{perceptual_loss.5} parent=5 // pred_region
      %s139 = ssub.s32 %s10, 1
      // Predicated region
      $region13: #{perceptual_loss.5} parent=11 // pred_check
        %p140 = pneg %p57
      $region14: #{perceptual_loss.5} parent=11 // pred_check_branch
        %142 = sbr.rel (%p140) target = $region16
      $region15: #{perceptual_loss.5} parent=11 // pred_region
        _
      $region16: #{perceptual_loss.5} parent=11 // pred_fallthru
        _
      // Predicated region
      $region17: #{perceptual_loss.5} parent=11 // pred_check
        %p143 = pneg %p78
      $region18: #{perceptual_loss.5} parent=11 // pred_check_branch
        %145 = sbr.rel (%p143) target = $region20
      $region19: #{perceptual_loss.5} parent=11 // pred_region
        _
      $region20: #{perceptual_loss.5} parent=11 // pred_fallthru
        _
      // Predicated region
      $region21: #{perceptual_loss.5} parent=11 // pred_check
        %p146 = pneg %p99
      $region22: #{perceptual_loss.5} parent=11 // pred_check_branch
        %148 = sbr.rel (%p146) target = $region24
      $region23: #{perceptual_loss.5} parent=11 // pred_region
        _
      $region24: #{perceptual_loss.5} parent=11 // pred_fallthru
        _
    $region12: #{perceptual_loss.5} parent=5 // pred_fallthru
      _
    %p149 = scmp.lt.s32.totalorder %s10, 4
    // Predicated region
    $region25: #{perceptual_loss.5} parent=5 // pred_check
      %p150 = pneg %p149
    $region26: #{perceptual_loss.5} parent=5 // pred_check_branch
      %152 = sbr.rel (%p150) target = $region28
    $region27: #{perceptual_loss.5} parent=5 // pred_region
      // Predicated region
      $region29: #{perceptual_loss.5} parent=27 // pred_check
        %p153 = pneg %p30
      $region30: #{perceptual_loss.5} parent=27 // pred_check_branch
        %155 = sbr.rel (%p153) target = $region32
      $region31: #{perceptual_loss.5} parent=27 // pred_region
        %p156 = scmp.lt.s32.totalorder %s10, 3
        %s157 = scalar_select %p156, %s10, 3
        %s158 = smul.addr %s157, 32
        %s159 = smul.addr %s158, 4
        %s160 = scalar_lea.vmem %s0, %s159
      $region32: #{perceptual_loss.5} parent=27 // pred_fallthru
        _
    $region28: #{perceptual_loss.5} parent=5 // pred_fallthru
      _
    %p161 = scmp.le.s32.totalorder 1, %s10
    %p162 = scmp.lt.s32.totalorder %s10, 5
    %p163 = pnand %p161, %p162
    %p164 = pneg %p163
    // Predicated region
    $region33: #{perceptual_loss.5} parent=5 // pred_check
      _
    $region34: #{perceptual_loss.5} parent=5 // pred_check_branch
      %166 = sbr.rel (%p163) target = $region36
    $region35: #{perceptual_loss.5} parent=5 // pred_region
      %s167 = ssub.s32 %s10, 1
      %p168 = scmp.lt.s32.totalorder %s15, 3
      %s169 = scalar_select %p168, %s15, 3
      %s170 = smul.addr %s169, 32
      %s171 = smul.addr %s170, 4
      %s172 = scalar_lea.vmem %s0, %s171
      %p173 = pneg %p36
      %p174 = pneg %p33
      %p175 = pneg %p57
      %p176 = pneg %p54
      %p177 = pneg %p78
      %p178 = pneg %p75
      %p179 = pneg %p99
      %p180 = pneg %p96
      %p181 = pneg %p125
      %p182 = pneg %p122
      %p183 = scmp.lt.s32.totalorder %s15, 3
      %s184 = scalar_select %p183, %s15, 3
      %s185 = smul.addr %s184, 32
      %s186 = smul.addr %s185, 4
      %s187 = scalar_lea.vmem %s4, %s186
      %p188 = scmp.lt.s32.totalorder %s15, 3
      %s189 = scalar_select %p188, %s15, 3
      %s190 = smul.addr %s189, 32
      %s191 = smul.addr %s190, 4
      %s192 = scalar_lea.vmem %s0, %s191
      %p193 = scmp.lt.s32.totalorder %s15, 3
      %s194 = scalar_select %p193, %s15, 3
      %s195 = smul.addr %s194, 32
      %s196 = smul.addr %s195, 4
      %s197 = scalar_lea.vmem %s4, %s196
      %v199 = vld [vmem:[%s3] sm:$0x1]
      %v200 = vpack.c.bf16 %v199, %v199
      %v202 = vpack.i.b16 %v200, %v200
      %v204 = vlaneseq
      %v205 = vshrl.u32 %v204, 7
      %v206 = vsub.s32 0, %v205
      %v207 = vrot.slane %v202, %v206
      %v209 = vunpack.c.l.b16 %v207
      %v210 = vpack.c.b16 %v209, %v209
      %vm212 = vcmask 519168
      %213 = vst.msk [vmem:[#allocation2] sm:$0xf] %vm212, %v210
      %214 = vst.msk [vmem:[#allocation2 + $0x4] sm:$0xf] %vm212, %v210
      %vm215 = vcmask 516096
      %216 = vst.msk [vmem:[#allocation2 + $0x8] sm:$0x1] %vm215, %v210
      %s217 = scalar_lea.vmem [#allocation2], 204
      %218 = vst.msk [vmem:[%s217] sm:$0xf] %vm212, %v210
      %219 = vst.msk [vmem:[%s217 + $0x4] sm:$0xf] %vm212, %v210
      %220 = vst.msk [vmem:[%s217 + $0x8] sm:$0x1] %vm215, %v210
      %s221 = scalar_lea.vmem [#allocation2], 12
      %vm222 = vcmask 516096
      %vm223 = vsmask.f32 256
      %vm224 = vmand %vm222, %vm223
      %v225 = vld [vmem:[%s221] sm:$0x1]
      %v226 = vsel %vm224, %v200, %v225
      %227 = vst [vmem:[%s221] sm:$0x1] %v226
      %v228 = vld [vmem:[%s221 + $0xc] sm:$0x1]
      %v229 = vsel %vm224, %v200, %v228
      %230 = vst [vmem:[%s221 + $0xc] sm:$0x1] %v229
      %v231 = vld [vmem:[%s221 + $0x18] sm:$0x1]
      %v232 = vsel %vm224, %v200, %v231
      %233 = vst [vmem:[%s221 + $0x18] sm:$0x1] %v232
      %v234 = vld [vmem:[%s221 + $0x24] sm:$0x1]
      %v235 = vsel %vm224, %v200, %v234
      %236 = vst [vmem:[%s221 + $0x24] sm:$0x1] %v235
      %v237 = vld [vmem:[%s221 + $0x30] sm:$0x1]
      %v238 = vsel %vm224, %v200, %v237
      %239 = vst [vmem:[%s221 + $0x30] sm:$0x1] %v238
      %v240 = vld [vmem:[%s221 + $0x3c] sm:$0x1]
      %v241 = vsel %vm224, %v200, %v240
      %242 = vst [vmem:[%s221 + $0x3c] sm:$0x1] %v241
      %v243 = vld [vmem:[%s221 + $0x48] sm:$0x1]
      %v244 = vsel %vm224, %v200, %v243
      %245 = vst [vmem:[%s221 + $0x48] sm:$0x1] %v244
      %v246 = vld [vmem:[%s221 + $0x54] sm:$0x1]
      %v247 = vsel %vm224, %v200, %v246
      %248 = vst [vmem:[%s221 + $0x54] sm:$0x1] %v247
      %v249 = vld [vmem:[%s221 + $0x60] sm:$0x1]
      %v250 = vsel %vm224, %v200, %v249
      %251 = vst [vmem:[%s221 + $0x60] sm:$0x1] %v250
      %v252 = vld [vmem:[%s221 + $0x6c] sm:$0x1]
      %v253 = vsel %vm224, %v200, %v252
      %254 = vst [vmem:[%s221 + $0x6c] sm:$0x1] %v253
      %v255 = vld [vmem:[%s221 + $0x78] sm:$0x1]
      %v256 = vsel %vm224, %v200, %v255
      %257 = vst [vmem:[%s221 + $0x78] sm:$0x1] %v256
      %v258 = vld [vmem:[%s221 + $0x84] sm:$0x1]
      %v259 = vsel %vm224, %v200, %v258
      %260 = vst [vmem:[%s221 + $0x84] sm:$0x1] %v259
      %v261 = vld [vmem:[%s221 + $0x90] sm:$0x1]
      %v262 = vsel %vm224, %v200, %v261
      %263 = vst [vmem:[%s221 + $0x90] sm:$0x1] %v262
      %v264 = vld [vmem:[%s221 + $0x9c] sm:$0x1]
      %v265 = vsel %vm224, %v200, %v264
      %266 = vst [vmem:[%s221 + $0x9c] sm:$0x1] %v265
      %v267 = vld [vmem:[%s221 + $0xa8] sm:$0x1]
      %v268 = vsel %vm224, %v200, %v267
      %269 = vst [vmem:[%s221 + $0xa8] sm:$0x1] %v268
      %v270 = vld [vmem:[%s221 + $0xb4] sm:$0x1]
      %v271 = vsel %vm224, %v200, %v270
      %272 = vst [vmem:[%s221 + $0xb4] sm:$0x1] %v271
      %v274 = vunpack.c.l.b16 %v200
      %v275 = vpack.c.b16 %v274, %v274
      %v277 = vshll.u32 %v275, 16
      %vm280 = vsmask.f32 7938
      %vm281 = vmand %vm222, %vm280
      %v282 = vld [vmem:[%s221 + $0x8] sm:$0x1]
      %v283 = vsel %vm281, %v277, %v282
      %284 = vst [vmem:[%s221 + $0x8] sm:$0x1] %v283
      %v285 = vld [vmem:[%s221 + $0x14] sm:$0x1]
      %v286 = vsel %vm281, %v277, %v285
      %287 = vst [vmem:[%s221 + $0x14] sm:$0x1] %v286
      %v288 = vld [vmem:[%s221 + $0x20] sm:$0x1]
      %v289 = vsel %vm281, %v277, %v288
      %290 = vst [vmem:[%s221 + $0x20] sm:$0x1] %v289
      %v291 = vld [vmem:[%s221 + $0x2c] sm:$0x1]
      %v292 = vsel %vm281, %v277, %v291
      %293 = vst [vmem:[%s221 + $0x2c] sm:$0x1] %v292
      %v294 = vld [vmem:[%s221 + $0x38] sm:$0x1]
      %v295 = vsel %vm281, %v277, %v294
      %296 = vst [vmem:[%s221 + $0x38] sm:$0x1] %v295
      %v297 = vld [vmem:[%s221 + $0x44] sm:$0x1]
      %v298 = vsel %vm281, %v277, %v297
      %299 = vst [vmem:[%s221 + $0x44] sm:$0x1] %v298
      %v300 = vld [vmem:[%s221 + $0x50] sm:$0x1]
      %v301 = vsel %vm281, %v277, %v300
      %302 = vst [vmem:[%s221 + $0x50] sm:$0x1] %v301
      %v303 = vld [vmem:[%s221 + $0x5c] sm:$0x1]
      %v304 = vsel %vm281, %v277, %v303
      %305 = vst [vmem:[%s221 + $0x5c] sm:$0x1] %v304
      %v306 = vld [vmem:[%s221 + $0x68] sm:$0x1]
      %v307 = vsel %vm281, %v277, %v306
      %308 = vst [vmem:[%s221 + $0x68] sm:$0x1] %v307
      %v309 = vld [vmem:[%s221 + $0x74] sm:$0x1]
      %v310 = vsel %vm281, %v277, %v309
      %311 = vst [vmem:[%s221 + $0x74] sm:$0x1] %v310
      %v312 = vld [vmem:[%s221 + $0x80] sm:$0x1]
      %v313 = vsel %vm281, %v277, %v312
      %314 = vst [vmem:[%s221 + $0x80] sm:$0x1] %v313
      %v315 = vld [vmem:[%s221 + $0x8c] sm:$0x1]
      %v316 = vsel %vm281, %v277, %v315
      %317 = vst [vmem:[%s221 + $0x8c] sm:$0x1] %v316
      %v318 = vld [vmem:[%s221 + $0x98] sm:$0x1]
      %v319 = vsel %vm281, %v277, %v318
      %320 = vst [vmem:[%s221 + $0x98] sm:$0x1] %v319
      %v321 = vld [vmem:[%s221 + $0xa4] sm:$0x1]
      %v322 = vsel %vm281, %v277, %v321
      %323 = vst [vmem:[%s221 + $0xa4] sm:$0x1] %v322
      %v324 = vld [vmem:[%s221 + $0xb0] sm:$0x1]
      %v325 = vsel %vm281, %v277, %v324
      %326 = vst [vmem:[%s221 + $0xb0] sm:$0x1] %v325
      %v327 = vld [vmem:[%s221 + $0xbc] sm:$0x1]
      %v328 = vsel %vm281, %v277, %v327
      %329 = vst [vmem:[%s221 + $0xbc] sm:$0x1] %v328
      %v330 = vld [vmem:[%s192] sm:$0xf]
      %v331 = vld [vmem:[%s192 + $0x4] sm:$0xf]
      %v332 = vld [vmem:[%s192 + $0x8] sm:$0xf]
      %v333 = vld [vmem:[%s192 + $0xc] sm:$0xf]
      %v334 = vld [vmem:[%s192 + $0x10] sm:$0xf]
      %v335 = vld [vmem:[%s192 + $0x14] sm:$0xf]
      %v336 = vld [vmem:[%s192 + $0x18] sm:$0xf]
      %v337 = vld [vmem:[%s192 + $0x1c] sm:$0xf]
      %v338 = vld [vmem:[%s192 + $0x20] sm:$0xf]
      %v339 = vld [vmem:[%s192 + $0x24] sm:$0xf]
      %v340 = vld [vmem:[%s192 + $0x28] sm:$0xf]
      %v341 = vld [vmem:[%s192 + $0x2c] sm:$0xf]
      %v342 = vld [vmem:[%s192 + $0x30] sm:$0xf]
      %v343 = vld [vmem:[%s192 + $0x34] sm:$0xf]
      %v344 = vld [vmem:[%s192 + $0x38] sm:$0xf]
      %v345 = vld [vmem:[%s192 + $0x3c] sm:$0xf]
      %v346 = vld [vmem:[%s192 + $0x40] sm:$0xf]
      %v347 = vld [vmem:[%s192 + $0x44] sm:$0xf]
      %v348 = vld [vmem:[%s192 + $0x48] sm:$0xf]
      %v349 = vld [vmem:[%s192 + $0x4c] sm:$0xf]
      %v350 = vld [vmem:[%s192 + $0x50] sm:$0xf]
      %v351 = vld [vmem:[%s192 + $0x54] sm:$0xf]
      %v352 = vld [vmem:[%s192 + $0x58] sm:$0xf]
      %v353 = vld [vmem:[%s192 + $0x5c] sm:$0xf]
      %v354 = vld [vmem:[%s192 + $0x60] sm:$0xf]
      %v355 = vld [vmem:[%s192 + $0x64] sm:$0xf]
      %v356 = vld [vmem:[%s192 + $0x68] sm:$0xf]
      %v357 = vld [vmem:[%s192 + $0x6c] sm:$0xf]
      %v358 = vld [vmem:[%s192 + $0x70] sm:$0xf]
      %v359 = vld [vmem:[%s192 + $0x74] sm:$0xf]
      %v360 = vld [vmem:[%s192 + $0x78] sm:$0xf]
      %v361 = vld [vmem:[%s192 + $0x7c] sm:$0xf]
      %vm362 = vsmask.f32 4368
      %vm363 = vmor %vm223, %vm362
      %v365 = vshrl.u32 %v330, 16
      %v367 = vrot.slane %v365, 7
      %v368 = vshll.u32 %v330, 16
      %v370 = vor.u32 %v367, %v368
      %v371 = vrot.slane %v367, 4
      %v373 = vshrl.u32 %v331, 16
      %v375 = vrot.slane %v373, 7
      %v376 = vshll.u32 %v331, 16
      %v378 = vor.u32 %v375, %v376
      %v379 = vsel %vm363, %v371, %v378
      %v380 = vrot.slane %v375, 4
      %v382 = vshrl.u32 %v332, 16
      %v384 = vrot.slane %v382, 7
      %v385 = vshll.u32 %v332, 16
      %v387 = vor.u32 %v384, %v385
      %v388 = vrot.slane %v384, 4
      %v390 = vshrl.u32 %v333, 16
      %v392 = vrot.slane %v390, 7
      %v393 = vshll.u32 %v333, 16
      %v395 = vor.u32 %v392, %v393
      %v396 = vsel %vm363, %v388, %v395
      %v397 = vrot.slane %v392, 4
      %v399 = vshrl.u32 %v334, 16
      %v401 = vrot.slane %v399, 7
      %v402 = vshll.u32 %v334, 16
      %v404 = vor.u32 %v401, %v402
      %v405 = vrot.slane %v401, 4
      %v407 = vshrl.u32 %v335, 16
      %v409 = vrot.slane %v407, 7
      %v410 = vshll.u32 %v335, 16
      %v412 = vor.u32 %v409, %v410
      %v413 = vsel %vm363, %v405, %v412
      %v414 = vrot.slane %v409, 4
      %v416 = vshrl.u32 %v336, 16
      %v418 = vrot.slane %v416, 7
      %v419 = vshll.u32 %v336, 16
      %v421 = vor.u32 %v418, %v419
      %v422 = vrot.slane %v418, 4
      %v424 = vshrl.u32 %v337, 16
      %v426 = vrot.slane %v424, 7
      %v427 = vshll.u32 %v337, 16
      %v429 = vor.u32 %v426, %v427
      %v430 = vsel %vm363, %v422, %v429
      %v431 = vrot.slane %v426, 4
      %v433 = vshrl.u32 %v338, 16
      %v435 = vrot.slane %v433, 7
      %v436 = vshll.u32 %v338, 16
      %v438 = vor.u32 %v435, %v436
      %v439 = vrot.slane %v435, 4
      %v441 = vshrl.u32 %v339, 16
      %v443 = vrot.slane %v441, 7
      %v444 = vshll.u32 %v339, 16
      %v446 = vor.u32 %v443, %v444
      %v447 = vsel %vm363, %v439, %v446
      %v448 = vrot.slane %v443, 4
      %v450 = vshrl.u32 %v340, 16
      %v452 = vrot.slane %v450, 7
      %v453 = vshll.u32 %v340, 16
      %v455 = vor.u32 %v452, %v453
      %v456 = vrot.slane %v452, 4
      %v458 = vshrl.u32 %v341, 16
      %v460 = vrot.slane %v458, 7
      %v461 = vshll.u32 %v341, 16
      %v463 = vor.u32 %v460, %v461
      %v464 = vsel %vm363, %v456, %v463
      %v465 = vrot.slane %v460, 4
      %v467 = vshrl.u32 %v342, 16
      %v469 = vrot.slane %v467, 7
      %v470 = vshll.u32 %v342, 16
      %v472 = vor.u32 %v469, %v470
      %v473 = vrot.slane %v469, 4
      %v475 = vshrl.u32 %v343, 16
      %v477 = vrot.slane %v475, 7
      %v478 = vshll.u32 %v343, 16
      %v480 = vor.u32 %v477, %v478
      %v481 = vsel %vm363, %v473, %v480
      %v482 = vrot.slane %v477, 4
      %v484 = vshrl.u32 %v344, 16
      %v486 = vrot.slane %v484, 7
      %v487 = vshll.u32 %v344, 16
      %v489 = vor.u32 %v486, %v487
      %v490 = vrot.slane %v486, 4
      %v492 = vshrl.u32 %v345, 16
      %v494 = vrot.slane %v492, 7
      %v495 = vshll.u32 %v345, 16
      %v497 = vor.u32 %v494, %v495
      %v498 = vsel %vm363, %v490, %v497
      %v499 = vrot.slane %v494, 4
      %v501 = vshrl.u32 %v346, 16
      %v503 = vrot.slane %v501, 7
      %v504 = vshll.u32 %v346, 16
      %v506 = vor.u32 %v503, %v504
      %v507 = vrot.slane %v503, 4
      %v509 = vshrl.u32 %v347, 16
      %v511 = vrot.slane %v509, 7
      %v512 = vshll.u32 %v347, 16
      %v514 = vor.u32 %v511, %v512
      %v515 = vsel %vm363, %v507, %v514
      %v516 = vrot.slane %v511, 4
      %v518 = vshrl.u32 %v348, 16
      %v520 = vrot.slane %v518, 7
      %v521 = vshll.u32 %v348, 16
      %v523 = vor.u32 %v520, %v521
      %v524 = vrot.slane %v520, 4
      %v526 = vshrl.u32 %v349, 16
      %v528 = vrot.slane %v526, 7
      %v529 = vshll.u32 %v349, 16
      %v531 = vor.u32 %v528, %v529
      %v532 = vsel %vm363, %v524, %v531
      %v533 = vrot.slane %v528, 4
      %v535 = vshrl.u32 %v350, 16
      %v537 = vrot.slane %v535, 7
      %v538 = vshll.u32 %v350, 16
      %v540 = vor.u32 %v537, %v538
      %v541 = vrot.slane %v537, 4
      %v543 = vshrl.u32 %v351, 16
      %v545 = vrot.slane %v543, 7
      %v546 = vshll.u32 %v351, 16
      %v548 = vor.u32 %v545, %v546
      %v549 = vsel %vm363, %v541, %v548
      %v550 = vrot.slane %v545, 4
      %v552 = vshrl.u32 %v352, 16
      %v554 = vrot.slane %v552, 7
      %v555 = vshll.u32 %v352, 16
      %v557 = vor.u32 %v554, %v555
      %v558 = vrot.slane %v554, 4
      %v560 = vshrl.u32 %v353, 16
      %v562 = vrot.slane %v560, 7
      %v563 = vshll.u32 %v353, 16
      %v565 = vor.u32 %v562, %v563
      %v566 = vsel %vm363, %v558, %v565
      %v567 = vrot.slane %v562, 4
      %v569 = vshrl.u32 %v354, 16
      %v571 = vrot.slane %v569, 7
      %v572 = vshll.u32 %v354, 16
      %v574 = vor.u32 %v571, %v572
      %v575 = vrot.slane %v571, 4
      %v577 = vshrl.u32 %v355, 16
      %v579 = vrot.slane %v577, 7
      %v580 = vshll.u32 %v355, 16
      %v582 = vor.u32 %v579, %v580
      %v583 = vsel %vm363, %v575, %v582
      %v584 = vrot.slane %v579, 4
      %v586 = vshrl.u32 %v356, 16
      %v588 = vrot.slane %v586, 7
      %v589 = vshll.u32 %v356, 16
      %v591 = vor.u32 %v588, %v589
      %v592 = vrot.slane %v588, 4
      %v594 = vshrl.u32 %v357, 16
      %v596 = vrot.slane %v594, 7
      %v597 = vshll.u32 %v357, 16
      %v599 = vor.u32 %v596, %v597
      %v600 = vsel %vm363, %v592, %v599
      %v601 = vrot.slane %v596, 4
      %v603 = vshrl.u32 %v358, 16
      %v605 = vrot.slane %v603, 7
      %v606 = vshll.u32 %v358, 16
      %v608 = vor.u32 %v605, %v606
      %v609 = vrot.slane %v605, 4
      %v611 = vshrl.u32 %v359, 16
      %v613 = vrot.slane %v611, 7
      %v614 = vshll.u32 %v359, 16
      %v616 = vor.u32 %v613, %v614
      %v617 = vsel %vm363, %v609, %v616
      %v618 = vrot.slane %v613, 4
      %v620 = vshrl.u32 %v360, 16
      %v622 = vrot.slane %v620, 7
      %v623 = vshll.u32 %v360, 16
      %v625 = vor.u32 %v622, %v623
      %v626 = vrot.slane %v622, 4
      %v628 = vshrl.u32 %v361, 16
      %v630 = vrot.slane %v628, 7
      %v631 = vshll.u32 %v361, 16
      %v633 = vor.u32 %v630, %v631
      %v634 = vsel %vm363, %v626, %v633
      %v635 = vrot.slane %v630, 4
      %vm684 = vcmask 519168
      %vm685 = vmand %vm684, %vm280
      %v686 = vld [vmem:[%s221] sm:$0xf]
      %v687 = vsel %vm685, %v370, %v686
      %688 = vst [vmem:[%s221] sm:$0xf] %v687
      %689 = vst.msk [vmem:[%s221 + $0x4] sm:$0xf] %vm212, %v379
      %v690 = vld [vmem:[%s221 + $0x8] sm:$0x1]
      %v691 = vsel %vm224, %v380, %v690
      %692 = vst [vmem:[%s221 + $0x8] sm:$0x1] %v691
      %v693 = vld [vmem:[%s221 + $0xc] sm:$0xf]
      %v694 = vsel %vm685, %v387, %v693
      %695 = vst [vmem:[%s221 + $0xc] sm:$0xf] %v694
      %696 = vst.msk [vmem:[%s221 + $0x10] sm:$0xf] %vm212, %v396
      %v697 = vld [vmem:[%s221 + $0x14] sm:$0x1]
      %v698 = vsel %vm224, %v397, %v697
      %699 = vst [vmem:[%s221 + $0x14] sm:$0x1] %v698
      %v700 = vld [vmem:[%s221 + $0x18] sm:$0xf]
      %v701 = vsel %vm685, %v404, %v700
      %702 = vst [vmem:[%s221 + $0x18] sm:$0xf] %v701
      %703 = vst.msk [vmem:[%s221 + $0x1c] sm:$0xf] %vm212, %v413
      %v704 = vld [vmem:[%s221 + $0x20] sm:$0x1]
      %v705 = vsel %vm224, %v414, %v704
      %706 = vst [vmem:[%s221 + $0x20] sm:$0x1] %v705
      %v707 = vld [vmem:[%s221 + $0x24] sm:$0xf]
      %v708 = vsel %vm685, %v421, %v707
      %709 = vst [vmem:[%s221 + $0x24] sm:$0xf] %v708
      %710 = vst.msk [vmem:[%s221 + $0x28] sm:$0xf] %vm212, %v430
      %v711 = vld [vmem:[%s221 + $0x2c] sm:$0x1]
      %v712 = vsel %vm224, %v431, %v711
      %713 = vst [vmem:[%s221 + $0x2c] sm:$0x1] %v712
      %v714 = vld [vmem:[%s221 + $0x30] sm:$0xf]
      %v715 = vsel %vm685, %v438, %v714
      %716 = vst [vmem:[%s221 + $0x30] sm:$0xf] %v715
      %717 = vst.msk [vmem:[%s221 + $0x34] sm:$0xf] %vm212, %v447
      %v718 = vld [vmem:[%s221 + $0x38] sm:$0x1]
      %v719 = vsel %vm224, %v448, %v718
      %720 = vst [vmem:[%s221 + $0x38] sm:$0x1] %v719
      %v721 = vld [vmem:[%s221 + $0x3c] sm:$0xf]
      %v722 = vsel %vm685, %v455, %v721
      %723 = vst [vmem:[%s221 + $0x3c] sm:$0xf] %v722
      %724 = vst.msk [vmem:[%s221 + $0x40] sm:$0xf] %vm212, %v464
      %v725 = vld [vmem:[%s221 + $0x44] sm:$0x1]
      %v726 = vsel %vm224, %v465, %v725
      %727 = vst [vmem:[%s221 + $0x44] sm:$0x1] %v726
      %v728 = vld [vmem:[%s221 + $0x48] sm:$0xf]
      %v729 = vsel %vm685, %v472, %v728
      %730 = vst [vmem:[%s221 + $0x48] sm:$0xf] %v729
      %731 = vst.msk [vmem:[%s221 + $0x4c] sm:$0xf] %vm212, %v481
      %v732 = vld [vmem:[%s221 + $0x50] sm:$0x1]
      %v733 = vsel %vm224, %v482, %v732
      %734 = vst [vmem:[%s221 + $0x50] sm:$0x1] %v733
      %v735 = vld [vmem:[%s221 + $0x54] sm:$0xf]
      %v736 = vsel %vm685, %v489, %v735
      %737 = vst [vmem:[%s221 + $0x54] sm:$0xf] %v736
      %738 = vst.msk [vmem:[%s221 + $0x58] sm:$0xf] %vm212, %v498
      %v739 = vld [vmem:[%s221 + $0x5c] sm:$0x1]
      %v740 = vsel %vm224, %v499, %v739
      %741 = vst [vmem:[%s221 + $0x5c] sm:$0x1] %v740
      %v742 = vld [vmem:[%s221 + $0x60] sm:$0xf]
      %v743 = vsel %vm685, %v506, %v742
      %744 = vst [vmem:[%s221 + $0x60] sm:$0xf] %v743
      %745 = vst.msk [vmem:[%s221 + $0x64] sm:$0xf] %vm212, %v515
      %v746 = vld [vmem:[%s221 + $0x68] sm:$0x1]
      %v747 = vsel %vm224, %v516, %v746
      %748 = vst [vmem:[%s221 + $0x68] sm:$0x1] %v747
      %v749 = vld [vmem:[%s221 + $0x6c] sm:$0xf]
      %v750 = vsel %vm685, %v523, %v749
      %751 = vst [vmem:[%s221 + $0x6c] sm:$0xf] %v750
      %752 = vst.msk [vmem:[%s221 + $0x70] sm:$0xf] %vm212, %v532
      %v753 = vld [vmem:[%s221 + $0x74] sm:$0x1]
      %v754 = vsel %vm224, %v533, %v753
      %755 = vst [vmem:[%s221 + $0x74] sm:$0x1] %v754
      %v756 = vld [vmem:[%s221 + $0x78] sm:$0xf]
      %v757 = vsel %vm685, %v540, %v756
      %758 = vst [vmem:[%s221 + $0x78] sm:$0xf] %v757
      %759 = vst.msk [vmem:[%s221 + $0x7c] sm:$0xf] %vm212, %v549
      %v760 = vld [vmem:[%s221 + $0x80] sm:$0x1]
      %v761 = vsel %vm224, %v550, %v760
      %762 = vst [vmem:[%s221 + $0x80] sm:$0x1] %v761
      %v763 = vld [vmem:[%s221 + $0x84] sm:$0xf]
      %v764 = vsel %vm685, %v557, %v763
      %765 = vst [vmem:[%s221 + $0x84] sm:$0xf] %v764
      %766 = vst.msk [vmem:[%s221 + $0x88] sm:$0xf] %vm212, %v566
      %v767 = vld [vmem:[%s221 + $0x8c] sm:$0x1]
      %v768 = vsel %vm224, %v567, %v767
      %769 = vst [vmem:[%s221 + $0x8c] sm:$0x1] %v768
      %v770 = vld [vmem:[%s221 + $0x90] sm:$0xf]
      %v771 = vsel %vm685, %v574, %v770
      %772 = vst [vmem:[%s221 + $0x90] sm:$0xf] %v771
      %773 = vst.msk [vmem:[%s221 + $0x94] sm:$0xf] %vm212, %v583
      %v774 = vld [vmem:[%s221 + $0x98] sm:$0x1]
      %v775 = vsel %vm224, %v584, %v774
      %776 = vst [vmem:[%s221 + $0x98] sm:$0x1] %v775
      %v777 = vld [vmem:[%s221 + $0x9c] sm:$0xf]
      %v778 = vsel %vm685, %v591, %v777
      %779 = vst [vmem:[%s221 + $0x9c] sm:$0xf] %v778
      %780 = vst.msk [vmem:[%s221 + $0xa0] sm:$0xf] %vm212, %v600
      %v781 = vld [vmem:[%s221 + $0xa4] sm:$0x1]
      %v782 = vsel %vm224, %v601, %v781
      %783 = vst [vmem:[%s221 + $0xa4] sm:$0x1] %v782
      %v784 = vld [vmem:[%s221 + $0xa8] sm:$0xf]
      %v785 = vsel %vm685, %v608, %v784
      %786 = vst [vmem:[%s221 + $0xa8] sm:$0xf] %v785
      %787 = vst.msk [vmem:[%s221 + $0xac] sm:$0xf] %vm212, %v617
      %v788 = vld [vmem:[%s221 + $0xb0] sm:$0x1]
      %v789 = vsel %vm224, %v618, %v788
      %790 = vst [vmem:[%s221 + $0xb0] sm:$0x1] %v789
      %v791 = vld [vmem:[%s221 + $0xb4] sm:$0xf]
      %v792 = vsel %vm685, %v625, %v791
      %793 = vst [vmem:[%s221 + $0xb4] sm:$0xf] %v792
      %794 = vst.msk [vmem:[%s221 + $0xb8] sm:$0xf] %vm212, %v634
      %v795 = vld [vmem:[%s221 + $0xbc] sm:$0x1]
      %v796 = vsel %vm224, %v635, %v795
      %797 = vst [vmem:[%s221 + $0xbc] sm:$0x1] %v796
      %v798 = vld [vmem:[#allocation2] sm:$0xf]
      %v799 = vld [vmem:[#allocation2 + $0x4] sm:$0xf]
      %v800 = vld [vmem:[#allocation2 + $0xc] sm:$0xf]
      %v801 = vld [vmem:[#allocation2 + $0x10] sm:$0xf]
      %v802 = vld [vmem:[#allocation2 + $0x18] sm:$0xf]
      %v803 = vld [vmem:[#allocation2 + $0x1c] sm:$0xf]
      %v804 = vld [vmem:[#allocation2 + $0x24] sm:$0xf]
      %v805 = vld [vmem:[#allocation2 + $0x28] sm:$0xf]
      %v806 = vld [vmem:[#allocation2 + $0x30] sm:$0xf]
      %v807 = vld [vmem:[#allocation2 + $0x34] sm:$0xf]
      %v808 = vld [vmem:[#allocation2 + $0x3c] sm:$0xf]
      %v809 = vld [vmem:[#allocation2 + $0x40] sm:$0xf]
      %v810 = vld [vmem:[#allocation2 + $0x48] sm:$0xf]
      %v811 = vld [vmem:[#allocation2 + $0x4c] sm:$0xf]
      %v812 = vld [vmem:[#allocation2 + $0x54] sm:$0xf]
      %v813 = vld [vmem:[#allocation2 + $0x58] sm:$0xf]
      %v814 = vld [vmem:[#allocation2 + $0x60] sm:$0xf]
      %v815 = vld [vmem:[#allocation2 + $0x64] sm:$0xf]
      %v816 = vld [vmem:[#allocation2 + $0x6c] sm:$0xf]
      %v817 = vld [vmem:[#allocation2 + $0x70] sm:$0xf]
      %v818 = vld [vmem:[#allocation2 + $0x78] sm:$0xf]
      %v819 = vld [vmem:[#allocation2 + $0x7c] sm:$0xf]
      %v820 = vld [vmem:[#allocation2 + $0x84] sm:$0xf]
      %v821 = vld [vmem:[#allocation2 + $0x88] sm:$0xf]
      %v822 = vld [vmem:[#allocation2 + $0x90] sm:$0xf]
      %v823 = vld [vmem:[#allocation2 + $0x94] sm:$0xf]
      %v824 = vld [vmem:[#allocation2 + $0x9c] sm:$0xf]
      %v825 = vld [vmem:[#allocation2 + $0xa0] sm:$0xf]
      %v826 = vld [vmem:[#allocation2 + $0xa8] sm:$0xf]
      %v827 = vld [vmem:[#allocation2 + $0xac] sm:$0xf]
      %v828 = vld [vmem:[#allocation2 + $0xb4] sm:$0xf]
      %v829 = vld [vmem:[#allocation2 + $0xb8] sm:$0xf]
      %v830 = vld [vmem:[#allocation2 + $0x8] sm:$0x1]
      %v831 = vld [vmem:[#allocation2 + $0x14] sm:$0x1]
      %v832 = vld [vmem:[#allocation2 + $0x20] sm:$0x1]
      %v833 = vld [vmem:[#allocation2 + $0x2c] sm:$0x1]
      %v834 = vld [vmem:[#allocation2 + $0x38] sm:$0x1]
      %v835 = vld [vmem:[#allocation2 + $0x44] sm:$0x1]
      %v836 = vld [vmem:[#allocation2 + $0x50] sm:$0x1]
      %v837 = vld [vmem:[#allocation2 + $0x5c] sm:$0x1]
      %v838 = vld [vmem:[#allocation2 + $0x68] sm:$0x1]
      %v839 = vld [vmem:[#allocation2 + $0x74] sm:$0x1]
      %v840 = vld [vmem:[#allocation2 + $0x80] sm:$0x1]
      %v841 = vld [vmem:[#allocation2 + $0x8c] sm:$0x1]
      %v842 = vld [vmem:[#allocation2 + $0x98] sm:$0x1]
      %v843 = vld [vmem:[#allocation2 + $0xa4] sm:$0x1]
      %v844 = vld [vmem:[#allocation2 + $0xb0] sm:$0x1]
      %v845 = vld [vmem:[#allocation2 + $0xbc] sm:$0x1]
      %vm846 = vsmask.f32 3328
      %vm847 = vsmask.f32 7440
      %vm848 = vmor %vm846, %vm847
      %v850 = vshrl.u32 %v798, 16
      %v852 = vrot.slane %v850, 4
      %v853 = vshll.u32 %v798, 16
      %v855 = vrot.slane %v853, 5
      %v856 = vor.u32 %v852, %v855
      %v857 = vrot.slane %v856, 4
      %v859 = vshll.u32 %v799, 16
      %v861 = vrot.slane %v859, 5
      %v862 = vsel %vm848, %v857, %v861
      %v863 = vshrl.u32 %v799, 16
      %v865 = vrot.slane %v863, 4
      %v866 = vor.u32 %v865, %v861
      %v867 = vrot.slane %v866, 4
      %v869 = vshll.u32 %v830, 16
      %v871 = vrot.slane %v869, 5
      %v872 = vsel %vm848, %v867, %v871
      %v874 = vshrl.u32 %v800, 16
      %v876 = vrot.slane %v874, 4
      %v877 = vshll.u32 %v800, 16
      %v879 = vrot.slane %v877, 5
      %v880 = vor.u32 %v876, %v879
      %v881 = vrot.slane %v880, 4
      %v883 = vshll.u32 %v801, 16
      %v885 = vrot.slane %v883, 5
      %v886 = vsel %vm848, %v881, %v885
      %v887 = vshrl.u32 %v801, 16
      %v889 = vrot.slane %v887, 4
      %v890 = vor.u32 %v889, %v885
      %v891 = vrot.slane %v890, 4
      %v893 = vshll.u32 %v831, 16
      %v895 = vrot.slane %v893, 5
      %v896 = vsel %vm848, %v891, %v895
      %v898 = vshrl.u32 %v802, 16
      %v900 = vrot.slane %v898, 4
      %v901 = vshll.u32 %v802, 16
      %v903 = vrot.slane %v901, 5
      %v904 = vor.u32 %v900, %v903
      %v905 = vrot.slane %v904, 4
      %v907 = vshll.u32 %v803, 16
      %v909 = vrot.slane %v907, 5
      %v910 = vsel %vm848, %v905, %v909
      %v911 = vshrl.u32 %v803, 16
      %v913 = vrot.slane %v911, 4
      %v914 = vor.u32 %v913, %v909
      %v915 = vrot.slane %v914, 4
      %v917 = vshll.u32 %v832, 16
      %v919 = vrot.slane %v917, 5
      %v920 = vsel %vm848, %v915, %v919
      %v922 = vshrl.u32 %v804, 16
      %v924 = vrot.slane %v922, 4
      %v925 = vshll.u32 %v804, 16
      %v927 = vrot.slane %v925, 5
      %v928 = vor.u32 %v924, %v927
      %v929 = vrot.slane %v928, 4
      %v931 = vshll.u32 %v805, 16
      %v933 = vrot.slane %v931, 5
      %v934 = vsel %vm848, %v929, %v933
      %v935 = vshrl.u32 %v805, 16
      %v937 = vrot.slane %v935, 4
      %v938 = vor.u32 %v937, %v933
      %v939 = vrot.slane %v938, 4
      %v941 = vshll.u32 %v833, 16
      %v943 = vrot.slane %v941, 5
      %v944 = vsel %vm848, %v939, %v943
      %v946 = vshrl.u32 %v806, 16
      %v948 = vrot.slane %v946, 4
      %v949 = vshll.u32 %v806, 16
      %v951 = vrot.slane %v949, 5
      %v952 = vor.u32 %v948, %v951
      %v953 = vrot.slane %v952, 4
      %v955 = vshll.u32 %v807, 16
      %v957 = vrot.slane %v955, 5
      %v958 = vsel %vm848, %v953, %v957
      %v959 = vshrl.u32 %v807, 16
      %v961 = vrot.slane %v959, 4
      %v962 = vor.u32 %v961, %v957
      %v963 = vrot.slane %v962, 4
      %v965 = vshll.u32 %v834, 16
      %v967 = vrot.slane %v965, 5
      %v968 = vsel %vm848, %v963, %v967
      %v970 = vshrl.u32 %v808, 16
      %v972 = vrot.slane %v970, 4
      %v973 = vshll.u32 %v808, 16
      %v975 = vrot.slane %v973, 5
      %v976 = vor.u32 %v972, %v975
      %v977 = vrot.slane %v976, 4
      %v979 = vshll.u32 %v809, 16
      %v981 = vrot.slane %v979, 5
      %v982 = vsel %vm848, %v977, %v981
      %v983 = vshrl.u32 %v809, 16
      %v985 = vrot.slane %v983, 4
      %v986 = vor.u32 %v985, %v981
      %v987 = vrot.slane %v986, 4
      %v989 = vshll.u32 %v835, 16
      %v991 = vrot.slane %v989, 5
      %v992 = vsel %vm848, %v987, %v991
      %v994 = vshrl.u32 %v810, 16
      %v996 = vrot.slane %v994, 4
      %v997 = vshll.u32 %v810, 16
      %v999 = vrot.slane %v997, 5
      %v1000 = vor.u32 %v996, %v999
      %v1001 = vrot.slane %v1000, 4
      %v1003 = vshll.u32 %v811, 16
      %v1005 = vrot.slane %v1003, 5
      %v1006 = vsel %vm848, %v1001, %v1005
      %v1007 = vshrl.u32 %v811, 16
      %v1009 = vrot.slane %v1007, 4
      %v1010 = vor.u32 %v1009, %v1005
      %v1011 = vrot.slane %v1010, 4
      %v1013 = vshll.u32 %v836, 16
      %v1015 = vrot.slane %v1013, 5
      %v1016 = vsel %vm848, %v1011, %v1015
      %v1018 = vshrl.u32 %v812, 16
      %v1020 = vrot.slane %v1018, 4
      %v1021 = vshll.u32 %v812, 16
      %v1023 = vrot.slane %v1021, 5
      %v1024 = vor.u32 %v1020, %v1023
      %v1025 = vrot.slane %v1024, 4
      %v1027 = vshll.u32 %v813, 16
      %v1029 = vrot.slane %v1027, 5
      %v1030 = vsel %vm848, %v1025, %v1029
      %v1031 = vshrl.u32 %v813, 16
      %v1033 = vrot.slane %v1031, 4
      %v1034 = vor.u32 %v1033, %v1029
      %v1035 = vrot.slane %v1034, 4
      %v1037 = vshll.u32 %v837, 16
      %v1039 = vrot.slane %v1037, 5
      %v1040 = vsel %vm848, %v1035, %v1039
      %v1042 = vshrl.u32 %v814, 16
      %v1044 = vrot.slane %v1042, 4
      %v1045 = vshll.u32 %v814, 16
      %v1047 = vrot.slane %v1045, 5
      %v1048 = vor.u32 %v1044, %v1047
      %v1049 = vrot.slane %v1048, 4
      %v1051 = vshll.u32 %v815, 16
      %v1053 = vrot.slane %v1051, 5
      %v1054 = vsel %vm848, %v1049, %v1053
      %v1055 = vshrl.u32 %v815, 16
      %v1057 = vrot.slane %v1055, 4
      %v1058 = vor.u32 %v1057, %v1053
      %v1059 = vrot.slane %v1058, 4
      %v1061 = vshll.u32 %v838, 16
      %v1063 = vrot.slane %v1061, 5
      %v1064 = vsel %vm848, %v1059, %v1063
      %v1066 = vshrl.u32 %v816, 16
      %v1068 = vrot.slane %v1066, 4
      %v1069 = vshll.u32 %v816, 16
      %v1071 = vrot.slane %v1069, 5
      %v1072 = vor.u32 %v1068, %v1071
      %v1073 = vrot.slane %v1072, 4
      %v1075 = vshll.u32 %v817, 16
      %v1077 = vrot.slane %v1075, 5
      %v1078 = vsel %vm848, %v1073, %v1077
      %v1079 = vshrl.u32 %v817, 16
      %v1081 = vrot.slane %v1079, 4
      %v1082 = vor.u32 %v1081, %v1077
      %v1083 = vrot.slane %v1082, 4
      %v1085 = vshll.u32 %v839, 16
      %v1087 = vrot.slane %v1085, 5
      %v1088 = vsel %vm848, %v1083, %v1087
      %v1090 = vshrl.u32 %v818, 16
      %v1092 = vrot.slane %v1090, 4
      %v1093 = vshll.u32 %v818, 16
      %v1095 = vrot.slane %v1093, 5
      %v1096 = vor.u32 %v1092, %v1095
      %v1097 = vrot.slane %v1096, 4
      %v1099 = vshll.u32 %v819, 16
      %v1101 = vrot.slane %v1099, 5
      %v1102 = vsel %vm848, %v1097, %v1101
      %v1103 = vshrl.u32 %v819, 16
      %v1105 = vrot.slane %v1103, 4
      %v1106 = vor.u32 %v1105, %v1101
      %v1107 = vrot.slane %v1106, 4
      %v1109 = vshll.u32 %v840, 16
      %v1111 = vrot.slane %v1109, 5
      %v1112 = vsel %vm848, %v1107, %v1111
      %v1114 = vshrl.u32 %v820, 16
      %v1116 = vrot.slane %v1114, 4
      %v1117 = vshll.u32 %v820, 16
      %v1119 = vrot.slane %v1117, 5
      %v1120 = vor.u32 %v1116, %v1119
      %v1121 = vrot.slane %v1120, 4
      %v1123 = vshll.u32 %v821, 16
      %v1125 = vrot.slane %v1123, 5
      %v1126 = vsel %vm848, %v1121, %v1125
      %v1127 = vshrl.u32 %v821, 16
      %v1129 = vrot.slane %v1127, 4
      %v1130 = vor.u32 %v1129, %v1125
      %v1131 = vrot.slane %v1130, 4
      %v1133 = vshll.u32 %v841, 16
      %v1135 = vrot.slane %v1133, 5
      %v1136 = vsel %vm848, %v1131, %v1135
      %v1138 = vshrl.u32 %v822, 16
      %v1140 = vrot.slane %v1138, 4
      %v1141 = vshll.u32 %v822, 16
      %v1143 = vrot.slane %v1141, 5
      %v1144 = vor.u32 %v1140, %v1143
      %v1145 = vrot.slane %v1144, 4
      %v1147 = vshll.u32 %v823, 16
      %v1149 = vrot.slane %v1147, 5
      %v1150 = vsel %vm848, %v1145, %v1149
      %v1151 = vshrl.u32 %v823, 16
      %v1153 = vrot.slane %v1151, 4
      %v1154 = vor.u32 %v1153, %v1149
      %v1155 = vrot.slane %v1154, 4
      %v1157 = vshll.u32 %v842, 16
      %v1159 = vrot.slane %v1157, 5
      %v1160 = vsel %vm848, %v1155, %v1159
      %v1162 = vshrl.u32 %v824, 16
      %v1164 = vrot.slane %v1162, 4
      %v1165 = vshll.u32 %v824, 16
      %v1167 = vrot.slane %v1165, 5
      %v1168 = vor.u32 %v1164, %v1167
      %v1169 = vrot.slane %v1168, 4
      %v1171 = vshll.u32 %v825, 16
      %v1173 = vrot.slane %v1171, 5
      %v1174 = vsel %vm848, %v1169, %v1173
      %v1175 = vshrl.u32 %v825, 16
      %v1177 = vrot.slane %v1175, 4
      %v1178 = vor.u32 %v1177, %v1173
      %v1179 = vrot.slane %v1178, 4
      %v1181 = vshll.u32 %v843, 16
      %v1183 = vrot.slane %v1181, 5
      %v1184 = vsel %vm848, %v1179, %v1183
      %v1186 = vshrl.u32 %v826, 16
      %v1188 = vrot.slane %v1186, 4
      %v1189 = vshll.u32 %v826, 16
      %v1191 = vrot.slane %v1189, 5
      %v1192 = vor.u32 %v1188, %v1191
      %v1193 = vrot.slane %v1192, 4
      %v1195 = vshll.u32 %v827, 16
      %v1197 = vrot.slane %v1195, 5
      %v1198 = vsel %vm848, %v1193, %v1197
      %v1199 = vshrl.u32 %v827, 16
      %v1201 = vrot.slane %v1199, 4
      %v1202 = vor.u32 %v1201, %v1197
      %v1203 = vrot.slane %v1202, 4
      %v1205 = vshll.u32 %v844, 16
      %v1207 = vrot.slane %v1205, 5
      %v1208 = vsel %vm848, %v1203, %v1207
      %v1210 = vshrl.u32 %v828, 16
      %v1212 = vrot.slane %v1210, 4
      %v1213 = vshll.u32 %v828, 16
      %v1215 = vrot.slane %v1213, 5
      %v1216 = vor.u32 %v1212, %v1215
      %v1217 = vrot.slane %v1216, 4
      %v1219 = vshll.u32 %v829, 16
      %v1221 = vrot.slane %v1219, 5
      %v1222 = vsel %vm848, %v1217, %v1221
      %v1223 = vshrl.u32 %v829, 16
      %v1225 = vrot.slane %v1223, 4
      %v1226 = vor.u32 %v1225, %v1221
      %v1227 = vrot.slane %v1226, 4
      %v1229 = vshll.u32 %v845, 16
      %v1231 = vrot.slane %v1229, 5
      %v1232 = vsel %vm848, %v1227, %v1231
      %v1233 = vld [vmem:[#allocation2] sm:$0xe]
      %v1234 = vld [vmem:[#allocation2 + $0xc] sm:$0xe]
      %v1235 = vld [vmem:[#allocation2 + $0x18] sm:$0xe]
      %v1236 = vld [vmem:[#allocation2 + $0x24] sm:$0xe]
      %v1237 = vld [vmem:[#allocation2 + $0x30] sm:$0xe]
      %v1238 = vld [vmem:[#allocation2 + $0x3c] sm:$0xe]
      %v1239 = vld [vmem:[#allocation2 + $0x48] sm:$0xe]
      %v1240 = vld [vmem:[#allocation2 + $0x54] sm:$0xe]
      %v1241 = vld [vmem:[#allocation2 + $0x60] sm:$0xe]
      %v1242 = vld [vmem:[#allocation2 + $0x6c] sm:$0xe]
      %v1243 = vld [vmem:[#allocation2 + $0x78] sm:$0xe]
      %v1244 = vld [vmem:[#allocation2 + $0x84] sm:$0xe]
      %v1245 = vld [vmem:[#allocation2 + $0x90] sm:$0xe]
      %v1246 = vld [vmem:[#allocation2 + $0x9c] sm:$0xe]
      %v1247 = vld [vmem:[#allocation2 + $0xa8] sm:$0xe]
      %v1248 = vld [vmem:[#allocation2 + $0xb4] sm:$0xe]
      %vm1297 = vcmask 1042432
      %vm1298 = vcmask 1046532
      %vm1299 = vmor %vm1297, %vm1298
      %v1300 = vrot.slane %v1233, 5
      %v1301 = vrot.slane %v1300, 4
      %v1302 = vrot.slane %v799, 5
      %v1303 = vsel %vm1299, %v1301, %v1302
      %v1304 = vrot.slane %v1302, 4
      %v1305 = vrot.slane %v830, 5
      %v1306 = vsel %vm1299, %v1304, %v1305
      %v1307 = vrot.slane %v1234, 5
      %v1308 = vrot.slane %v1307, 4
      %v1309 = vrot.slane %v801, 5
      %v1310 = vsel %vm1299, %v1308, %v1309
      %v1311 = vrot.slane %v1309, 4
      %v1312 = vrot.slane %v831, 5
      %v1313 = vsel %vm1299, %v1311, %v1312
      %v1314 = vrot.slane %v1235, 5
      %v1315 = vrot.slane %v1314, 4
      %v1316 = vrot.slane %v803, 5
      %v1317 = vsel %vm1299, %v1315, %v1316
      %v1318 = vrot.slane %v1316, 4
      %v1319 = vrot.slane %v832, 5
      %v1320 = vsel %vm1299, %v1318, %v1319
      %v1321 = vrot.slane %v1236, 5
      %v1322 = vrot.slane %v1321, 4
      %v1323 = vrot.slane %v805, 5
      %v1324 = vsel %vm1299, %v1322, %v1323
      %v1325 = vrot.slane %v1323, 4
      %v1326 = vrot.slane %v833, 5
      %v1327 = vsel %vm1299, %v1325, %v1326
      %v1328 = vrot.slane %v1237, 5
      %v1329 = vrot.slane %v1328, 4
      %v1330 = vrot.slane %v807, 5
      %v1331 = vsel %vm1299, %v1329, %v1330
      %v1332 = vrot.slane %v1330, 4
      %v1333 = vrot.slane %v834, 5
      %v1334 = vsel %vm1299, %v1332, %v1333
      %v1335 = vrot.slane %v1238, 5
      %v1336 = vrot.slane %v1335, 4
      %v1337 = vrot.slane %v809, 5
      %v1338 = vsel %vm1299, %v1336, %v1337
      %v1339 = vrot.slane %v1337, 4
      %v1340 = vrot.slane %v835, 5
      %v1341 = vsel %vm1299, %v1339, %v1340
      %v1342 = vrot.slane %v1239, 5
      %v1343 = vrot.slane %v1342, 4
      %v1344 = vrot.slane %v811, 5
      %v1345 = vsel %vm1299, %v1343, %v1344
      %v1346 = vrot.slane %v1344, 4
      %v1347 = vrot.slane %v836, 5
      %v1348 = vsel %vm1299, %v1346, %v1347
      %v1349 = vrot.slane %v1240, 5
      %v1350 = vrot.slane %v1349, 4
      %v1351 = vrot.slane %v813, 5
      %v1352 = vsel %vm1299, %v1350, %v1351
      %v1353 = vrot.slane %v1351, 4
      %v1354 = vrot.slane %v837, 5
      %v1355 = vsel %vm1299, %v1353, %v1354
      %v1356 = vrot.slane %v1241, 5
      %v1357 = vrot.slane %v1356, 4
      %v1358 = vrot.slane %v815, 5
      %v1359 = vsel %vm1299, %v1357, %v1358
      %v1360 = vrot.slane %v1358, 4
      %v1361 = vrot.slane %v838, 5
      %v1362 = vsel %vm1299, %v1360, %v1361
      %v1363 = vrot.slane %v1242, 5
      %v1364 = vrot.slane %v1363, 4
      %v1365 = vrot.slane %v817, 5
      %v1366 = vsel %vm1299, %v1364, %v1365
      %v1367 = vrot.slane %v1365, 4
      %v1368 = vrot.slane %v839, 5
      %v1369 = vsel %vm1299, %v1367, %v1368
      %v1370 = vrot.slane %v1243, 5
      %v1371 = vrot.slane %v1370, 4
      %v1372 = vrot.slane %v819, 5
      %v1373 = vsel %vm1299, %v1371, %v1372
      %v1374 = vrot.slane %v1372, 4
      %v1375 = vrot.slane %v840, 5
      %v1376 = vsel %vm1299, %v1374, %v1375
      %v1377 = vrot.slane %v1244, 5
      %v1378 = vrot.slane %v1377, 4
      %v1379 = vrot.slane %v821, 5
      %v1380 = vsel %vm1299, %v1378, %v1379
      %v1381 = vrot.slane %v1379, 4
      %v1382 = vrot.slane %v841, 5
      %v1383 = vsel %vm1299, %v1381, %v1382
      %v1384 = vrot.slane %v1245, 5
      %v1385 = vrot.slane %v1384, 4
      %v1386 = vrot.slane %v823, 5
      %v1387 = vsel %vm1299, %v1385, %v1386
      %v1388 = vrot.slane %v1386, 4
      %v1389 = vrot.slane %v842, 5
      %v1390 = vsel %vm1299, %v1388, %v1389
      %v1391 = vrot.slane %v1246, 5
      %v1392 = vrot.slane %v1391, 4
      %v1393 = vrot.slane %v825, 5
      %v1394 = vsel %vm1299, %v1392, %v1393
      %v1395 = vrot.slane %v1393, 4
      %v1396 = vrot.slane %v843, 5
      %v1397 = vsel %vm1299, %v1395, %v1396
      %v1398 = vrot.slane %v1247, 5
      %v1399 = vrot.slane %v1398, 4
      %v1400 = vrot.slane %v827, 5
      %v1401 = vsel %vm1299, %v1399, %v1400
      %v1402 = vrot.slane %v1400, 4
      %v1403 = vrot.slane %v844, 5
      %v1404 = vsel %vm1299, %v1402, %v1403
      %v1405 = vrot.slane %v1248, 5
      %v1406 = vrot.slane %v1405, 4
      %v1407 = vrot.slane %v829, 5
      %v1408 = vsel %vm1299, %v1406, %v1407
      %v1409 = vrot.slane %v1407, 4
      %v1410 = vrot.slane %v845, 5
      %v1411 = vsel %vm1299, %v1409, %v1410
      %v1412 = vld [vmem:[%s221] sm:$0xf]
      %v1413 = vld [vmem:[%s221 + $0x4] sm:$0xf]
      %v1414 = vld [vmem:[%s221 + $0xc] sm:$0xf]
      %v1415 = vld [vmem:[%s221 + $0x10] sm:$0xf]
      %v1416 = vld [vmem:[%s221 + $0x18] sm:$0xf]
      %v1417 = vld [vmem:[%s221 + $0x1c] sm:$0xf]
      %v1418 = vld [vmem:[%s221 + $0x24] sm:$0xf]
      %v1419 = vld [vmem:[%s221 + $0x28] sm:$0xf]
      %v1420 = vld [vmem:[%s221 + $0x30] sm:$0xf]
      %v1421 = vld [vmem:[%s221 + $0x34] sm:$0xf]
      %v1422 = vld [vmem:[%s221 + $0x3c] sm:$0xf]
      %v1423 = vld [vmem:[%s221 + $0x40] sm:$0xf]
      %v1424 = vld [vmem:[%s221 + $0x48] sm:$0xf]
      %v1425 = vld [vmem:[%s221 + $0x4c] sm:$0xf]
      %v1426 = vld [vmem:[%s221 + $0x54] sm:$0xf]
      %v1427 = vld [vmem:[%s221 + $0x58] sm:$0xf]
      %v1428 = vld [vmem:[%s221 + $0x60] sm:$0xf]
      %v1429 = vld [vmem:[%s221 + $0x64] sm:$0xf]
      %v1430 = vld [vmem:[%s221 + $0x6c] sm:$0xf]
      %v1431 = vld [vmem:[%s221 + $0x70] sm:$0xf]
      %v1432 = vld [vmem:[%s221 + $0x78] sm:$0xf]
      %v1433 = vld [vmem:[%s221 + $0x7c] sm:$0xf]
      %v1434 = vld [vmem:[%s221 + $0x84] sm:$0xf]
      %v1435 = vld [vmem:[%s221 + $0x88] sm:$0xf]
      %v1436 = vld [vmem:[%s221 + $0x90] sm:$0xf]
      %v1437 = vld [vmem:[%s221 + $0x94] sm:$0xf]
      %v1438 = vld [vmem:[%s221 + $0x9c] sm:$0xf]
      %v1439 = vld [vmem:[%s221 + $0xa0] sm:$0xf]
      %v1440 = vld [vmem:[%s221 + $0xa8] sm:$0xf]
      %v1441 = vld [vmem:[%s221 + $0xac] sm:$0xf]
      %v1442 = vld [vmem:[%s221 + $0xb4] sm:$0xf]
      %v1443 = vld [vmem:[%s221 + $0xb8] sm:$0xf]
      %v1444 = vld [vmem:[%s221 + $0x8] sm:$0x1]
      %v1445 = vld [vmem:[%s221 + $0x14] sm:$0x1]
      %v1446 = vld [vmem:[%s221 + $0x20] sm:$0x1]
      %v1447 = vld [vmem:[%s221 + $0x2c] sm:$0x1]
      %v1448 = vld [vmem:[%s221 + $0x38] sm:$0x1]
      %v1449 = vld [vmem:[%s221 + $0x44] sm:$0x1]
      %v1450 = vld [vmem:[%s221 + $0x50] sm:$0x1]
      %v1451 = vld [vmem:[%s221 + $0x5c] sm:$0x1]
      %v1452 = vld [vmem:[%s221 + $0x68] sm:$0x1]
      %v1453 = vld [vmem:[%s221 + $0x74] sm:$0x1]
      %v1454 = vld [vmem:[%s221 + $0x80] sm:$0x1]
      %v1455 = vld [vmem:[%s221 + $0x8c] sm:$0x1]
      %v1456 = vld [vmem:[%s221 + $0x98] sm:$0x1]
      %v1457 = vld [vmem:[%s221 + $0xa4] sm:$0x1]
      %v1458 = vld [vmem:[%s221 + $0xb0] sm:$0x1]
      %v1459 = vld [vmem:[%s221 + $0xbc] sm:$0x1]
      %v1461 = vshrl.u32 %v1412, 16
      %v1463 = vrot.slane %v1461, 4
      %v1464 = vshll.u32 %v1412, 16
      %v1466 = vrot.slane %v1464, 5
      %v1467 = vor.u32 %v1463, %v1466
      %v1468 = vrot.slane %v1467, 4
      %v1470 = vshll.u32 %v1413, 16
      %v1472 = vrot.slane %v1470, 5
      %v1473 = vsel %vm848, %v1468, %v1472
      %v1474 = vshrl.u32 %v1413, 16
      %v1476 = vrot.slane %v1474, 4
      %v1477 = vor.u32 %v1476, %v1472
      %v1478 = vrot.slane %v1477, 4
      %v1480 = vshll.u32 %v1444, 16
      %v1482 = vrot.slane %v1480, 5
      %v1483 = vsel %vm848, %v1478, %v1482
      %v1485 = vshrl.u32 %v1414, 16
      %v1487 = vrot.slane %v1485, 4
      %v1488 = vshll.u32 %v1414, 16
      %v1490 = vrot.slane %v1488, 5
      %v1491 = vor.u32 %v1487, %v1490
      %v1492 = vrot.slane %v1491, 4
      %v1494 = vshll.u32 %v1415, 16
      %v1496 = vrot.slane %v1494, 5
      %v1497 = vsel %vm848, %v1492, %v1496
      %v1498 = vshrl.u32 %v1415, 16
      %v1500 = vrot.slane %v1498, 4
      %v1501 = vor.u32 %v1500, %v1496
      %v1502 = vrot.slane %v1501, 4
      %v1504 = vshll.u32 %v1445, 16
      %v1506 = vrot.slane %v1504, 5
      %v1507 = vsel %vm848, %v1502, %v1506
      %v1509 = vshrl.u32 %v1416, 16
      %v1511 = vrot.slane %v1509, 4
      %v1512 = vshll.u32 %v1416, 16
      %v1514 = vrot.slane %v1512, 5
      %v1515 = vor.u32 %v1511, %v1514
      %v1516 = vrot.slane %v1515, 4
      %v1518 = vshll.u32 %v1417, 16
      %v1520 = vrot.slane %v1518, 5
      %v1521 = vsel %vm848, %v1516, %v1520
      %v1522 = vshrl.u32 %v1417, 16
      %v1524 = vrot.slane %v1522, 4
      %v1525 = vor.u32 %v1524, %v1520
      %v1526 = vrot.slane %v1525, 4
      %v1528 = vshll.u32 %v1446, 16
      %v1530 = vrot.slane %v1528, 5
      %v1531 = vsel %vm848, %v1526, %v1530
      %v1533 = vshrl.u32 %v1418, 16
      %v1535 = vrot.slane %v1533, 4
      %v1536 = vshll.u32 %v1418, 16
      %v1538 = vrot.slane %v1536, 5
      %v1539 = vor.u32 %v1535, %v1538
      %v1540 = vrot.slane %v1539, 4
      %v1542 = vshll.u32 %v1419, 16
      %v1544 = vrot.slane %v1542, 5
      %v1545 = vsel %vm848, %v1540, %v1544
      %v1546 = vshrl.u32 %v1419, 16
      %v1548 = vrot.slane %v1546, 4
      %v1549 = vor.u32 %v1548, %v1544
      %v1550 = vrot.slane %v1549, 4
      %v1552 = vshll.u32 %v1447, 16
      %v1554 = vrot.slane %v1552, 5
      %v1555 = vsel %vm848, %v1550, %v1554
      %v1557 = vshrl.u32 %v1420, 16
      %v1559 = vrot.slane %v1557, 4
      %v1560 = vshll.u32 %v1420, 16
      %v1562 = vrot.slane %v1560, 5
      %v1563 = vor.u32 %v1559, %v1562
      %v1564 = vrot.slane %v1563, 4
      %v1566 = vshll.u32 %v1421, 16
      %v1568 = vrot.slane %v1566, 5
      %v1569 = vsel %vm848, %v1564, %v1568
      %v1570 = vshrl.u32 %v1421, 16
      %v1572 = vrot.slane %v1570, 4
      %v1573 = vor.u32 %v1572, %v1568
      %v1574 = vrot.slane %v1573, 4
      %v1576 = vshll.u32 %v1448, 16
      %v1578 = vrot.slane %v1576, 5
      %v1579 = vsel %vm848, %v1574, %v1578
      %v1581 = vshrl.u32 %v1422, 16
      %v1583 = vrot.slane %v1581, 4
      %v1584 = vshll.u32 %v1422, 16
      %v1586 = vrot.slane %v1584, 5
      %v1587 = vor.u32 %v1583, %v1586
      %v1588 = vrot.slane %v1587, 4
      %v1590 = vshll.u32 %v1423, 16
      %v1592 = vrot.slane %v1590, 5
      %v1593 = vsel %vm848, %v1588, %v1592
      %v1594 = vshrl.u32 %v1423, 16
      %v1596 = vrot.slane %v1594, 4
      %v1597 = vor.u32 %v1596, %v1592
      %v1598 = vrot.slane %v1597, 4
      %v1600 = vshll.u32 %v1449, 16
      %v1602 = vrot.slane %v1600, 5
      %v1603 = vsel %vm848, %v1598, %v1602
      %v1605 = vshrl.u32 %v1424, 16
      %v1607 = vrot.slane %v1605, 4
      %v1608 = vshll.u32 %v1424, 16
      %v1610 = vrot.slane %v1608, 5
      %v1611 = vor.u32 %v1607, %v1610
      %v1612 = vrot.slane %v1611, 4
      %v1614 = vshll.u32 %v1425, 16
      %v1616 = vrot.slane %v1614, 5
      %v1617 = vsel %vm848, %v1612, %v1616
      %v1618 = vshrl.u32 %v1425, 16
      %v1620 = vrot.slane %v1618, 4
      %v1621 = vor.u32 %v1620, %v1616
      %v1622 = vrot.slane %v1621, 4
      %v1624 = vshll.u32 %v1450, 16
      %v1626 = vrot.slane %v1624, 5
      %v1627 = vsel %vm848, %v1622, %v1626
      %v1629 = vshrl.u32 %v1426, 16
      %v1631 = vrot.slane %v1629, 4
      %v1632 = vshll.u32 %v1426, 16
      %v1634 = vrot.slane %v1632, 5
      %v1635 = vor.u32 %v1631, %v1634
      %v1636 = vrot.slane %v1635, 4
      %v1638 = vshll.u32 %v1427, 16
      %v1640 = vrot.slane %v1638, 5
      %v1641 = vsel %vm848, %v1636, %v1640
      %v1642 = vshrl.u32 %v1427, 16
      %v1644 = vrot.slane %v1642, 4
      %v1645 = vor.u32 %v1644, %v1640
      %v1646 = vrot.slane %v1645, 4
      %v1648 = vshll.u32 %v1451, 16
      %v1650 = vrot.slane %v1648, 5
      %v1651 = vsel %vm848, %v1646, %v1650
      %v1653 = vshrl.u32 %v1428, 16
      %v1655 = vrot.slane %v1653, 4
      %v1656 = vshll.u32 %v1428, 16
      %v1658 = vrot.slane %v1656, 5
      %v1659 = vor.u32 %v1655, %v1658
      %v1660 = vrot.slane %v1659, 4
      %v1662 = vshll.u32 %v1429, 16
      %v1664 = vrot.slane %v1662, 5
      %v1665 = vsel %vm848, %v1660, %v1664
      %v1666 = vshrl.u32 %v1429, 16
      %v1668 = vrot.slane %v1666, 4
      %v1669 = vor.u32 %v1668, %v1664
      %v1670 = vrot.slane %v1669, 4
      %v1672 = vshll.u32 %v1452, 16
      %v1674 = vrot.slane %v1672, 5
      %v1675 = vsel %vm848, %v1670, %v1674
      %v1677 = vshrl.u32 %v1430, 16
      %v1679 = vrot.slane %v1677, 4
      %v1680 = vshll.u32 %v1430, 16
      %v1682 = vrot.slane %v1680, 5
      %v1683 = vor.u32 %v1679, %v1682
      %v1684 = vrot.slane %v1683, 4
      %v1686 = vshll.u32 %v1431, 16
      %v1688 = vrot.slane %v1686, 5
      %v1689 = vsel %vm848, %v1684, %v1688
      %v1690 = vshrl.u32 %v1431, 16
      %v1692 = vrot.slane %v1690, 4
      %v1693 = vor.u32 %v1692, %v1688
      %v1694 = vrot.slane %v1693, 4
      %v1696 = vshll.u32 %v1453, 16
      %v1698 = vrot.slane %v1696, 5
      %v1699 = vsel %vm848, %v1694, %v1698
      %v1701 = vshrl.u32 %v1432, 16
      %v1703 = vrot.slane %v1701, 4
      %v1704 = vshll.u32 %v1432, 16
      %v1706 = vrot.slane %v1704, 5
      %v1707 = vor.u32 %v1703, %v1706
      %v1708 = vrot.slane %v1707, 4
      %v1710 = vshll.u32 %v1433, 16
      %v1712 = vrot.slane %v1710, 5
      %v1713 = vsel %vm848, %v1708, %v1712
      %v1714 = vshrl.u32 %v1433, 16
      %v1716 = vrot.slane %v1714, 4
      %v1717 = vor.u32 %v1716, %v1712
      %v1718 = vrot.slane %v1717, 4
      %v1720 = vshll.u32 %v1454, 16
      %v1722 = vrot.slane %v1720, 5
      %v1723 = vsel %vm848, %v1718, %v1722
      %v1725 = vshrl.u32 %v1434, 16
      %v1727 = vrot.slane %v1725, 4
      %v1728 = vshll.u32 %v1434, 16
      %v1730 = vrot.slane %v1728, 5
      %v1731 = vor.u32 %v1727, %v1730
      %v1732 = vrot.slane %v1731, 4
      %v1734 = vshll.u32 %v1435, 16
      %v1736 = vrot.slane %v1734, 5
      %v1737 = vsel %vm848, %v1732, %v1736
      %v1738 = vshrl.u32 %v1435, 16
      %v1740 = vrot.slane %v1738, 4
      %v1741 = vor.u32 %v1740, %v1736
      %v1742 = vrot.slane %v1741, 4
      %v1744 = vshll.u32 %v1455, 16
      %v1746 = vrot.slane %v1744, 5
      %v1747 = vsel %vm848, %v1742, %v1746
      %v1749 = vshrl.u32 %v1436, 16
      %v1751 = vrot.slane %v1749, 4
      %v1752 = vshll.u32 %v1436, 16
      %v1754 = vrot.slane %v1752, 5
      %v1755 = vor.u32 %v1751, %v1754
      %v1756 = vrot.slane %v1755, 4
      %v1758 = vshll.u32 %v1437, 16
      %v1760 = vrot.slane %v1758, 5
      %v1761 = vsel %vm848, %v1756, %v1760
      %v1762 = vshrl.u32 %v1437, 16
      %v1764 = vrot.slane %v1762, 4
      %v1765 = vor.u32 %v1764, %v1760
      %v1766 = vrot.slane %v1765, 4
      %v1768 = vshll.u32 %v1456, 16
      %v1770 = vrot.slane %v1768, 5
      %v1771 = vsel %vm848, %v1766, %v1770
      %v1773 = vshrl.u32 %v1438, 16
      %v1775 = vrot.slane %v1773, 4
      %v1776 = vshll.u32 %v1438, 16
      %v1778 = vrot.slane %v1776, 5
      %v1779 = vor.u32 %v1775, %v1778
      %v1780 = vrot.slane %v1779, 4
      %v1782 = vshll.u32 %v1439, 16
      %v1784 = vrot.slane %v1782, 5
      %v1785 = vsel %vm848, %v1780, %v1784
      %v1786 = vshrl.u32 %v1439, 16
      %v1788 = vrot.slane %v1786, 4
      %v1789 = vor.u32 %v1788, %v1784
      %v1790 = vrot.slane %v1789, 4
      %v1792 = vshll.u32 %v1457, 16
      %v1794 = vrot.slane %v1792, 5
      %v1795 = vsel %vm848, %v1790, %v1794
      %v1797 = vshrl.u32 %v1440, 16
      %v1799 = vrot.slane %v1797, 4
      %v1800 = vshll.u32 %v1440, 16
      %v1802 = vrot.slane %v1800, 5
      %v1803 = vor.u32 %v1799, %v1802
      %v1804 = vrot.slane %v1803, 4
      %v1806 = vshll.u32 %v1441, 16
      %v1808 = vrot.slane %v1806, 5
      %v1809 = vsel %vm848, %v1804, %v1808
      %v1810 = vshrl.u32 %v1441, 16
      %v1812 = vrot.slane %v1810, 4
      %v1813 = vor.u32 %v1812, %v1808
      %v1814 = vrot.slane %v1813, 4
      %v1816 = vshll.u32 %v1458, 16
      %v1818 = vrot.slane %v1816, 5
      %v1819 = vsel %vm848, %v1814, %v1818
      %v1821 = vshrl.u32 %v1442, 16
      %v1823 = vrot.slane %v1821, 4
      %v1824 = vshll.u32 %v1442, 16
      %v1826 = vrot.slane %v1824, 5
      %v1827 = vor.u32 %v1823, %v1826
      %v1828 = vrot.slane %v1827, 4
      %v1830 = vshll.u32 %v1443, 16
      %v1832 = vrot.slane %v1830, 5
      %v1833 = vsel %vm848, %v1828, %v1832
      %v1834 = vshrl.u32 %v1443, 16
      %v1836 = vrot.slane %v1834, 4
      %v1837 = vor.u32 %v1836, %v1832
      %v1838 = vrot.slane %v1837, 4
      %v1840 = vshll.u32 %v1459, 16
      %v1842 = vrot.slane %v1840, 5
      %v1843 = vsel %vm848, %v1838, %v1842
      %v1844 = vld [vmem:[%s221] sm:$0xe]
      %v1845 = vld [vmem:[%s221 + $0xc] sm:$0xe]
      %v1846 = vld [vmem:[%s221 + $0x18] sm:$0xe]
      %v1847 = vld [vmem:[%s221 + $0x24] sm:$0xe]
      %v1848 = vld [vmem:[%s221 + $0x30] sm:$0xe]
      %v1849 = vld [vmem:[%s221 + $0x3c] sm:$0xe]
      %v1850 = vld [vmem:[%s221 + $0x48] sm:$0xe]
      %v1851 = vld [vmem:[%s221 + $0x54] sm:$0xe]
      %v1852 = vld [vmem:[%s221 + $0x60] sm:$0xe]
      %v1853 = vld [vmem:[%s221 + $0x6c] sm:$0xe]
      %v1854 = vld [vmem:[%s221 + $0x78] sm:$0xe]
      %v1855 = vld [vmem:[%s221 + $0x84] sm:$0xe]
      %v1856 = vld [vmem:[%s221 + $0x90] sm:$0xe]
      %v1857 = vld [vmem:[%s221 + $0x9c] sm:$0xe]
      %v1858 = vld [vmem:[%s221 + $0xa8] sm:$0xe]
      %v1859 = vld [vmem:[%s221 + $0xb4] sm:$0xe]
      %v1908 = vrot.slane %v1844, 5
      %v1909 = vrot.slane %v1908, 4
      %v1910 = vrot.slane %v1413, 5
      %v1911 = vsel %vm1299, %v1909, %v1910
      %v1912 = vrot.slane %v1910, 4
      %v1913 = vrot.slane %v1444, 5
      %v1914 = vsel %vm1299, %v1912, %v1913
      %v1915 = vrot.slane %v1845, 5
      %v1916 = vrot.slane %v1915, 4
      %v1917 = vrot.slane %v1415, 5
      %v1918 = vsel %vm1299, %v1916, %v1917
      %v1919 = vrot.slane %v1917, 4
      %v1920 = vrot.slane %v1445, 5
      %v1921 = vsel %vm1299, %v1919, %v1920
      %v1922 = vrot.slane %v1846, 5
      %v1923 = vrot.slane %v1922, 4
      %v1924 = vrot.slane %v1417, 5
      %v1925 = vsel %vm1299, %v1923, %v1924
      %v1926 = vrot.slane %v1924, 4
      %v1927 = vrot.slane %v1446, 5
      %v1928 = vsel %vm1299, %v1926, %v1927
      %v1929 = vrot.slane %v1847, 5
      %v1930 = vrot.slane %v1929, 4
      %v1931 = vrot.slane %v1419, 5
      %v1932 = vsel %vm1299, %v1930, %v1931
      %v1933 = vrot.slane %v1931, 4
      %v1934 = vrot.slane %v1447, 5
      %v1935 = vsel %vm1299, %v1933, %v1934
      %v1936 = vrot.slane %v1848, 5
      %v1937 = vrot.slane %v1936, 4
      %v1938 = vrot.slane %v1421, 5
      %v1939 = vsel %vm1299, %v1937, %v1938
      %v1940 = vrot.slane %v1938, 4
      %v1941 = vrot.slane %v1448, 5
      %v1942 = vsel %vm1299, %v1940, %v1941
      %v1943 = vrot.slane %v1849, 5
      %v1944 = vrot.slane %v1943, 4
      %v1945 = vrot.slane %v1423, 5
      %v1946 = vsel %vm1299, %v1944, %v1945
      %v1947 = vrot.slane %v1945, 4
      %v1948 = vrot.slane %v1449, 5
      %v1949 = vsel %vm1299, %v1947, %v1948
      %v1950 = vrot.slane %v1850, 5
      %v1951 = vrot.slane %v1950, 4
      %v1952 = vrot.slane %v1425, 5
      %v1953 = vsel %vm1299, %v1951, %v1952
      %v1954 = vrot.slane %v1952, 4
      %v1955 = vrot.slane %v1450, 5
      %v1956 = vsel %vm1299, %v1954, %v1955
      %v1957 = vrot.slane %v1851, 5
      %v1958 = vrot.slane %v1957, 4
      %v1959 = vrot.slane %v1427, 5
      %v1960 = vsel %vm1299, %v1958, %v1959
      %v1961 = vrot.slane %v1959, 4
      %v1962 = vrot.slane %v1451, 5
      %v1963 = vsel %vm1299, %v1961, %v1962
      %v1964 = vrot.slane %v1852, 5
      %v1965 = vrot.slane %v1964, 4
      %v1966 = vrot.slane %v1429, 5
      %v1967 = vsel %vm1299, %v1965, %v1966
      %v1968 = vrot.slane %v1966, 4
      %v1969 = vrot.slane %v1452, 5
      %v1970 = vsel %vm1299, %v1968, %v1969
      %v1971 = vrot.slane %v1853, 5
      %v1972 = vrot.slane %v1971, 4
      %v1973 = vrot.slane %v1431, 5
      %v1974 = vsel %vm1299, %v1972, %v1973
      %v1975 = vrot.slane %v1973, 4
      %v1976 = vrot.slane %v1453, 5
      %v1977 = vsel %vm1299, %v1975, %v1976
      %v1978 = vrot.slane %v1854, 5
      %v1979 = vrot.slane %v1978, 4
      %v1980 = vrot.slane %v1433, 5
      %v1981 = vsel %vm1299, %v1979, %v1980
      %v1982 = vrot.slane %v1980, 4
      %v1983 = vrot.slane %v1454, 5
      %v1984 = vsel %vm1299, %v1982, %v1983
      %v1985 = vrot.slane %v1855, 5
      %v1986 = vrot.slane %v1985, 4
      %v1987 = vrot.slane %v1435, 5
      %v1988 = vsel %vm1299, %v1986, %v1987
      %v1989 = vrot.slane %v1987, 4
      %v1990 = vrot.slane %v1455, 5
      %v1991 = vsel %vm1299, %v1989, %v1990
      %v1992 = vrot.slane %v1856, 5
      %v1993 = vrot.slane %v1992, 4
      %v1994 = vrot.slane %v1437, 5
      %v1995 = vsel %vm1299, %v1993, %v1994
      %v1996 = vrot.slane %v1994, 4
      %v1997 = vrot.slane %v1456, 5
      %v1998 = vsel %vm1299, %v1996, %v1997
      %v1999 = vrot.slane %v1857, 5
      %v2000 = vrot.slane %v1999, 4
      %v2001 = vrot.slane %v1439, 5
      %v2002 = vsel %vm1299, %v2000, %v2001
      %v2003 = vrot.slane %v2001, 4
      %v2004 = vrot.slane %v1457, 5
      %v2005 = vsel %vm1299, %v2003, %v2004
      %v2006 = vrot.slane %v1858, 5
      %v2007 = vrot.slane %v2006, 4
      %v2008 = vrot.slane %v1441, 5
      %v2009 = vsel %vm1299, %v2007, %v2008
      %v2010 = vrot.slane %v2008, 4
      %v2011 = vrot.slane %v1458, 5
      %v2012 = vsel %vm1299, %v2010, %v2011
      %v2013 = vrot.slane %v1859, 5
      %v2014 = vrot.slane %v2013, 4
      %v2015 = vrot.slane %v1443, 5
      %v2016 = vsel %vm1299, %v2014, %v2015
      %v2017 = vrot.slane %v2015, 4
      %v2018 = vrot.slane %v1459, 5
      %v2019 = vsel %vm1299, %v2017, %v2018
      %s2020 = scalar_lea.vmem [#allocation2], 24
      %v2021 = vld [vmem:[%s2020] sm:$0xf]
      %v2022 = vld [vmem:[%s2020 + $0x4] sm:$0xf]
      %v2023 = vld [vmem:[%s2020 + $0xc] sm:$0xf]
      %v2024 = vld [vmem:[%s2020 + $0x10] sm:$0xf]
      %v2025 = vld [vmem:[%s2020 + $0x18] sm:$0xf]
      %v2026 = vld [vmem:[%s2020 + $0x1c] sm:$0xf]
      %v2027 = vld [vmem:[%s2020 + $0x24] sm:$0xf]
      %v2028 = vld [vmem:[%s2020 + $0x28] sm:$0xf]
      %v2029 = vld [vmem:[%s2020 + $0x30] sm:$0xf]
      %v2030 = vld [vmem:[%s2020 + $0x34] sm:$0xf]
      %v2031 = vld [vmem:[%s2020 + $0x3c] sm:$0xf]
      %v2032 = vld [vmem:[%s2020 + $0x40] sm:$0xf]
      %v2033 = vld [vmem:[%s2020 + $0x48] sm:$0xf]
      %v2034 = vld [vmem:[%s2020 + $0x4c] sm:$0xf]
      %v2035 = vld [vmem:[%s2020 + $0x54] sm:$0xf]
      %v2036 = vld [vmem:[%s2020 + $0x58] sm:$0xf]
      %v2037 = vld [vmem:[%s2020 + $0x60] sm:$0xf]
      %v2038 = vld [vmem:[%s2020 + $0x64] sm:$0xf]
      %v2039 = vld [vmem:[%s2020 + $0x6c] sm:$0xf]
      %v2040 = vld [vmem:[%s2020 + $0x70] sm:$0xf]
      %v2041 = vld [vmem:[%s2020 + $0x78] sm:$0xf]
      %v2042 = vld [vmem:[%s2020 + $0x7c] sm:$0xf]
      %v2043 = vld [vmem:[%s2020 + $0x84] sm:$0xf]
      %v2044 = vld [vmem:[%s2020 + $0x88] sm:$0xf]
      %v2045 = vld [vmem:[%s2020 + $0x90] sm:$0xf]
      %v2046 = vld [vmem:[%s2020 + $0x94] sm:$0xf]
      %v2047 = vld [vmem:[%s2020 + $0x9c] sm:$0xf]
      %v2048 = vld [vmem:[%s2020 + $0xa0] sm:$0xf]
      %v2049 = vld [vmem:[%s2020 + $0xa8] sm:$0xf]
      %v2050 = vld [vmem:[%s2020 + $0xac] sm:$0xf]
      %v2051 = vld [vmem:[%s2020 + $0xb4] sm:$0xf]
      %v2052 = vld [vmem:[%s2020 + $0xb8] sm:$0xf]
      %v2053 = vld [vmem:[%s2020 + $0x8] sm:$0x1]
      %v2054 = vld [vmem:[%s2020 + $0x14] sm:$0x1]
      %v2055 = vld [vmem:[%s2020 + $0x20] sm:$0x1]
      %v2056 = vld [vmem:[%s2020 + $0x2c] sm:$0x1]
      %v2057 = vld [vmem:[%s2020 + $0x38] sm:$0x1]
      %v2058 = vld [vmem:[%s2020 + $0x44] sm:$0x1]
      %v2059 = vld [vmem:[%s2020 + $0x50] sm:$0x1]
      %v2060 = vld [vmem:[%s2020 + $0x5c] sm:$0x1]
      %v2061 = vld [vmem:[%s2020 + $0x68] sm:$0x1]
      %v2062 = vld [vmem:[%s2020 + $0x74] sm:$0x1]
      %v2063 = vld [vmem:[%s2020 + $0x80] sm:$0x1]
      %v2064 = vld [vmem:[%s2020 + $0x8c] sm:$0x1]
      %v2065 = vld [vmem:[%s2020 + $0x98] sm:$0x1]
      %v2066 = vld [vmem:[%s2020 + $0xa4] sm:$0x1]
      %v2067 = vld [vmem:[%s2020 + $0xb0] sm:$0x1]
      %v2068 = vld [vmem:[%s2020 + $0xbc] sm:$0x1]
      %v2070 = vshrl.u32 %v2021, 16
      %v2072 = vrot.slane %v2070, 4
      %v2073 = vshll.u32 %v2021, 16
      %v2075 = vrot.slane %v2073, 5
      %v2076 = vor.u32 %v2072, %v2075
      %v2077 = vrot.slane %v2076, 4
      %v2079 = vshll.u32 %v2022, 16
      %v2081 = vrot.slane %v2079, 5
      %v2082 = vsel %vm848, %v2077, %v2081
      %v2083 = vshrl.u32 %v2022, 16
      %v2085 = vrot.slane %v2083, 4
      %v2086 = vor.u32 %v2085, %v2081
      %v2087 = vrot.slane %v2086, 4
      %v2089 = vshll.u32 %v2053, 16
      %v2091 = vrot.slane %v2089, 5
      %v2092 = vsel %vm848, %v2087, %v2091
      %v2094 = vshrl.u32 %v2023, 16
      %v2096 = vrot.slane %v2094, 4
      %v2097 = vshll.u32 %v2023, 16
      %v2099 = vrot.slane %v2097, 5
      %v2100 = vor.u32 %v2096, %v2099
      %v2101 = vrot.slane %v2100, 4
      %v2103 = vshll.u32 %v2024, 16
      %v2105 = vrot.slane %v2103, 5
      %v2106 = vsel %vm848, %v2101, %v2105
      %v2107 = vshrl.u32 %v2024, 16
      %v2109 = vrot.slane %v2107, 4
      %v2110 = vor.u32 %v2109, %v2105
      %v2111 = vrot.slane %v2110, 4
      %v2113 = vshll.u32 %v2054, 16
      %v2115 = vrot.slane %v2113, 5
      %v2116 = vsel %vm848, %v2111, %v2115
      %v2118 = vshrl.u32 %v2025, 16
      %v2120 = vrot.slane %v2118, 4
      %v2121 = vshll.u32 %v2025, 16
      %v2123 = vrot.slane %v2121, 5
      %v2124 = vor.u32 %v2120, %v2123
      %v2125 = vrot.slane %v2124, 4
      %v2127 = vshll.u32 %v2026, 16
      %v2129 = vrot.slane %v2127, 5
      %v2130 = vsel %vm848, %v2125, %v2129
      %v2131 = vshrl.u32 %v2026, 16
      %v2133 = vrot.slane %v2131, 4
      %v2134 = vor.u32 %v2133, %v2129
      %v2135 = vrot.slane %v2134, 4
      %v2137 = vshll.u32 %v2055, 16
      %v2139 = vrot.slane %v2137, 5
      %v2140 = vsel %vm848, %v2135, %v2139
      %v2142 = vshrl.u32 %v2027, 16
      %v2144 = vrot.slane %v2142, 4
      %v2145 = vshll.u32 %v2027, 16
      %v2147 = vrot.slane %v2145, 5
      %v2148 = vor.u32 %v2144, %v2147
      %v2149 = vrot.slane %v2148, 4
      %v2151 = vshll.u32 %v2028, 16
      %v2153 = vrot.slane %v2151, 5
      %v2154 = vsel %vm848, %v2149, %v2153
      %v2155 = vshrl.u32 %v2028, 16
      %v2157 = vrot.slane %v2155, 4
      %v2158 = vor.u32 %v2157, %v2153
      %v2159 = vrot.slane %v2158, 4
      %v2161 = vshll.u32 %v2056, 16
      %v2163 = vrot.slane %v2161, 5
      %v2164 = vsel %vm848, %v2159, %v2163
      %v2166 = vshrl.u32 %v2029, 16
      %v2168 = vrot.slane %v2166, 4
      %v2169 = vshll.u32 %v2029, 16
      %v2171 = vrot.slane %v2169, 5
      %v2172 = vor.u32 %v2168, %v2171
      %v2173 = vrot.slane %v2172, 4
      %v2175 = vshll.u32 %v2030, 16
      %v2177 = vrot.slane %v2175, 5
      %v2178 = vsel %vm848, %v2173, %v2177
      %v2179 = vshrl.u32 %v2030, 16
      %v2181 = vrot.slane %v2179, 4
      %v2182 = vor.u32 %v2181, %v2177
      %v2183 = vrot.slane %v2182, 4
      %v2185 = vshll.u32 %v2057, 16
      %v2187 = vrot.slane %v2185, 5
      %v2188 = vsel %vm848, %v2183, %v2187
      %v2190 = vshrl.u32 %v2031, 16
      %v2192 = vrot.slane %v2190, 4
      %v2193 = vshll.u32 %v2031, 16
      %v2195 = vrot.slane %v2193, 5
      %v2196 = vor.u32 %v2192, %v2195
      %v2197 = vrot.slane %v2196, 4
      %v2199 = vshll.u32 %v2032, 16
      %v2201 = vrot.slane %v2199, 5
      %v2202 = vsel %vm848, %v2197, %v2201
      %v2203 = vshrl.u32 %v2032, 16
      %v2205 = vrot.slane %v2203, 4
      %v2206 = vor.u32 %v2205, %v2201
      %v2207 = vrot.slane %v2206, 4
      %v2209 = vshll.u32 %v2058, 16
      %v2211 = vrot.slane %v2209, 5
      %v2212 = vsel %vm848, %v2207, %v2211
      %v2214 = vshrl.u32 %v2033, 16
      %v2216 = vrot.slane %v2214, 4
      %v2217 = vshll.u32 %v2033, 16
      %v2219 = vrot.slane %v2217, 5
      %v2220 = vor.u32 %v2216, %v2219
      %v2221 = vrot.slane %v2220, 4
      %v2223 = vshll.u32 %v2034, 16
      %v2225 = vrot.slane %v2223, 5
      %v2226 = vsel %vm848, %v2221, %v2225
      %v2227 = vshrl.u32 %v2034, 16
      %v2229 = vrot.slane %v2227, 4
      %v2230 = vor.u32 %v2229, %v2225
      %v2231 = vrot.slane %v2230, 4
      %v2233 = vshll.u32 %v2059, 16
      %v2235 = vrot.slane %v2233, 5
      %v2236 = vsel %vm848, %v2231, %v2235
      %v2238 = vshrl.u32 %v2035, 16
      %v2240 = vrot.slane %v2238, 4
      %v2241 = vshll.u32 %v2035, 16
      %v2243 = vrot.slane %v2241, 5
      %v2244 = vor.u32 %v2240, %v2243
      %v2245 = vrot.slane %v2244, 4
      %v2247 = vshll.u32 %v2036, 16
      %v2249 = vrot.slane %v2247, 5
      %v2250 = vsel %vm848, %v2245, %v2249
      %v2251 = vshrl.u32 %v2036, 16
      %v2253 = vrot.slane %v2251, 4
      %v2254 = vor.u32 %v2253, %v2249
      %v2255 = vrot.slane %v2254, 4
      %v2257 = vshll.u32 %v2060, 16
      %v2259 = vrot.slane %v2257, 5
      %v2260 = vsel %vm848, %v2255, %v2259
      %v2262 = vshrl.u32 %v2037, 16
      %v2264 = vrot.slane %v2262, 4
      %v2265 = vshll.u32 %v2037, 16
      %v2267 = vrot.slane %v2265, 5
      %v2268 = vor.u32 %v2264, %v2267
      %v2269 = vrot.slane %v2268, 4
      %v2271 = vshll.u32 %v2038, 16
      %v2273 = vrot.slane %v2271, 5
      %v2274 = vsel %vm848, %v2269, %v2273
      %v2275 = vshrl.u32 %v2038, 16
      %v2277 = vrot.slane %v2275, 4
      %v2278 = vor.u32 %v2277, %v2273
      %v2279 = vrot.slane %v2278, 4
      %v2281 = vshll.u32 %v2061, 16
      %v2283 = vrot.slane %v2281, 5
      %v2284 = vsel %vm848, %v2279, %v2283
      %v2286 = vshrl.u32 %v2039, 16
      %v2288 = vrot.slane %v2286, 4
      %v2289 = vshll.u32 %v2039, 16
      %v2291 = vrot.slane %v2289, 5
      %v2292 = vor.u32 %v2288, %v2291
      %v2293 = vrot.slane %v2292, 4
      %v2295 = vshll.u32 %v2040, 16
      %v2297 = vrot.slane %v2295, 5
      %v2298 = vsel %vm848, %v2293, %v2297
      %v2299 = vshrl.u32 %v2040, 16
      %v2301 = vrot.slane %v2299, 4
      %v2302 = vor.u32 %v2301, %v2297
      %v2303 = vrot.slane %v2302, 4
      %v2305 = vshll.u32 %v2062, 16
      %v2307 = vrot.slane %v2305, 5
      %v2308 = vsel %vm848, %v2303, %v2307
      %v2310 = vshrl.u32 %v2041, 16
      %v2312 = vrot.slane %v2310, 4
      %v2313 = vshll.u32 %v2041, 16
      %v2315 = vrot.slane %v2313, 5
      %v2316 = vor.u32 %v2312, %v2315
      %v2317 = vrot.slane %v2316, 4
      %v2319 = vshll.u32 %v2042, 16
      %v2321 = vrot.slane %v2319, 5
      %v2322 = vsel %vm848, %v2317, %v2321
      %v2323 = vshrl.u32 %v2042, 16
      %v2325 = vrot.slane %v2323, 4
      %v2326 = vor.u32 %v2325, %v2321
      %v2327 = vrot.slane %v2326, 4
      %v2329 = vshll.u32 %v2063, 16
      %v2331 = vrot.slane %v2329, 5
      %v2332 = vsel %vm848, %v2327, %v2331
      %v2334 = vshrl.u32 %v2043, 16
      %v2336 = vrot.slane %v2334, 4
      %v2337 = vshll.u32 %v2043, 16
      %v2339 = vrot.slane %v2337, 5
      %v2340 = vor.u32 %v2336, %v2339
      %v2341 = vrot.slane %v2340, 4
      %v2343 = vshll.u32 %v2044, 16
      %v2345 = vrot.slane %v2343, 5
      %v2346 = vsel %vm848, %v2341, %v2345
      %v2347 = vshrl.u32 %v2044, 16
      %v2349 = vrot.slane %v2347, 4
      %v2350 = vor.u32 %v2349, %v2345
      %v2351 = vrot.slane %v2350, 4
      %v2353 = vshll.u32 %v2064, 16
      %v2355 = vrot.slane %v2353, 5
      %v2356 = vsel %vm848, %v2351, %v2355
      %v2358 = vshrl.u32 %v2045, 16
      %v2360 = vrot.slane %v2358, 4
      %v2361 = vshll.u32 %v2045, 16
      %v2363 = vrot.slane %v2361, 5
      %v2364 = vor.u32 %v2360, %v2363
      %v2365 = vrot.slane %v2364, 4
      %v2367 = vshll.u32 %v2046, 16
      %v2369 = vrot.slane %v2367, 5
      %v2370 = vsel %vm848, %v2365, %v2369
      %v2371 = vshrl.u32 %v2046, 16
      %v2373 = vrot.slane %v2371, 4
      %v2374 = vor.u32 %v2373, %v2369
      %v2375 = vrot.slane %v2374, 4
      %v2377 = vshll.u32 %v2065, 16
      %v2379 = vrot.slane %v2377, 5
      %v2380 = vsel %vm848, %v2375, %v2379
      %v2382 = vshrl.u32 %v2047, 16
      %v2384 = vrot.slane %v2382, 4
      %v2385 = vshll.u32 %v2047, 16
      %v2387 = vrot.slane %v2385, 5
      %v2388 = vor.u32 %v2384, %v2387
      %v2389 = vrot.slane %v2388, 4
      %v2391 = vshll.u32 %v2048, 16
      %v2393 = vrot.slane %v2391, 5
      %v2394 = vsel %vm848, %v2389, %v2393
      %v2395 = vshrl.u32 %v2048, 16
      %v2397 = vrot.slane %v2395, 4
      %v2398 = vor.u32 %v2397, %v2393
      %v2399 = vrot.slane %v2398, 4
      %v2401 = vshll.u32 %v2066, 16
      %v2403 = vrot.slane %v2401, 5
      %v2404 = vsel %vm848, %v2399, %v2403
      %v2406 = vshrl.u32 %v2049, 16
      %v2408 = vrot.slane %v2406, 4
      %v2409 = vshll.u32 %v2049, 16
      %v2411 = vrot.slane %v2409, 5
      %v2412 = vor.u32 %v2408, %v2411
      %v2413 = vrot.slane %v2412, 4
      %v2415 = vshll.u32 %v2050, 16
      %v2417 = vrot.slane %v2415, 5
      %v2418 = vsel %vm848, %v2413, %v2417
      %v2419 = vshrl.u32 %v2050, 16
      %v2421 = vrot.slane %v2419, 4
      %v2422 = vor.u32 %v2421, %v2417
      %v2423 = vrot.slane %v2422, 4
      %v2425 = vshll.u32 %v2067, 16
      %v2427 = vrot.slane %v2425, 5
      %v2428 = vsel %vm848, %v2423, %v2427
      %v2430 = vshrl.u32 %v2051, 16
      %v2432 = vrot.slane %v2430, 4
      %v2433 = vshll.u32 %v2051, 16
      %v2435 = vrot.slane %v2433, 5
      %v2436 = vor.u32 %v2432, %v2435
      %v2437 = vrot.slane %v2436, 4
      %v2439 = vshll.u32 %v2052, 16
      %v2441 = vrot.slane %v2439, 5
      %v2442 = vsel %vm848, %v2437, %v2441
      %v2443 = vshrl.u32 %v2052, 16
      %v2445 = vrot.slane %v2443, 4
      %v2446 = vor.u32 %v2445, %v2441
      %v2447 = vrot.slane %v2446, 4
      %v2449 = vshll.u32 %v2068, 16
      %v2451 = vrot.slane %v2449, 5
      %v2452 = vsel %vm848, %v2447, %v2451
      %v2453 = vld [vmem:[%s2020] sm:$0xe]
      %v2454 = vld [vmem:[%s2020 + $0xc] sm:$0xe]
      %v2455 = vld [vmem:[%s2020 + $0x18] sm:$0xe]
      %v2456 = vld [vmem:[%s2020 + $0x24] sm:$0xe]
      %v2457 = vld [vmem:[%s2020 + $0x30] sm:$0xe]
      %v2458 = vld [vmem:[%s2020 + $0x3c] sm:$0xe]
      %v2459 = vld [vmem:[%s2020 + $0x48] sm:$0xe]
      %v2460 = vld [vmem:[%s2020 + $0x54] sm:$0xe]
      %v2461 = vld [vmem:[%s2020 + $0x60] sm:$0xe]
      %v2462 = vld [vmem:[%s2020 + $0x6c] sm:$0xe]
      %v2463 = vld [vmem:[%s2020 + $0x78] sm:$0xe]
      %v2464 = vld [vmem:[%s2020 + $0x84] sm:$0xe]
      %v2465 = vld [vmem:[%s2020 + $0x90] sm:$0xe]
      %v2466 = vld [vmem:[%s2020 + $0x9c] sm:$0xe]
      %v2467 = vld [vmem:[%s2020 + $0xa8] sm:$0xe]
      %v2468 = vld [vmem:[%s2020 + $0xb4] sm:$0xe]
      %v2517 = vrot.slane %v2453, 5
      %v2518 = vrot.slane %v2517, 4
      %v2519 = vrot.slane %v2022, 5
      %v2520 = vsel %vm1299, %v2518, %v2519
      %v2521 = vrot.slane %v2519, 4
      %v2522 = vrot.slane %v2053, 5
      %v2523 = vsel %vm1299, %v2521, %v2522
      %v2524 = vrot.slane %v2454, 5
      %v2525 = vrot.slane %v2524, 4
      %v2526 = vrot.slane %v2024, 5
      %v2527 = vsel %vm1299, %v2525, %v2526
      %v2528 = vrot.slane %v2526, 4
      %v2529 = vrot.slane %v2054, 5
      %v2530 = vsel %vm1299, %v2528, %v2529
      %v2531 = vrot.slane %v2455, 5
      %v2532 = vrot.slane %v2531, 4
      %v2533 = vrot.slane %v2026, 5
      %v2534 = vsel %vm1299, %v2532, %v2533
      %v2535 = vrot.slane %v2533, 4
      %v2536 = vrot.slane %v2055, 5
      %v2537 = vsel %vm1299, %v2535, %v2536
      %v2538 = vrot.slane %v2456, 5
      %v2539 = vrot.slane %v2538, 4
      %v2540 = vrot.slane %v2028, 5
      %v2541 = vsel %vm1299, %v2539, %v2540
      %v2542 = vrot.slane %v2540, 4
      %v2543 = vrot.slane %v2056, 5
      %v2544 = vsel %vm1299, %v2542, %v2543
      %v2545 = vrot.slane %v2457, 5
      %v2546 = vrot.slane %v2545, 4
      %v2547 = vrot.slane %v2030, 5
      %v2548 = vsel %vm1299, %v2546, %v2547
      %v2549 = vrot.slane %v2547, 4
      %v2550 = vrot.slane %v2057, 5
      %v2551 = vsel %vm1299, %v2549, %v2550
      %v2552 = vrot.slane %v2458, 5
      %v2553 = vrot.slane %v2552, 4
      %v2554 = vrot.slane %v2032, 5
      %v2555 = vsel %vm1299, %v2553, %v2554
      %v2556 = vrot.slane %v2554, 4
      %v2557 = vrot.slane %v2058, 5
      %v2558 = vsel %vm1299, %v2556, %v2557
      %v2559 = vrot.slane %v2459, 5
      %v2560 = vrot.slane %v2559, 4
      %v2561 = vrot.slane %v2034, 5
      %v2562 = vsel %vm1299, %v2560, %v2561
      %v2563 = vrot.slane %v2561, 4
      %v2564 = vrot.slane %v2059, 5
      %v2565 = vsel %vm1299, %v2563, %v2564
      %v2566 = vrot.slane %v2460, 5
      %v2567 = vrot.slane %v2566, 4
      %v2568 = vrot.slane %v2036, 5
      %v2569 = vsel %vm1299, %v2567, %v2568
      %v2570 = vrot.slane %v2568, 4
      %v2571 = vrot.slane %v2060, 5
      %v2572 = vsel %vm1299, %v2570, %v2571
      %v2573 = vrot.slane %v2461, 5
      %v2574 = vrot.slane %v2573, 4
      %v2575 = vrot.slane %v2038, 5
      %v2576 = vsel %vm1299, %v2574, %v2575
      %v2577 = vrot.slane %v2575, 4
      %v2578 = vrot.slane %v2061, 5
      %v2579 = vsel %vm1299, %v2577, %v2578
      %v2580 = vrot.slane %v2462, 5
      %v2581 = vrot.slane %v2580, 4
      %v2582 = vrot.slane %v2040, 5
      %v2583 = vsel %vm1299, %v2581, %v2582
      %v2584 = vrot.slane %v2582, 4
      %v2585 = vrot.slane %v2062, 5
      %v2586 = vsel %vm1299, %v2584, %v2585
      %v2587 = vrot.slane %v2463, 5
      %v2588 = vrot.slane %v2587, 4
      %v2589 = vrot.slane %v2042, 5
      %v2590 = vsel %vm1299, %v2588, %v2589
      %v2591 = vrot.slane %v2589, 4
      %v2592 = vrot.slane %v2063, 5
      %v2593 = vsel %vm1299, %v2591, %v2592
      %v2594 = vrot.slane %v2464, 5
      %v2595 = vrot.slane %v2594, 4
      %v2596 = vrot.slane %v2044, 5
      %v2597 = vsel %vm1299, %v2595, %v2596
      %v2598 = vrot.slane %v2596, 4
      %v2599 = vrot.slane %v2064, 5
      %v2600 = vsel %vm1299, %v2598, %v2599
      %v2601 = vrot.slane %v2465, 5
      %v2602 = vrot.slane %v2601, 4
      %v2603 = vrot.slane %v2046, 5
      %v2604 = vsel %vm1299, %v2602, %v2603
      %v2605 = vrot.slane %v2603, 4
      %v2606 = vrot.slane %v2065, 5
      %v2607 = vsel %vm1299, %v2605, %v2606
      %v2608 = vrot.slane %v2466, 5
      %v2609 = vrot.slane %v2608, 4
      %v2610 = vrot.slane %v2048, 5
      %v2611 = vsel %vm1299, %v2609, %v2610
      %v2612 = vrot.slane %v2610, 4
      %v2613 = vrot.slane %v2066, 5
      %v2614 = vsel %vm1299, %v2612, %v2613
      %v2615 = vrot.slane %v2467, 5
      %v2616 = vrot.slane %v2615, 4
      %v2617 = vrot.slane %v2050, 5
      %v2618 = vsel %vm1299, %v2616, %v2617
      %v2619 = vrot.slane %v2617, 4
      %v2620 = vrot.slane %v2067, 5
      %v2621 = vsel %vm1299, %v2619, %v2620
      %v2622 = vrot.slane %v2468, 5
      %v2623 = vrot.slane %v2622, 4
      %v2624 = vrot.slane %v2052, 5
      %v2625 = vsel %vm1299, %v2623, %v2624
      %v2626 = vrot.slane %v2624, 4
      %v2627 = vrot.slane %v2068, 5
      %v2628 = vsel %vm1299, %v2626, %v2627
      %v2645 = vunpack.c.l.b16 %v798
      %v2646 = vunpack.c.l.b16 %v799
      %v2647 = vunpack.c.l.b16 %v800
      %v2648 = vunpack.c.l.b16 %v801
      %v2649 = vunpack.c.l.b16 %v802
      %v2650 = vunpack.c.l.b16 %v803
      %v2651 = vunpack.c.l.b16 %v804
      %v2652 = vunpack.c.l.b16 %v805
      %v2653 = vunpack.c.l.b16 %v806
      %v2654 = vunpack.c.l.b16 %v807
      %v2655 = vunpack.c.l.b16 %v808
      %v2656 = vunpack.c.l.b16 %v809
      %v2657 = vunpack.c.l.b16 %v810
      %v2658 = vunpack.c.l.b16 %v811
      %v2659 = vunpack.c.l.b16 %v812
      %v2660 = vunpack.c.l.b16 %v813
      %v2661 = vunpack.c.l.b16 %v814
      %v2662 = vunpack.c.l.b16 %v815
      %v2663 = vunpack.c.l.b16 %v816
      %v2664 = vunpack.c.l.b16 %v817
      %v2665 = vunpack.c.l.b16 %v818
      %v2666 = vunpack.c.l.b16 %v819
      %v2667 = vunpack.c.l.b16 %v820
      %v2668 = vunpack.c.l.b16 %v821
      %v2669 = vunpack.c.l.b16 %v822
      %v2670 = vunpack.c.l.b16 %v823
      %v2671 = vunpack.c.l.b16 %v824
      %v2672 = vunpack.c.l.b16 %v825
      %v2673 = vunpack.c.l.b16 %v826
      %v2674 = vunpack.c.l.b16 %v827
      %v2675 = vunpack.c.l.b16 %v828
      %v2676 = vunpack.c.l.b16 %v829
      %v2677 = vpack.c.b16 %v2646, %v2645
      %v2678 = vpack.c.b16 %v2648, %v2647
      %v2679 = vpack.c.b16 %v2650, %v2649
      %v2680 = vpack.c.b16 %v2652, %v2651
      %v2681 = vpack.c.b16 %v2654, %v2653
      %v2682 = vpack.c.b16 %v2656, %v2655
      %v2683 = vpack.c.b16 %v2658, %v2657
      %v2684 = vpack.c.b16 %v2660, %v2659
      %v2685 = vpack.c.b16 %v2662, %v2661
      %v2686 = vpack.c.b16 %v2664, %v2663
      %v2687 = vpack.c.b16 %v2666, %v2665
      %v2688 = vpack.c.b16 %v2668, %v2667
      %v2689 = vpack.c.b16 %v2670, %v2669
      %v2690 = vpack.c.b16 %v2672, %v2671
      %v2691 = vpack.c.b16 %v2674, %v2673
      %v2692 = vpack.c.b16 %v2676, %v2675
      %v2693 = vunpack.c.l.b16 %v862
      %v2694 = vunpack.c.l.b16 %v872
      %v2695 = vunpack.c.l.b16 %v886
      %v2696 = vunpack.c.l.b16 %v896
      %v2697 = vunpack.c.l.b16 %v910
      %v2698 = vunpack.c.l.b16 %v920
      %v2699 = vunpack.c.l.b16 %v934
      %v2700 = vunpack.c.l.b16 %v944
      %v2701 = vunpack.c.l.b16 %v958
      %v2702 = vunpack.c.l.b16 %v968
      %v2703 = vunpack.c.l.b16 %v982
      %v2704 = vunpack.c.l.b16 %v992
      %v2705 = vunpack.c.l.b16 %v1006
      %v2706 = vunpack.c.l.b16 %v1016
      %v2707 = vunpack.c.l.b16 %v1030
      %v2708 = vunpack.c.l.b16 %v1040
      %v2709 = vunpack.c.l.b16 %v1054
      %v2710 = vunpack.c.l.b16 %v1064
      %v2711 = vunpack.c.l.b16 %v1078
      %v2712 = vunpack.c.l.b16 %v1088
      %v2713 = vunpack.c.l.b16 %v1102
      %v2714 = vunpack.c.l.b16 %v1112
      %v2715 = vunpack.c.l.b16 %v1126
      %v2716 = vunpack.c.l.b16 %v1136
      %v2717 = vunpack.c.l.b16 %v1150
      %v2718 = vunpack.c.l.b16 %v1160
      %v2719 = vunpack.c.l.b16 %v1174
      %v2720 = vunpack.c.l.b16 %v1184
      %v2721 = vunpack.c.l.b16 %v1198
      %v2722 = vunpack.c.l.b16 %v1208
      %v2723 = vunpack.c.l.b16 %v1222
      %v2724 = vunpack.c.l.b16 %v1232
      %v2725 = vpack.c.b16 %v2694, %v2693
      %v2726 = vpack.c.b16 %v2696, %v2695
      %v2727 = vpack.c.b16 %v2698, %v2697
      %v2728 = vpack.c.b16 %v2700, %v2699
      %v2729 = vpack.c.b16 %v2702, %v2701
      %v2730 = vpack.c.b16 %v2704, %v2703
      %v2731 = vpack.c.b16 %v2706, %v2705
      %v2732 = vpack.c.b16 %v2708, %v2707
      %v2733 = vpack.c.b16 %v2710, %v2709
      %v2734 = vpack.c.b16 %v2712, %v2711
      %v2735 = vpack.c.b16 %v2714, %v2713
      %v2736 = vpack.c.b16 %v2716, %v2715
      %v2737 = vpack.c.b16 %v2718, %v2717
      %v2738 = vpack.c.b16 %v2720, %v2719
      %v2739 = vpack.c.b16 %v2722, %v2721
      %v2740 = vpack.c.b16 %v2724, %v2723
      %2741 = vrot.lane.b32.xlu0 %v2725, 64
      %v2742 = vpop.permute.xlu0 %2741
      %2743 = vrot.lane.b32.xlu0 %v2726, 64
      %v2744 = vpop.permute.xlu0 %2743
      %2745 = vrot.lane.b32.xlu0 %v2727, 64
      %v2746 = vpop.permute.xlu0 %2745
      %2747 = vrot.lane.b32.xlu0 %v2728, 64
      %v2748 = vpop.permute.xlu0 %2747
      %2749 = vrot.lane.b32.xlu0 %v2729, 64
      %v2750 = vpop.permute.xlu0 %2749
      %2751 = vrot.lane.b32.xlu0 %v2730, 64
      %v2752 = vpop.permute.xlu0 %2751
      %2753 = vrot.lane.b32.xlu0 %v2731, 64
      %v2754 = vpop.permute.xlu0 %2753
      %2755 = vrot.lane.b32.xlu0 %v2732, 64
      %v2756 = vpop.permute.xlu0 %2755
      %2757 = vrot.lane.b32.xlu0 %v2733, 64
      %v2758 = vpop.permute.xlu0 %2757
      %2759 = vrot.lane.b32.xlu0 %v2734, 64
      %v2760 = vpop.permute.xlu0 %2759
      %2761 = vrot.lane.b32.xlu0 %v2735, 64
      %v2762 = vpop.permute.xlu0 %2761
      %2763 = vrot.lane.b32.xlu0 %v2736, 64
      %v2764 = vpop.permute.xlu0 %2763
      %2765 = vrot.lane.b32.xlu0 %v2737, 64
      %v2766 = vpop.permute.xlu0 %2765
      %2767 = vrot.lane.b32.xlu0 %v2738, 64
      %v2768 = vpop.permute.xlu0 %2767
      %2769 = vrot.lane.b32.xlu0 %v2739, 64
      %v2770 = vpop.permute.xlu0 %2769
      %2771 = vrot.lane.b32.xlu0 %v2740, 64
      %v2772 = vpop.permute.xlu0 %2771
      %v2773 = vunpack.c.l.b16 %v1303
      %v2774 = vunpack.c.l.b16 %v1306
      %v2775 = vunpack.c.l.b16 %v1310
      %v2776 = vunpack.c.l.b16 %v1313
      %v2777 = vunpack.c.l.b16 %v1317
      %v2778 = vunpack.c.l.b16 %v1320
      %v2779 = vunpack.c.l.b16 %v1324
      %v2780 = vunpack.c.l.b16 %v1327
      %v2781 = vunpack.c.l.b16 %v1331
      %v2782 = vunpack.c.l.b16 %v1334
      %v2783 = vunpack.c.l.b16 %v1338
      %v2784 = vunpack.c.l.b16 %v1341
      %v2785 = vunpack.c.l.b16 %v1345
      %v2786 = vunpack.c.l.b16 %v1348
      %v2787 = vunpack.c.l.b16 %v1352
      %v2788 = vunpack.c.l.b16 %v1355
      %v2789 = vunpack.c.l.b16 %v1359
      %v2790 = vunpack.c.l.b16 %v1362
      %v2791 = vunpack.c.l.b16 %v1366
      %v2792 = vunpack.c.l.b16 %v1369
      %v2793 = vunpack.c.l.b16 %v1373
      %v2794 = vunpack.c.l.b16 %v1376
      %v2795 = vunpack.c.l.b16 %v1380
      %v2796 = vunpack.c.l.b16 %v1383
      %v2797 = vunpack.c.l.b16 %v1387
      %v2798 = vunpack.c.l.b16 %v1390
      %v2799 = vunpack.c.l.b16 %v1394
      %v2800 = vunpack.c.l.b16 %v1397
      %v2801 = vunpack.c.l.b16 %v1401
      %v2802 = vunpack.c.l.b16 %v1404
      %v2803 = vunpack.c.l.b16 %v1408
      %v2804 = vunpack.c.l.b16 %v1411
      %v2805 = vpack.c.b16 %v2774, %v2773
      %v2806 = vpack.c.b16 %v2776, %v2775
      %v2807 = vpack.c.b16 %v2778, %v2777
      %v2808 = vpack.c.b16 %v2780, %v2779
      %v2809 = vpack.c.b16 %v2782, %v2781
      %v2810 = vpack.c.b16 %v2784, %v2783
      %v2811 = vpack.c.b16 %v2786, %v2785
      %v2812 = vpack.c.b16 %v2788, %v2787
      %v2813 = vpack.c.b16 %v2790, %v2789
      %v2814 = vpack.c.b16 %v2792, %v2791
      %v2815 = vpack.c.b16 %v2794, %v2793
      %v2816 = vpack.c.b16 %v2796, %v2795
      %v2817 = vpack.c.b16 %v2798, %v2797
      %v2818 = vpack.c.b16 %v2800, %v2799
      %v2819 = vpack.c.b16 %v2802, %v2801
      %v2820 = vpack.c.b16 %v2804, %v2803
      %v2837 = vunpack.c.l.b16 %v1412
      %v2838 = vunpack.c.l.b16 %v1413
      %v2839 = vunpack.c.l.b16 %v1414
      %v2840 = vunpack.c.l.b16 %v1415
      %v2841 = vunpack.c.l.b16 %v1416
      %v2842 = vunpack.c.l.b16 %v1417
      %v2843 = vunpack.c.l.b16 %v1418
      %v2844 = vunpack.c.l.b16 %v1419
      %v2845 = vunpack.c.l.b16 %v1420
      %v2846 = vunpack.c.l.b16 %v1421
      %v2847 = vunpack.c.l.b16 %v1422
      %v2848 = vunpack.c.l.b16 %v1423
      %v2849 = vunpack.c.l.b16 %v1424
      %v2850 = vunpack.c.l.b16 %v1425
      %v2851 = vunpack.c.l.b16 %v1426
      %v2852 = vunpack.c.l.b16 %v1427
      %v2853 = vunpack.c.l.b16 %v1428
      %v2854 = vunpack.c.l.b16 %v1429
      %v2855 = vunpack.c.l.b16 %v1430
      %v2856 = vunpack.c.l.b16 %v1431
      %v2857 = vunpack.c.l.b16 %v1432
      %v2858 = vunpack.c.l.b16 %v1433
      %v2859 = vunpack.c.l.b16 %v1434
      %v2860 = vunpack.c.l.b16 %v1435
      %v2861 = vunpack.c.l.b16 %v1436
      %v2862 = vunpack.c.l.b16 %v1437
      %v2863 = vunpack.c.l.b16 %v1438
      %v2864 = vunpack.c.l.b16 %v1439
      %v2865 = vunpack.c.l.b16 %v1440
      %v2866 = vunpack.c.l.b16 %v1441
      %v2867 = vunpack.c.l.b16 %v1442
      %v2868 = vunpack.c.l.b16 %v1443
      %v2869 = vpack.c.b16 %v2838, %v2837
      %v2870 = vpack.c.b16 %v2840, %v2839
      %v2871 = vpack.c.b16 %v2842, %v2841
      %v2872 = vpack.c.b16 %v2844, %v2843
      %v2873 = vpack.c.b16 %v2846, %v2845
      %v2874 = vpack.c.b16 %v2848, %v2847
      %v2875 = vpack.c.b16 %v2850, %v2849
      %v2876 = vpack.c.b16 %v2852, %v2851
      %v2877 = vpack.c.b16 %v2854, %v2853
      %v2878 = vpack.c.b16 %v2856, %v2855
      %v2879 = vpack.c.b16 %v2858, %v2857
      %v2880 = vpack.c.b16 %v2860, %v2859
      %v2881 = vpack.c.b16 %v2862, %v2861
      %v2882 = vpack.c.b16 %v2864, %v2863
      %v2883 = vpack.c.b16 %v2866, %v2865
      %v2884 = vpack.c.b16 %v2868, %v2867
      %2885 = vrot.lane.b32.xlu0 %v2869, 64
      %v2886 = vpop.permute.xlu0 %2885
      %2887 = vrot.lane.b32.xlu0 %v2870, 64
      %v2888 = vpop.permute.xlu0 %2887
      %2889 = vrot.lane.b32.xlu0 %v2871, 64
      %v2890 = vpop.permute.xlu0 %2889
      %2891 = vrot.lane.b32.xlu0 %v2872, 64
      %v2892 = vpop.permute.xlu0 %2891
      %2893 = vrot.lane.b32.xlu0 %v2873, 64
      %v2894 = vpop.permute.xlu0 %2893
      %2895 = vrot.lane.b32.xlu0 %v2874, 64
      %v2896 = vpop.permute.xlu0 %2895
      %2897 = vrot.lane.b32.xlu0 %v2875, 64
      %v2898 = vpop.permute.xlu0 %2897
      %2899 = vrot.lane.b32.xlu0 %v2876, 64
      %v2900 = vpop.permute.xlu0 %2899
      %2901 = vrot.lane.b32.xlu0 %v2877, 64
      %v2902 = vpop.permute.xlu0 %2901
      %2903 = vrot.lane.b32.xlu0 %v2878, 64
      %v2904 = vpop.permute.xlu0 %2903
      %2905 = vrot.lane.b32.xlu0 %v2879, 64
      %v2906 = vpop.permute.xlu0 %2905
      %2907 = vrot.lane.b32.xlu0 %v2880, 64
      %v2908 = vpop.permute.xlu0 %2907
      %2909 = vrot.lane.b32.xlu0 %v2881, 64
      %v2910 = vpop.permute.xlu0 %2909
      %2911 = vrot.lane.b32.xlu0 %v2882, 64
      %v2912 = vpop.permute.xlu0 %2911
      %2913 = vrot.lane.b32.xlu0 %v2883, 64
      %v2914 = vpop.permute.xlu0 %2913
      %2915 = vrot.lane.b32.xlu0 %v2884, 64
      %v2916 = vpop.permute.xlu0 %2915
      %v2917 = vunpack.c.l.b16 %v1473
      %v2918 = vunpack.c.l.b16 %v1483
      %v2919 = vunpack.c.l.b16 %v1497
      %v2920 = vunpack.c.l.b16 %v1507
      %v2921 = vunpack.c.l.b16 %v1521
      %v2922 = vunpack.c.l.b16 %v1531
      %v2923 = vunpack.c.l.b16 %v1545
      %v2924 = vunpack.c.l.b16 %v1555
      %v2925 = vunpack.c.l.b16 %v1569
      %v2926 = vunpack.c.l.b16 %v1579
      %v2927 = vunpack.c.l.b16 %v1593
      %v2928 = vunpack.c.l.b16 %v1603
      %v2929 = vunpack.c.l.b16 %v1617
      %v2930 = vunpack.c.l.b16 %v1627
      %v2931 = vunpack.c.l.b16 %v1641
      %v2932 = vunpack.c.l.b16 %v1651
      %v2933 = vunpack.c.l.b16 %v1665
      %v2934 = vunpack.c.l.b16 %v1675
      %v2935 = vunpack.c.l.b16 %v1689
      %v2936 = vunpack.c.l.b16 %v1699
      %v2937 = vunpack.c.l.b16 %v1713
      %v2938 = vunpack.c.l.b16 %v1723
      %v2939 = vunpack.c.l.b16 %v1737
      %v2940 = vunpack.c.l.b16 %v1747
      %v2941 = vunpack.c.l.b16 %v1761
      %v2942 = vunpack.c.l.b16 %v1771
      %v2943 = vunpack.c.l.b16 %v1785
      %v2944 = vunpack.c.l.b16 %v1795
      %v2945 = vunpack.c.l.b16 %v1809
      %v2946 = vunpack.c.l.b16 %v1819
      %v2947 = vunpack.c.l.b16 %v1833
      %v2948 = vunpack.c.l.b16 %v1843
      %v2949 = vpack.c.b16 %v2918, %v2917
      %v2950 = vpack.c.b16 %v2920, %v2919
      %v2951 = vpack.c.b16 %v2922, %v2921
      %v2952 = vpack.c.b16 %v2924, %v2923
      %v2953 = vpack.c.b16 %v2926, %v2925
      %v2954 = vpack.c.b16 %v2928, %v2927
      %v2955 = vpack.c.b16 %v2930, %v2929
      %v2956 = vpack.c.b16 %v2932, %v2931
      %v2957 = vpack.c.b16 %v2934, %v2933
      %v2958 = vpack.c.b16 %v2936, %v2935
      %v2959 = vpack.c.b16 %v2938, %v2937
      %v2960 = vpack.c.b16 %v2940, %v2939
      %v2961 = vpack.c.b16 %v2942, %v2941
      %v2962 = vpack.c.b16 %v2944, %v2943
      %v2963 = vpack.c.b16 %v2946, %v2945
      %v2964 = vpack.c.b16 %v2948, %v2947
      %v2965 = vunpack.c.l.b16 %v1911
      %v2966 = vunpack.c.l.b16 %v1914
      %v2967 = vunpack.c.l.b16 %v1918
      %v2968 = vunpack.c.l.b16 %v1921
      %v2969 = vunpack.c.l.b16 %v1925
      %v2970 = vunpack.c.l.b16 %v1928
      %v2971 = vunpack.c.l.b16 %v1932
      %v2972 = vunpack.c.l.b16 %v1935
      %v2973 = vunpack.c.l.b16 %v1939
      %v2974 = vunpack.c.l.b16 %v1942
      %v2975 = vunpack.c.l.b16 %v1946
      %v2976 = vunpack.c.l.b16 %v1949
      %v2977 = vunpack.c.l.b16 %v1953
      %v2978 = vunpack.c.l.b16 %v1956
      %v2979 = vunpack.c.l.b16 %v1960
      %v2980 = vunpack.c.l.b16 %v1963
      %v2981 = vunpack.c.l.b16 %v1967
      %v2982 = vunpack.c.l.b16 %v1970
      %v2983 = vunpack.c.l.b16 %v1974
      %v2984 = vunpack.c.l.b16 %v1977
      %v2985 = vunpack.c.l.b16 %v1981
      %v2986 = vunpack.c.l.b16 %v1984
      %v2987 = vunpack.c.l.b16 %v1988
      %v2988 = vunpack.c.l.b16 %v1991
      %v2989 = vunpack.c.l.b16 %v1995
      %v2990 = vunpack.c.l.b16 %v1998
      %v2991 = vunpack.c.l.b16 %v2002
      %v2992 = vunpack.c.l.b16 %v2005
      %v2993 = vunpack.c.l.b16 %v2009
      %v2994 = vunpack.c.l.b16 %v2012
      %v2995 = vunpack.c.l.b16 %v2016
      %v2996 = vunpack.c.l.b16 %v2019
      %v2997 = vpack.c.b16 %v2966, %v2965
      %v2998 = vpack.c.b16 %v2968, %v2967
      %v2999 = vpack.c.b16 %v2970, %v2969
      %v3000 = vpack.c.b16 %v2972, %v2971
      %v3001 = vpack.c.b16 %v2974, %v2973
      %v3002 = vpack.c.b16 %v2976, %v2975
      %v3003 = vpack.c.b16 %v2978, %v2977
      %v3004 = vpack.c.b16 %v2980, %v2979
      %v3005 = vpack.c.b16 %v2982, %v2981
      %v3006 = vpack.c.b16 %v2984, %v2983
      %v3007 = vpack.c.b16 %v2986, %v2985
      %v3008 = vpack.c.b16 %v2988, %v2987
      %v3009 = vpack.c.b16 %v2990, %v2989
      %v3010 = vpack.c.b16 %v2992, %v2991
      %v3011 = vpack.c.b16 %v2994, %v2993
      %v3012 = vpack.c.b16 %v2996, %v2995
      %3013 = vrot.lane.b32.xlu0 %v2997, 64
      %v3014 = vpop.permute.xlu0 %3013
      %3015 = vrot.lane.b32.xlu0 %v2998, 64
      %v3016 = vpop.permute.xlu0 %3015
      %3017 = vrot.lane.b32.xlu0 %v2999, 64
      %v3018 = vpop.permute.xlu0 %3017
      %3019 = vrot.lane.b32.xlu0 %v3000, 64
      %v3020 = vpop.permute.xlu0 %3019
      %3021 = vrot.lane.b32.xlu0 %v3001, 64
      %v3022 = vpop.permute.xlu0 %3021
      %3023 = vrot.lane.b32.xlu0 %v3002, 64
      %v3024 = vpop.permute.xlu0 %3023
      %3025 = vrot.lane.b32.xlu0 %v3003, 64
      %v3026 = vpop.permute.xlu0 %3025
      %3027 = vrot.lane.b32.xlu0 %v3004, 64
      %v3028 = vpop.permute.xlu0 %3027
      %3029 = vrot.lane.b32.xlu0 %v3005, 64
      %v3030 = vpop.permute.xlu0 %3029
      %3031 = vrot.lane.b32.xlu0 %v3006, 64
      %v3032 = vpop.permute.xlu0 %3031
      %3033 = vrot.lane.b32.xlu0 %v3007, 64
      %v3034 = vpop.permute.xlu0 %3033
      %3035 = vrot.lane.b32.xlu0 %v3008, 64
      %v3036 = vpop.permute.xlu0 %3035
      %3037 = vrot.lane.b32.xlu0 %v3009, 64
      %v3038 = vpop.permute.xlu0 %3037
      %3039 = vrot.lane.b32.xlu0 %v3010, 64
      %v3040 = vpop.permute.xlu0 %3039
      %3041 = vrot.lane.b32.xlu0 %v3011, 64
      %v3042 = vpop.permute.xlu0 %3041
      %3043 = vrot.lane.b32.xlu0 %v3012, 64
      %v3044 = vpop.permute.xlu0 %3043
      %v3061 = vunpack.c.l.b16 %v2021
      %v3062 = vunpack.c.l.b16 %v2022
      %v3063 = vunpack.c.l.b16 %v2023
      %v3064 = vunpack.c.l.b16 %v2024
      %v3065 = vunpack.c.l.b16 %v2025
      %v3066 = vunpack.c.l.b16 %v2026
      %v3067 = vunpack.c.l.b16 %v2027
      %v3068 = vunpack.c.l.b16 %v2028
      %v3069 = vunpack.c.l.b16 %v2029
      %v3070 = vunpack.c.l.b16 %v2030
      %v3071 = vunpack.c.l.b16 %v2031
      %v3072 = vunpack.c.l.b16 %v2032
      %v3073 = vunpack.c.l.b16 %v2033
      %v3074 = vunpack.c.l.b16 %v2034
      %v3075 = vunpack.c.l.b16 %v2035
      %v3076 = vunpack.c.l.b16 %v2036
      %v3077 = vunpack.c.l.b16 %v2037
      %v3078 = vunpack.c.l.b16 %v2038
      %v3079 = vunpack.c.l.b16 %v2039
      %v3080 = vunpack.c.l.b16 %v2040
      %v3081 = vunpack.c.l.b16 %v2041
      %v3082 = vunpack.c.l.b16 %v2042
      %v3083 = vunpack.c.l.b16 %v2043
      %v3084 = vunpack.c.l.b16 %v2044
      %v3085 = vunpack.c.l.b16 %v2045
      %v3086 = vunpack.c.l.b16 %v2046
      %v3087 = vunpack.c.l.b16 %v2047
      %v3088 = vunpack.c.l.b16 %v2048
      %v3089 = vunpack.c.l.b16 %v2049
      %v3090 = vunpack.c.l.b16 %v2050
      %v3091 = vunpack.c.l.b16 %v2051
      %v3092 = vunpack.c.l.b16 %v2052
      %v3093 = vpack.c.b16 %v3062, %v3061
      %v3094 = vpack.c.b16 %v3064, %v3063
      %v3095 = vpack.c.b16 %v3066, %v3065
      %v3096 = vpack.c.b16 %v3068, %v3067
      %v3097 = vpack.c.b16 %v3070, %v3069
      %v3098 = vpack.c.b16 %v3072, %v3071
      %v3099 = vpack.c.b16 %v3074, %v3073
      %v3100 = vpack.c.b16 %v3076, %v3075
      %v3101 = vpack.c.b16 %v3078, %v3077
      %v3102 = vpack.c.b16 %v3080, %v3079
      %v3103 = vpack.c.b16 %v3082, %v3081
      %v3104 = vpack.c.b16 %v3084, %v3083
      %v3105 = vpack.c.b16 %v3086, %v3085
      %v3106 = vpack.c.b16 %v3088, %v3087
      %v3107 = vpack.c.b16 %v3090, %v3089
      %v3108 = vpack.c.b16 %v3092, %v3091
      %v3109 = vunpack.c.l.b16 %v2082
      %v3110 = vunpack.c.l.b16 %v2092
      %v3111 = vunpack.c.l.b16 %v2106
      %v3112 = vunpack.c.l.b16 %v2116
      %v3113 = vunpack.c.l.b16 %v2130
      %v3114 = vunpack.c.l.b16 %v2140
      %v3115 = vunpack.c.l.b16 %v2154
      %v3116 = vunpack.c.l.b16 %v2164
      %v3117 = vunpack.c.l.b16 %v2178
      %v3118 = vunpack.c.l.b16 %v2188
      %v3119 = vunpack.c.l.b16 %v2202
      %v3120 = vunpack.c.l.b16 %v2212
      %v3121 = vunpack.c.l.b16 %v2226
      %v3122 = vunpack.c.l.b16 %v2236
      %v3123 = vunpack.c.l.b16 %v2250
      %v3124 = vunpack.c.l.b16 %v2260
      %v3125 = vunpack.c.l.b16 %v2274
      %v3126 = vunpack.c.l.b16 %v2284
      %v3127 = vunpack.c.l.b16 %v2298
      %v3128 = vunpack.c.l.b16 %v2308
      %v3129 = vunpack.c.l.b16 %v2322
      %v3130 = vunpack.c.l.b16 %v2332
      %v3131 = vunpack.c.l.b16 %v2346
      %v3132 = vunpack.c.l.b16 %v2356
      %v3133 = vunpack.c.l.b16 %v2370
      %v3134 = vunpack.c.l.b16 %v2380
      %v3135 = vunpack.c.l.b16 %v2394
      %v3136 = vunpack.c.l.b16 %v2404
      %v3137 = vunpack.c.l.b16 %v2418
      %v3138 = vunpack.c.l.b16 %v2428
      %v3139 = vunpack.c.l.b16 %v2442
      %v3140 = vunpack.c.l.b16 %v2452
      %v3141 = vpack.c.b16 %v3110, %v3109
      %v3142 = vpack.c.b16 %v3112, %v3111
      %v3143 = vpack.c.b16 %v3114, %v3113
      %v3144 = vpack.c.b16 %v3116, %v3115
      %v3145 = vpack.c.b16 %v3118, %v3117
      %v3146 = vpack.c.b16 %v3120, %v3119
      %v3147 = vpack.c.b16 %v3122, %v3121
      %v3148 = vpack.c.b16 %v3124, %v3123
      %v3149 = vpack.c.b16 %v3126, %v3125
      %v3150 = vpack.c.b16 %v3128, %v3127
      %v3151 = vpack.c.b16 %v3130, %v3129
      %v3152 = vpack.c.b16 %v3132, %v3131
      %v3153 = vpack.c.b16 %v3134, %v3133
      %v3154 = vpack.c.b16 %v3136, %v3135
      %v3155 = vpack.c.b16 %v3138, %v3137
      %v3156 = vpack.c.b16 %v3140, %v3139
      %3157 = vrot.lane.b32.xlu0 %v3141, 64
      %v3158 = vpop.permute.xlu0 %3157
      %3159 = vrot.lane.b32.xlu0 %v3142, 64
      %v3160 = vpop.permute.xlu0 %3159
      %3161 = vrot.lane.b32.xlu0 %v3143, 64
      %v3162 = vpop.permute.xlu0 %3161
      %3163 = vrot.lane.b32.xlu0 %v3144, 64
      %v3164 = vpop.permute.xlu0 %3163
      %3165 = vrot.lane.b32.xlu0 %v3145, 64
      %v3166 = vpop.permute.xlu0 %3165
      %3167 = vrot.lane.b32.xlu0 %v3146, 64
      %v3168 = vpop.permute.xlu0 %3167
      %3169 = vrot.lane.b32.xlu0 %v3147, 64
      %v3170 = vpop.permute.xlu0 %3169
      %3171 = vrot.lane.b32.xlu0 %v3148, 64
      %v3172 = vpop.permute.xlu0 %3171
      %3173 = vrot.lane.b32.xlu0 %v3149, 64
      %v3174 = vpop.permute.xlu0 %3173
      %3175 = vrot.lane.b32.xlu0 %v3150, 64
      %v3176 = vpop.permute.xlu0 %3175
      %3177 = vrot.lane.b32.xlu0 %v3151, 64
      %v3178 = vpop.permute.xlu0 %3177
      %3179 = vrot.lane.b32.xlu0 %v3152, 64
      %v3180 = vpop.permute.xlu0 %3179
      %3181 = vrot.lane.b32.xlu0 %v3153, 64
      %v3182 = vpop.permute.xlu0 %3181
      %3183 = vrot.lane.b32.xlu0 %v3154, 64
      %v3184 = vpop.permute.xlu0 %3183
      %3185 = vrot.lane.b32.xlu0 %v3155, 64
      %v3186 = vpop.permute.xlu0 %3185
      %3187 = vrot.lane.b32.xlu0 %v3156, 64
      %v3188 = vpop.permute.xlu0 %3187
      %v3189 = vunpack.c.l.b16 %v2520
      %v3190 = vunpack.c.l.b16 %v2523
      %v3191 = vunpack.c.l.b16 %v2527
      %v3192 = vunpack.c.l.b16 %v2530
      %v3193 = vunpack.c.l.b16 %v2534
      %v3194 = vunpack.c.l.b16 %v2537
      %v3195 = vunpack.c.l.b16 %v2541
      %v3196 = vunpack.c.l.b16 %v2544
      %v3197 = vunpack.c.l.b16 %v2548
      %v3198 = vunpack.c.l.b16 %v2551
      %v3199 = vunpack.c.l.b16 %v2555
      %v3200 = vunpack.c.l.b16 %v2558
      %v3201 = vunpack.c.l.b16 %v2562
      %v3202 = vunpack.c.l.b16 %v2565
      %v3203 = vunpack.c.l.b16 %v2569
      %v3204 = vunpack.c.l.b16 %v2572
      %v3205 = vunpack.c.l.b16 %v2576
      %v3206 = vunpack.c.l.b16 %v2579
      %v3207 = vunpack.c.l.b16 %v2583
      %v3208 = vunpack.c.l.b16 %v2586
      %v3209 = vunpack.c.l.b16 %v2590
      %v3210 = vunpack.c.l.b16 %v2593
      %v3211 = vunpack.c.l.b16 %v2597
      %v3212 = vunpack.c.l.b16 %v2600
      %v3213 = vunpack.c.l.b16 %v2604
      %v3214 = vunpack.c.l.b16 %v2607
      %v3215 = vunpack.c.l.b16 %v2611
      %v3216 = vunpack.c.l.b16 %v2614
      %v3217 = vunpack.c.l.b16 %v2618
      %v3218 = vunpack.c.l.b16 %v2621
      %v3219 = vunpack.c.l.b16 %v2625
      %v3220 = vunpack.c.l.b16 %v2628
      %v3221 = vpack.c.b16 %v3190, %v3189
      %v3222 = vpack.c.b16 %v3192, %v3191
      %v3223 = vpack.c.b16 %v3194, %v3193
      %v3224 = vpack.c.b16 %v3196, %v3195
      %v3225 = vpack.c.b16 %v3198, %v3197
      %v3226 = vpack.c.b16 %v3200, %v3199
      %v3227 = vpack.c.b16 %v3202, %v3201
      %v3228 = vpack.c.b16 %v3204, %v3203
      %v3229 = vpack.c.b16 %v3206, %v3205
      %v3230 = vpack.c.b16 %v3208, %v3207
      %v3231 = vpack.c.b16 %v3210, %v3209
      %v3232 = vpack.c.b16 %v3212, %v3211
      %v3233 = vpack.c.b16 %v3214, %v3213
      %v3234 = vpack.c.b16 %v3216, %v3215
      %v3235 = vpack.c.b16 %v3218, %v3217
      %v3236 = vpack.c.b16 %v3220, %v3219
      %vm3237 = vcmask 523264
      %v3240 = vsel %vm3237, %v2677, %v2742
      %v3244 = vsel %vm3237, %v2678, %v2744
      %v3248 = vsel %vm3237, %v2679, %v2746
      %v3252 = vsel %vm3237, %v2680, %v2748
      %v3256 = vsel %vm3237, %v2681, %v2750
      %v3260 = vsel %vm3237, %v2682, %v2752
      %v3264 = vsel %vm3237, %v2683, %v2754
      %v3268 = vsel %vm3237, %v2684, %v2756
      %v3272 = vsel %vm3237, %v2685, %v2758
      %v3276 = vsel %vm3237, %v2686, %v2760
      %v3280 = vsel %vm3237, %v2687, %v2762
      %v3284 = vsel %vm3237, %v2688, %v2764
      %v3288 = vsel %vm3237, %v2689, %v2766
      %v3292 = vsel %vm3237, %v2690, %v2768
      %v3296 = vsel %vm3237, %v2691, %v2770
      %v3300 = vsel %vm3237, %v2692, %v2772
      %v3304 = vsel %vm3237, %v2805, %v2886
      %v3308 = vsel %vm3237, %v2806, %v2888
      %v3312 = vsel %vm3237, %v2807, %v2890
      %v3316 = vsel %vm3237, %v2808, %v2892
      %v3320 = vsel %vm3237, %v2809, %v2894
      %v3324 = vsel %vm3237, %v2810, %v2896
      %v3328 = vsel %vm3237, %v2811, %v2898
      %v3332 = vsel %vm3237, %v2812, %v2900
      %v3336 = vsel %vm3237, %v2813, %v2902
      %v3340 = vsel %vm3237, %v2814, %v2904
      %v3344 = vsel %vm3237, %v2815, %v2906
      %v3348 = vsel %vm3237, %v2816, %v2908
      %v3352 = vsel %vm3237, %v2817, %v2910
      %v3356 = vsel %vm3237, %v2818, %v2912
      %v3360 = vsel %vm3237, %v2819, %v2914
      %v3364 = vsel %vm3237, %v2820, %v2916
      %v3368 = vsel %vm3237, %v2949, %v3014
      %v3372 = vsel %vm3237, %v2950, %v3016
      %v3376 = vsel %vm3237, %v2951, %v3018
      %v3380 = vsel %vm3237, %v2952, %v3020
      %v3384 = vsel %vm3237, %v2953, %v3022
      %v3388 = vsel %vm3237, %v2954, %v3024
      %v3392 = vsel %vm3237, %v2955, %v3026
      %v3396 = vsel %vm3237, %v2956, %v3028
      %v3400 = vsel %vm3237, %v2957, %v3030
      %v3404 = vsel %vm3237, %v2958, %v3032
      %v3408 = vsel %vm3237, %v2959, %v3034
      %v3412 = vsel %vm3237, %v2960, %v3036
      %v3416 = vsel %vm3237, %v2961, %v3038
      %v3420 = vsel %vm3237, %v2962, %v3040
      %v3424 = vsel %vm3237, %v2963, %v3042
      %v3428 = vsel %vm3237, %v2964, %v3044
      %v3432 = vsel %vm3237, %v3093, %v3158
      %v3436 = vsel %vm3237, %v3094, %v3160
      %v3440 = vsel %vm3237, %v3095, %v3162
      %v3444 = vsel %vm3237, %v3096, %v3164
      %v3448 = vsel %vm3237, %v3097, %v3166
      %v3452 = vsel %vm3237, %v3098, %v3168
      %v3456 = vsel %vm3237, %v3099, %v3170
      %v3460 = vsel %vm3237, %v3100, %v3172
      %v3464 = vsel %vm3237, %v3101, %v3174
      %v3468 = vsel %vm3237, %v3102, %v3176
      %v3472 = vsel %vm3237, %v3103, %v3178
      %v3476 = vsel %vm3237, %v3104, %v3180
      %v3480 = vsel %vm3237, %v3105, %v3182
      %v3484 = vsel %vm3237, %v3106, %v3184
      %v3488 = vsel %vm3237, %v3107, %v3186
      %v3492 = vsel %vm3237, %v3108, %v3188
      %v3494 = vld [vmem:[%s1] sm:$0xf]
      %v3495 = vld [vmem:[%s1 + $0x4] sm:$0xf]
      %v3496 = vld [vmem:[%s1 + $0x8] sm:$0xf]
      %v3497 = vld [vmem:[%s1 + $0xc] sm:$0xf]
      %v3498 = vld [vmem:[%s1 + $0x10] sm:$0xf]
      %v3499 = vld [vmem:[%s1 + $0x14] sm:$0xf]
      %v3500 = vld [vmem:[%s1 + $0x18] sm:$0xf]
      %v3501 = vld [vmem:[%s1 + $0x1c] sm:$0xf]
      %v3502 = vld [vmem:[%s1 + $0x20] sm:$0xf]
      %v3503 = vld [vmem:[%s1 + $0x24] sm:$0xf]
      %v3504 = vld [vmem:[%s1 + $0x28] sm:$0xf]
      %v3505 = vld [vmem:[%s1 + $0x2c] sm:$0xf]
      %v3506 = vld [vmem:[%s1 + $0x30] sm:$0xf]
      %v3507 = vld [vmem:[%s1 + $0x34] sm:$0xf]
      %v3508 = vld [vmem:[%s1 + $0x38] sm:$0xf]
      %v3509 = vld [vmem:[%s1 + $0x3c] sm:$0xf]
      %v3510 = vld [vmem:[%s1 + $0x40] sm:$0xf]
      %v3511 = vld [vmem:[%s1 + $0x44] sm:$0xf]
      %v3512 = vld [vmem:[%s1 + $0x48] sm:$0xf]
      %v3513 = vld [vmem:[%s1 + $0x4c] sm:$0xf]
      %v3514 = vld [vmem:[%s1 + $0x50] sm:$0xf]
      %v3515 = vld [vmem:[%s1 + $0x54] sm:$0xf]
      %v3516 = vld [vmem:[%s1 + $0x58] sm:$0xf]
      %v3517 = vld [vmem:[%s1 + $0x5c] sm:$0xf]
      %v3518 = vld [vmem:[%s1 + $0x60] sm:$0xf]
      %v3519 = vld [vmem:[%s1 + $0x64] sm:$0xf]
      %v3520 = vld [vmem:[%s1 + $0x68] sm:$0xf]
      %v3521 = vld [vmem:[%s1 + $0x6c] sm:$0xf]
      %v3522 = vld [vmem:[%s1 + $0x70] sm:$0xf]
      %v3523 = vld [vmem:[%s1 + $0x74] sm:$0xf]
      %v3524 = vld [vmem:[%s1 + $0x78] sm:$0xf]
      %v3525 = vld [vmem:[%s1 + $0x7c] sm:$0xf]
      %v3526 = vld [vmem:[%s1 + $0x80] sm:$0xf]
      %v3527 = vld [vmem:[%s1 + $0x84] sm:$0xf]
      %v3528 = vld [vmem:[%s1 + $0x88] sm:$0xf]
      %v3529 = vld [vmem:[%s1 + $0x8c] sm:$0xf]
      %v3530 = vld [vmem:[%s1 + $0x90] sm:$0xf]
      %v3531 = vld [vmem:[%s1 + $0x94] sm:$0xf]
      %v3532 = vld [vmem:[%s1 + $0x98] sm:$0xf]
      %v3533 = vld [vmem:[%s1 + $0x9c] sm:$0xf]
      %v3534 = vld [vmem:[%s1 + $0xa0] sm:$0xf]
      %v3535 = vld [vmem:[%s1 + $0xa4] sm:$0xf]
      %v3536 = vld [vmem:[%s1 + $0xa8] sm:$0xf]
      %v3537 = vld [vmem:[%s1 + $0xac] sm:$0xf]
      %v3538 = vld [vmem:[%s1 + $0xb0] sm:$0xf]
      %v3539 = vld [vmem:[%s1 + $0xb4] sm:$0xf]
      %v3540 = vld [vmem:[%s1 + $0xb8] sm:$0xf]
      %v3541 = vld [vmem:[%s1 + $0xbc] sm:$0xf]
      %v3542 = vld [vmem:[%s1 + $0xc0] sm:$0xf]
      %v3543 = vld [vmem:[%s1 + $0xc4] sm:$0xf]
      %v3544 = vld [vmem:[%s1 + $0xc8] sm:$0xf]
      %v3545 = vld [vmem:[%s1 + $0xcc] sm:$0xf]
      %v3546 = vld [vmem:[%s1 + $0xd0] sm:$0xf]
      %v3547 = vld [vmem:[%s1 + $0xd4] sm:$0xf]
      %v3548 = vld [vmem:[%s1 + $0xd8] sm:$0xf]
      %v3549 = vld [vmem:[%s1 + $0xdc] sm:$0xf]
      %v3550 = vld [vmem:[%s1 + $0xe0] sm:$0xf]
      %v3551 = vld [vmem:[%s1 + $0xe4] sm:$0xf]
      %v3552 = vld [vmem:[%s1 + $0xe8] sm:$0xf]
      %v3553 = vld [vmem:[%s1 + $0xec] sm:$0xf]
      %v3554 = vld [vmem:[%s1 + $0xf0] sm:$0xf]
      %v3555 = vld [vmem:[%s1 + $0xf4] sm:$0xf]
      %v3556 = vld [vmem:[%s1 + $0xf8] sm:$0xf]
      %v3557 = vld [vmem:[%s1 + $0xfc] sm:$0xf]
      %v3558 = vld [vmem:[%s1 + $0x100] sm:$0xf]
      %v3559 = vld [vmem:[%s1 + $0x104] sm:$0xf]
      %v3560 = vld [vmem:[%s1 + $0x108] sm:$0xf]
      %v3561 = vld [vmem:[%s1 + $0x10c] sm:$0xf]
      %v3562 = vld [vmem:[%s1 + $0x110] sm:$0xf]
      %v3563 = vld [vmem:[%s1 + $0x114] sm:$0xf]
      %v3564 = vld [vmem:[%s1 + $0x118] sm:$0xf]
      %v3565 = vld [vmem:[%s1 + $0x11c] sm:$0xf]
      %v3566 = vld [vmem:[%s2] sm:$0x1]
      %v3568 = vlaneseq
      %v3569 = vshrl.u32 %v3568, 7
      %v3570 = vsub.s32 0, %v3569
      %v3571 = vrot.slane %v3566, %v3570
      %v3645 = vunpack.c.l.b16 %v3494
      %v3646 = vunpack.c.l.b16 %v3495
      %v3647 = vunpack.c.l.b16 %v3496
      %v3648 = vunpack.c.l.b16 %v3497
      %v3649 = vunpack.c.l.b16 %v3498
      %v3650 = vunpack.c.l.b16 %v3499
      %v3651 = vunpack.c.l.b16 %v3500
      %v3652 = vunpack.c.l.b16 %v3501
      %v3653 = vunpack.c.l.b16 %v3502
      %v3654 = vunpack.c.l.b16 %v3503
      %v3655 = vunpack.c.l.b16 %v3504
      %v3656 = vunpack.c.l.b16 %v3505
      %v3657 = vunpack.c.l.b16 %v3506
      %v3658 = vunpack.c.l.b16 %v3507
      %v3659 = vunpack.c.l.b16 %v3508
      %v3660 = vunpack.c.l.b16 %v3509
      %v3661 = vunpack.c.l.b16 %v3510
      %v3662 = vunpack.c.l.b16 %v3511
      %v3663 = vunpack.c.l.b16 %v3512
      %v3664 = vunpack.c.l.b16 %v3513
      %v3665 = vunpack.c.l.b16 %v3514
      %v3666 = vunpack.c.l.b16 %v3515
      %v3667 = vunpack.c.l.b16 %v3516
      %v3668 = vunpack.c.l.b16 %v3517
      %v3669 = vunpack.c.l.b16 %v3518
      %v3670 = vunpack.c.l.b16 %v3519
      %v3671 = vunpack.c.l.b16 %v3520
      %v3672 = vunpack.c.l.b16 %v3521
      %v3673 = vunpack.c.l.b16 %v3522
      %v3674 = vunpack.c.l.b16 %v3523
      %v3675 = vunpack.c.l.b16 %v3524
      %v3676 = vunpack.c.l.b16 %v3525
      %v3677 = vunpack.c.l.b16 %v3526
      %v3678 = vunpack.c.l.b16 %v3527
      %v3679 = vunpack.c.l.b16 %v3528
      %v3680 = vunpack.c.l.b16 %v3529
      %v3681 = vunpack.c.l.b16 %v3530
      %v3682 = vunpack.c.l.b16 %v3531
      %v3683 = vunpack.c.l.b16 %v3532
      %v3684 = vunpack.c.l.b16 %v3533
      %v3685 = vunpack.c.l.b16 %v3534
      %v3686 = vunpack.c.l.b16 %v3535
      %v3687 = vunpack.c.l.b16 %v3536
      %v3688 = vunpack.c.l.b16 %v3537
      %v3689 = vunpack.c.l.b16 %v3538
      %v3690 = vunpack.c.l.b16 %v3539
      %v3691 = vunpack.c.l.b16 %v3540
      %v3692 = vunpack.c.l.b16 %v3541
      %v3693 = vunpack.c.l.b16 %v3542
      %v3694 = vunpack.c.l.b16 %v3543
      %v3695 = vunpack.c.l.b16 %v3544
      %v3696 = vunpack.c.l.b16 %v3545
      %v3697 = vunpack.c.l.b16 %v3546
      %v3698 = vunpack.c.l.b16 %v3547
      %v3699 = vunpack.c.l.b16 %v3548
      %v3700 = vunpack.c.l.b16 %v3549
      %v3701 = vunpack.c.l.b16 %v3550
      %v3702 = vunpack.c.l.b16 %v3551
      %v3703 = vunpack.c.l.b16 %v3552
      %v3704 = vunpack.c.l.b16 %v3553
      %v3705 = vunpack.c.l.b16 %v3554
      %v3706 = vunpack.c.l.b16 %v3555
      %v3707 = vunpack.c.l.b16 %v3556
      %v3708 = vunpack.c.l.b16 %v3557
      %v3709 = vunpack.c.l.b16 %v3558
      %v3710 = vunpack.c.l.b16 %v3559
      %v3711 = vunpack.c.l.b16 %v3560
      %v3712 = vunpack.c.l.b16 %v3561
      %v3713 = vunpack.c.l.b16 %v3562
      %v3714 = vunpack.c.l.b16 %v3563
      %v3715 = vunpack.c.l.b16 %v3564
      %v3716 = vunpack.c.l.b16 %v3565
      %v3717 = vpack.c.b16 %v3646, %v3645
      %v3718 = vpack.c.b16 %v3648, %v3647
      %v3719 = vpack.c.b16 %v3650, %v3649
      %v3720 = vpack.c.b16 %v3652, %v3651
      %v3721 = vpack.c.b16 %v3654, %v3653
      %v3722 = vpack.c.b16 %v3656, %v3655
      %v3723 = vpack.c.b16 %v3658, %v3657
      %v3724 = vpack.c.b16 %v3660, %v3659
      %v3725 = vpack.c.b16 %v3662, %v3661
      %v3726 = vpack.c.b16 %v3664, %v3663
      %v3727 = vpack.c.b16 %v3666, %v3665
      %v3728 = vpack.c.b16 %v3668, %v3667
      %v3729 = vpack.c.b16 %v3670, %v3669
      %v3730 = vpack.c.b16 %v3672, %v3671
      %v3731 = vpack.c.b16 %v3674, %v3673
      %v3732 = vpack.c.b16 %v3676, %v3675
      %v3733 = vpack.c.b16 %v3678, %v3677
      %v3734 = vpack.c.b16 %v3680, %v3679
      %v3735 = vpack.c.b16 %v3682, %v3681
      %v3736 = vpack.c.b16 %v3684, %v3683
      %v3737 = vpack.c.b16 %v3686, %v3685
      %v3738 = vpack.c.b16 %v3688, %v3687
      %v3739 = vpack.c.b16 %v3690, %v3689
      %v3740 = vpack.c.b16 %v3692, %v3691
      %v3741 = vpack.c.b16 %v3694, %v3693
      %v3742 = vpack.c.b16 %v3696, %v3695
      %v3743 = vpack.c.b16 %v3698, %v3697
      %v3744 = vpack.c.b16 %v3700, %v3699
      %v3745 = vpack.c.b16 %v3702, %v3701
      %v3746 = vpack.c.b16 %v3704, %v3703
      %v3747 = vpack.c.b16 %v3706, %v3705
      %v3748 = vpack.c.b16 %v3708, %v3707
      %v3749 = vpack.c.b16 %v3710, %v3709
      %v3750 = vpack.c.b16 %v3712, %v3711
      %v3751 = vpack.c.b16 %v3714, %v3713
      %v3752 = vpack.c.b16 %v3716, %v3715
      %v3790 = vsel %vm3237, %v3221, 0
      %v3793 = vsel %vm3237, %v3222, 0
      %v3796 = vsel %vm3237, %v3223, 0
      %v3799 = vsel %vm3237, %v3224, 0
      %v3802 = vsel %vm3237, %v3225, 0
      %v3805 = vsel %vm3237, %v3226, 0
      %v3808 = vsel %vm3237, %v3227, 0
      %v3811 = vsel %vm3237, %v3228, 0
      %v3814 = vsel %vm3237, %v3229, 0
      %v3817 = vsel %vm3237, %v3230, 0
      %v3820 = vsel %vm3237, %v3231, 0
      %v3823 = vsel %vm3237, %v3232, 0
      %v3826 = vsel %vm3237, %v3233, 0
      %v3829 = vsel %vm3237, %v3234, 0
      %v3832 = vsel %vm3237, %v3235, 0
      %v3835 = vsel %vm3237, %v3236, 0
      %3837 = vmatprep.subr.bf16.mxu0 0
      %3838 = vmatpush1.bf16.msra.mxu0 %v3717
      %3839 = vmatprep.subr.bf16.mxu0 0
      %3840 = vmatpush1.bf16.msra.mxu0 %v3718
      %3841 = vmatprep.subr.bf16.mxu0 0
      %3842 = vmatpush1.bf16.msra.mxu0 %v3719
      %3843 = vmatprep.subr.bf16.mxu0 0
      %3844 = vmatpush1.bf16.msra.mxu0 %v3720
      %3845 = vmatprep.subr.bf16.mxu0 0
      %3846 = vmatpush1.bf16.msra.mxu0 %v3721
      %3847 = vmatprep.subr.bf16.mxu0 0
      %3848 = vmatpush1.bf16.msra.mxu0 %v3722
      %3849 = vmatprep.subr.bf16.mxu0 0
      %3850 = vmatpush1.bf16.msra.mxu0 %v3723
      %3851 = vmatprep.subr.bf16.mxu0 0
      %3852 = vmatpush1.bf16.msra.mxu0 %v3724
      %3853 = vmatprep.subr.bf16.mxu0 0
      %3854 = vmatpush1.bf16.msra.mxu0 %v3725
      %3855 = vmatprep.subr.bf16.mxu0 0
      %3856 = vmatpush1.bf16.msra.mxu0 %v3726
      %3857 = vmatprep.subr.bf16.mxu0 0
      %3858 = vmatpush1.bf16.msra.mxu0 %v3727
      %3859 = vmatprep.subr.bf16.mxu0 0
      %3860 = vmatpush1.bf16.msra.mxu0 %v3728
      %3861 = vmatprep.subr.bf16.mxu0 0
      %3862 = vmatpush1.bf16.msra.mxu0 %v3729
      %3863 = vmatprep.subr.bf16.mxu0 0
      %3864 = vmatpush1.bf16.msra.mxu0 %v3730
      %3865 = vmatprep.subr.bf16.mxu0 0
      %3866 = vmatpush1.bf16.msra.mxu0 %v3731
      %3867 = vmatprep.subr.bf16.mxu0 0
      %3868 = vmatpush1.bf16.msra.mxu0 %v3732
      %3869 = vmatprep.mubr.bf16.mxu0 %v3304
      %3870 = vmatmul.mubr.bf16.gmra.mrb[0].mxu0 %v3240
      %v3871 = vpop.f32.mrb[0].mxu0
      %v3872 = vadd.f32 %v3571, %v3871
      %v3873 = vpop.f32.mrb[0].mxu0
      %v3874 = vpop.f32.mrb[0].mxu0
      %v3875 = vadd.f32 %v3571, %v3874
      %v3876 = vpop.f32.mrb[0].mxu0
      %3877 = vmatprep.mubr.bf16.mxu0 %v3308
      %3878 = vmatmul.mubr.bf16.gmra.mrb[0].mxu0 %v3244
      %v3879 = vpop.f32.mrb[0].mxu0
      %v3880 = vadd.f32 %v3571, %v3879
      %v3881 = vpop.f32.mrb[0].mxu0
      %v3882 = vpop.f32.mrb[0].mxu0
      %v3883 = vadd.f32 %v3571, %v3882
      %v3884 = vpop.f32.mrb[0].mxu0
      %3885 = vmatprep.mubr.bf16.mxu0 %v3312
      %3886 = vmatmul.mubr.bf16.gmra.mrb[0].mxu0 %v3248
      %v3887 = vpop.f32.mrb[0].mxu0
      %v3888 = vadd.f32 %v3571, %v3887
      %v3889 = vpop.f32.mrb[0].mxu0
      %v3890 = vpop.f32.mrb[0].mxu0
      %v3891 = vadd.f32 %v3571, %v3890
      %v3892 = vpop.f32.mrb[0].mxu0
      %3893 = vmatprep.mubr.bf16.mxu0 %v3316
      %3894 = vmatmul.mubr.bf16.gmra.mrb[0].mxu0 %v3252
      %v3895 = vpop.f32.mrb[0].mxu0
      %v3896 = vadd.f32 %v3571, %v3895
      %v3897 = vpop.f32.mrb[0].mxu0
      %v3898 = vpop.f32.mrb[0].mxu0
      %v3899 = vadd.f32 %v3571, %v3898
      %v3900 = vpop.f32.mrb[0].mxu0
      %3901 = vmatprep.mubr.bf16.mxu0 %v3320
      %3902 = vmatmul.mubr.bf16.gmra.mrb[0].mxu0 %v3256
      %v3903 = vpop.f32.mrb[0].mxu0
      %v3904 = vadd.f32 %v3571, %v3903
      %v3905 = vpop.f32.mrb[0].mxu0
      %v3906 = vpop.f32.mrb[0].mxu0
      %v3907 = vadd.f32 %v3571, %v3906
      %v3908 = vpop.f32.mrb[0].mxu0
      %3909 = vmatprep.mubr.bf16.mxu0 %v3324
      %3910 = vmatmul.mubr.bf16.gmra.mrb[0].mxu0 %v3260
      %v3911 = vpop.f32.mrb[0].mxu0
      %v3912 = vadd.f32 %v3571, %v3911
      %v3913 = vpop.f32.mrb[0].mxu0
      %v3914 = vpop.f32.mrb[0].mxu0
      %v3915 = vadd.f32 %v3571, %v3914
      %v3916 = vpop.f32.mrb[0].mxu0
      %3917 = vmatprep.mubr.bf16.mxu0 %v3328
      %3918 = vmatmul.mubr.bf16.gmra.mrb[0].mxu0 %v3264
      %v3919 = vpop.f32.mrb[0].mxu0
      %v3920 = vadd.f32 %v3571, %v3919
      %v3921 = vpop.f32.mrb[0].mxu0
      %v3922 = vpop.f32.mrb[0].mxu0
      %v3923 = vadd.f32 %v3571, %v3922
      %v3924 = vpop.f32.mrb[0].mxu0
      %3925 = vmatprep.mubr.bf16.mxu0 %v3332
      %3926 = vmatmul.mubr.bf16.gmra.mrb[0].mxu0 %v3268
      %v3927 = vpop.f32.mrb[0].mxu0
      %v3928 = vadd.f32 %v3571, %v3927
      %v3929 = vpop.f32.mrb[0].mxu0
      %v3930 = vpop.f32.mrb[0].mxu0
      %v3931 = vadd.f32 %v3571, %v3930
      %v3932 = vpop.f32.mrb[0].mxu0
      %3933 = vmatprep.mubr.bf16.mxu0 %v3336
      %3934 = vmatmul.mubr.bf16.gmra.mrb[0].mxu0 %v3272
      %v3935 = vpop.f32.mrb[0].mxu0
      %v3936 = vadd.f32 %v3571, %v3935
      %v3937 = vpop.f32.mrb[0].mxu0
      %v3938 = vpop.f32.mrb[0].mxu0
      %v3939 = vadd.f32 %v3571, %v3938
      %v3940 = vpop.f32.mrb[0].mxu0
      %3941 = vmatprep.mubr.bf16.mxu0 %v3340
      %3942 = vmatmul.mubr.bf16.gmra.mrb[0].mxu0 %v3276
      %v3943 = vpop.f32.mrb[0].mxu0
      %v3944 = vadd.f32 %v3571, %v3943
      %v3945 = vpop.f32.mrb[0].mxu0
      %v3946 = vpop.f32.mrb[0].mxu0
      %v3947 = vadd.f32 %v3571, %v3946
      %v3948 = vpop.f32.mrb[0].mxu0
      %3949 = vmatprep.mubr.bf16.mxu0 %v3344
      %3950 = vmatmul.mubr.bf16.gmra.mrb[0].mxu0 %v3280
      %v3951 = vpop.f32.mrb[0].mxu0
      %v3952 = vadd.f32 %v3571, %v3951
      %v3953 = vpop.f32.mrb[0].mxu0
      %v3954 = vpop.f32.mrb[0].mxu0
      %v3955 = vadd.f32 %v3571, %v3954
      %v3956 = vpop.f32.mrb[0].mxu0
      %3957 = vmatprep.mubr.bf16.mxu0 %v3348
      %3958 = vmatmul.mubr.bf16.gmra.mrb[0].mxu0 %v3284
      %v3959 = vpop.f32.mrb[0].mxu0
      %v3960 = vadd.f32 %v3571, %v3959
      %v3961 = vpop.f32.mrb[0].mxu0
      %v3962 = vpop.f32.mrb[0].mxu0
      %v3963 = vadd.f32 %v3571, %v3962
      %v3964 = vpop.f32.mrb[0].mxu0
      %3965 = vmatprep.mubr.bf16.mxu0 %v3352
      %3966 = vmatmul.mubr.bf16.gmra.mrb[0].mxu0 %v3288
      %v3967 = vpop.f32.mrb[0].mxu0
      %v3968 = vadd.f32 %v3571, %v3967
      %v3969 = vpop.f32.mrb[0].mxu0
      %v3970 = vpop.f32.mrb[0].mxu0
      %v3971 = vadd.f32 %v3571, %v3970
      %v3972 = vpop.f32.mrb[0].mxu0
      %3973 = vmatprep.mubr.bf16.mxu0 %v3356
      %3974 = vmatmul.mubr.bf16.gmra.mrb[0].mxu0 %v3292
      %v3975 = vpop.f32.mrb[0].mxu0
      %v3976 = vadd.f32 %v3571, %v3975
      %v3977 = vpop.f32.mrb[0].mxu0
      %v3978 = vpop.f32.mrb[0].mxu0
      %v3979 = vadd.f32 %v3571, %v3978
      %v3980 = vpop.f32.mrb[0].mxu0
      %3981 = vmatprep.mubr.bf16.mxu0 %v3360
      %3982 = vmatmul.mubr.bf16.gmra.mrb[0].mxu0 %v3296
      %v3983 = vpop.f32.mrb[0].mxu0
      %v3984 = vadd.f32 %v3571, %v3983
      %v3985 = vpop.f32.mrb[0].mxu0
      %v3986 = vpop.f32.mrb[0].mxu0
      %v3987 = vadd.f32 %v3571, %v3986
      %v3988 = vpop.f32.mrb[0].mxu0
      %3989 = vmatprep.mubr.bf16.mxu0 %v3364
      %3990 = vmatmul.mubr.bf16.gmra.mrb[0].mxu0 %v3300
      %v3991 = vpop.f32.mrb[0].mxu0
      %v3992 = vadd.f32 %v3571, %v3991
      %v3993 = vpop.f32.mrb[0].mxu0
      %v3994 = vpop.f32.mrb[0].mxu0
      %v3995 = vadd.f32 %v3571, %v3994
      %v3996 = vpop.f32.mrb[0].mxu0
      %3997 = vdwg.mxu0
      %3998 = vmatprep.subr.bf16.mxu0 0
      %3999 = vmatpush1.bf16.msra.mxu0 %v3733
      %4000 = vmatprep.subr.bf16.mxu0 0
      %4001 = vmatpush1.bf16.msra.mxu0 %v3734
      %4002 = vmatprep.subr.bf16.mxu0 0
      %4003 = vmatpush1.bf16.msra.mxu0 %v3735
      %4004 = vmatprep.subr.bf16.mxu0 0
      %4005 = vmatpush1.bf16.msra.mxu0 %v3736
      %4006 = vmatprep.subr.bf16.mxu0 0
      %4007 = vmatpush1.bf16.msra.mxu0 %v3737
      %4008 = vmatprep.subr.bf16.mxu0 0
      %4009 = vmatpush1.bf16.msra.mxu0 %v3738
      %4010 = vmatprep.subr.bf16.mxu0 0
      %4011 = vmatpush1.bf16.msra.mxu0 %v3739
      %4012 = vmatprep.subr.bf16.mxu0 0
      %4013 = vmatpush1.bf16.msra.mxu0 %v3740
      %4014 = vmatprep.subr.bf16.mxu0 0
      %4015 = vmatpush1.bf16.msra.mxu0 %v3741
      %4016 = vmatprep.subr.bf16.mxu0 0
      %4017 = vmatpush1.bf16.msra.mxu0 %v3742
      %4018 = vmatprep.subr.bf16.mxu0 0
      %4019 = vmatpush1.bf16.msra.mxu0 %v3743
      %4020 = vmatprep.subr.bf16.mxu0 0
      %4021 = vmatpush1.bf16.msra.mxu0 %v3744
      %4022 = vmatprep.subr.bf16.mxu0 0
      %4023 = vmatpush1.bf16.msra.mxu0 %v3745
      %4024 = vmatprep.subr.bf16.mxu0 0
      %4025 = vmatpush1.bf16.msra.mxu0 %v3746
      %4026 = vmatprep.subr.bf16.mxu0 0
      %4027 = vmatpush1.bf16.msra.mxu0 %v3747
      %4028 = vmatprep.subr.bf16.mxu0 0
      %4029 = vmatpush1.bf16.msra.mxu0 %v3748
      %4030 = vmatprep.mubr.bf16.mxu0 %v3432
      %4031 = vmatmul.mubr.bf16.gmra.mrb[0].mxu0 %v3368
      %v4032 = vpop.f32.mrb[0].mxu0
      %v4033 = vadd.f32 %v3872, %v4032
      %v4034 = vpop.f32.mrb[0].mxu0
      %v4035 = vpop.f32.mrb[0].mxu0
      %v4036 = vadd.f32 %v3875, %v4035
      %v4037 = vpop.f32.mrb[0].mxu0
      %4038 = vmatprep.mubr.bf16.mxu0 %v3436
      %4039 = vmatmul.mubr.bf16.gmra.mrb[0].mxu0 %v3372
      %v4040 = vpop.f32.mrb[0].mxu0
      %v4041 = vadd.f32 %v3880, %v4040
      %v4042 = vpop.f32.mrb[0].mxu0
      %v4043 = vpop.f32.mrb[0].mxu0
      %v4044 = vadd.f32 %v3883, %v4043
      %v4045 = vpop.f32.mrb[0].mxu0
      %4046 = vmatprep.mubr.bf16.mxu0 %v3440
      %4047 = vmatmul.mubr.bf16.gmra.mrb[0].mxu0 %v3376
      %v4048 = vpop.f32.mrb[0].mxu0
      %v4049 = vadd.f32 %v3888, %v4048
      %v4050 = vpop.f32.mrb[0].mxu0
      %v4051 = vpop.f32.mrb[0].mxu0
      %v4052 = vadd.f32 %v3891, %v4051
      %v4053 = vpop.f32.mrb[0].mxu0
      %4054 = vmatprep.mubr.bf16.mxu0 %v3444
      %4055 = vmatmul.mubr.bf16.gmra.mrb[0].mxu0 %v3380
      %v4056 = vpop.f32.mrb[0].mxu0
      %v4057 = vadd.f32 %v3896, %v4056
      %v4058 = vpop.f32.mrb[0].mxu0
      %v4059 = vpop.f32.mrb[0].mxu0
      %v4060 = vadd.f32 %v3899, %v4059
      %v4061 = vpop.f32.mrb[0].mxu0
      %4062 = vmatprep.mubr.bf16.mxu0 %v3448
      %4063 = vmatmul.mubr.bf16.gmra.mrb[0].mxu0 %v3384
      %v4064 = vpop.f32.mrb[0].mxu0
      %v4065 = vadd.f32 %v3904, %v4064
      %v4066 = vpop.f32.mrb[0].mxu0
      %v4067 = vpop.f32.mrb[0].mxu0
      %v4068 = vadd.f32 %v3907, %v4067
      %v4069 = vpop.f32.mrb[0].mxu0
      %4070 = vmatprep.mubr.bf16.mxu0 %v3452
      %4071 = vmatmul.mubr.bf16.gmra.mrb[0].mxu0 %v3388
      %v4072 = vpop.f32.mrb[0].mxu0
      %v4073 = vadd.f32 %v3912, %v4072
      %v4074 = vpop.f32.mrb[0].mxu0
      %v4075 = vpop.f32.mrb[0].mxu0
      %v4076 = vadd.f32 %v3915, %v4075
      %v4077 = vpop.f32.mrb[0].mxu0
      %4078 = vmatprep.mubr.bf16.mxu0 %v3456
      %4079 = vmatmul.mubr.bf16.gmra.mrb[0].mxu0 %v3392
      %v4080 = vpop.f32.mrb[0].mxu0
      %v4081 = vadd.f32 %v3920, %v4080
      %v4082 = vpop.f32.mrb[0].mxu0
      %v4083 = vpop.f32.mrb[0].mxu0
      %v4084 = vadd.f32 %v3923, %v4083
      %v4085 = vpop.f32.mrb[0].mxu0
      %4086 = vmatprep.mubr.bf16.mxu0 %v3460
      %4087 = vmatmul.mubr.bf16.gmra.mrb[0].mxu0 %v3396
      %v4088 = vpop.f32.mrb[0].mxu0
      %v4089 = vadd.f32 %v3928, %v4088
      %v4090 = vpop.f32.mrb[0].mxu0
      %v4091 = vpop.f32.mrb[0].mxu0
      %v4092 = vadd.f32 %v3931, %v4091
      %v4093 = vpop.f32.mrb[0].mxu0
      %4094 = vmatprep.mubr.bf16.mxu0 %v3464
      %4095 = vmatmul.mubr.bf16.gmra.mrb[0].mxu0 %v3400
      %v4096 = vpop.f32.mrb[0].mxu0
      %v4097 = vadd.f32 %v3936, %v4096
      %v4098 = vpop.f32.mrb[0].mxu0
      %v4099 = vpop.f32.mrb[0].mxu0
      %v4100 = vadd.f32 %v3939, %v4099
      %v4101 = vpop.f32.mrb[0].mxu0
      %4102 = vmatprep.mubr.bf16.mxu0 %v3468
      %4103 = vmatmul.mubr.bf16.gmra.mrb[0].mxu0 %v3404
      %v4104 = vpop.f32.mrb[0].mxu0
      %v4105 = vadd.f32 %v3944, %v4104
      %v4106 = vpop.f32.mrb[0].mxu0
      %v4107 = vpop.f32.mrb[0].mxu0
      %v4108 = vadd.f32 %v3947, %v4107
      %v4109 = vpop.f32.mrb[0].mxu0
      %4110 = vmatprep.mubr.bf16.mxu0 %v3472
      %4111 = vmatmul.mubr.bf16.gmra.mrb[0].mxu0 %v3408
      %v4112 = vpop.f32.mrb[0].mxu0
      %v4113 = vadd.f32 %v3952, %v4112
      %v4114 = vpop.f32.mrb[0].mxu0
      %v4115 = vpop.f32.mrb[0].mxu0
      %v4116 = vadd.f32 %v3955, %v4115
      %v4117 = vpop.f32.mrb[0].mxu0
      %4118 = vmatprep.mubr.bf16.mxu0 %v3476
      %4119 = vmatmul.mubr.bf16.gmra.mrb[0].mxu0 %v3412
      %v4120 = vpop.f32.mrb[0].mxu0
      %v4121 = vadd.f32 %v3960, %v4120
      %v4122 = vpop.f32.mrb[0].mxu0
      %v4123 = vpop.f32.mrb[0].mxu0
      %v4124 = vadd.f32 %v3963, %v4123
      %v4125 = vpop.f32.mrb[0].mxu0
      %4126 = vmatprep.mubr.bf16.mxu0 %v3480
      %4127 = vmatmul.mubr.bf16.gmra.mrb[0].mxu0 %v3416
      %v4128 = vpop.f32.mrb[0].mxu0
      %v4129 = vadd.f32 %v3968, %v4128
      %v4130 = vpop.f32.mrb[0].mxu0
      %v4131 = vpop.f32.mrb[0].mxu0
      %v4132 = vadd.f32 %v3971, %v4131
      %v4133 = vpop.f32.mrb[0].mxu0
      %4134 = vmatprep.mubr.bf16.mxu0 %v3484
      %4135 = vmatmul.mubr.bf16.gmra.mrb[0].mxu0 %v3420
      %v4136 = vpop.f32.mrb[0].mxu0
      %v4137 = vadd.f32 %v3976, %v4136
      %v4138 = vpop.f32.mrb[0].mxu0
      %v4139 = vpop.f32.mrb[0].mxu0
      %v4140 = vadd.f32 %v3979, %v4139
      %v4141 = vpop.f32.mrb[0].mxu0
      %4142 = vmatprep.mubr.bf16.mxu0 %v3488
      %4143 = vmatmul.mubr.bf16.gmra.mrb[0].mxu0 %v3424
      %v4144 = vpop.f32.mrb[0].mxu0
      %v4145 = vadd.f32 %v3984, %v4144
      %v4146 = vpop.f32.mrb[0].mxu0
      %v4147 = vpop.f32.mrb[0].mxu0
      %v4148 = vadd.f32 %v3987, %v4147
      %v4149 = vpop.f32.mrb[0].mxu0
      %4150 = vmatprep.mubr.bf16.mxu0 %v3492
      %4151 = vmatmul.mubr.bf16.gmra.mrb[0].mxu0 %v3428
      %v4152 = vpop.f32.mrb[0].mxu0
      %v4153 = vadd.f32 %v3992, %v4152
      %v4154 = vpop.f32.mrb[0].mxu0
      %v4155 = vpop.f32.mrb[0].mxu0
      %v4156 = vadd.f32 %v3995, %v4155
      %v4157 = vpop.f32.mrb[0].mxu0
      %4158 = vdwg.mxu0
      %4159 = vmatprep.subr.bf16.mxu0 0
      %4160 = vmatpush1.bf16.msra.mxu0 %v3749
      %4161 = vmatprep.subr.bf16.mxu0 0
      %4162 = vmatpush1.bf16.msra.mxu0 %v3750
      %4163 = vmatprep.subr.bf16.mxu0 0
      %4164 = vmatpush1.bf16.msra.mxu0 %v3751
      %4165 = vmatprep.subr.bf16.mxu0 0
      %4166 = vmatpush1.bf16.msra.mxu0 %v3752
      %4167 = vmatprep.subr.bf16.mxu0 0
      %4168 = vmatpush1.bf16.msra.mxu0 0
      %4169 = vmatprep.subr.bf16.mxu0 0
      %4170 = vmatpush1.bf16.msra.mxu0 0
      %4171 = vmatprep.subr.bf16.mxu0 0
      %4172 = vmatpush1.bf16.msra.mxu0 0
      %4173 = vmatprep.subr.bf16.mxu0 0
      %4174 = vmatpush1.bf16.msra.mxu0 0
      %4175 = vmatprep.subr.bf16.mxu0 0
      %4176 = vmatpush1.bf16.msra.mxu0 0
      %4177 = vmatprep.subr.bf16.mxu0 0
      %4178 = vmatpush1.bf16.msra.mxu0 0
      %4179 = vmatprep.subr.bf16.mxu0 0
      %4180 = vmatpush1.bf16.msra.mxu0 0
      %4181 = vmatprep.subr.bf16.mxu0 0
      %4182 = vmatpush1.bf16.msra.mxu0 0
      %4183 = vmatprep.subr.bf16.mxu0 0
      %4184 = vmatpush1.bf16.msra.mxu0 0
      %4185 = vmatprep.subr.bf16.mxu0 0
      %4186 = vmatpush1.bf16.msra.mxu0 0
      %4187 = vmatprep.subr.bf16.mxu0 0
      %4188 = vmatpush1.bf16.msra.mxu0 0
      %4189 = vmatprep.subr.bf16.mxu0 0
      %4190 = vmatpush1.bf16.msra.mxu0 0
      %4191 = vmatprep.mubr.bf16.mxu0 0
      %4192 = vmatmul.mubr.bf16.gmra.mrb[0].mxu0 %v3790
      %v4193 = vpop.f32.mrb[0].mxu0
      %v4194 = vadd.f32 %v4033, %v4193
      %v4195 = vpop.f32.mrb[0].mxu0
      %v4196 = vpop.f32.mrb[0].mxu0
      %v4197 = vadd.f32 %v4036, %v4196
      %v4198 = vpop.f32.mrb[0].mxu0
      %4199 = vmatprep.mubr.bf16.mxu0 0
      %4200 = vmatmul.mubr.bf16.gmra.mrb[0].mxu0 %v3793
      %v4201 = vpop.f32.mrb[0].mxu0
      %v4202 = vadd.f32 %v4041, %v4201
      %v4203 = vpop.f32.mrb[0].mxu0
      %v4204 = vpop.f32.mrb[0].mxu0
      %v4205 = vadd.f32 %v4044, %v4204
      %v4206 = vpop.f32.mrb[0].mxu0
      %4207 = vmatprep.mubr.bf16.mxu0 0
      %4208 = vmatmul.mubr.bf16.gmra.mrb[0].mxu0 %v3796
      %v4209 = vpop.f32.mrb[0].mxu0
      %v4210 = vadd.f32 %v4049, %v4209
      %v4211 = vpop.f32.mrb[0].mxu0
      %v4212 = vpop.f32.mrb[0].mxu0
      %v4213 = vadd.f32 %v4052, %v4212
      %v4214 = vpop.f32.mrb[0].mxu0
      %4215 = vmatprep.mubr.bf16.mxu0 0
      %4216 = vmatmul.mubr.bf16.gmra.mrb[0].mxu0 %v3799
      %v4217 = vpop.f32.mrb[0].mxu0
      %v4218 = vadd.f32 %v4057, %v4217
      %v4219 = vpop.f32.mrb[0].mxu0
      %v4220 = vpop.f32.mrb[0].mxu0
      %v4221 = vadd.f32 %v4060, %v4220
      %v4222 = vpop.f32.mrb[0].mxu0
      %4223 = vmatprep.mubr.bf16.mxu0 0
      %4224 = vmatmul.mubr.bf16.gmra.mrb[0].mxu0 %v3802
      %v4225 = vpop.f32.mrb[0].mxu0
      %v4226 = vadd.f32 %v4065, %v4225
      %v4227 = vpop.f32.mrb[0].mxu0
      %v4228 = vpop.f32.mrb[0].mxu0
      %v4229 = vadd.f32 %v4068, %v4228
      %v4230 = vpop.f32.mrb[0].mxu0
      %4231 = vmatprep.mubr.bf16.mxu0 0
      %4232 = vmatmul.mubr.bf16.gmra.mrb[0].mxu0 %v3805
      %v4233 = vpop.f32.mrb[0].mxu0
      %v4234 = vadd.f32 %v4073, %v4233
      %v4235 = vpop.f32.mrb[0].mxu0
      %v4236 = vpop.f32.mrb[0].mxu0
      %v4237 = vadd.f32 %v4076, %v4236
      %v4238 = vpop.f32.mrb[0].mxu0
      %4239 = vmatprep.mubr.bf16.mxu0 0
      %4240 = vmatmul.mubr.bf16.gmra.mrb[0].mxu0 %v3808
      %v4241 = vpop.f32.mrb[0].mxu0
      %v4242 = vadd.f32 %v4081, %v4241
      %v4243 = vpop.f32.mrb[0].mxu0
      %v4244 = vpop.f32.mrb[0].mxu0
      %v4245 = vadd.f32 %v4084, %v4244
      %v4246 = vpop.f32.mrb[0].mxu0
      %4247 = vmatprep.mubr.bf16.mxu0 0
      %4248 = vmatmul.mubr.bf16.gmra.mrb[0].mxu0 %v3811
      %v4249 = vpop.f32.mrb[0].mxu0
      %v4250 = vadd.f32 %v4089, %v4249
      %v4251 = vpop.f32.mrb[0].mxu0
      %v4252 = vpop.f32.mrb[0].mxu0
      %v4253 = vadd.f32 %v4092, %v4252
      %v4254 = vpop.f32.mrb[0].mxu0
      %4255 = vmatprep.mubr.bf16.mxu0 0
      %4256 = vmatmul.mubr.bf16.gmra.mrb[0].mxu0 %v3814
      %v4257 = vpop.f32.mrb[0].mxu0
      %v4258 = vadd.f32 %v4097, %v4257
      %v4259 = vpop.f32.mrb[0].mxu0
      %v4260 = vpop.f32.mrb[0].mxu0
      %v4261 = vadd.f32 %v4100, %v4260
      %v4262 = vpop.f32.mrb[0].mxu0
      %4263 = vmatprep.mubr.bf16.mxu0 0
      %4264 = vmatmul.mubr.bf16.gmra.mrb[0].mxu0 %v3817
      %v4265 = vpop.f32.mrb[0].mxu0
      %v4266 = vadd.f32 %v4105, %v4265
      %v4267 = vpop.f32.mrb[0].mxu0
      %v4268 = vpop.f32.mrb[0].mxu0
      %v4269 = vadd.f32 %v4108, %v4268
      %v4270 = vpop.f32.mrb[0].mxu0
      %4271 = vmatprep.mubr.bf16.mxu0 0
      %4272 = vmatmul.mubr.bf16.gmra.mrb[0].mxu0 %v3820
      %v4273 = vpop.f32.mrb[0].mxu0
      %v4274 = vadd.f32 %v4113, %v4273
      %v4275 = vpop.f32.mrb[0].mxu0
      %v4276 = vpop.f32.mrb[0].mxu0
      %v4277 = vadd.f32 %v4116, %v4276
      %v4278 = vpop.f32.mrb[0].mxu0
      %4279 = vmatprep.mubr.bf16.mxu0 0
      %4280 = vmatmul.mubr.bf16.gmra.mrb[0].mxu0 %v3823
      %v4281 = vpop.f32.mrb[0].mxu0
      %v4282 = vadd.f32 %v4121, %v4281
      %v4283 = vpop.f32.mrb[0].mxu0
      %v4284 = vpop.f32.mrb[0].mxu0
      %v4285 = vadd.f32 %v4124, %v4284
      %v4286 = vpop.f32.mrb[0].mxu0
      %4287 = vmatprep.mubr.bf16.mxu0 0
      %4288 = vmatmul.mubr.bf16.gmra.mrb[0].mxu0 %v3826
      %v4289 = vpop.f32.mrb[0].mxu0
      %v4290 = vadd.f32 %v4129, %v4289
      %v4291 = vpop.f32.mrb[0].mxu0
      %v4292 = vpop.f32.mrb[0].mxu0
      %v4293 = vadd.f32 %v4132, %v4292
      %v4294 = vpop.f32.mrb[0].mxu0
      %4295 = vmatprep.mubr.bf16.mxu0 0
      %4296 = vmatmul.mubr.bf16.gmra.mrb[0].mxu0 %v3829
      %v4297 = vpop.f32.mrb[0].mxu0
      %v4298 = vadd.f32 %v4137, %v4297
      %v4299 = vpop.f32.mrb[0].mxu0
      %v4300 = vpop.f32.mrb[0].mxu0
      %v4301 = vadd.f32 %v4140, %v4300
      %v4302 = vpop.f32.mrb[0].mxu0
      %4303 = vmatprep.mubr.bf16.mxu0 0
      %4304 = vmatmul.mubr.bf16.gmra.mrb[0].mxu0 %v3832
      %v4305 = vpop.f32.mrb[0].mxu0
      %v4306 = vadd.f32 %v4145, %v4305
      %v4307 = vpop.f32.mrb[0].mxu0
      %v4308 = vpop.f32.mrb[0].mxu0
      %v4309 = vadd.f32 %v4148, %v4308
      %v4310 = vpop.f32.mrb[0].mxu0
      %4311 = vmatprep.mubr.bf16.mxu0 0
      %4312 = vmatmul.mubr.bf16.gmra.mrb[0].mxu0 %v3835
      %v4313 = vpop.f32.mrb[0].mxu0
      %v4314 = vadd.f32 %v4153, %v4313
      %v4315 = vpop.f32.mrb[0].mxu0
      %v4316 = vpop.f32.mrb[0].mxu0
      %v4317 = vadd.f32 %v4156, %v4316
      %v4318 = vpop.f32.mrb[0].mxu0
      %4319 = vdwg.mxu0
      %v4320 = vmax.f32 %v4194, 0.0
      %v4321 = vmax.f32 %v4197, 0.0
      %v4322 = vmax.f32 %v4202, 0.0
      %v4323 = vmax.f32 %v4205, 0.0
      %v4324 = vmax.f32 %v4210, 0.0
      %v4325 = vmax.f32 %v4213, 0.0
      %v4326 = vmax.f32 %v4218, 0.0
      %v4327 = vmax.f32 %v4221, 0.0
      %v4328 = vmax.f32 %v4226, 0.0
      %v4329 = vmax.f32 %v4229, 0.0
      %v4330 = vmax.f32 %v4234, 0.0
      %v4331 = vmax.f32 %v4237, 0.0
      %v4332 = vmax.f32 %v4242, 0.0
      %v4333 = vmax.f32 %v4245, 0.0
      %v4334 = vmax.f32 %v4250, 0.0
      %v4335 = vmax.f32 %v4253, 0.0
      %v4336 = vmax.f32 %v4258, 0.0
      %v4337 = vmax.f32 %v4261, 0.0
      %v4338 = vmax.f32 %v4266, 0.0
      %v4339 = vmax.f32 %v4269, 0.0
      %v4340 = vmax.f32 %v4274, 0.0
      %v4341 = vmax.f32 %v4277, 0.0
      %v4342 = vmax.f32 %v4282, 0.0
      %v4343 = vmax.f32 %v4285, 0.0
      %v4344 = vmax.f32 %v4290, 0.0
      %v4345 = vmax.f32 %v4293, 0.0
      %v4346 = vmax.f32 %v4298, 0.0
      %v4347 = vmax.f32 %v4301, 0.0
      %v4348 = vmax.f32 %v4306, 0.0
      %v4349 = vmax.f32 %v4309, 0.0
      %v4350 = vmax.f32 %v4314, 0.0
      %v4351 = vmax.f32 %v4317, 0.0
      %v4352 = vpack.c.bf16 %v4321, %v4320
      %v4353 = vpack.c.bf16 %v4323, %v4322
      %v4354 = vpack.c.bf16 %v4325, %v4324
      %v4355 = vpack.c.bf16 %v4327, %v4326
      %v4356 = vpack.c.bf16 %v4329, %v4328
      %v4357 = vpack.c.bf16 %v4331, %v4330
      %v4358 = vpack.c.bf16 %v4333, %v4332
      %v4359 = vpack.c.bf16 %v4335, %v4334
      %v4360 = vpack.c.bf16 %v4337, %v4336
      %v4361 = vpack.c.bf16 %v4339, %v4338
      %v4362 = vpack.c.bf16 %v4341, %v4340
      %v4363 = vpack.c.bf16 %v4343, %v4342
      %v4364 = vpack.c.bf16 %v4345, %v4344
      %v4365 = vpack.c.bf16 %v4347, %v4346
      %v4366 = vpack.c.bf16 %v4349, %v4348
      %v4367 = vpack.c.bf16 %v4351, %v4350
      %v4384 = vunpack.c.l.b16 %v4352
      %v4385 = vunpack.c.h.b16 %v4352
      %v4386 = vunpack.c.l.b16 %v4353
      %v4387 = vunpack.c.h.b16 %v4353
      %v4388 = vunpack.c.l.b16 %v4354
      %v4389 = vunpack.c.h.b16 %v4354
      %v4390 = vunpack.c.l.b16 %v4355
      %v4391 = vunpack.c.h.b16 %v4355
      %v4392 = vunpack.c.l.b16 %v4356
      %v4393 = vunpack.c.h.b16 %v4356
      %v4394 = vunpack.c.l.b16 %v4357
      %v4395 = vunpack.c.h.b16 %v4357
      %v4396 = vunpack.c.l.b16 %v4358
      %v4397 = vunpack.c.h.b16 %v4358
      %v4398 = vunpack.c.l.b16 %v4359
      %v4399 = vunpack.c.h.b16 %v4359
      %v4400 = vunpack.c.l.b16 %v4360
      %v4401 = vunpack.c.h.b16 %v4360
      %v4402 = vunpack.c.l.b16 %v4361
      %v4403 = vunpack.c.h.b16 %v4361
      %v4404 = vunpack.c.l.b16 %v4362
      %v4405 = vunpack.c.h.b16 %v4362
      %v4406 = vunpack.c.l.b16 %v4363
      %v4407 = vunpack.c.h.b16 %v4363
      %v4408 = vunpack.c.l.b16 %v4364
      %v4409 = vunpack.c.h.b16 %v4364
      %v4410 = vunpack.c.l.b16 %v4365
      %v4411 = vunpack.c.h.b16 %v4365
      %v4412 = vunpack.c.l.b16 %v4366
      %v4413 = vunpack.c.h.b16 %v4366
      %v4414 = vunpack.c.l.b16 %v4367
      %v4415 = vunpack.c.h.b16 %v4367
      %v4416 = vpack.c.b16 %v4384, %v4384
      %v4417 = vpack.c.b16 %v4385, %v4385
      %v4418 = vpack.c.b16 %v4386, %v4386
      %v4419 = vpack.c.b16 %v4387, %v4387
      %v4420 = vpack.c.b16 %v4388, %v4388
      %v4421 = vpack.c.b16 %v4389, %v4389
      %v4422 = vpack.c.b16 %v4390, %v4390
      %v4423 = vpack.c.b16 %v4391, %v4391
      %v4424 = vpack.c.b16 %v4392, %v4392
      %v4425 = vpack.c.b16 %v4393, %v4393
      %v4426 = vpack.c.b16 %v4394, %v4394
      %v4427 = vpack.c.b16 %v4395, %v4395
      %v4428 = vpack.c.b16 %v4396, %v4396
      %v4429 = vpack.c.b16 %v4397, %v4397
      %v4430 = vpack.c.b16 %v4398, %v4398
      %v4431 = vpack.c.b16 %v4399, %v4399
      %v4432 = vpack.c.b16 %v4400, %v4400
      %v4433 = vpack.c.b16 %v4401, %v4401
      %v4434 = vpack.c.b16 %v4402, %v4402
      %v4435 = vpack.c.b16 %v4403, %v4403
      %v4436 = vpack.c.b16 %v4404, %v4404
      %v4437 = vpack.c.b16 %v4405, %v4405
      %v4438 = vpack.c.b16 %v4406, %v4406
      %v4439 = vpack.c.b16 %v4407, %v4407
      %v4440 = vpack.c.b16 %v4408, %v4408
      %v4441 = vpack.c.b16 %v4409, %v4409
      %v4442 = vpack.c.b16 %v4410, %v4410
      %v4443 = vpack.c.b16 %v4411, %v4411
      %v4444 = vpack.c.b16 %v4412, %v4412
      %v4445 = vpack.c.b16 %v4413, %v4413
      %v4446 = vpack.c.b16 %v4414, %v4414
      %v4447 = vpack.c.b16 %v4415, %v4415
      %4480 = vst.msk [vmem:[%s197] sm:$0xf] %vm212, %v4416
      %4481 = vst.msk [vmem:[%s197 + $0x4] sm:$0xf] %vm212, %v4417
      %4482 = vst.msk [vmem:[%s197 + $0x8] sm:$0xf] %vm212, %v4418
      %4483 = vst.msk [vmem:[%s197 + $0xc] sm:$0xf] %vm212, %v4419
      %4484 = vst.msk [vmem:[%s197 + $0x10] sm:$0xf] %vm212, %v4420
      %4485 = vst.msk [vmem:[%s197 + $0x14] sm:$0xf] %vm212, %v4421
      %4486 = vst.msk [vmem:[%s197 + $0x18] sm:$0xf] %vm212, %v4422
      %4487 = vst.msk [vmem:[%s197 + $0x1c] sm:$0xf] %vm212, %v4423
      %4488 = vst.msk [vmem:[%s197 + $0x20] sm:$0xf] %vm212, %v4424
      %4489 = vst.msk [vmem:[%s197 + $0x24] sm:$0xf] %vm212, %v4425
      %4490 = vst.msk [vmem:[%s197 + $0x28] sm:$0xf] %vm212, %v4426
      %4491 = vst.msk [vmem:[%s197 + $0x2c] sm:$0xf] %vm212, %v4427
      %4492 = vst.msk [vmem:[%s197 + $0x30] sm:$0xf] %vm212, %v4428
      %4493 = vst.msk [vmem:[%s197 + $0x34] sm:$0xf] %vm212, %v4429
      %4494 = vst.msk [vmem:[%s197 + $0x38] sm:$0xf] %vm212, %v4430
      %4495 = vst.msk [vmem:[%s197 + $0x3c] sm:$0xf] %vm212, %v4431
      %4496 = vst.msk [vmem:[%s197 + $0x40] sm:$0xf] %vm212, %v4432
      %4497 = vst.msk [vmem:[%s197 + $0x44] sm:$0xf] %vm212, %v4433
      %4498 = vst.msk [vmem:[%s197 + $0x48] sm:$0xf] %vm212, %v4434
      %4499 = vst.msk [vmem:[%s197 + $0x4c] sm:$0xf] %vm212, %v4435
      %4500 = vst.msk [vmem:[%s197 + $0x50] sm:$0xf] %vm212, %v4436
      %4501 = vst.msk [vmem:[%s197 + $0x54] sm:$0xf] %vm212, %v4437
      %4502 = vst.msk [vmem:[%s197 + $0x58] sm:$0xf] %vm212, %v4438
      %4503 = vst.msk [vmem:[%s197 + $0x5c] sm:$0xf] %vm212, %v4439
      %4504 = vst.msk [vmem:[%s197 + $0x60] sm:$0xf] %vm212, %v4440
      %4505 = vst.msk [vmem:[%s197 + $0x64] sm:$0xf] %vm212, %v4441
      %4506 = vst.msk [vmem:[%s197 + $0x68] sm:$0xf] %vm212, %v4442
      %4507 = vst.msk [vmem:[%s197 + $0x6c] sm:$0xf] %vm212, %v4443
      %4508 = vst.msk [vmem:[%s197 + $0x70] sm:$0xf] %vm212, %v4444
      %4509 = vst.msk [vmem:[%s197 + $0x74] sm:$0xf] %vm212, %v4445
      %4510 = vst.msk [vmem:[%s197 + $0x78] sm:$0xf] %vm212, %v4446
      %4511 = vst.msk [vmem:[%s197 + $0x7c] sm:$0xf] %vm212, %v4447
      %p4512 = scmp.lt.s32.totalorder %s15, 3
      %s4513 = scalar_select %p4512, %s15, 3
      %s4514 = smul.addr %s4513, 32
      %s4515 = smul.addr %s4514, 4
      %s4516 = scalar_lea.vmem %s4, %s4515
      // Predicated region
      $region37: #{perceptual_loss.5} parent=35 // pred_check
        %p4517 = pneg %p122
      $region38: #{perceptual_loss.5} parent=35 // pred_check_branch
        %4519 = sbr.rel (%p4517) target = $region40
      $region39: #{perceptual_loss.5} parent=35 // pred_region
        _
      $region40: #{perceptual_loss.5} parent=35 // pred_fallthru
        _
    $region36: #{perceptual_loss.5} parent=5 // pred_fallthru
      _
    %p4520 = scmp.le.s32.totalorder 2, %s10
    // Predicated region
    $region41: #{perceptual_loss.5} parent=5 // pred_check
      %p4521 = pneg %p4520
    $region42: #{perceptual_loss.5} parent=5 // pred_check_branch
      %4523 = sbr.rel (%p4521) target = $region44
    $region43: #{perceptual_loss.5} parent=5 // pred_region
      %s4524 = ssub.s32 %s10, 2
      // Predicated region
      $region45: #{perceptual_loss.5} parent=43 // pred_check
        %p4525 = pneg %p128
      $region46: #{perceptual_loss.5} parent=43 // pred_check_branch
        %4527 = sbr.rel (%p4525) target = $region48
      $region47: #{perceptual_loss.5} parent=43 // pred_region
        %p4528 = scmp.lt.s32.totalorder %s16, 3
        %s4529 = scalar_select %p4528, %s16, 3
        %s4530 = smul.addr %s4529, 32
        %s4531 = smul.addr %s4530, 4
        %s4532 = scalar_lea.vmem %s4, %s4531
      $region48: #{perceptual_loss.5} parent=43 // pred_fallthru
        _
    $region44: #{perceptual_loss.5} parent=5 // pred_fallthru
      _
  $region6: #{perceptual_loss.5} parent=0 // loop_footer
    %s14 = sadd.s32 1, %s10
  $region7: #{perceptual_loss.5} parent=0 // loop_footer_branch
    %9 = sbr.rel target = $region3
  $region8: #{perceptual_loss.5} parent=0 // loop_exit
    _

</llo_original>
